<compile_context>
chip_gen: v7x
topology: tpu7x:2x2x1
jax: 0.10.0
libtpu: 0.0.40
codegen_flags: <defaults>
</compile_context>

<pallas_src>
import math

import jax
import jax.numpy as jnp
from jax.experimental import pallas as pl
from jax.experimental.pallas import tpu as pltpu

# ----- model hyper-parameters (small, deterministic) -----
EMB = 32
NHEAD = 4
HEAD_DIM = EMB // NHEAD
FFN = 64
N_ENC = 2
N_DEC = 2
SRC_VOCAB = 11
TGT_VOCAB = 13
MAXLEN = 300
LN_EPS = 1e-5
NEG_BIG = -1e9           # additive mask value (large finite, never -inf in-kernel)
PAD = 128                # lane-dense padded width for everything


# ============================ packed-slab layout ============================

def _slab_names():
    w = ["src_emb", "tgt_emb", "gen_w"]
    v = ["gen_b", "enc_norm_w", "enc_norm_b", "dec_norm_w", "dec_norm_b"]
    for i in range(N_ENC):
        t = f"enc{i}"
        w += [f"{t}_sa_wq", f"{t}_sa_wk", f"{t}_sa_wv", f"{t}_sa_wo",
              f"{t}_lin1", f"{t}_lin2"]
        v += [f"{t}_sa_bq", f"{t}_sa_bk", f"{t}_sa_bv", f"{t}_sa_bo",
              f"{t}_lin1_b", f"{t}_lin2_b",
              f"{t}_n1w", f"{t}_n1b", f"{t}_n2w", f"{t}_n2b"]
    for i in range(N_DEC):
        t = f"dec{i}"
        w += [f"{t}_sa_wq", f"{t}_sa_wk", f"{t}_sa_wv", f"{t}_sa_wo",
              f"{t}_ca_wq", f"{t}_ca_wk", f"{t}_ca_wv", f"{t}_ca_wo",
              f"{t}_lin1", f"{t}_lin2"]
        v += [f"{t}_sa_bq", f"{t}_sa_bk", f"{t}_sa_bv", f"{t}_sa_bo",
              f"{t}_ca_bq", f"{t}_ca_bk", f"{t}_ca_bv", f"{t}_ca_bo",
              f"{t}_lin1_b", f"{t}_lin2_b",
              f"{t}_n1w", f"{t}_n1b", f"{t}_n2w", f"{t}_n2b",
              f"{t}_n3w", f"{t}_n3b"]
    return w, v


_W_NAMES, _V_NAMES = _slab_names()
W_IDX = {n: i for i, n in enumerate(_W_NAMES)}
V_IDX = {n: i for i, n in enumerate(_V_NAMES)}


# ============================ fused kernel ============================

def _fused_kernel(src_ids_ref, tgt_ids_ref, pe_src_ref, pe_tgt_ref,
                  msk_src_ref, msk_tgt_ref, msk_mem_ref,
                  w_ref, v_ref, out_ref):
    """One grid step == one batch element, end-to-end (enc + dec + generator)."""
    S = pe_src_ref.shape[0]
    T = pe_tgt_ref.shape[0]

    def mat(name):                         # (128, 128) weight, stored (in, out)
        return w_ref[W_IDX[name]]

    def vec(name):                         # (1, 128) bias / LN row
        i = V_IDX[name]
        return v_ref[i:i + 1, :]

    def matmul(x, w):
        return jnp.dot(x, w, preferred_element_type=jnp.float32)

    def layer_norm(x, wn, bn):
        # x is zero-padded beyond EMB, so plain sums divided by EMB are exact.
        s1 = jnp.sum(x, axis=-1, keepdims=True)
        s2 = jnp.sum(x * x, axis=-1, keepdims=True)
        mu = s1 * (1.0 / EMB)
        var = s2 * (1.0 / EMB) - mu * mu
        xn = (x - mu) * jax.lax.rsqrt(var + LN_EPS)
        return xn * vec(wn) + vec(bn)      # pad lanes of LN weight/bias are 0 -> stay 0

    # (NHEAD, 1, 128) 0/1 lane mask selecting each head's EMB columns
    lane = jax.lax.broadcasted_iota(jnp.int32, (1, PAD), 1)
    head_mask = jnp.stack(
        [((lane >= h * HEAD_DIM) & (lane < (h + 1) * HEAD_DIM)).astype(jnp.float32)
         for h in range(NHEAD)], axis=0)

    def mha(xq, xkv, add_mask, tag):
        """All heads at once via head-masked batched dot_generals.

        xq: (Lq, 128), xkv: (Lkv, 128), add_mask broadcastable to (Lq, Lkv).
        1/sqrt(head_dim) is pre-folded into wq/bq.
        """
        Lq = xq.shape[0]
        q = matmul(xq, mat(tag + "_wq")) + vec(tag + "_bq")
        k = matmul(xkv, mat(tag + "_wk")) + vec(tag + "_bk")
        v = matmul(xkv, mat(tag + "_wv")) + vec(tag + "_bv")

        km = k[None, :, :] * head_mask                      # (H, Lkv, 128)
        vm = v[None, :, :] * head_mask                      # (H, Lkv, 128)
        qb = jnp.broadcast_to(q[None, :, :], (NHEAD, Lq, PAD))

        # scores: contraction over the full lane width; km is zero outside head h,
        # so each batch slice h gives exactly that head's Q_h . K_h^T.
        s = jnp.einsum('hqd,hkd->hqk', qb, km,
                       preferred_element_type=jnp.float32)  # (H, Lq, Lkv)
        s = s + add_mask[None, :, :]
        p = jnp.exp(s)                                      # masked: exp(NEG_BIG) -> 0
        denom = jnp.sum(p, axis=-1, keepdims=True)
        p = p * pl.reciprocal(denom, approx=True)

        o = jnp.einsum('hqk,hkd->hqd', p, vm,
                       preferred_element_type=jnp.float32)  # (H, Lq, 128)
        attn = jnp.sum(o, axis=0)            # head h only writes its own lane block
        return matmul(attn, mat(tag + "_wo")) + vec(tag + "_bo")

    def ffn(x, tag):
        h = matmul(x, mat(tag + "_lin1")) + vec(tag + "_lin1_b")
        h = jnp.maximum(h, 0.0)
        return matmul(h, mat(tag + "_lin2")) + vec(tag + "_lin2_b")

    def embed(ids_ref, L, table_name, pe_ref):
        ids = ids_ref[0]                                     # (L, 1) int32
        onehot = (ids == jax.lax.broadcasted_iota(jnp.int32, (L, PAD), 1)
                  ).astype(jnp.float32)                      # (L, 128) one-hot over vocab
        # table already includes the *sqrt(EMB) factor
        return matmul(onehot, mat(table_name)) + pe_ref[...]

    # per-batch additive masks (pre-combined on host, clamped to NEG_BIG)
    m_src = msk_src_ref[0]       # (S, S)
    m_tgt = msk_tgt_ref[0]       # (T, T)
    m_mem = msk_mem_ref[0]       # (1, S)

    # ---------------- encoder ----------------
    mem = embed(src_ids_ref, S, "src_emb", pe_src_ref)       # (S, 128)
    for i in range(N_ENC):
        t = f"enc{i}"
        h = layer_norm(mem, t + "_n1w", t + "_n1b")
        mem = mem + mha(h, h, m_src, t + "_sa")
        h = layer_norm(mem, t + "_n2w", t + "_n2b")
        mem = mem + ffn(h, t)
    mem = layer_norm(mem, "enc_norm_w", "enc_norm_b")

    # ---------------- decoder ----------------
    x = embed(tgt_ids_ref, T, "tgt_emb", pe_tgt_ref)         # (T, 128)
    for i in range(N_DEC):
        t = f"dec{i}"
        h = layer_norm(x, t + "_n1w", t + "_n1b")
        x = x + mha(h, h, m_tgt, t + "_sa")
        h = layer_norm(x, t + "_n2w", t + "_n2b")
        x = x + mha(h, mem, m_mem, t + "_ca")
        h = layer_norm(x, t + "_n3w", t + "_n3b")
        x = x + ffn(h, t)
    x = layer_norm(x, "dec_norm_w", "dec_norm_b")

    # ---------------- generator (lane-dense, 128-wide padded vocab) ----------------
    out_ref[0] = matmul(x, mat("gen_w")) + vec("gen_b")


# ============================ wrapper / glue ============================

def seq2seq_forward(model, src, trg, src_mask, tgt_mask,
                    src_padding_mask, tgt_padding_mask, memory_key_padding_mask):
    S, B = src.shape
    T = trg.shape[0]

    # batch-major token ids, (B, L, 1) so the in-kernel one-hot compares along lanes
    src_ids = src.T.reshape(B, S, 1).astype(jnp.int32)
    tgt_ids = trg.T.reshape(B, T, 1).astype(jnp.int32)

    pe_src = model["pe"][:S]                                  # (S, 128)
    pe_tgt = model["pe"][:T]                                  # (T, 128)

    # pre-combined additive masks, clamped to a large finite negative (no -inf)
    src_kpm = src_padding_mask.astype(jnp.float32) * NEG_BIG          # (B, S)
    tgt_kpm = tgt_padding_mask.astype(jnp.float32) * NEG_BIG          # (B, T)
    mem_kpm = memory_key_padding_mask.astype(jnp.float32) * NEG_BIG   # (B, S)
    m_src = jnp.maximum(src_mask.astype(jnp.float32)[None] + src_kpm[:, None, :], NEG_BIG)
    m_tgt = jnp.maximum(tgt_mask.astype(jnp.float32)[None] + tgt_kpm[:, None, :], NEG_BIG)
    m_mem = jnp.maximum(mem_kpm[:, None, :], NEG_BIG)                 # (B, 1, S)

    w_slab, v_slab = model["w_slab"], model["v_slab"]
    nw, nv = w_slab.shape[0], v_slab.shape[0]

    out = pl.pallas_call(
        _fused_kernel,
        out_shape=jax.ShapeDtypeStruct((B, T, PAD), jnp.float32),
        grid=(B,),
        in_specs=[
            pl.BlockSpec((1, S, 1), lambda b: (b, 0, 0)),      # src token ids
            pl.BlockSpec((1, T, 1), lambda b: (b, 0, 0)),      # tgt token ids
            pl.BlockSpec((S, PAD), lambda b: (0, 0)),          # pos-enc (src)
            pl.BlockSpec((T, PAD), lambda b: (0, 0)),          # pos-enc (tgt)
            pl.BlockSpec((1, S, S), lambda b: (b, 0, 0)),      # combined src mask
            pl.BlockSpec((1, T, T), lambda b: (b, 0, 0)),      # combined tgt mask
            pl.BlockSpec((1, 1, S), lambda b: (b, 0, 0)),      # combined mem mask
            pl.BlockSpec((nw, PAD, PAD), lambda b: (0, 0, 0)),  # packed weight slab
            pl.BlockSpec((nv, PAD), lambda b: (0, 0)),          # packed bias/LN slab
        ],
        out_specs=pl.BlockSpec((1, T, PAD), lambda b: (b, 0, 0)),
        compiler_params=pltpu.CompilerParams(
            dimension_semantics=("parallel",)),                 # both TCs on v7x
    )(src_ids, tgt_ids, pe_src, pe_tgt, m_src, m_tgt, m_mem, w_slab, v_slab)

    # (B, T, 128) -> (T, B, TGT_VOCAB)
    return out[:, :, :TGT_VOCAB].transpose(1, 0, 2)


# ============================ params ============================

def make_pos_embedding(emb_size, maxlen):
    den = jnp.exp(-jnp.arange(0, emb_size, 2, dtype=jnp.float32)
                  * math.log(10000.0) / emb_size)
    pos = jnp.arange(0, maxlen, dtype=jnp.float32).reshape(maxlen, 1)
    pe = jnp.zeros((maxlen, emb_size), jnp.float32)
    pe = pe.at[:, 0::2].set(jnp.sin(pos * den))
    pe = pe.at[:, 1::2].set(jnp.cos(pos * den))
    return pe[:, None, :]            # (maxlen, 1, emb), broadcast over batch


def init_params(key):
    """Raw parameters in PyTorch layout (weights (out, in), 1-D biases)."""
    keys = iter(jax.random.split(key, 256))

    def nrm(shape, scale=0.02):
        return scale * jax.random.normal(next(keys), shape, jnp.float32)

    def mha_params():
        return dict(in_proj_w=nrm((3 * EMB, EMB)), in_proj_b=nrm((3 * EMB,)),
                    out_proj_w=nrm((EMB, EMB)), out_proj_b=nrm((EMB,)))

    def enc_layer_params():
        return dict(self_attn=mha_params(),
                    lin1_w=nrm((FFN, EMB)), lin1_b=nrm((FFN,)),
                    lin2_w=nrm((EMB, FFN)), lin2_b=nrm((EMB,)),
                    norm1_w=jnp.ones((EMB,)), norm1_b=jnp.zeros((EMB,)),
                    norm2_w=jnp.ones((EMB,)), norm2_b=jnp.zeros((EMB,)))

    def dec_layer_params():
        d = enc_layer_params()
        d["cross_attn"] = mha_params()
        d["norm3_w"] = jnp.ones((EMB,))
        d["norm3_b"] = jnp.zeros((EMB,))
        return d

    return dict(
        src_emb=nrm((SRC_VOCAB, EMB), 1.0),
        tgt_emb=nrm((TGT_VOCAB, EMB), 1.0),
        gen_w=nrm((TGT_VOCAB, EMB)),
        gen_b=nrm((TGT_VOCAB,)),
        enc_layers=[enc_layer_params() for _ in range(N_ENC)],
        dec_layers=[dec_layer_params() for _ in range(N_DEC)],
        enc_norm_w=jnp.ones((EMB,)), enc_norm_b=jnp.zeros((EMB,)),
        dec_norm_w=jnp.ones((EMB,)), dec_norm_b=jnp.zeros((EMB,)),
        pos_embedding=make_pos_embedding(EMB, MAXLEN),
    )


def _pad2(a):
    out = jnp.zeros((PAD, PAD), jnp.float32)
    return out.at[:a.shape[0], :a.shape[1]].set(a.astype(jnp.float32))


def _pad1(a):
    out = jnp.zeros((PAD,), jnp.float32)
    return out.at[:a.shape[0]].set(a.astype(jnp.float32))


def prepare_model(raw):
    """One-time transform of PyTorch-layout weights into the fused-kernel layout:
    pre-transposed (in, out) 128x128 zero-padded matrices packed into one slab,
    all biases/LN rows packed into one (N, 128) slab, 1/sqrt(head_dim) folded into
    the Q projection, *sqrt(EMB) folded into the embedding tables, and a lane-dense
    padded positional-encoding table."""
    scale = 1.0 / math.sqrt(HEAD_DIM)
    wd, vd = {}, {}

    wd["src_emb"] = _pad2(raw["src_emb"] * math.sqrt(EMB))
    wd["tgt_emb"] = _pad2(raw["tgt_emb"] * math.sqrt(EMB))
    wd["gen_w"] = _pad2(raw["gen_w"].T)
    vd["gen_b"] = _pad1(raw["gen_b"])
    vd["enc_norm_w"] = _pad1(raw["enc_norm_w"]); vd["enc_norm_b"] = _pad1(raw["enc_norm_b"])
    vd["dec_norm_w"] = _pad1(raw["dec_norm_w"]); vd["dec_norm_b"] = _pad1(raw["dec_norm_b"])

    def add_mha(tag, p):
        wq, wk, wv = jnp.split(p["in_proj_w"], 3, axis=0)     # each (E, E), (out, in)
        bq, bk, bv = jnp.split(p["in_proj_b"], 3, axis=0)
        wd[f"{tag}_wq"] = _pad2((wq * scale).T)               # fold attention scale
        wd[f"{tag}_wk"] = _pad2(wk.T)
        wd[f"{tag}_wv"] = _pad2(wv.T)
        wd[f"{tag}_wo"] = _pad2(p["out_proj_w"].T)
        vd[f"{tag}_bq"] = _pad1(bq * scale)
        vd[f"{tag}_bk"] = _pad1(bk)
        vd[f"{tag}_bv"] = _pad1(bv)
        vd[f"{tag}_bo"] = _pad1(p["out_proj_b"])

    def add_common(tag, p):
        wd[f"{tag}_lin1"] = _pad2(p["lin1_w"].T)
        wd[f"{tag}_lin2"] = _pad2(p["lin2_w"].T)
        vd[f"{tag}_lin1_b"] = _pad1(p["lin1_b"])
        vd[f"{tag}_lin2_b"] = _pad1(p["lin2_b"])
        vd[f"{tag}_n1w"] = _pad1(p["norm1_w"]); vd[f"{tag}_n1b"] = _pad1(p["norm1_b"])
        vd[f"{tag}_n2w"] = _pad1(p["norm2_w"]); vd[f"{tag}_n2b"] = _pad1(p["norm2_b"])

    for i, p in enumerate(raw["enc_layers"]):
        t = f"enc{i}"
        add_mha(t + "_sa", p["self_attn"])
        add_common(t, p)
    for i, p in enumerate(raw["dec_layers"]):
        t = f"dec{i}"
        add_mha(t + "_sa", p["self_attn"])
        add_mha(t + "_ca", p["cross_attn"])
        add_common(t, p)
        vd[f"{t}_n3w"] = _pad1(p["norm3_w"]); vd[f"{t}_n3b"] = _pad1(p["norm3_b"])

    w_slab = jnp.stack([wd[n] for n in _W_NAMES], axis=0)     # (N_MATS, 128, 128)
    v_slab = jnp.stack([vd[n] for n in _V_NAMES], axis=0)     # (N_VECS, 128)

    pe = jnp.zeros((MAXLEN, PAD), jnp.float32).at[:, :EMB].set(raw["pos_embedding"][:, 0, :])
    return dict(w_slab=w_slab, v_slab=v_slab, pe=pe)


# ============================ pure-JAX reference (no Pallas) ============================

def _reference_forward(raw, src, trg, src_mask, tgt_mask, src_pad, tgt_pad, mem_pad):
    S, B = src.shape
    T = trg.shape[0]
    pe = raw["pos_embedding"]

    def ln(x, w, b):
        mu = x.mean(-1, keepdims=True)
        v = ((x - mu) ** 2).mean(-1, keepdims=True)
        return (x - mu) * jax.lax.rsqrt(v + LN_EPS) * w + b

    def mha(q_in, k_in, v_in, p, attn_mask, kpm):
        L, N, E = q_in.shape
        Skv = k_in.shape[0]
        wq, wk, wv = jnp.split(p["in_proj_w"], 3, axis=0)
        bq, bk, bv = jnp.split(p["in_proj_b"], 3, axis=0)
        q = q_in @ wq.T + bq
        k = k_in @ wk.T + bk
        v = v_in @ wv.T + bv
        qh = q.reshape(L, N, NHEAD, HEAD_DIM).transpose(1, 2, 0, 3)
        kh = k.reshape(Skv, N, NHEAD, HEAD_DIM).transpose(1, 2, 0, 3)
        vh = v.reshape(Skv, N, NHEAD, HEAD_DIM).transpose(1, 2, 0, 3)
        s = jnp.einsum('nhld,nhsd->nhls', qh, kh) / math.sqrt(HEAD_DIM)
        if attn_mask is not None:
            s = s + attn_mask[None, None]
        if kpm is not None:
            s = s + (kpm.astype(jnp.float32) * NEG_BIG)[:, None, None, :]
        pw = jax.nn.softmax(s, axis=-1)
        o = jnp.einsum('nhls,nhsd->nhld', pw, vh)
        o = o.transpose(2, 0, 1, 3).reshape(L, N, E)
        return o @ p["out_proj_w"].T + p["out_proj_b"]

    def ffn(x, p):
        h = jnp.maximum(x @ p["lin1_w"].T + p["lin1_b"], 0.0)
        return h @ p["lin2_w"].T + p["lin2_b"]

    src_emb = jnp.take(raw["src_emb"], src, axis=0) * math.sqrt(EMB) + pe[:S]
    tgt_emb = jnp.take(raw["tgt_emb"], trg, axis=0) * math.sqrt(EMB) + pe[:T]

    mem = src_emb
    for p in raw["enc_layers"]:
        h = ln(mem, p["norm1_w"], p["norm1_b"])
        mem = mem + mha(h, h, h, p["self_attn"], src_mask, src_pad)
        h = ln(mem, p["norm2_w"], p["norm2_b"])
        mem = mem + ffn(h, p)
    mem = ln(mem, raw["enc_norm_w"], raw["enc_norm_b"])

    x = tgt_emb
    for p in raw["dec_layers"]:
        h = ln(x, p["norm1_w"], p["norm1_b"])
        x = x + mha(h, h, h, p["self_attn"], tgt_mask, tgt_pad)
        h = ln(x, p["norm2_w"], p["norm2_b"])
        x = x + mha(h, mem, mem, p["cross_attn"], None, mem_pad)
        h = ln(x, p["norm3_w"], p["norm3_b"])
        x = x + ffn(h, p)
    x = ln(x, raw["dec_norm_w"], raw["dec_norm_b"])
    return x @ raw["gen_w"].T + raw["gen_b"]


# ============================ main ============================

if __name__ == "__main__":
    key = jax.random.PRNGKey(0)
    kp, ks, kt = jax.random.split(key, 3)

    raw = init_params(kp)
    model = prepare_model(raw)

    S_LEN, T_LEN, BATCH = 10, 8, 2
    src = jax.random.randint(ks, (S_LEN, BATCH), 0, SRC_VOCAB, dtype=jnp.int32)
    trg = jax.random.randint(kt, (T_LEN, BATCH), 0, TGT_VOCAB, dtype=jnp.int32)

    src_mask = jnp.zeros((S_LEN, S_LEN), jnp.float32)
    causal = jnp.triu(jnp.ones((T_LEN, T_LEN), bool), k=1)
    tgt_mask = jnp.where(causal, -jnp.inf, 0.0).astype(jnp.float32)
    src_padding_mask = jnp.zeros((BATCH, S_LEN), bool)
    tgt_padding_mask = jnp.zeros((BATCH, T_LEN), bool)
    memory_key_padding_mask = jnp.zeros((BATCH, S_LEN), bool)

    fwd = jax.jit(seq2seq_forward)
    logits = fwd(model, src, trg, src_mask, tgt_mask,
                 src_padding_mask, tgt_padding_mask, memory_key_padding_mask)
    logits = jax.block_until_ready(logits)

    assert logits.shape == (T_LEN, BATCH, TGT_VOCAB)
    assert bool(jnp.all(jnp.isfinite(logits)))

    # cross-check the fused Pallas kernel against a pure-JAX reference
    ref = _reference_forward(raw, src, trg, src_mask, tgt_mask,
                             src_padding_mask, tgt_padding_mask,
                             memory_key_padding_mask)
    assert bool(jnp.allclose(logits, ref, atol=5e-3, rtol=5e-3))

    print("KERNEL_OK")
</pallas_src>

<mosaic_0001>
module attributes {stable_mosaic.version = 11 : i64} {
  func.func @_fused_kernel(%arg0: i32, %arg1: memref<1x10x1xi32, #tpu.memory_space<vmem>>, %arg2: memref<1x8x1xi32, #tpu.memory_space<vmem>>, %arg3: memref<10x128xf32, #tpu.memory_space<vmem>>, %arg4: memref<8x128xf32, #tpu.memory_space<vmem>>, %arg5: memref<1x10x10xf32, #tpu.memory_space<vmem>>, %arg6: memref<1x8x8xf32, #tpu.memory_space<vmem>>, %arg7: memref<1x1x10xf32, #tpu.memory_space<vmem>>, %arg8: memref<35x128x128xf32, #tpu.memory_space<vmem>>, %arg9: memref<57x128xf32, #tpu.memory_space<vmem>>, %arg10: memref<1x8x128xf32, #tpu.memory_space<vmem>>) attributes {dimension_semantics = [#tpu.dimension_semantics<parallel>], iteration_bounds = array<i64: 2>, scalar_prefetch = 0 : i64, scratch_operands = 0 : i64, tpu.core_type = #tpu.core_type<tc>, window_params = [{transform_indices = @transform_0, window_bounds = array<i64: 1, 10, 1>}, {transform_indices = @transform_1, window_bounds = array<i64: 1, 8, 1>}, {pipeline_mode = #tpu.pipeline_mode<synchronous>, transform_indices = @transform_2, window_bounds = array<i64: 10, 128>}, {pipeline_mode = #tpu.pipeline_mode<synchronous>, transform_indices = @transform_3, window_bounds = array<i64: 8, 128>}, {transform_indices = @transform_4, window_bounds = array<i64: 1, 10, 10>}, {transform_indices = @transform_5, window_bounds = array<i64: 1, 8, 8>}, {transform_indices = @transform_6, window_bounds = array<i64: 1, 1, 10>}, {pipeline_mode = #tpu.pipeline_mode<synchronous>, transform_indices = @transform_7, window_bounds = array<i64: 35, 128, 128>}, {pipeline_mode = #tpu.pipeline_mode<synchronous>, transform_indices = @transform_8, window_bounds = array<i64: 57, 128>}, {transform_indices = @transform_9, window_bounds = array<i64: 1, 8, 128>}]} {
    %0 = tpu.iota {dimensions = array<i32: 1>} : vector<1x128xi32>
    %c0_i32 = arith.constant 0 : i32
    %1 = vector.broadcast %c0_i32 : i32 to vector<1x128xi32>
    %2 = arith.cmpi sge, %0, %1 : vector<1x128xi32>
    %c8_i32 = arith.constant 8 : i32
    %3 = vector.broadcast %c8_i32 : i32 to vector<1x128xi32>
    %4 = arith.cmpi slt, %0, %3 : vector<1x128xi32>
    %5 = arith.andi %2, %4 : vector<1x128xi1>
    %6 = arith.extui %5 : vector<1x128xi1> to vector<1x128xi32>
    %7 = arith.sitofp %6 : vector<1x128xi32> to vector<1x128xf32>
    %c8_i32_0 = arith.constant 8 : i32
    %8 = vector.broadcast %c8_i32_0 : i32 to vector<1x128xi32>
    %9 = arith.cmpi sge, %0, %8 : vector<1x128xi32>
    %c16_i32 = arith.constant 16 : i32
    %10 = vector.broadcast %c16_i32 : i32 to vector<1x128xi32>
    %11 = arith.cmpi slt, %0, %10 : vector<1x128xi32>
    %12 = arith.andi %9, %11 : vector<1x128xi1>
    %13 = arith.extui %12 : vector<1x128xi1> to vector<1x128xi32>
    %14 = arith.sitofp %13 : vector<1x128xi32> to vector<1x128xf32>
    %c16_i32_1 = arith.constant 16 : i32
    %15 = vector.broadcast %c16_i32_1 : i32 to vector<1x128xi32>
    %16 = arith.cmpi sge, %0, %15 : vector<1x128xi32>
    %c24_i32 = arith.constant 24 : i32
    %17 = vector.broadcast %c24_i32 : i32 to vector<1x128xi32>
    %18 = arith.cmpi slt, %0, %17 : vector<1x128xi32>
    %19 = arith.andi %16, %18 : vector<1x128xi1>
    %20 = arith.extui %19 : vector<1x128xi1> to vector<1x128xi32>
    %21 = arith.sitofp %20 : vector<1x128xi32> to vector<1x128xf32>
    %c24_i32_2 = arith.constant 24 : i32
    %22 = vector.broadcast %c24_i32_2 : i32 to vector<1x128xi32>
    %23 = arith.cmpi sge, %0, %22 : vector<1x128xi32>
    %c32_i32 = arith.constant 32 : i32
    %24 = vector.broadcast %c32_i32 : i32 to vector<1x128xi32>
    %25 = arith.cmpi slt, %0, %24 : vector<1x128xi32>
    %26 = arith.andi %23, %25 : vector<1x128xi1>
    %27 = arith.extui %26 : vector<1x128xi1> to vector<1x128xi32>
    %28 = arith.sitofp %27 : vector<1x128xi32> to vector<1x128xf32>
    %29 = vector.shape_cast %7 : vector<1x128xf32> to vector<1x1x128xf32>
    %30 = vector.shape_cast %14 : vector<1x128xf32> to vector<1x1x128xf32>
    %31 = vector.shape_cast %21 : vector<1x128xf32> to vector<1x1x128xf32>
    %32 = vector.shape_cast %28 : vector<1x128xf32> to vector<1x1x128xf32>
    %33 = tpu.concatenate %29, %30, %31, %32 in 0 : vector<1x1x128xf32>, vector<1x1x128xf32>, vector<1x1x128xf32>, vector<1x1x128xf32> -> vector<4x1x128xf32>
    %c0 = arith.constant 0 : index
    %c0_3 = arith.constant 0 : index
    %c0_4 = arith.constant 0 : index
    %34 = vector.load %arg5[%c0, %c0_3, %c0_4] : memref<1x10x10xf32, #tpu.memory_space<vmem>>, vector<1x10x10xf32>
    %35 = vector.shape_cast %34 : vector<1x10x10xf32> to vector<10x10xf32>
    %c0_5 = arith.constant 0 : index
    %c0_6 = arith.constant 0 : index
    %c0_7 = arith.constant 0 : index
    %36 = vector.load %arg6[%c0_5, %c0_6, %c0_7] : memref<1x8x8xf32, #tpu.memory_space<vmem>>, vector<1x8x8xf32>
    %37 = vector.shape_cast %36 : vector<1x8x8xf32> to vector<8x8xf32>
    %c0_8 = arith.constant 0 : index
    %c0_9 = arith.constant 0 : index
    %c0_10 = arith.constant 0 : index
    %38 = vector.load %arg7[%c0_8, %c0_9, %c0_10] : memref<1x1x10xf32, #tpu.memory_space<vmem>>, vector<1x1x10xf32>
    %39 = vector.shape_cast %38 : vector<1x1x10xf32> to vector<1x10xf32>
    %c0_11 = arith.constant 0 : index
    %c0_12 = arith.constant 0 : index
    %c0_13 = arith.constant 0 : index
    %40 = vector.load %arg1[%c0_11, %c0_12, %c0_13] : memref<1x10x1xi32, #tpu.memory_space<vmem>>, vector<1x10x1xi32>
    %41 = vector.shape_cast %40 : vector<1x10x1xi32> to vector<10x1xi32>
    %42 = tpu.iota {dimensions = array<i32: 1>} : vector<10x128xi32>
    %43 = vector.broadcast %41 : vector<10x1xi32> to vector<10x128xi32>
    %44 = arith.cmpi eq, %43, %42 : vector<10x128xi32>
    %45 = arith.extui %44 : vector<10x128xi1> to vector<10x128xi32>
    %46 = arith.sitofp %45 : vector<10x128xi32> to vector<10x128xf32>
    %c0_14 = arith.constant 0 : index
    %c0_15 = arith.constant 0 : index
    %c0_16 = arith.constant 0 : index
    %47 = vector.load %arg8[%c0_14, %c0_15, %c0_16] : memref<35x128x128xf32, #tpu.memory_space<vmem>>, vector<1x128x128xf32>
    %48 = vector.shape_cast %47 : vector<1x128x128xf32> to vector<128x128xf32>
    %cst = arith.constant dense<0.000000e+00> : vector<10x128xf32>
    %49 = tpu.matmul %46, %48, %cst {dimension_numbers = #tpu.dot_dimension_numbers<[1], [0], [0], [1], [0, 0, 1, 1], [], []>} : vector<10x128xf32>, vector<128x128xf32>, vector<10x128xf32> -> vector<10x128xf32>
    %c0_17 = arith.constant 0 : index
    %c0_18 = arith.constant 0 : index
    %50 = vector.load %arg3[%c0_17, %c0_18] : memref<10x128xf32, #tpu.memory_space<vmem>>, vector<10x128xf32>
    %51 = arith.addf %49, %50 : vector<10x128xf32>
    %cst_19 = arith.constant dense<0.000000e+00> : vector<10xf32>
    %52 = vector.multi_reduction <add>, %51, %cst_19 [1] : vector<10x128xf32> to vector<10xf32>
    %53 = vector.shape_cast %52 : vector<10xf32> to vector<10x1xf32>
    %54 = arith.mulf %51, %51 : vector<10x128xf32>
    %cst_20 = arith.constant dense<0.000000e+00> : vector<10xf32>
    %55 = vector.multi_reduction <add>, %54, %cst_20 [1] : vector<10x128xf32> to vector<10xf32>
    %56 = vector.shape_cast %55 : vector<10xf32> to vector<10x1xf32>
    %cst_21 = arith.constant 3.125000e-02 : f32
    %57 = vector.broadcast %cst_21 : f32 to vector<10x1xf32>
    %58 = arith.mulf %53, %57 : vector<10x1xf32>
    %cst_22 = arith.constant 3.125000e-02 : f32
    %59 = vector.broadcast %cst_22 : f32 to vector<10x1xf32>
    %60 = arith.mulf %56, %59 : vector<10x1xf32>
    %61 = arith.mulf %58, %58 : vector<10x1xf32>
    %62 = arith.subf %60, %61 : vector<10x1xf32>
    %63 = vector.broadcast %58 : vector<10x1xf32> to vector<10x128xf32>
    %64 = arith.subf %51, %63 : vector<10x128xf32>
    %cst_23 = arith.constant 9.99999974E-6 : f32
    %65 = vector.broadcast %cst_23 : f32 to vector<10x1xf32>
    %66 = arith.addf %62, %65 : vector<10x1xf32>
    %67 = math.rsqrt %66 : vector<10x1xf32>
    %68 = vector.broadcast %67 : vector<10x1xf32> to vector<10x128xf32>
    %69 = arith.mulf %64, %68 : vector<10x128xf32>
    %c11 = arith.constant 11 : index
    %c0_24 = arith.constant 0 : index
    %70 = vector.load %arg9[%c11, %c0_24] : memref<57x128xf32, #tpu.memory_space<vmem>>, vector<1x128xf32>
    %71 = vector.broadcast %70 : vector<1x128xf32> to vector<10x128xf32>
    %72 = arith.mulf %69, %71 : vector<10x128xf32>
    %c12 = arith.constant 12 : index
    %c0_25 = arith.constant 0 : index
    %73 = vector.load %arg9[%c12, %c0_25] : memref<57x128xf32, #tpu.memory_space<vmem>>, vector<1x128xf32>
    %74 = vector.broadcast %73 : vector<1x128xf32> to vector<10x128xf32>
    %75 = arith.addf %72, %74 : vector<10x128xf32>
    %c3 = arith.constant 3 : index
    %c0_26 = arith.constant 0 : index
    %c0_27 = arith.constant 0 : index
    %76 = vector.load %arg8[%c3, %c0_26, %c0_27] : memref<35x128x128xf32, #tpu.memory_space<vmem>>, vector<1x128x128xf32>
    %77 = vector.shape_cast %76 : vector<1x128x128xf32> to vector<128x128xf32>
    %cst_28 = arith.constant dense<0.000000e+00> : vector<10x128xf32>
    %78 = tpu.matmul %75, %77, %cst_28 {dimension_numbers = #tpu.dot_dimension_numbers<[1], [0], [0], [1], [0, 0, 1, 1], [], []>} : vector<10x128xf32>, vector<128x128xf32>, vector<10x128xf32> -> vector<10x128xf32>
    %c5 = arith.constant 5 : index
    %c0_29 = arith.constant 0 : index
    %79 = vector.load %arg9[%c5, %c0_29] : memref<57x128xf32, #tpu.memory_space<vmem>>, vector<1x128xf32>
    %80 = vector.broadcast %79 : vector<1x128xf32> to vector<10x128xf32>
    %81 = arith.addf %78, %80 : vector<10x128xf32>
    %c4 = arith.constant 4 : index
    %c0_30 = arith.constant 0 : index
    %c0_31 = arith.constant 0 : index
    %82 = vector.load %arg8[%c4, %c0_30, %c0_31] : memref<35x128x128xf32, #tpu.memory_space<vmem>>, vector<1x128x128xf32>
    %83 = vector.shape_cast %82 : vector<1x128x128xf32> to vector<128x128xf32>
    %cst_32 = arith.constant dense<0.000000e+00> : vector<10x128xf32>
    %84 = tpu.matmul %75, %83, %cst_32 {dimension_numbers = #tpu.dot_dimension_numbers<[1], [0], [0], [1], [0, 0, 1, 1], [], []>} : vector<10x128xf32>, vector<128x128xf32>, vector<10x128xf32> -> vector<10x128xf32>
    %c6 = arith.constant 6 : index
    %c0_33 = arith.constant 0 : index
    %85 = vector.load %arg9[%c6, %c0_33] : memref<57x128xf32, #tpu.memory_space<vmem>>, vector<1x128xf32>
    %86 = vector.broadcast %85 : vector<1x128xf32> to vector<10x128xf32>
    %87 = arith.addf %84, %86 : vector<10x128xf32>
    %c5_34 = arith.constant 5 : index
    %c0_35 = arith.constant 0 : index
    %c0_36 = arith.constant 0 : index
    %88 = vector.load %arg8[%c5_34, %c0_35, %c0_36] : memref<35x128x128xf32, #tpu.memory_space<vmem>>, vector<1x128x128xf32>
    %89 = vector.shape_cast %88 : vector<1x128x128xf32> to vector<128x128xf32>
    %cst_37 = arith.constant dense<0.000000e+00> : vector<10x128xf32>
    %90 = tpu.matmul %75, %89, %cst_37 {dimension_numbers = #tpu.dot_dimension_numbers<[1], [0], [0], [1], [0, 0, 1, 1], [], []>} : vector<10x128xf32>, vector<128x128xf32>, vector<10x128xf32> -> vector<10x128xf32>
    %c7 = arith.constant 7 : index
    %c0_38 = arith.constant 0 : index
    %91 = vector.load %arg9[%c7, %c0_38] : memref<57x128xf32, #tpu.memory_space<vmem>>, vector<1x128xf32>
    %92 = vector.broadcast %91 : vector<1x128xf32> to vector<10x128xf32>
    %93 = arith.addf %90, %92 : vector<10x128xf32>
    %94 = vector.shape_cast %87 : vector<10x128xf32> to vector<1x10x128xf32>
    %95 = vector.broadcast %94 : vector<1x10x128xf32> to vector<4x10x128xf32>
    %96 = vector.broadcast %33 : vector<4x1x128xf32> to vector<4x10x128xf32>
    %97 = arith.mulf %95, %96 : vector<4x10x128xf32>
    %98 = vector.shape_cast %93 : vector<10x128xf32> to vector<1x10x128xf32>
    %99 = vector.broadcast %98 : vector<1x10x128xf32> to vector<4x10x128xf32>
    %100 = vector.broadcast %33 : vector<4x1x128xf32> to vector<4x10x128xf32>
    %101 = arith.mulf %99, %100 : vector<4x10x128xf32>
    %102 = vector.shape_cast %81 : vector<10x128xf32> to vector<1x10x128xf32>
    %103 = vector.shape_cast %102 : vector<1x10x128xf32> to vector<1x10x128xf32>
    %104 = vector.broadcast %103 : vector<1x10x128xf32> to vector<4x10x128xf32>
    "tpu.trace_start"() <{level = 10 : i32, message = "hqd,hkd->hqk"}> : () -> ()
    %cst_39 = arith.constant dense<0.000000e+00> : vector<4x10x10xf32>
    %105 = tpu.matmul %104, %97, %cst_39 {dimension_numbers = #tpu.dot_dimension_numbers<[2], [2], [1], [1], [0, 0, 0, 1, 1, 1], [0], [0]>} : vector<4x10x128xf32>, vector<4x10x128xf32>, vector<4x10x10xf32> -> vector<4x10x10xf32>
    "tpu.trace_stop"() : () -> ()
    %106 = vector.shape_cast %35 : vector<10x10xf32> to vector<1x10x10xf32>
    %107 = vector.broadcast %106 : vector<1x10x10xf32> to vector<4x10x10xf32>
    %108 = arith.addf %105, %107 : vector<4x10x10xf32>
    %109 = math.exp %108 : vector<4x10x10xf32>
    %cst_40 = arith.constant dense<0.000000e+00> : vector<4x10xf32>
    %110 = vector.multi_reduction <add>, %109, %cst_40 [2] : vector<4x10x10xf32> to vector<4x10xf32>
    %111 = vector.shape_cast %110 : vector<4x10xf32> to vector<4x10x1xf32>
    %112 = tpu.reciprocal %111 {approx = true} : vector<4x10x1xf32> -> vector<4x10x1xf32>
    %113 = vector.broadcast %112 : vector<4x10x1xf32> to vector<4x10x10xf32>
    %114 = arith.mulf %109, %113 : vector<4x10x10xf32>
    "tpu.trace_start"() <{level = 10 : i32, message = "hqk,hkd->hqd"}> : () -> ()
    %cst_41 = arith.constant dense<0.000000e+00> : vector<4x10x128xf32>
    %115 = tpu.matmul %114, %101, %cst_41 {dimension_numbers = #tpu.dot_dimension_numbers<[2], [1], [1], [2], [0, 0, 0, 1, 1, 2], [0], [0]>} : vector<4x10x10xf32>, vector<4x10x128xf32>, vector<4x10x128xf32> -> vector<4x10x128xf32>
    "tpu.trace_stop"() : () -> ()
    %cst_42 = arith.constant dense<0.000000e+00> : vector<10x128xf32>
    %116 = vector.multi_reduction <add>, %115, %cst_42 [0] : vector<4x10x128xf32> to vector<10x128xf32>
    %c6_43 = arith.constant 6 : index
    %c0_44 = arith.constant 0 : index
    %c0_45 = arith.constant 0 : index
    %117 = vector.load %arg8[%c6_43, %c0_44, %c0_45] : memref<35x128x128xf32, #tpu.memory_space<vmem>>, vector<1x128x128xf32>
    %118 = vector.shape_cast %117 : vector<1x128x128xf32> to vector<128x128xf32>
    %cst_46 = arith.constant dense<0.000000e+00> : vector<10x128xf32>
    %119 = tpu.matmul %116, %118, %cst_46 {dimension_numbers = #tpu.dot_dimension_numbers<[1], [0], [0], [1], [0, 0, 1, 1], [], []>} : vector<10x128xf32>, vector<128x128xf32>, vector<10x128xf32> -> vector<10x128xf32>
    %c8 = arith.constant 8 : index
    %c0_47 = arith.constant 0 : index
    %120 = vector.load %arg9[%c8, %c0_47] : memref<57x128xf32, #tpu.memory_space<vmem>>, vector<1x128xf32>
    %121 = vector.broadcast %120 : vector<1x128xf32> to vector<10x128xf32>
    %122 = arith.addf %119, %121 : vector<10x128xf32>
    %123 = arith.addf %51, %122 : vector<10x128xf32>
    %cst_48 = arith.constant dense<0.000000e+00> : vector<10xf32>
    %124 = vector.multi_reduction <add>, %123, %cst_48 [1] : vector<10x128xf32> to vector<10xf32>
    %125 = vector.shape_cast %124 : vector<10xf32> to vector<10x1xf32>
    %126 = arith.mulf %123, %123 : vector<10x128xf32>
    %cst_49 = arith.constant dense<0.000000e+00> : vector<10xf32>
    %127 = vector.multi_reduction <add>, %126, %cst_49 [1] : vector<10x128xf32> to vector<10xf32>
    %128 = vector.shape_cast %127 : vector<10xf32> to vector<10x1xf32>
    %cst_50 = arith.constant 3.125000e-02 : f32
    %129 = vector.broadcast %cst_50 : f32 to vector<10x1xf32>
    %130 = arith.mulf %125, %129 : vector<10x1xf32>
    %cst_51 = arith.constant 3.125000e-02 : f32
    %131 = vector.broadcast %cst_51 : f32 to vector<10x1xf32>
    %132 = arith.mulf %128, %131 : vector<10x1xf32>
    %133 = arith.mulf %130, %130 : vector<10x1xf32>
    %134 = arith.subf %132, %133 : vector<10x1xf32>
    %135 = vector.broadcast %130 : vector<10x1xf32> to vector<10x128xf32>
    %136 = arith.subf %123, %135 : vector<10x128xf32>
    %cst_52 = arith.constant 9.99999974E-6 : f32
    %137 = vector.broadcast %cst_52 : f32 to vector<10x1xf32>
    %138 = arith.addf %134, %137 : vector<10x1xf32>
    %139 = math.rsqrt %138 : vector<10x1xf32>
    %140 = vector.broadcast %139 : vector<10x1xf32> to vector<10x128xf32>
    %141 = arith.mulf %136, %140 : vector<10x128xf32>
    %c13 = arith.constant 13 : index
    %c0_53 = arith.constant 0 : index
    %142 = vector.load %arg9[%c13, %c0_53] : memref<57x128xf32, #tpu.memory_space<vmem>>, vector<1x128xf32>
    %143 = vector.broadcast %142 : vector<1x128xf32> to vector<10x128xf32>
    %144 = arith.mulf %141, %143 : vector<10x128xf32>
    %c14 = arith.constant 14 : index
    %c0_54 = arith.constant 0 : index
    %145 = vector.load %arg9[%c14, %c0_54] : memref<57x128xf32, #tpu.memory_space<vmem>>, vector<1x128xf32>
    %146 = vector.broadcast %145 : vector<1x128xf32> to vector<10x128xf32>
    %147 = arith.addf %144, %146 : vector<10x128xf32>
    %c7_55 = arith.constant 7 : index
    %c0_56 = arith.constant 0 : index
    %c0_57 = arith.constant 0 : index
    %148 = vector.load %arg8[%c7_55, %c0_56, %c0_57] : memref<35x128x128xf32, #tpu.memory_space<vmem>>, vector<1x128x128xf32>
    %149 = vector.shape_cast %148 : vector<1x128x128xf32> to vector<128x128xf32>
    %cst_58 = arith.constant dense<0.000000e+00> : vector<10x128xf32>
    %150 = tpu.matmul %147, %149, %cst_58 {dimension_numbers = #tpu.dot_dimension_numbers<[1], [0], [0], [1], [0, 0, 1, 1], [], []>} : vector<10x128xf32>, vector<128x128xf32>, vector<10x128xf32> -> vector<10x128xf32>
    %c9 = arith.constant 9 : index
    %c0_59 = arith.constant 0 : index
    %151 = vector.load %arg9[%c9, %c0_59] : memref<57x128xf32, #tpu.memory_space<vmem>>, vector<1x128xf32>
    %152 = vector.broadcast %151 : vector<1x128xf32> to vector<10x128xf32>
    %153 = arith.addf %150, %152 : vector<10x128xf32>
    %cst_60 = arith.constant 0.000000e+00 : f32
    %154 = vector.broadcast %cst_60 : f32 to vector<10x128xf32>
    %155 = arith.maximumf %153, %154 : vector<10x128xf32>
    %c8_61 = arith.constant 8 : index
    %c0_62 = arith.constant 0 : index
    %c0_63 = arith.constant 0 : index
    %156 = vector.load %arg8[%c8_61, %c0_62, %c0_63] : memref<35x128x128xf32, #tpu.memory_space<vmem>>, vector<1x128x128xf32>
    %157 = vector.shape_cast %156 : vector<1x128x128xf32> to vector<128x128xf32>
    %cst_64 = arith.constant dense<0.000000e+00> : vector<10x128xf32>
    %158 = tpu.matmul %155, %157, %cst_64 {dimension_numbers = #tpu.dot_dimension_numbers<[1], [0], [0], [1], [0, 0, 1, 1], [], []>} : vector<10x128xf32>, vector<128x128xf32>, vector<10x128xf32> -> vector<10x128xf32>
    %c10 = arith.constant 10 : index
    %c0_65 = arith.constant 0 : index
    %159 = vector.load %arg9[%c10, %c0_65] : memref<57x128xf32, #tpu.memory_space<vmem>>, vector<1x128xf32>
    %160 = vector.broadcast %159 : vector<1x128xf32> to vector<10x128xf32>
    %161 = arith.addf %158, %160 : vector<10x128xf32>
    %162 = arith.addf %123, %161 : vector<10x128xf32>
    %cst_66 = arith.constant dense<0.000000e+00> : vector<10xf32>
    %163 = vector.multi_reduction <add>, %162, %cst_66 [1] : vector<10x128xf32> to vector<10xf32>
    %164 = vector.shape_cast %163 : vector<10xf32> to vector<10x1xf32>
    %165 = arith.mulf %162, %162 : vector<10x128xf32>
    %cst_67 = arith.constant dense<0.000000e+00> : vector<10xf32>
    %166 = vector.multi_reduction <add>, %165, %cst_67 [1] : vector<10x128xf32> to vector<10xf32>
    %167 = vector.shape_cast %166 : vector<10xf32> to vector<10x1xf32>
    %cst_68 = arith.constant 3.125000e-02 : f32
    %168 = vector.broadcast %cst_68 : f32 to vector<10x1xf32>
    %169 = arith.mulf %164, %168 : vector<10x1xf32>
    %cst_69 = arith.constant 3.125000e-02 : f32
    %170 = vector.broadcast %cst_69 : f32 to vector<10x1xf32>
    %171 = arith.mulf %167, %170 : vector<10x1xf32>
    %172 = arith.mulf %169, %169 : vector<10x1xf32>
    %173 = arith.subf %171, %172 : vector<10x1xf32>
    %174 = vector.broadcast %169 : vector<10x1xf32> to vector<10x128xf32>
    %175 = arith.subf %162, %174 : vector<10x128xf32>
    %cst_70 = arith.constant 9.99999974E-6 : f32
    %176 = vector.broadcast %cst_70 : f32 to vector<10x1xf32>
    %177 = arith.addf %173, %176 : vector<10x1xf32>
    %178 = math.rsqrt %177 : vector<10x1xf32>
    %179 = vector.broadcast %178 : vector<10x1xf32> to vector<10x128xf32>
    %180 = arith.mulf %175, %179 : vector<10x128xf32>
    %c21 = arith.constant 21 : index
    %c0_71 = arith.constant 0 : index
    %181 = vector.load %arg9[%c21, %c0_71] : memref<57x128xf32, #tpu.memory_space<vmem>>, vector<1x128xf32>
    %182 = vector.broadcast %181 : vector<1x128xf32> to vector<10x128xf32>
    %183 = arith.mulf %180, %182 : vector<10x128xf32>
    %c22 = arith.constant 22 : index
    %c0_72 = arith.constant 0 : index
    %184 = vector.load %arg9[%c22, %c0_72] : memref<57x128xf32, #tpu.memory_space<vmem>>, vector<1x128xf32>
    %185 = vector.broadcast %184 : vector<1x128xf32> to vector<10x128xf32>
    %186 = arith.addf %183, %185 : vector<10x128xf32>
    %c9_73 = arith.constant 9 : index
    %c0_74 = arith.constant 0 : index
    %c0_75 = arith.constant 0 : index
    %187 = vector.load %arg8[%c9_73, %c0_74, %c0_75] : memref<35x128x128xf32, #tpu.memory_space<vmem>>, vector<1x128x128xf32>
    %188 = vector.shape_cast %187 : vector<1x128x128xf32> to vector<128x128xf32>
    %cst_76 = arith.constant dense<0.000000e+00> : vector<10x128xf32>
    %189 = tpu.matmul %186, %188, %cst_76 {dimension_numbers = #tpu.dot_dimension_numbers<[1], [0], [0], [1], [0, 0, 1, 1], [], []>} : vector<10x128xf32>, vector<128x128xf32>, vector<10x128xf32> -> vector<10x128xf32>
    %c15 = arith.constant 15 : index
    %c0_77 = arith.constant 0 : index
    %190 = vector.load %arg9[%c15, %c0_77] : memref<57x128xf32, #tpu.memory_space<vmem>>, vector<1x128xf32>
    %191 = vector.broadcast %190 : vector<1x128xf32> to vector<10x128xf32>
    %192 = arith.addf %189, %191 : vector<10x128xf32>
    %c10_78 = arith.constant 10 : index
    %c0_79 = arith.constant 0 : index
    %c0_80 = arith.constant 0 : index
    %193 = vector.load %arg8[%c10_78, %c0_79, %c0_80] : memref<35x128x128xf32, #tpu.memory_space<vmem>>, vector<1x128x128xf32>
    %194 = vector.shape_cast %193 : vector<1x128x128xf32> to vector<128x128xf32>
    %cst_81 = arith.constant dense<0.000000e+00> : vector<10x128xf32>
    %195 = tpu.matmul %186, %194, %cst_81 {dimension_numbers = #tpu.dot_dimension_numbers<[1], [0], [0], [1], [0, 0, 1, 1], [], []>} : vector<10x128xf32>, vector<128x128xf32>, vector<10x128xf32> -> vector<10x128xf32>
    %c16 = arith.constant 16 : index
    %c0_82 = arith.constant 0 : index
    %196 = vector.load %arg9[%c16, %c0_82] : memref<57x128xf32, #tpu.memory_space<vmem>>, vector<1x128xf32>
    %197 = vector.broadcast %196 : vector<1x128xf32> to vector<10x128xf32>
    %198 = arith.addf %195, %197 : vector<10x128xf32>
    %c11_83 = arith.constant 11 : index
    %c0_84 = arith.constant 0 : index
    %c0_85 = arith.constant 0 : index
    %199 = vector.load %arg8[%c11_83, %c0_84, %c0_85] : memref<35x128x128xf32, #tpu.memory_space<vmem>>, vector<1x128x128xf32>
    %200 = vector.shape_cast %199 : vector<1x128x128xf32> to vector<128x128xf32>
    %cst_86 = arith.constant dense<0.000000e+00> : vector<10x128xf32>
    %201 = tpu.matmul %186, %200, %cst_86 {dimension_numbers = #tpu.dot_dimension_numbers<[1], [0], [0], [1], [0, 0, 1, 1], [], []>} : vector<10x128xf32>, vector<128x128xf32>, vector<10x128xf32> -> vector<10x128xf32>
    %c17 = arith.constant 17 : index
    %c0_87 = arith.constant 0 : index
    %202 = vector.load %arg9[%c17, %c0_87] : memref<57x128xf32, #tpu.memory_space<vmem>>, vector<1x128xf32>
    %203 = vector.broadcast %202 : vector<1x128xf32> to vector<10x128xf32>
    %204 = arith.addf %201, %203 : vector<10x128xf32>
    %205 = vector.shape_cast %198 : vector<10x128xf32> to vector<1x10x128xf32>
    %206 = vector.broadcast %205 : vector<1x10x128xf32> to vector<4x10x128xf32>
    %207 = vector.broadcast %33 : vector<4x1x128xf32> to vector<4x10x128xf32>
    %208 = arith.mulf %206, %207 : vector<4x10x128xf32>
    %209 = vector.shape_cast %204 : vector<10x128xf32> to vector<1x10x128xf32>
    %210 = vector.broadcast %209 : vector<1x10x128xf32> to vector<4x10x128xf32>
    %211 = vector.broadcast %33 : vector<4x1x128xf32> to vector<4x10x128xf32>
    %212 = arith.mulf %210, %211 : vector<4x10x128xf32>
    %213 = vector.shape_cast %192 : vector<10x128xf32> to vector<1x10x128xf32>
    %214 = vector.shape_cast %213 : vector<1x10x128xf32> to vector<1x10x128xf32>
    %215 = vector.broadcast %214 : vector<1x10x128xf32> to vector<4x10x128xf32>
    "tpu.trace_start"() <{level = 10 : i32, message = "hqd,hkd->hqk"}> : () -> ()
    %cst_88 = arith.constant dense<0.000000e+00> : vector<4x10x10xf32>
    %216 = tpu.matmul %215, %208, %cst_88 {dimension_numbers = #tpu.dot_dimension_numbers<[2], [2], [1], [1], [0, 0, 0, 1, 1, 1], [0], [0]>} : vector<4x10x128xf32>, vector<4x10x128xf32>, vector<4x10x10xf32> -> vector<4x10x10xf32>
    "tpu.trace_stop"() : () -> ()
    %217 = vector.shape_cast %35 : vector<10x10xf32> to vector<1x10x10xf32>
    %218 = vector.broadcast %217 : vector<1x10x10xf32> to vector<4x10x10xf32>
    %219 = arith.addf %216, %218 : vector<4x10x10xf32>
    %220 = math.exp %219 : vector<4x10x10xf32>
    %cst_89 = arith.constant dense<0.000000e+00> : vector<4x10xf32>
    %221 = vector.multi_reduction <add>, %220, %cst_89 [2] : vector<4x10x10xf32> to vector<4x10xf32>
    %222 = vector.shape_cast %221 : vector<4x10xf32> to vector<4x10x1xf32>
    %223 = tpu.reciprocal %222 {approx = true} : vector<4x10x1xf32> -> vector<4x10x1xf32>
    %224 = vector.broadcast %223 : vector<4x10x1xf32> to vector<4x10x10xf32>
    %225 = arith.mulf %220, %224 : vector<4x10x10xf32>
    "tpu.trace_start"() <{level = 10 : i32, message = "hqk,hkd->hqd"}> : () -> ()
    %cst_90 = arith.constant dense<0.000000e+00> : vector<4x10x128xf32>
    %226 = tpu.matmul %225, %212, %cst_90 {dimension_numbers = #tpu.dot_dimension_numbers<[2], [1], [1], [2], [0, 0, 0, 1, 1, 2], [0], [0]>} : vector<4x10x10xf32>, vector<4x10x128xf32>, vector<4x10x128xf32> -> vector<4x10x128xf32>
    "tpu.trace_stop"() : () -> ()
    %cst_91 = arith.constant dense<0.000000e+00> : vector<10x128xf32>
    %227 = vector.multi_reduction <add>, %226, %cst_91 [0] : vector<4x10x128xf32> to vector<10x128xf32>
    %c12_92 = arith.constant 12 : index
    %c0_93 = arith.constant 0 : index
    %c0_94 = arith.constant 0 : index
    %228 = vector.load %arg8[%c12_92, %c0_93, %c0_94] : memref<35x128x128xf32, #tpu.memory_space<vmem>>, vector<1x128x128xf32>
    %229 = vector.shape_cast %228 : vector<1x128x128xf32> to vector<128x128xf32>
    %cst_95 = arith.constant dense<0.000000e+00> : vector<10x128xf32>
    %230 = tpu.matmul %227, %229, %cst_95 {dimension_numbers = #tpu.dot_dimension_numbers<[1], [0], [0], [1], [0, 0, 1, 1], [], []>} : vector<10x128xf32>, vector<128x128xf32>, vector<10x128xf32> -> vector<10x128xf32>
    %c18 = arith.constant 18 : index
    %c0_96 = arith.constant 0 : index
    %231 = vector.load %arg9[%c18, %c0_96] : memref<57x128xf32, #tpu.memory_space<vmem>>, vector<1x128xf32>
    %232 = vector.broadcast %231 : vector<1x128xf32> to vector<10x128xf32>
    %233 = arith.addf %230, %232 : vector<10x128xf32>
    %234 = arith.addf %162, %233 : vector<10x128xf32>
    %cst_97 = arith.constant dense<0.000000e+00> : vector<10xf32>
    %235 = vector.multi_reduction <add>, %234, %cst_97 [1] : vector<10x128xf32> to vector<10xf32>
    %236 = vector.shape_cast %235 : vector<10xf32> to vector<10x1xf32>
    %237 = arith.mulf %234, %234 : vector<10x128xf32>
    %cst_98 = arith.constant dense<0.000000e+00> : vector<10xf32>
    %238 = vector.multi_reduction <add>, %237, %cst_98 [1] : vector<10x128xf32> to vector<10xf32>
    %239 = vector.shape_cast %238 : vector<10xf32> to vector<10x1xf32>
    %cst_99 = arith.constant 3.125000e-02 : f32
    %240 = vector.broadcast %cst_99 : f32 to vector<10x1xf32>
    %241 = arith.mulf %236, %240 : vector<10x1xf32>
    %cst_100 = arith.constant 3.125000e-02 : f32
    %242 = vector.broadcast %cst_100 : f32 to vector<10x1xf32>
    %243 = arith.mulf %239, %242 : vector<10x1xf32>
    %244 = arith.mulf %241, %241 : vector<10x1xf32>
    %245 = arith.subf %243, %244 : vector<10x1xf32>
    %246 = vector.broadcast %241 : vector<10x1xf32> to vector<10x128xf32>
    %247 = arith.subf %234, %246 : vector<10x128xf32>
    %cst_101 = arith.constant 9.99999974E-6 : f32
    %248 = vector.broadcast %cst_101 : f32 to vector<10x1xf32>
    %249 = arith.addf %245, %248 : vector<10x1xf32>
    %250 = math.rsqrt %249 : vector<10x1xf32>
    %251 = vector.broadcast %250 : vector<10x1xf32> to vector<10x128xf32>
    %252 = arith.mulf %247, %251 : vector<10x128xf32>
    %c23 = arith.constant 23 : index
    %c0_102 = arith.constant 0 : index
    %253 = vector.load %arg9[%c23, %c0_102] : memref<57x128xf32, #tpu.memory_space<vmem>>, vector<1x128xf32>
    %254 = vector.broadcast %253 : vector<1x128xf32> to vector<10x128xf32>
    %255 = arith.mulf %252, %254 : vector<10x128xf32>
    %c24 = arith.constant 24 : index
    %c0_103 = arith.constant 0 : index
    %256 = vector.load %arg9[%c24, %c0_103] : memref<57x128xf32, #tpu.memory_space<vmem>>, vector<1x128xf32>
    %257 = vector.broadcast %256 : vector<1x128xf32> to vector<10x128xf32>
    %258 = arith.addf %255, %257 : vector<10x128xf32>
    %c13_104 = arith.constant 13 : index
    %c0_105 = arith.constant 0 : index
    %c0_106 = arith.constant 0 : index
    %259 = vector.load %arg8[%c13_104, %c0_105, %c0_106] : memref<35x128x128xf32, #tpu.memory_space<vmem>>, vector<1x128x128xf32>
    %260 = vector.shape_cast %259 : vector<1x128x128xf32> to vector<128x128xf32>
    %cst_107 = arith.constant dense<0.000000e+00> : vector<10x128xf32>
    %261 = tpu.matmul %258, %260, %cst_107 {dimension_numbers = #tpu.dot_dimension_numbers<[1], [0], [0], [1], [0, 0, 1, 1], [], []>} : vector<10x128xf32>, vector<128x128xf32>, vector<10x128xf32> -> vector<10x128xf32>
    %c19 = arith.constant 19 : index
    %c0_108 = arith.constant 0 : index
    %262 = vector.load %arg9[%c19, %c0_108] : memref<57x128xf32, #tpu.memory_space<vmem>>, vector<1x128xf32>
    %263 = vector.broadcast %262 : vector<1x128xf32> to vector<10x128xf32>
    %264 = arith.addf %261, %263 : vector<10x128xf32>
    %cst_109 = arith.constant 0.000000e+00 : f32
    %265 = vector.broadcast %cst_109 : f32 to vector<10x128xf32>
    %266 = arith.maximumf %264, %265 : vector<10x128xf32>
    %c14_110 = arith.constant 14 : index
    %c0_111 = arith.constant 0 : index
    %c0_112 = arith.constant 0 : index
    %267 = vector.load %arg8[%c14_110, %c0_111, %c0_112] : memref<35x128x128xf32, #tpu.memory_space<vmem>>, vector<1x128x128xf32>
    %268 = vector.shape_cast %267 : vector<1x128x128xf32> to vector<128x128xf32>
    %cst_113 = arith.constant dense<0.000000e+00> : vector<10x128xf32>
    %269 = tpu.matmul %266, %268, %cst_113 {dimension_numbers = #tpu.dot_dimension_numbers<[1], [0], [0], [1], [0, 0, 1, 1], [], []>} : vector<10x128xf32>, vector<128x128xf32>, vector<10x128xf32> -> vector<10x128xf32>
    %c20 = arith.constant 20 : index
    %c0_114 = arith.constant 0 : index
    %270 = vector.load %arg9[%c20, %c0_114] : memref<57x128xf32, #tpu.memory_space<vmem>>, vector<1x128xf32>
    %271 = vector.broadcast %270 : vector<1x128xf32> to vector<10x128xf32>
    %272 = arith.addf %269, %271 : vector<10x128xf32>
    %273 = arith.addf %234, %272 : vector<10x128xf32>
    %cst_115 = arith.constant dense<0.000000e+00> : vector<10xf32>
    %274 = vector.multi_reduction <add>, %273, %cst_115 [1] : vector<10x128xf32> to vector<10xf32>
    %275 = vector.shape_cast %274 : vector<10xf32> to vector<10x1xf32>
    %276 = arith.mulf %273, %273 : vector<10x128xf32>
    %cst_116 = arith.constant dense<0.000000e+00> : vector<10xf32>
    %277 = vector.multi_reduction <add>, %276, %cst_116 [1] : vector<10x128xf32> to vector<10xf32>
    %278 = vector.shape_cast %277 : vector<10xf32> to vector<10x1xf32>
    %cst_117 = arith.constant 3.125000e-02 : f32
    %279 = vector.broadcast %cst_117 : f32 to vector<10x1xf32>
    %280 = arith.mulf %275, %279 : vector<10x1xf32>
    %cst_118 = arith.constant 3.125000e-02 : f32
    %281 = vector.broadcast %cst_118 : f32 to vector<10x1xf32>
    %282 = arith.mulf %278, %281 : vector<10x1xf32>
    %283 = arith.mulf %280, %280 : vector<10x1xf32>
    %284 = arith.subf %282, %283 : vector<10x1xf32>
    %285 = vector.broadcast %280 : vector<10x1xf32> to vector<10x128xf32>
    %286 = arith.subf %273, %285 : vector<10x128xf32>
    %cst_119 = arith.constant 9.99999974E-6 : f32
    %287 = vector.broadcast %cst_119 : f32 to vector<10x1xf32>
    %288 = arith.addf %284, %287 : vector<10x1xf32>
    %289 = math.rsqrt %288 : vector<10x1xf32>
    %290 = vector.broadcast %289 : vector<10x1xf32> to vector<10x128xf32>
    %291 = arith.mulf %286, %290 : vector<10x128xf32>
    %c1 = arith.constant 1 : index
    %c0_120 = arith.constant 0 : index
    %292 = vector.load %arg9[%c1, %c0_120] : memref<57x128xf32, #tpu.memory_space<vmem>>, vector<1x128xf32>
    %293 = vector.broadcast %292 : vector<1x128xf32> to vector<10x128xf32>
    %294 = arith.mulf %291, %293 : vector<10x128xf32>
    %c2 = arith.constant 2 : index
    %c0_121 = arith.constant 0 : index
    %295 = vector.load %arg9[%c2, %c0_121] : memref<57x128xf32, #tpu.memory_space<vmem>>, vector<1x128xf32>
    %296 = vector.broadcast %295 : vector<1x128xf32> to vector<10x128xf32>
    %297 = arith.addf %294, %296 : vector<10x128xf32>
    %c0_122 = arith.constant 0 : index
    %c0_123 = arith.constant 0 : index
    %c0_124 = arith.constant 0 : index
    %298 = vector.load %arg2[%c0_122, %c0_123, %c0_124] : memref<1x8x1xi32, #tpu.memory_space<vmem>>, vector<1x8x1xi32>
    %299 = vector.shape_cast %298 : vector<1x8x1xi32> to vector<8x1xi32>
    %300 = tpu.iota {dimensions = array<i32: 1>} : vector<8x128xi32>
    %301 = vector.broadcast %299 : vector<8x1xi32> to vector<8x128xi32>
    %302 = arith.cmpi eq, %301, %300 : vector<8x128xi32>
    %303 = arith.extui %302 : vector<8x128xi1> to vector<8x128xi32>
    %304 = arith.sitofp %303 : vector<8x128xi32> to vector<8x128xf32>
    %c1_125 = arith.constant 1 : index
    %c0_126 = arith.constant 0 : index
    %c0_127 = arith.constant 0 : index
    %305 = vector.load %arg8[%c1_125, %c0_126, %c0_127] : memref<35x128x128xf32, #tpu.memory_space<vmem>>, vector<1x128x128xf32>
    %306 = vector.shape_cast %305 : vector<1x128x128xf32> to vector<128x128xf32>
    %cst_128 = arith.constant dense<0.000000e+00> : vector<8x128xf32>
    %307 = tpu.matmul %304, %306, %cst_128 {dimension_numbers = #tpu.dot_dimension_numbers<[1], [0], [0], [1], [0, 0, 1, 1], [], []>} : vector<8x128xf32>, vector<128x128xf32>, vector<8x128xf32> -> vector<8x128xf32>
    %c0_129 = arith.constant 0 : index
    %c0_130 = arith.constant 0 : index
    %308 = vector.load %arg4[%c0_129, %c0_130] : memref<8x128xf32, #tpu.memory_space<vmem>>, vector<8x128xf32>
    %309 = arith.addf %307, %308 : vector<8x128xf32>
    %cst_131 = arith.constant dense<0.000000e+00> : vector<8xf32>
    %310 = vector.multi_reduction <add>, %309, %cst_131 [1] : vector<8x128xf32> to vector<8xf32>
    %311 = vector.shape_cast %310 : vector<8xf32> to vector<8x1xf32>
    %312 = arith.mulf %309, %309 : vector<8x128xf32>
    %cst_132 = arith.constant dense<0.000000e+00> : vector<8xf32>
    %313 = vector.multi_reduction <add>, %312, %cst_132 [1] : vector<8x128xf32> to vector<8xf32>
    %314 = vector.shape_cast %313 : vector<8xf32> to vector<8x1xf32>
    %cst_133 = arith.constant 3.125000e-02 : f32
    %315 = vector.broadcast %cst_133 : f32 to vector<8x1xf32>
    %316 = arith.mulf %311, %315 : vector<8x1xf32>
    %cst_134 = arith.constant 3.125000e-02 : f32
    %317 = vector.broadcast %cst_134 : f32 to vector<8x1xf32>
    %318 = arith.mulf %314, %317 : vector<8x1xf32>
    %319 = arith.mulf %316, %316 : vector<8x1xf32>
    %320 = arith.subf %318, %319 : vector<8x1xf32>
    %321 = vector.broadcast %316 : vector<8x1xf32> to vector<8x128xf32>
    %322 = arith.subf %309, %321 : vector<8x128xf32>
    %cst_135 = arith.constant 9.99999974E-6 : f32
    %323 = vector.broadcast %cst_135 : f32 to vector<8x1xf32>
    %324 = arith.addf %320, %323 : vector<8x1xf32>
    %325 = math.rsqrt %324 : vector<8x1xf32>
    %326 = vector.broadcast %325 : vector<8x1xf32> to vector<8x128xf32>
    %327 = arith.mulf %322, %326 : vector<8x128xf32>
    %c35 = arith.constant 35 : index
    %c0_136 = arith.constant 0 : index
    %328 = vector.load %arg9[%c35, %c0_136] : memref<57x128xf32, #tpu.memory_space<vmem>>, vector<1x128xf32>
    %329 = vector.broadcast %328 : vector<1x128xf32> to vector<8x128xf32>
    %330 = arith.mulf %327, %329 : vector<8x128xf32>
    %c36 = arith.constant 36 : index
    %c0_137 = arith.constant 0 : index
    %331 = vector.load %arg9[%c36, %c0_137] : memref<57x128xf32, #tpu.memory_space<vmem>>, vector<1x128xf32>
    %332 = vector.broadcast %331 : vector<1x128xf32> to vector<8x128xf32>
    %333 = arith.addf %330, %332 : vector<8x128xf32>
    %c15_138 = arith.constant 15 : index
    %c0_139 = arith.constant 0 : index
    %c0_140 = arith.constant 0 : index
    %334 = vector.load %arg8[%c15_138, %c0_139, %c0_140] : memref<35x128x128xf32, #tpu.memory_space<vmem>>, vector<1x128x128xf32>
    %335 = vector.shape_cast %334 : vector<1x128x128xf32> to vector<128x128xf32>
    %cst_141 = arith.constant dense<0.000000e+00> : vector<8x128xf32>
    %336 = tpu.matmul %333, %335, %cst_141 {dimension_numbers = #tpu.dot_dimension_numbers<[1], [0], [0], [1], [0, 0, 1, 1], [], []>} : vector<8x128xf32>, vector<128x128xf32>, vector<8x128xf32> -> vector<8x128xf32>
    %c25 = arith.constant 25 : index
    %c0_142 = arith.constant 0 : index
    %337 = vector.load %arg9[%c25, %c0_142] : memref<57x128xf32, #tpu.memory_space<vmem>>, vector<1x128xf32>
    %338 = vector.broadcast %337 : vector<1x128xf32> to vector<8x128xf32>
    %339 = arith.addf %336, %338 : vector<8x128xf32>
    %c16_143 = arith.constant 16 : index
    %c0_144 = arith.constant 0 : index
    %c0_145 = arith.constant 0 : index
    %340 = vector.load %arg8[%c16_143, %c0_144, %c0_145] : memref<35x128x128xf32, #tpu.memory_space<vmem>>, vector<1x128x128xf32>
    %341 = vector.shape_cast %340 : vector<1x128x128xf32> to vector<128x128xf32>
    %cst_146 = arith.constant dense<0.000000e+00> : vector<8x128xf32>
    %342 = tpu.matmul %333, %341, %cst_146 {dimension_numbers = #tpu.dot_dimension_numbers<[1], [0], [0], [1], [0, 0, 1, 1], [], []>} : vector<8x128xf32>, vector<128x128xf32>, vector<8x128xf32> -> vector<8x128xf32>
    %c26 = arith.constant 26 : index
    %c0_147 = arith.constant 0 : index
    %343 = vector.load %arg9[%c26, %c0_147] : memref<57x128xf32, #tpu.memory_space<vmem>>, vector<1x128xf32>
    %344 = vector.broadcast %343 : vector<1x128xf32> to vector<8x128xf32>
    %345 = arith.addf %342, %344 : vector<8x128xf32>
    %c17_148 = arith.constant 17 : index
    %c0_149 = arith.constant 0 : index
    %c0_150 = arith.constant 0 : index
    %346 = vector.load %arg8[%c17_148, %c0_149, %c0_150] : memref<35x128x128xf32, #tpu.memory_space<vmem>>, vector<1x128x128xf32>
    %347 = vector.shape_cast %346 : vector<1x128x128xf32> to vector<128x128xf32>
    %cst_151 = arith.constant dense<0.000000e+00> : vector<8x128xf32>
    %348 = tpu.matmul %333, %347, %cst_151 {dimension_numbers = #tpu.dot_dimension_numbers<[1], [0], [0], [1], [0, 0, 1, 1], [], []>} : vector<8x128xf32>, vector<128x128xf32>, vector<8x128xf32> -> vector<8x128xf32>
    %c27 = arith.constant 27 : index
    %c0_152 = arith.constant 0 : index
    %349 = vector.load %arg9[%c27, %c0_152] : memref<57x128xf32, #tpu.memory_space<vmem>>, vector<1x128xf32>
    %350 = vector.broadcast %349 : vector<1x128xf32> to vector<8x128xf32>
    %351 = arith.addf %348, %350 : vector<8x128xf32>
    %352 = vector.shape_cast %345 : vector<8x128xf32> to vector<1x8x128xf32>
    %353 = vector.broadcast %352 : vector<1x8x128xf32> to vector<4x8x128xf32>
    %354 = vector.broadcast %33 : vector<4x1x128xf32> to vector<4x8x128xf32>
    %355 = arith.mulf %353, %354 : vector<4x8x128xf32>
    %356 = vector.shape_cast %351 : vector<8x128xf32> to vector<1x8x128xf32>
    %357 = vector.broadcast %356 : vector<1x8x128xf32> to vector<4x8x128xf32>
    %358 = vector.broadcast %33 : vector<4x1x128xf32> to vector<4x8x128xf32>
    %359 = arith.mulf %357, %358 : vector<4x8x128xf32>
    %360 = vector.shape_cast %339 : vector<8x128xf32> to vector<1x8x128xf32>
    %361 = vector.shape_cast %360 : vector<1x8x128xf32> to vector<1x8x128xf32>
    %362 = vector.broadcast %361 : vector<1x8x128xf32> to vector<4x8x128xf32>
    "tpu.trace_start"() <{level = 10 : i32, message = "hqd,hkd->hqk"}> : () -> ()
    %cst_153 = arith.constant dense<0.000000e+00> : vector<4x8x8xf32>
    %363 = tpu.matmul %362, %355, %cst_153 {dimension_numbers = #tpu.dot_dimension_numbers<[2], [2], [1], [1], [0, 0, 0, 1, 1, 1], [0], [0]>} : vector<4x8x128xf32>, vector<4x8x128xf32>, vector<4x8x8xf32> -> vector<4x8x8xf32>
    "tpu.trace_stop"() : () -> ()
    %364 = vector.shape_cast %37 : vector<8x8xf32> to vector<1x8x8xf32>
    %365 = vector.broadcast %364 : vector<1x8x8xf32> to vector<4x8x8xf32>
    %366 = arith.addf %363, %365 : vector<4x8x8xf32>
    %367 = math.exp %366 : vector<4x8x8xf32>
    %cst_154 = arith.constant dense<0.000000e+00> : vector<4x8xf32>
    %368 = vector.multi_reduction <add>, %367, %cst_154 [2] : vector<4x8x8xf32> to vector<4x8xf32>
    %369 = vector.shape_cast %368 : vector<4x8xf32> to vector<4x8x1xf32>
    %370 = tpu.reciprocal %369 {approx = true} : vector<4x8x1xf32> -> vector<4x8x1xf32>
    %371 = vector.broadcast %370 : vector<4x8x1xf32> to vector<4x8x8xf32>
    %372 = arith.mulf %367, %371 : vector<4x8x8xf32>
    "tpu.trace_start"() <{level = 10 : i32, message = "hqk,hkd->hqd"}> : () -> ()
    %cst_155 = arith.constant dense<0.000000e+00> : vector<4x8x128xf32>
    %373 = tpu.matmul %372, %359, %cst_155 {dimension_numbers = #tpu.dot_dimension_numbers<[2], [1], [1], [2], [0, 0, 0, 1, 1, 2], [0], [0]>} : vector<4x8x8xf32>, vector<4x8x128xf32>, vector<4x8x128xf32> -> vector<4x8x128xf32>
    "tpu.trace_stop"() : () -> ()
    %cst_156 = arith.constant dense<0.000000e+00> : vector<8x128xf32>
    %374 = vector.multi_reduction <add>, %373, %cst_156 [0] : vector<4x8x128xf32> to vector<8x128xf32>
    %c18_157 = arith.constant 18 : index
    %c0_158 = arith.constant 0 : index
    %c0_159 = arith.constant 0 : index
    %375 = vector.load %arg8[%c18_157, %c0_158, %c0_159] : memref<35x128x128xf32, #tpu.memory_space<vmem>>, vector<1x128x128xf32>
    %376 = vector.shape_cast %375 : vector<1x128x128xf32> to vector<128x128xf32>
    %cst_160 = arith.constant dense<0.000000e+00> : vector<8x128xf32>
    %377 = tpu.matmul %374, %376, %cst_160 {dimension_numbers = #tpu.dot_dimension_numbers<[1], [0], [0], [1], [0, 0, 1, 1], [], []>} : vector<8x128xf32>, vector<128x128xf32>, vector<8x128xf32> -> vector<8x128xf32>
    %c28 = arith.constant 28 : index
    %c0_161 = arith.constant 0 : index
    %378 = vector.load %arg9[%c28, %c0_161] : memref<57x128xf32, #tpu.memory_space<vmem>>, vector<1x128xf32>
    %379 = vector.broadcast %378 : vector<1x128xf32> to vector<8x128xf32>
    %380 = arith.addf %377, %379 : vector<8x128xf32>
    %381 = arith.addf %309, %380 : vector<8x128xf32>
    %cst_162 = arith.constant dense<0.000000e+00> : vector<8xf32>
    %382 = vector.multi_reduction <add>, %381, %cst_162 [1] : vector<8x128xf32> to vector<8xf32>
    %383 = vector.shape_cast %382 : vector<8xf32> to vector<8x1xf32>
    %384 = arith.mulf %381, %381 : vector<8x128xf32>
    %cst_163 = arith.constant dense<0.000000e+00> : vector<8xf32>
    %385 = vector.multi_reduction <add>, %384, %cst_163 [1] : vector<8x128xf32> to vector<8xf32>
    %386 = vector.shape_cast %385 : vector<8xf32> to vector<8x1xf32>
    %cst_164 = arith.constant 3.125000e-02 : f32
    %387 = vector.broadcast %cst_164 : f32 to vector<8x1xf32>
    %388 = arith.mulf %383, %387 : vector<8x1xf32>
    %cst_165 = arith.constant 3.125000e-02 : f32
    %389 = vector.broadcast %cst_165 : f32 to vector<8x1xf32>
    %390 = arith.mulf %386, %389 : vector<8x1xf32>
    %391 = arith.mulf %388, %388 : vector<8x1xf32>
    %392 = arith.subf %390, %391 : vector<8x1xf32>
    %393 = vector.broadcast %388 : vector<8x1xf32> to vector<8x128xf32>
    %394 = arith.subf %381, %393 : vector<8x128xf32>
    %cst_166 = arith.constant 9.99999974E-6 : f32
    %395 = vector.broadcast %cst_166 : f32 to vector<8x1xf32>
    %396 = arith.addf %392, %395 : vector<8x1xf32>
    %397 = math.rsqrt %396 : vector<8x1xf32>
    %398 = vector.broadcast %397 : vector<8x1xf32> to vector<8x128xf32>
    %399 = arith.mulf %394, %398 : vector<8x128xf32>
    %c37 = arith.constant 37 : index
    %c0_167 = arith.constant 0 : index
    %400 = vector.load %arg9[%c37, %c0_167] : memref<57x128xf32, #tpu.memory_space<vmem>>, vector<1x128xf32>
    %401 = vector.broadcast %400 : vector<1x128xf32> to vector<8x128xf32>
    %402 = arith.mulf %399, %401 : vector<8x128xf32>
    %c38 = arith.constant 38 : index
    %c0_168 = arith.constant 0 : index
    %403 = vector.load %arg9[%c38, %c0_168] : memref<57x128xf32, #tpu.memory_space<vmem>>, vector<1x128xf32>
    %404 = vector.broadcast %403 : vector<1x128xf32> to vector<8x128xf32>
    %405 = arith.addf %402, %404 : vector<8x128xf32>
    %c19_169 = arith.constant 19 : index
    %c0_170 = arith.constant 0 : index
    %c0_171 = arith.constant 0 : index
    %406 = vector.load %arg8[%c19_169, %c0_170, %c0_171] : memref<35x128x128xf32, #tpu.memory_space<vmem>>, vector<1x128x128xf32>
    %407 = vector.shape_cast %406 : vector<1x128x128xf32> to vector<128x128xf32>
    %cst_172 = arith.constant dense<0.000000e+00> : vector<8x128xf32>
    %408 = tpu.matmul %405, %407, %cst_172 {dimension_numbers = #tpu.dot_dimension_numbers<[1], [0], [0], [1], [0, 0, 1, 1], [], []>} : vector<8x128xf32>, vector<128x128xf32>, vector<8x128xf32> -> vector<8x128xf32>
    %c29 = arith.constant 29 : index
    %c0_173 = arith.constant 0 : index
    %409 = vector.load %arg9[%c29, %c0_173] : memref<57x128xf32, #tpu.memory_space<vmem>>, vector<1x128xf32>
    %410 = vector.broadcast %409 : vector<1x128xf32> to vector<8x128xf32>
    %411 = arith.addf %408, %410 : vector<8x128xf32>
    %c20_174 = arith.constant 20 : index
    %c0_175 = arith.constant 0 : index
    %c0_176 = arith.constant 0 : index
    %412 = vector.load %arg8[%c20_174, %c0_175, %c0_176] : memref<35x128x128xf32, #tpu.memory_space<vmem>>, vector<1x128x128xf32>
    %413 = vector.shape_cast %412 : vector<1x128x128xf32> to vector<128x128xf32>
    %cst_177 = arith.constant dense<0.000000e+00> : vector<10x128xf32>
    %414 = tpu.matmul %297, %413, %cst_177 {dimension_numbers = #tpu.dot_dimension_numbers<[1], [0], [0], [1], [0, 0, 1, 1], [], []>} : vector<10x128xf32>, vector<128x128xf32>, vector<10x128xf32> -> vector<10x128xf32>
    %c30 = arith.constant 30 : index
    %c0_178 = arith.constant 0 : index
    %415 = vector.load %arg9[%c30, %c0_178] : memref<57x128xf32, #tpu.memory_space<vmem>>, vector<1x128xf32>
    %416 = vector.broadcast %415 : vector<1x128xf32> to vector<10x128xf32>
    %417 = arith.addf %414, %416 : vector<10x128xf32>
    %c21_179 = arith.constant 21 : index
    %c0_180 = arith.constant 0 : index
    %c0_181 = arith.constant 0 : index
    %418 = vector.load %arg8[%c21_179, %c0_180, %c0_181] : memref<35x128x128xf32, #tpu.memory_space<vmem>>, vector<1x128x128xf32>
    %419 = vector.shape_cast %418 : vector<1x128x128xf32> to vector<128x128xf32>
    %cst_182 = arith.constant dense<0.000000e+00> : vector<10x128xf32>
    %420 = tpu.matmul %297, %419, %cst_182 {dimension_numbers = #tpu.dot_dimension_numbers<[1], [0], [0], [1], [0, 0, 1, 1], [], []>} : vector<10x128xf32>, vector<128x128xf32>, vector<10x128xf32> -> vector<10x128xf32>
    %c31 = arith.constant 31 : index
    %c0_183 = arith.constant 0 : index
    %421 = vector.load %arg9[%c31, %c0_183] : memref<57x128xf32, #tpu.memory_space<vmem>>, vector<1x128xf32>
    %422 = vector.broadcast %421 : vector<1x128xf32> to vector<10x128xf32>
    %423 = arith.addf %420, %422 : vector<10x128xf32>
    %424 = vector.shape_cast %417 : vector<10x128xf32> to vector<1x10x128xf32>
    %425 = vector.broadcast %424 : vector<1x10x128xf32> to vector<4x10x128xf32>
    %426 = vector.broadcast %33 : vector<4x1x128xf32> to vector<4x10x128xf32>
    %427 = arith.mulf %425, %426 : vector<4x10x128xf32>
    %428 = vector.shape_cast %423 : vector<10x128xf32> to vector<1x10x128xf32>
    %429 = vector.broadcast %428 : vector<1x10x128xf32> to vector<4x10x128xf32>
    %430 = vector.broadcast %33 : vector<4x1x128xf32> to vector<4x10x128xf32>
    %431 = arith.mulf %429, %430 : vector<4x10x128xf32>
    %432 = vector.shape_cast %411 : vector<8x128xf32> to vector<1x8x128xf32>
    %433 = vector.shape_cast %432 : vector<1x8x128xf32> to vector<1x8x128xf32>
    %434 = vector.broadcast %433 : vector<1x8x128xf32> to vector<4x8x128xf32>
    "tpu.trace_start"() <{level = 10 : i32, message = "hqd,hkd->hqk"}> : () -> ()
    %cst_184 = arith.constant dense<0.000000e+00> : vector<4x8x10xf32>
    %435 = tpu.matmul %434, %427, %cst_184 {dimension_numbers = #tpu.dot_dimension_numbers<[2], [2], [1], [1], [0, 0, 0, 1, 1, 1], [0], [0]>} : vector<4x8x128xf32>, vector<4x10x128xf32>, vector<4x8x10xf32> -> vector<4x8x10xf32>
    "tpu.trace_stop"() : () -> ()
    %436 = vector.shape_cast %39 : vector<1x10xf32> to vector<1x1x10xf32>
    %437 = vector.broadcast %436 : vector<1x1x10xf32> to vector<4x8x10xf32>
    %438 = arith.addf %435, %437 : vector<4x8x10xf32>
    %439 = math.exp %438 : vector<4x8x10xf32>
    %cst_185 = arith.constant dense<0.000000e+00> : vector<4x8xf32>
    %440 = vector.multi_reduction <add>, %439, %cst_185 [2] : vector<4x8x10xf32> to vector<4x8xf32>
    %441 = vector.shape_cast %440 : vector<4x8xf32> to vector<4x8x1xf32>
    %442 = tpu.reciprocal %441 {approx = true} : vector<4x8x1xf32> -> vector<4x8x1xf32>
    %443 = vector.broadcast %442 : vector<4x8x1xf32> to vector<4x8x10xf32>
    %444 = arith.mulf %439, %443 : vector<4x8x10xf32>
    "tpu.trace_start"() <{level = 10 : i32, message = "hqk,hkd->hqd"}> : () -> ()
    %cst_186 = arith.constant dense<0.000000e+00> : vector<4x8x128xf32>
    %445 = tpu.matmul %444, %431, %cst_186 {dimension_numbers = #tpu.dot_dimension_numbers<[2], [1], [1], [2], [0, 0, 0, 1, 1, 2], [0], [0]>} : vector<4x8x10xf32>, vector<4x10x128xf32>, vector<4x8x128xf32> -> vector<4x8x128xf32>
    "tpu.trace_stop"() : () -> ()
    %cst_187 = arith.constant dense<0.000000e+00> : vector<8x128xf32>
    %446 = vector.multi_reduction <add>, %445, %cst_187 [0] : vector<4x8x128xf32> to vector<8x128xf32>
    %c22_188 = arith.constant 22 : index
    %c0_189 = arith.constant 0 : index
    %c0_190 = arith.constant 0 : index
    %447 = vector.load %arg8[%c22_188, %c0_189, %c0_190] : memref<35x128x128xf32, #tpu.memory_space<vmem>>, vector<1x128x128xf32>
    %448 = vector.shape_cast %447 : vector<1x128x128xf32> to vector<128x128xf32>
    %cst_191 = arith.constant dense<0.000000e+00> : vector<8x128xf32>
    %449 = tpu.matmul %446, %448, %cst_191 {dimension_numbers = #tpu.dot_dimension_numbers<[1], [0], [0], [1], [0, 0, 1, 1], [], []>} : vector<8x128xf32>, vector<128x128xf32>, vector<8x128xf32> -> vector<8x128xf32>
    %c32 = arith.constant 32 : index
    %c0_192 = arith.constant 0 : index
    %450 = vector.load %arg9[%c32, %c0_192] : memref<57x128xf32, #tpu.memory_space<vmem>>, vector<1x128xf32>
    %451 = vector.broadcast %450 : vector<1x128xf32> to vector<8x128xf32>
    %452 = arith.addf %449, %451 : vector<8x128xf32>
    %453 = arith.addf %381, %452 : vector<8x128xf32>
    %cst_193 = arith.constant dense<0.000000e+00> : vector<8xf32>
    %454 = vector.multi_reduction <add>, %453, %cst_193 [1] : vector<8x128xf32> to vector<8xf32>
    %455 = vector.shape_cast %454 : vector<8xf32> to vector<8x1xf32>
    %456 = arith.mulf %453, %453 : vector<8x128xf32>
    %cst_194 = arith.constant dense<0.000000e+00> : vector<8xf32>
    %457 = vector.multi_reduction <add>, %456, %cst_194 [1] : vector<8x128xf32> to vector<8xf32>
    %458 = vector.shape_cast %457 : vector<8xf32> to vector<8x1xf32>
    %cst_195 = arith.constant 3.125000e-02 : f32
    %459 = vector.broadcast %cst_195 : f32 to vector<8x1xf32>
    %460 = arith.mulf %455, %459 : vector<8x1xf32>
    %cst_196 = arith.constant 3.125000e-02 : f32
    %461 = vector.broadcast %cst_196 : f32 to vector<8x1xf32>
    %462 = arith.mulf %458, %461 : vector<8x1xf32>
    %463 = arith.mulf %460, %460 : vector<8x1xf32>
    %464 = arith.subf %462, %463 : vector<8x1xf32>
    %465 = vector.broadcast %460 : vector<8x1xf32> to vector<8x128xf32>
    %466 = arith.subf %453, %465 : vector<8x128xf32>
    %cst_197 = arith.constant 9.99999974E-6 : f32
    %467 = vector.broadcast %cst_197 : f32 to vector<8x1xf32>
    %468 = arith.addf %464, %467 : vector<8x1xf32>
    %469 = math.rsqrt %468 : vector<8x1xf32>
    %470 = vector.broadcast %469 : vector<8x1xf32> to vector<8x128xf32>
    %471 = arith.mulf %466, %470 : vector<8x128xf32>
    %c39 = arith.constant 39 : index
    %c0_198 = arith.constant 0 : index
    %472 = vector.load %arg9[%c39, %c0_198] : memref<57x128xf32, #tpu.memory_space<vmem>>, vector<1x128xf32>
    %473 = vector.broadcast %472 : vector<1x128xf32> to vector<8x128xf32>
    %474 = arith.mulf %471, %473 : vector<8x128xf32>
    %c40 = arith.constant 40 : index
    %c0_199 = arith.constant 0 : index
    %475 = vector.load %arg9[%c40, %c0_199] : memref<57x128xf32, #tpu.memory_space<vmem>>, vector<1x128xf32>
    %476 = vector.broadcast %475 : vector<1x128xf32> to vector<8x128xf32>
    %477 = arith.addf %474, %476 : vector<8x128xf32>
    %c23_200 = arith.constant 23 : index
    %c0_201 = arith.constant 0 : index
    %c0_202 = arith.constant 0 : index
    %478 = vector.load %arg8[%c23_200, %c0_201, %c0_202] : memref<35x128x128xf32, #tpu.memory_space<vmem>>, vector<1x128x128xf32>
    %479 = vector.shape_cast %478 : vector<1x128x128xf32> to vector<128x128xf32>
    %cst_203 = arith.constant dense<0.000000e+00> : vector<8x128xf32>
    %480 = tpu.matmul %477, %479, %cst_203 {dimension_numbers = #tpu.dot_dimension_numbers<[1], [0], [0], [1], [0, 0, 1, 1], [], []>} : vector<8x128xf32>, vector<128x128xf32>, vector<8x128xf32> -> vector<8x128xf32>
    %c33 = arith.constant 33 : index
    %c0_204 = arith.constant 0 : index
    %481 = vector.load %arg9[%c33, %c0_204] : memref<57x128xf32, #tpu.memory_space<vmem>>, vector<1x128xf32>
    %482 = vector.broadcast %481 : vector<1x128xf32> to vector<8x128xf32>
    %483 = arith.addf %480, %482 : vector<8x128xf32>
    %cst_205 = arith.constant 0.000000e+00 : f32
    %484 = vector.broadcast %cst_205 : f32 to vector<8x128xf32>
    %485 = arith.maximumf %483, %484 : vector<8x128xf32>
    %c24_206 = arith.constant 24 : index
    %c0_207 = arith.constant 0 : index
    %c0_208 = arith.constant 0 : index
    %486 = vector.load %arg8[%c24_206, %c0_207, %c0_208] : memref<35x128x128xf32, #tpu.memory_space<vmem>>, vector<1x128x128xf32>
    %487 = vector.shape_cast %486 : vector<1x128x128xf32> to vector<128x128xf32>
    %cst_209 = arith.constant dense<0.000000e+00> : vector<8x128xf32>
    %488 = tpu.matmul %485, %487, %cst_209 {dimension_numbers = #tpu.dot_dimension_numbers<[1], [0], [0], [1], [0, 0, 1, 1], [], []>} : vector<8x128xf32>, vector<128x128xf32>, vector<8x128xf32> -> vector<8x128xf32>
    %c34 = arith.constant 34 : index
    %c0_210 = arith.constant 0 : index
    %489 = vector.load %arg9[%c34, %c0_210] : memref<57x128xf32, #tpu.memory_space<vmem>>, vector<1x128xf32>
    %490 = vector.broadcast %489 : vector<1x128xf32> to vector<8x128xf32>
    %491 = arith.addf %488, %490 : vector<8x128xf32>
    %492 = arith.addf %453, %491 : vector<8x128xf32>
    %cst_211 = arith.constant dense<0.000000e+00> : vector<8xf32>
    %493 = vector.multi_reduction <add>, %492, %cst_211 [1] : vector<8x128xf32> to vector<8xf32>
    %494 = vector.shape_cast %493 : vector<8xf32> to vector<8x1xf32>
    %495 = arith.mulf %492, %492 : vector<8x128xf32>
    %cst_212 = arith.constant dense<0.000000e+00> : vector<8xf32>
    %496 = vector.multi_reduction <add>, %495, %cst_212 [1] : vector<8x128xf32> to vector<8xf32>
    %497 = vector.shape_cast %496 : vector<8xf32> to vector<8x1xf32>
    %cst_213 = arith.constant 3.125000e-02 : f32
    %498 = vector.broadcast %cst_213 : f32 to vector<8x1xf32>
    %499 = arith.mulf %494, %498 : vector<8x1xf32>
    %cst_214 = arith.constant 3.125000e-02 : f32
    %500 = vector.broadcast %cst_214 : f32 to vector<8x1xf32>
    %501 = arith.mulf %497, %500 : vector<8x1xf32>
    %502 = arith.mulf %499, %499 : vector<8x1xf32>
    %503 = arith.subf %501, %502 : vector<8x1xf32>
    %504 = vector.broadcast %499 : vector<8x1xf32> to vector<8x128xf32>
    %505 = arith.subf %492, %504 : vector<8x128xf32>
    %cst_215 = arith.constant 9.99999974E-6 : f32
    %506 = vector.broadcast %cst_215 : f32 to vector<8x1xf32>
    %507 = arith.addf %503, %506 : vector<8x1xf32>
    %508 = math.rsqrt %507 : vector<8x1xf32>
    %509 = vector.broadcast %508 : vector<8x1xf32> to vector<8x128xf32>
    %510 = arith.mulf %505, %509 : vector<8x128xf32>
    %c51 = arith.constant 51 : index
    %c0_216 = arith.constant 0 : index
    %511 = vector.load %arg9[%c51, %c0_216] : memref<57x128xf32, #tpu.memory_space<vmem>>, vector<1x128xf32>
    %512 = vector.broadcast %511 : vector<1x128xf32> to vector<8x128xf32>
    %513 = arith.mulf %510, %512 : vector<8x128xf32>
    %c52 = arith.constant 52 : index
    %c0_217 = arith.constant 0 : index
    %514 = vector.load %arg9[%c52, %c0_217] : memref<57x128xf32, #tpu.memory_space<vmem>>, vector<1x128xf32>
    %515 = vector.broadcast %514 : vector<1x128xf32> to vector<8x128xf32>
    %516 = arith.addf %513, %515 : vector<8x128xf32>
    %c25_218 = arith.constant 25 : index
    %c0_219 = arith.constant 0 : index
    %c0_220 = arith.constant 0 : index
    %517 = vector.load %arg8[%c25_218, %c0_219, %c0_220] : memref<35x128x128xf32, #tpu.memory_space<vmem>>, vector<1x128x128xf32>
    %518 = vector.shape_cast %517 : vector<1x128x128xf32> to vector<128x128xf32>
    %cst_221 = arith.constant dense<0.000000e+00> : vector<8x128xf32>
    %519 = tpu.matmul %516, %518, %cst_221 {dimension_numbers = #tpu.dot_dimension_numbers<[1], [0], [0], [1], [0, 0, 1, 1], [], []>} : vector<8x128xf32>, vector<128x128xf32>, vector<8x128xf32> -> vector<8x128xf32>
    %c41 = arith.constant 41 : index
    %c0_222 = arith.constant 0 : index
    %520 = vector.load %arg9[%c41, %c0_222] : memref<57x128xf32, #tpu.memory_space<vmem>>, vector<1x128xf32>
    %521 = vector.broadcast %520 : vector<1x128xf32> to vector<8x128xf32>
    %522 = arith.addf %519, %521 : vector<8x128xf32>
    %c26_223 = arith.constant 26 : index
    %c0_224 = arith.constant 0 : index
    %c0_225 = arith.constant 0 : index
    %523 = vector.load %arg8[%c26_223, %c0_224, %c0_225] : memref<35x128x128xf32, #tpu.memory_space<vmem>>, vector<1x128x128xf32>
    %524 = vector.shape_cast %523 : vector<1x128x128xf32> to vector<128x128xf32>
    %cst_226 = arith.constant dense<0.000000e+00> : vector<8x128xf32>
    %525 = tpu.matmul %516, %524, %cst_226 {dimension_numbers = #tpu.dot_dimension_numbers<[1], [0], [0], [1], [0, 0, 1, 1], [], []>} : vector<8x128xf32>, vector<128x128xf32>, vector<8x128xf32> -> vector<8x128xf32>
    %c42 = arith.constant 42 : index
    %c0_227 = arith.constant 0 : index
    %526 = vector.load %arg9[%c42, %c0_227] : memref<57x128xf32, #tpu.memory_space<vmem>>, vector<1x128xf32>
    %527 = vector.broadcast %526 : vector<1x128xf32> to vector<8x128xf32>
    %528 = arith.addf %525, %527 : vector<8x128xf32>
    %c27_228 = arith.constant 27 : index
    %c0_229 = arith.constant 0 : index
    %c0_230 = arith.constant 0 : index
    %529 = vector.load %arg8[%c27_228, %c0_229, %c0_230] : memref<35x128x128xf32, #tpu.memory_space<vmem>>, vector<1x128x128xf32>
    %530 = vector.shape_cast %529 : vector<1x128x128xf32> to vector<128x128xf32>
    %cst_231 = arith.constant dense<0.000000e+00> : vector<8x128xf32>
    %531 = tpu.matmul %516, %530, %cst_231 {dimension_numbers = #tpu.dot_dimension_numbers<[1], [0], [0], [1], [0, 0, 1, 1], [], []>} : vector<8x128xf32>, vector<128x128xf32>, vector<8x128xf32> -> vector<8x128xf32>
    %c43 = arith.constant 43 : index
    %c0_232 = arith.constant 0 : index
    %532 = vector.load %arg9[%c43, %c0_232] : memref<57x128xf32, #tpu.memory_space<vmem>>, vector<1x128xf32>
    %533 = vector.broadcast %532 : vector<1x128xf32> to vector<8x128xf32>
    %534 = arith.addf %531, %533 : vector<8x128xf32>
    %535 = vector.shape_cast %528 : vector<8x128xf32> to vector<1x8x128xf32>
    %536 = vector.broadcast %535 : vector<1x8x128xf32> to vector<4x8x128xf32>
    %537 = vector.broadcast %33 : vector<4x1x128xf32> to vector<4x8x128xf32>
    %538 = arith.mulf %536, %537 : vector<4x8x128xf32>
    %539 = vector.shape_cast %534 : vector<8x128xf32> to vector<1x8x128xf32>
    %540 = vector.broadcast %539 : vector<1x8x128xf32> to vector<4x8x128xf32>
    %541 = vector.broadcast %33 : vector<4x1x128xf32> to vector<4x8x128xf32>
    %542 = arith.mulf %540, %541 : vector<4x8x128xf32>
    %543 = vector.shape_cast %522 : vector<8x128xf32> to vector<1x8x128xf32>
    %544 = vector.shape_cast %543 : vector<1x8x128xf32> to vector<1x8x128xf32>
    %545 = vector.broadcast %544 : vector<1x8x128xf32> to vector<4x8x128xf32>
    "tpu.trace_start"() <{level = 10 : i32, message = "hqd,hkd->hqk"}> : () -> ()
    %cst_233 = arith.constant dense<0.000000e+00> : vector<4x8x8xf32>
    %546 = tpu.matmul %545, %538, %cst_233 {dimension_numbers = #tpu.dot_dimension_numbers<[2], [2], [1], [1], [0, 0, 0, 1, 1, 1], [0], [0]>} : vector<4x8x128xf32>, vector<4x8x128xf32>, vector<4x8x8xf32> -> vector<4x8x8xf32>
    "tpu.trace_stop"() : () -> ()
    %547 = vector.shape_cast %37 : vector<8x8xf32> to vector<1x8x8xf32>
    %548 = vector.broadcast %547 : vector<1x8x8xf32> to vector<4x8x8xf32>
    %549 = arith.addf %546, %548 : vector<4x8x8xf32>
    %550 = math.exp %549 : vector<4x8x8xf32>
    %cst_234 = arith.constant dense<0.000000e+00> : vector<4x8xf32>
    %551 = vector.multi_reduction <add>, %550, %cst_234 [2] : vector<4x8x8xf32> to vector<4x8xf32>
    %552 = vector.shape_cast %551 : vector<4x8xf32> to vector<4x8x1xf32>
    %553 = tpu.reciprocal %552 {approx = true} : vector<4x8x1xf32> -> vector<4x8x1xf32>
    %554 = vector.broadcast %553 : vector<4x8x1xf32> to vector<4x8x8xf32>
    %555 = arith.mulf %550, %554 : vector<4x8x8xf32>
    "tpu.trace_start"() <{level = 10 : i32, message = "hqk,hkd->hqd"}> : () -> ()
    %cst_235 = arith.constant dense<0.000000e+00> : vector<4x8x128xf32>
    %556 = tpu.matmul %555, %542, %cst_235 {dimension_numbers = #tpu.dot_dimension_numbers<[2], [1], [1], [2], [0, 0, 0, 1, 1, 2], [0], [0]>} : vector<4x8x8xf32>, vector<4x8x128xf32>, vector<4x8x128xf32> -> vector<4x8x128xf32>
    "tpu.trace_stop"() : () -> ()
    %cst_236 = arith.constant dense<0.000000e+00> : vector<8x128xf32>
    %557 = vector.multi_reduction <add>, %556, %cst_236 [0] : vector<4x8x128xf32> to vector<8x128xf32>
    %c28_237 = arith.constant 28 : index
    %c0_238 = arith.constant 0 : index
    %c0_239 = arith.constant 0 : index
    %558 = vector.load %arg8[%c28_237, %c0_238, %c0_239] : memref<35x128x128xf32, #tpu.memory_space<vmem>>, vector<1x128x128xf32>
    %559 = vector.shape_cast %558 : vector<1x128x128xf32> to vector<128x128xf32>
    %cst_240 = arith.constant dense<0.000000e+00> : vector<8x128xf32>
    %560 = tpu.matmul %557, %559, %cst_240 {dimension_numbers = #tpu.dot_dimension_numbers<[1], [0], [0], [1], [0, 0, 1, 1], [], []>} : vector<8x128xf32>, vector<128x128xf32>, vector<8x128xf32> -> vector<8x128xf32>
    %c44 = arith.constant 44 : index
    %c0_241 = arith.constant 0 : index
    %561 = vector.load %arg9[%c44, %c0_241] : memref<57x128xf32, #tpu.memory_space<vmem>>, vector<1x128xf32>
    %562 = vector.broadcast %561 : vector<1x128xf32> to vector<8x128xf32>
    %563 = arith.addf %560, %562 : vector<8x128xf32>
    %564 = arith.addf %492, %563 : vector<8x128xf32>
    %cst_242 = arith.constant dense<0.000000e+00> : vector<8xf32>
    %565 = vector.multi_reduction <add>, %564, %cst_242 [1] : vector<8x128xf32> to vector<8xf32>
    %566 = vector.shape_cast %565 : vector<8xf32> to vector<8x1xf32>
    %567 = arith.mulf %564, %564 : vector<8x128xf32>
    %cst_243 = arith.constant dense<0.000000e+00> : vector<8xf32>
    %568 = vector.multi_reduction <add>, %567, %cst_243 [1] : vector<8x128xf32> to vector<8xf32>
    %569 = vector.shape_cast %568 : vector<8xf32> to vector<8x1xf32>
    %cst_244 = arith.constant 3.125000e-02 : f32
    %570 = vector.broadcast %cst_244 : f32 to vector<8x1xf32>
    %571 = arith.mulf %566, %570 : vector<8x1xf32>
    %cst_245 = arith.constant 3.125000e-02 : f32
    %572 = vector.broadcast %cst_245 : f32 to vector<8x1xf32>
    %573 = arith.mulf %569, %572 : vector<8x1xf32>
    %574 = arith.mulf %571, %571 : vector<8x1xf32>
    %575 = arith.subf %573, %574 : vector<8x1xf32>
    %576 = vector.broadcast %571 : vector<8x1xf32> to vector<8x128xf32>
    %577 = arith.subf %564, %576 : vector<8x128xf32>
    %cst_246 = arith.constant 9.99999974E-6 : f32
    %578 = vector.broadcast %cst_246 : f32 to vector<8x1xf32>
    %579 = arith.addf %575, %578 : vector<8x1xf32>
    %580 = math.rsqrt %579 : vector<8x1xf32>
    %581 = vector.broadcast %580 : vector<8x1xf32> to vector<8x128xf32>
    %582 = arith.mulf %577, %581 : vector<8x128xf32>
    %c53 = arith.constant 53 : index
    %c0_247 = arith.constant 0 : index
    %583 = vector.load %arg9[%c53, %c0_247] : memref<57x128xf32, #tpu.memory_space<vmem>>, vector<1x128xf32>
    %584 = vector.broadcast %583 : vector<1x128xf32> to vector<8x128xf32>
    %585 = arith.mulf %582, %584 : vector<8x128xf32>
    %c54 = arith.constant 54 : index
    %c0_248 = arith.constant 0 : index
    %586 = vector.load %arg9[%c54, %c0_248] : memref<57x128xf32, #tpu.memory_space<vmem>>, vector<1x128xf32>
    %587 = vector.broadcast %586 : vector<1x128xf32> to vector<8x128xf32>
    %588 = arith.addf %585, %587 : vector<8x128xf32>
    %c29_249 = arith.constant 29 : index
    %c0_250 = arith.constant 0 : index
    %c0_251 = arith.constant 0 : index
    %589 = vector.load %arg8[%c29_249, %c0_250, %c0_251] : memref<35x128x128xf32, #tpu.memory_space<vmem>>, vector<1x128x128xf32>
    %590 = vector.shape_cast %589 : vector<1x128x128xf32> to vector<128x128xf32>
    %cst_252 = arith.constant dense<0.000000e+00> : vector<8x128xf32>
    %591 = tpu.matmul %588, %590, %cst_252 {dimension_numbers = #tpu.dot_dimension_numbers<[1], [0], [0], [1], [0, 0, 1, 1], [], []>} : vector<8x128xf32>, vector<128x128xf32>, vector<8x128xf32> -> vector<8x128xf32>
    %c45 = arith.constant 45 : index
    %c0_253 = arith.constant 0 : index
    %592 = vector.load %arg9[%c45, %c0_253] : memref<57x128xf32, #tpu.memory_space<vmem>>, vector<1x128xf32>
    %593 = vector.broadcast %592 : vector<1x128xf32> to vector<8x128xf32>
    %594 = arith.addf %591, %593 : vector<8x128xf32>
    %c30_254 = arith.constant 30 : index
    %c0_255 = arith.constant 0 : index
    %c0_256 = arith.constant 0 : index
    %595 = vector.load %arg8[%c30_254, %c0_255, %c0_256] : memref<35x128x128xf32, #tpu.memory_space<vmem>>, vector<1x128x128xf32>
    %596 = vector.shape_cast %595 : vector<1x128x128xf32> to vector<128x128xf32>
    %cst_257 = arith.constant dense<0.000000e+00> : vector<10x128xf32>
    %597 = tpu.matmul %297, %596, %cst_257 {dimension_numbers = #tpu.dot_dimension_numbers<[1], [0], [0], [1], [0, 0, 1, 1], [], []>} : vector<10x128xf32>, vector<128x128xf32>, vector<10x128xf32> -> vector<10x128xf32>
    %c46 = arith.constant 46 : index
    %c0_258 = arith.constant 0 : index
    %598 = vector.load %arg9[%c46, %c0_258] : memref<57x128xf32, #tpu.memory_space<vmem>>, vector<1x128xf32>
    %599 = vector.broadcast %598 : vector<1x128xf32> to vector<10x128xf32>
    %600 = arith.addf %597, %599 : vector<10x128xf32>
    %c31_259 = arith.constant 31 : index
    %c0_260 = arith.constant 0 : index
    %c0_261 = arith.constant 0 : index
    %601 = vector.load %arg8[%c31_259, %c0_260, %c0_261] : memref<35x128x128xf32, #tpu.memory_space<vmem>>, vector<1x128x128xf32>
    %602 = vector.shape_cast %601 : vector<1x128x128xf32> to vector<128x128xf32>
    %cst_262 = arith.constant dense<0.000000e+00> : vector<10x128xf32>
    %603 = tpu.matmul %297, %602, %cst_262 {dimension_numbers = #tpu.dot_dimension_numbers<[1], [0], [0], [1], [0, 0, 1, 1], [], []>} : vector<10x128xf32>, vector<128x128xf32>, vector<10x128xf32> -> vector<10x128xf32>
    %c47 = arith.constant 47 : index
    %c0_263 = arith.constant 0 : index
    %604 = vector.load %arg9[%c47, %c0_263] : memref<57x128xf32, #tpu.memory_space<vmem>>, vector<1x128xf32>
    %605 = vector.broadcast %604 : vector<1x128xf32> to vector<10x128xf32>
    %606 = arith.addf %603, %605 : vector<10x128xf32>
    %607 = vector.shape_cast %600 : vector<10x128xf32> to vector<1x10x128xf32>
    %608 = vector.broadcast %607 : vector<1x10x128xf32> to vector<4x10x128xf32>
    %609 = vector.broadcast %33 : vector<4x1x128xf32> to vector<4x10x128xf32>
    %610 = arith.mulf %608, %609 : vector<4x10x128xf32>
    %611 = vector.shape_cast %606 : vector<10x128xf32> to vector<1x10x128xf32>
    %612 = vector.broadcast %611 : vector<1x10x128xf32> to vector<4x10x128xf32>
    %613 = vector.broadcast %33 : vector<4x1x128xf32> to vector<4x10x128xf32>
    %614 = arith.mulf %612, %613 : vector<4x10x128xf32>
    %615 = vector.shape_cast %594 : vector<8x128xf32> to vector<1x8x128xf32>
    %616 = vector.shape_cast %615 : vector<1x8x128xf32> to vector<1x8x128xf32>
    %617 = vector.broadcast %616 : vector<1x8x128xf32> to vector<4x8x128xf32>
    "tpu.trace_start"() <{level = 10 : i32, message = "hqd,hkd->hqk"}> : () -> ()
    %cst_264 = arith.constant dense<0.000000e+00> : vector<4x8x10xf32>
    %618 = tpu.matmul %617, %610, %cst_264 {dimension_numbers = #tpu.dot_dimension_numbers<[2], [2], [1], [1], [0, 0, 0, 1, 1, 1], [0], [0]>} : vector<4x8x128xf32>, vector<4x10x128xf32>, vector<4x8x10xf32> -> vector<4x8x10xf32>
    "tpu.trace_stop"() : () -> ()
    %619 = vector.shape_cast %39 : vector<1x10xf32> to vector<1x1x10xf32>
    %620 = vector.broadcast %619 : vector<1x1x10xf32> to vector<4x8x10xf32>
    %621 = arith.addf %618, %620 : vector<4x8x10xf32>
    %622 = math.exp %621 : vector<4x8x10xf32>
    %cst_265 = arith.constant dense<0.000000e+00> : vector<4x8xf32>
    %623 = vector.multi_reduction <add>, %622, %cst_265 [2] : vector<4x8x10xf32> to vector<4x8xf32>
    %624 = vector.shape_cast %623 : vector<4x8xf32> to vector<4x8x1xf32>
    %625 = tpu.reciprocal %624 {approx = true} : vector<4x8x1xf32> -> vector<4x8x1xf32>
    %626 = vector.broadcast %625 : vector<4x8x1xf32> to vector<4x8x10xf32>
    %627 = arith.mulf %622, %626 : vector<4x8x10xf32>
    "tpu.trace_start"() <{level = 10 : i32, message = "hqk,hkd->hqd"}> : () -> ()
    %cst_266 = arith.constant dense<0.000000e+00> : vector<4x8x128xf32>
    %628 = tpu.matmul %627, %614, %cst_266 {dimension_numbers = #tpu.dot_dimension_numbers<[2], [1], [1], [2], [0, 0, 0, 1, 1, 2], [0], [0]>} : vector<4x8x10xf32>, vector<4x10x128xf32>, vector<4x8x128xf32> -> vector<4x8x128xf32>
    "tpu.trace_stop"() : () -> ()
    %cst_267 = arith.constant dense<0.000000e+00> : vector<8x128xf32>
    %629 = vector.multi_reduction <add>, %628, %cst_267 [0] : vector<4x8x128xf32> to vector<8x128xf32>
    %c32_268 = arith.constant 32 : index
    %c0_269 = arith.constant 0 : index
    %c0_270 = arith.constant 0 : index
    %630 = vector.load %arg8[%c32_268, %c0_269, %c0_270] : memref<35x128x128xf32, #tpu.memory_space<vmem>>, vector<1x128x128xf32>
    %631 = vector.shape_cast %630 : vector<1x128x128xf32> to vector<128x128xf32>
    %cst_271 = arith.constant dense<0.000000e+00> : vector<8x128xf32>
    %632 = tpu.matmul %629, %631, %cst_271 {dimension_numbers = #tpu.dot_dimension_numbers<[1], [0], [0], [1], [0, 0, 1, 1], [], []>} : vector<8x128xf32>, vector<128x128xf32>, vector<8x128xf32> -> vector<8x128xf32>
    %c48 = arith.constant 48 : index
    %c0_272 = arith.constant 0 : index
    %633 = vector.load %arg9[%c48, %c0_272] : memref<57x128xf32, #tpu.memory_space<vmem>>, vector<1x128xf32>
    %634 = vector.broadcast %633 : vector<1x128xf32> to vector<8x128xf32>
    %635 = arith.addf %632, %634 : vector<8x128xf32>
    %636 = arith.addf %564, %635 : vector<8x128xf32>
    %cst_273 = arith.constant dense<0.000000e+00> : vector<8xf32>
    %637 = vector.multi_reduction <add>, %636, %cst_273 [1] : vector<8x128xf32> to vector<8xf32>
    %638 = vector.shape_cast %637 : vector<8xf32> to vector<8x1xf32>
    %639 = arith.mulf %636, %636 : vector<8x128xf32>
    %cst_274 = arith.constant dense<0.000000e+00> : vector<8xf32>
    %640 = vector.multi_reduction <add>, %639, %cst_274 [1] : vector<8x128xf32> to vector<8xf32>
    %641 = vector.shape_cast %640 : vector<8xf32> to vector<8x1xf32>
    %cst_275 = arith.constant 3.125000e-02 : f32
    %642 = vector.broadcast %cst_275 : f32 to vector<8x1xf32>
    %643 = arith.mulf %638, %642 : vector<8x1xf32>
    %cst_276 = arith.constant 3.125000e-02 : f32
    %644 = vector.broadcast %cst_276 : f32 to vector<8x1xf32>
    %645 = arith.mulf %641, %644 : vector<8x1xf32>
    %646 = arith.mulf %643, %643 : vector<8x1xf32>
    %647 = arith.subf %645, %646 : vector<8x1xf32>
    %648 = vector.broadcast %643 : vector<8x1xf32> to vector<8x128xf32>
    %649 = arith.subf %636, %648 : vector<8x128xf32>
    %cst_277 = arith.constant 9.99999974E-6 : f32
    %650 = vector.broadcast %cst_277 : f32 to vector<8x1xf32>
    %651 = arith.addf %647, %650 : vector<8x1xf32>
    %652 = math.rsqrt %651 : vector<8x1xf32>
    %653 = vector.broadcast %652 : vector<8x1xf32> to vector<8x128xf32>
    %654 = arith.mulf %649, %653 : vector<8x128xf32>
    %c55 = arith.constant 55 : index
    %c0_278 = arith.constant 0 : index
    %655 = vector.load %arg9[%c55, %c0_278] : memref<57x128xf32, #tpu.memory_space<vmem>>, vector<1x128xf32>
    %656 = vector.broadcast %655 : vector<1x128xf32> to vector<8x128xf32>
    %657 = arith.mulf %654, %656 : vector<8x128xf32>
    %c56 = arith.constant 56 : index
    %c0_279 = arith.constant 0 : index
    %658 = vector.load %arg9[%c56, %c0_279] : memref<57x128xf32, #tpu.memory_space<vmem>>, vector<1x128xf32>
    %659 = vector.broadcast %658 : vector<1x128xf32> to vector<8x128xf32>
    %660 = arith.addf %657, %659 : vector<8x128xf32>
    %c33_280 = arith.constant 33 : index
    %c0_281 = arith.constant 0 : index
    %c0_282 = arith.constant 0 : index
    %661 = vector.load %arg8[%c33_280, %c0_281, %c0_282] : memref<35x128x128xf32, #tpu.memory_space<vmem>>, vector<1x128x128xf32>
    %662 = vector.shape_cast %661 : vector<1x128x128xf32> to vector<128x128xf32>
    %cst_283 = arith.constant dense<0.000000e+00> : vector<8x128xf32>
    %663 = tpu.matmul %660, %662, %cst_283 {dimension_numbers = #tpu.dot_dimension_numbers<[1], [0], [0], [1], [0, 0, 1, 1], [], []>} : vector<8x128xf32>, vector<128x128xf32>, vector<8x128xf32> -> vector<8x128xf32>
    %c49 = arith.constant 49 : index
    %c0_284 = arith.constant 0 : index
    %664 = vector.load %arg9[%c49, %c0_284] : memref<57x128xf32, #tpu.memory_space<vmem>>, vector<1x128xf32>
    %665 = vector.broadcast %664 : vector<1x128xf32> to vector<8x128xf32>
    %666 = arith.addf %663, %665 : vector<8x128xf32>
    %cst_285 = arith.constant 0.000000e+00 : f32
    %667 = vector.broadcast %cst_285 : f32 to vector<8x128xf32>
    %668 = arith.maximumf %666, %667 : vector<8x128xf32>
    %c34_286 = arith.constant 34 : index
    %c0_287 = arith.constant 0 : index
    %c0_288 = arith.constant 0 : index
    %669 = vector.load %arg8[%c34_286, %c0_287, %c0_288] : memref<35x128x128xf32, #tpu.memory_space<vmem>>, vector<1x128x128xf32>
    %670 = vector.shape_cast %669 : vector<1x128x128xf32> to vector<128x128xf32>
    %cst_289 = arith.constant dense<0.000000e+00> : vector<8x128xf32>
    %671 = tpu.matmul %668, %670, %cst_289 {dimension_numbers = #tpu.dot_dimension_numbers<[1], [0], [0], [1], [0, 0, 1, 1], [], []>} : vector<8x128xf32>, vector<128x128xf32>, vector<8x128xf32> -> vector<8x128xf32>
    %c50 = arith.constant 50 : index
    %c0_290 = arith.constant 0 : index
    %672 = vector.load %arg9[%c50, %c0_290] : memref<57x128xf32, #tpu.memory_space<vmem>>, vector<1x128xf32>
    %673 = vector.broadcast %672 : vector<1x128xf32> to vector<8x128xf32>
    %674 = arith.addf %671, %673 : vector<8x128xf32>
    %675 = arith.addf %636, %674 : vector<8x128xf32>
    %cst_291 = arith.constant dense<0.000000e+00> : vector<8xf32>
    %676 = vector.multi_reduction <add>, %675, %cst_291 [1] : vector<8x128xf32> to vector<8xf32>
    %677 = vector.shape_cast %676 : vector<8xf32> to vector<8x1xf32>
    %678 = arith.mulf %675, %675 : vector<8x128xf32>
    %cst_292 = arith.constant dense<0.000000e+00> : vector<8xf32>
    %679 = vector.multi_reduction <add>, %678, %cst_292 [1] : vector<8x128xf32> to vector<8xf32>
    %680 = vector.shape_cast %679 : vector<8xf32> to vector<8x1xf32>
    %cst_293 = arith.constant 3.125000e-02 : f32
    %681 = vector.broadcast %cst_293 : f32 to vector<8x1xf32>
    %682 = arith.mulf %677, %681 : vector<8x1xf32>
    %cst_294 = arith.constant 3.125000e-02 : f32
    %683 = vector.broadcast %cst_294 : f32 to vector<8x1xf32>
    %684 = arith.mulf %680, %683 : vector<8x1xf32>
    %685 = arith.mulf %682, %682 : vector<8x1xf32>
    %686 = arith.subf %684, %685 : vector<8x1xf32>
    %687 = vector.broadcast %682 : vector<8x1xf32> to vector<8x128xf32>
    %688 = arith.subf %675, %687 : vector<8x128xf32>
    %cst_295 = arith.constant 9.99999974E-6 : f32
    %689 = vector.broadcast %cst_295 : f32 to vector<8x1xf32>
    %690 = arith.addf %686, %689 : vector<8x1xf32>
    %691 = math.rsqrt %690 : vector<8x1xf32>
    %692 = vector.broadcast %691 : vector<8x1xf32> to vector<8x128xf32>
    %693 = arith.mulf %688, %692 : vector<8x128xf32>
    %c3_296 = arith.constant 3 : index
    %c0_297 = arith.constant 0 : index
    %694 = vector.load %arg9[%c3_296, %c0_297] : memref<57x128xf32, #tpu.memory_space<vmem>>, vector<1x128xf32>
    %695 = vector.broadcast %694 : vector<1x128xf32> to vector<8x128xf32>
    %696 = arith.mulf %693, %695 : vector<8x128xf32>
    %c4_298 = arith.constant 4 : index
    %c0_299 = arith.constant 0 : index
    %697 = vector.load %arg9[%c4_298, %c0_299] : memref<57x128xf32, #tpu.memory_space<vmem>>, vector<1x128xf32>
    %698 = vector.broadcast %697 : vector<1x128xf32> to vector<8x128xf32>
    %699 = arith.addf %696, %698 : vector<8x128xf32>
    %c2_300 = arith.constant 2 : index
    %c0_301 = arith.constant 0 : index
    %c0_302 = arith.constant 0 : index
    %700 = vector.load %arg8[%c2_300, %c0_301, %c0_302] : memref<35x128x128xf32, #tpu.memory_space<vmem>>, vector<1x128x128xf32>
    %701 = vector.shape_cast %700 : vector<1x128x128xf32> to vector<128x128xf32>
    %cst_303 = arith.constant dense<0.000000e+00> : vector<8x128xf32>
    %702 = tpu.matmul %699, %701, %cst_303 {dimension_numbers = #tpu.dot_dimension_numbers<[1], [0], [0], [1], [0, 0, 1, 1], [], []>} : vector<8x128xf32>, vector<128x128xf32>, vector<8x128xf32> -> vector<8x128xf32>
    %c0_304 = arith.constant 0 : index
    %c0_305 = arith.constant 0 : index
    %703 = vector.load %arg9[%c0_304, %c0_305] : memref<57x128xf32, #tpu.memory_space<vmem>>, vector<1x128xf32>
    %704 = vector.broadcast %703 : vector<1x128xf32> to vector<8x128xf32>
    %705 = arith.addf %702, %704 : vector<8x128xf32>
    %c0_306 = arith.constant 0 : index
    %c0_307 = arith.constant 0 : index
    %c0_308 = arith.constant 0 : index
    %706 = vector.load %arg10[%c0_306, %c0_307, %c0_308] : memref<1x8x128xf32, #tpu.memory_space<vmem>>, vector<1x8x128xf32>
    %707 = vector.shape_cast %706 : vector<1x8x128xf32> to vector<8x128xf32>
    %708 = vector.shape_cast %705 : vector<8x128xf32> to vector<1x8x128xf32>
    tpu.vector_store %arg10[%c0_306, %c0_307, %c0_308], %708 {strides = array<i32>} : memref<1x8x128xf32, #tpu.memory_space<vmem>>, vector<1x8x128xf32>,
    return
  }
  func.func @transform_0(%arg0: i32) -> (i32, i32, i32) {
    %c0_i32 = arith.constant 0 : i32
    %c0_i32_0 = arith.constant 0 : i32
    %c0_i32_1 = arith.constant 0 : i32
    return %arg0, %c0_i32, %c0_i32_0 : i32, i32, i32
  }
  func.func @transform_1(%arg0: i32) -> (i32, i32, i32) {
    %c0_i32 = arith.constant 0 : i32
    %c0_i32_0 = arith.constant 0 : i32
    %c0_i32_1 = arith.constant 0 : i32
    return %arg0, %c0_i32, %c0_i32_0 : i32, i32, i32
  }
  func.func @transform_2(%arg0: i32) -> (i32, i32) {
    %c0_i32 = arith.constant 0 : i32
    %c0_i32_0 = arith.constant 0 : i32
    %c0_i32_1 = arith.constant 0 : i32
    return %c0_i32, %c0_i32_0 : i32, i32
  }
  func.func @transform_3(%arg0: i32) -> (i32, i32) {
    %c0_i32 = arith.constant 0 : i32
    %c0_i32_0 = arith.constant 0 : i32
    %c0_i32_1 = arith.constant 0 : i32
    return %c0_i32, %c0_i32_0 : i32, i32
  }
  func.func @transform_4(%arg0: i32) -> (i32, i32, i32) {
    %c0_i32 = arith.constant 0 : i32
    %c0_i32_0 = arith.constant 0 : i32
    %c0_i32_1 = arith.constant 0 : i32
    return %arg0, %c0_i32, %c0_i32_0 : i32, i32, i32
  }
  func.func @transform_5(%arg0: i32) -> (i32, i32, i32) {
    %c0_i32 = arith.constant 0 : i32
    %c0_i32_0 = arith.constant 0 : i32
    %c0_i32_1 = arith.constant 0 : i32
    return %arg0, %c0_i32, %c0_i32_0 : i32, i32, i32
  }
  func.func @transform_6(%arg0: i32) -> (i32, i32, i32) {
    %c0_i32 = arith.constant 0 : i32
    %c0_i32_0 = arith.constant 0 : i32
    %c0_i32_1 = arith.constant 0 : i32
    return %arg0, %c0_i32, %c0_i32_0 : i32, i32, i32
  }
  func.func @transform_7(%arg0: i32) -> (i32, i32, i32) {
    %c0_i32 = arith.constant 0 : i32
    %c0_i32_0 = arith.constant 0 : i32
    %c0_i32_1 = arith.constant 0 : i32
    %c0_i32_2 = arith.constant 0 : i32
    return %c0_i32, %c0_i32_0, %c0_i32_1 : i32, i32, i32
  }
  func.func @transform_8(%arg0: i32) -> (i32, i32) {
    %c0_i32 = arith.constant 0 : i32
    %c0_i32_0 = arith.constant 0 : i32
    %c0_i32_1 = arith.constant 0 : i32
    return %c0_i32, %c0_i32_0 : i32, i32
  }
  func.func @transform_9(%arg0: i32) -> (i32, i32, i32) {
    %c0_i32 = arith.constant 0 : i32
    %c0_i32_0 = arith.constant 0 : i32
    %c0_i32_1 = arith.constant 0 : i32
    return %arg0, %c0_i32, %c0_i32_0 : i32, i32, i32
  }
}

</mosaic_0001>

<llo_original>
// kernel: seq2seq_forward.1
$region0: #{seq2seq_forward.1}
  #allocation0 [shape = 'u32[]', space=smem, size = 0x4, offset = 0x4, fixed_abs, tag = 'smem constant byte address 0x4 - core index']
  #allocation1 [shape = 'u32[144,128]{1,0:T(1,128)}', space=vmem, size = 0x12000, scoped, tag = 'internal scratch']
  %s0 = inlined_call_operand.vmem [shape: s32[2,10,1], index: 0, kind: input, shape index: {}]
  %s1 = inlined_call_operand.vmem [shape: s32[2,8,1], index: 1, kind: input, shape index: {}]
  %s2 = inlined_call_operand.vmem [shape: f32[10,128], index: 2, kind: input, shape index: {}]
  %s3 = inlined_call_operand.vmem [shape: f32[8,128], index: 3, kind: input, shape index: {}]
  %s4 = inlined_call_operand.vmem [shape: f32[2,10,10], index: 4, kind: input, shape index: {}]
  %s5 = inlined_call_operand.vmem [shape: f32[2,8,8], index: 5, kind: input, shape index: {}]
  %s6 = inlined_call_operand.vmem [shape: f32[2,1,10], index: 6, kind: input, shape index: {}]
  %s7 = inlined_call_operand.hbm [shape: f32[35,128,128], index: 7, kind: input, shape index: {}]
  %s8 = inlined_call_operand.hbm [shape: f32[57,128], index: 8, kind: input, shape index: {}]
  %s9 = inlined_call_operand.vmem [shape: f32[2,8,128], index: 9, kind: output, shape index: {}]
  %s10 = sld [smem:[#allocation0]]
  $region77: #{seq2seq_forward.1} parent=0
    _
  %s12 = ssub.s32 1, %s10
  %s13 = scalar_select 0, %s12, %s10
  $region1: #{seq2seq_forward.1} parent=0
    #allocation2 [shape = 'u8[2293760]{0}', space=vmem, size = 0x230000, scoped, tag = 'input window, operand 7, single buffered']
    #allocation3 [shape = 's32[2]{0}', space=sflag, size = 0x8, scoped, tag = 'scoped memory for seq2seq_forward.1']
    #allocation4 [shape = 'u8[32768]{0}', space=vmem, size = 0x8000, scoped, tag = 'input window, operand 8, single buffered']
    #allocation5 [shape = 's32[1]{0}', space=sflag, size = 0x4, scoped, tag = 'scoped memory for seq2seq_forward.1']
    %14 = vsyncpa [#allocation3], 0
    %15 = vsyncpa [#allocation5], 0
    loop: start=0, step=1, limit=4
    $region2: #{seq2seq_forward.1} parent=1 // loop_pre_header
      _
    $region3: #{seq2seq_forward.1} parent=1 // loop_header
      %s17 = sphi 0, %s21
      %p18 = scmp.ge.s32.totalorder %s17, 4
      %s27 = sphi 0, %s29
      %s30 = sphi 0, %s27
      %s31 = sphi 0, %s30
      %s47 = sphi 0, %s31
      %s53 = sphi 0, %s55
      %s56 = sphi 0, %s53
      %s57 = sphi 0, %s56
      %s73 = sphi 0, %s57
      %s77 = sphi 0, %s77
      %s79 = sphi 0, %s77
      %s80 = sphi 0, %s79
      %s94 = sphi 0, %s80
      %s98 = sphi 0, %s98
      %s100 = sphi 0, %s98
      %s101 = sphi 0, %s100
      %s115 = sphi 0, %s101
      %s121 = sphi 0, %s123
      %s124 = sphi 0, %s121
      %s125 = sphi 0, %s124
      %s141 = sphi 0, %s125
      %s147 = sphi 0, %s149
      %s150 = sphi 0, %s147
      %s151 = sphi 0, %s150
      %s167 = sphi 0, %s151
      %s173 = sphi 0, %s175
      %s176 = sphi 0, %s173
      %s177 = sphi 0, %s176
      %s193 = sphi 0, %s177
      %s197 = sphi 0, %s197
      %s199 = sphi 0, %s197
      %s200 = sphi 0, %s199
      %s214 = sphi 0, %s200
      %s218 = sphi 0, %s218
      %s220 = sphi 0, %s218
      %s221 = sphi 0, %s220
      %s235 = sphi 0, %s221
      %s241 = sphi 0, %s243
      %s244 = sphi 0, %s241
      %s245 = sphi 0, %s244
      %s261 = sphi 0, %s245
    $region4: #{seq2seq_forward.1} parent=1 // loop_header_branch
      %20 = sbr.rel (%p18) target = $region8
    $region5: #{seq2seq_forward.1} parent=1 // loop_body
      %s22 = ssub.s32 %s17, 1
      %s23 = ssub.s32 %s17, 2
      %s24 = sadd.s32 %s17, 1
      %s25 = ssub.s32 %s17, %s24
      %p26 = scmp.eq.s32.totalorder %s25, 0
      %s28 = sadd.s32 %s27, 1
      %s29 = scalar_select %p26, %s27, %s28
      %p32 = pneg %p26
      %p33 = scmp.eq.s32.totalorder %s17, 1
      %p34 = por %p32, %p33
      %p35 = scmp.ne.s32.totalorder %s27, %s30
      %p36 = scmp.eq.s32.totalorder %s17, 0
      %p37 = por %p35, %p36
      %p38 = scmp.ne.s32.totalorder %s27, %s30
      %p39 = scmp.eq.s32.totalorder %s22, 1
      %p40 = por %p38, %p39
      %p41 = scmp.ne.s32.totalorder %s30, %s31
      %p42 = scmp.eq.s32.totalorder %s22, 0
      %p43 = por %p41, %p42
      %p44 = scmp.ne.s32.totalorder %s30, %s31
      %p45 = scmp.eq.s32.totalorder %s23, 1
      %p46 = por %p44, %p45
      %p48 = scmp.ne.s32.totalorder %s31, %s47
      %p49 = scmp.eq.s32.totalorder %s23, 0
      %p50 = por %p48, %p49
      %s51 = ssub.s32 %s17, %s24
      %p52 = scmp.eq.s32.totalorder %s51, 0
      %s54 = sadd.s32 %s53, 1
      %s55 = scalar_select %p52, %s53, %s54
      %p58 = pneg %p52
      %p59 = scmp.eq.s32.totalorder %s17, 1
      %p60 = por %p58, %p59
      %p61 = scmp.ne.s32.totalorder %s53, %s56
      %p62 = scmp.eq.s32.totalorder %s17, 0
      %p63 = por %p61, %p62
      %p64 = scmp.ne.s32.totalorder %s53, %s56
      %p65 = scmp.eq.s32.totalorder %s22, 1
      %p66 = por %p64, %p65
      %p67 = scmp.ne.s32.totalorder %s56, %s57
      %p68 = scmp.eq.s32.totalorder %s22, 0
      %p69 = por %p67, %p68
      %p70 = scmp.ne.s32.totalorder %s56, %s57
      %p71 = scmp.eq.s32.totalorder %s23, 1
      %p72 = por %p70, %p71
      %p74 = scmp.ne.s32.totalorder %s57, %s73
      %p75 = scmp.eq.s32.totalorder %s23, 0
      %p76 = por %p74, %p75
      %s78 = sadd.s32 %s77, 1
      %p81 = scmp.eq.s32.totalorder %s17, 1
      %p82 = scmp.ne.s32.totalorder %s77, %s79
      %p83 = scmp.eq.s32.totalorder %s17, 0
      %p84 = por %p82, %p83
      %p85 = scmp.ne.s32.totalorder %s77, %s79
      %p86 = scmp.eq.s32.totalorder %s22, 1
      %p87 = por %p85, %p86
      %p88 = scmp.ne.s32.totalorder %s79, %s80
      %p89 = scmp.eq.s32.totalorder %s22, 0
      %p90 = por %p88, %p89
      %p91 = scmp.ne.s32.totalorder %s79, %s80
      %p92 = scmp.eq.s32.totalorder %s23, 1
      %p93 = por %p91, %p92
      %p95 = scmp.ne.s32.totalorder %s80, %s94
      %p96 = scmp.eq.s32.totalorder %s23, 0
      %p97 = por %p95, %p96
      %s99 = sadd.s32 %s98, 1
      %p102 = scmp.eq.s32.totalorder %s17, 1
      %p103 = scmp.ne.s32.totalorder %s98, %s100
      %p104 = scmp.eq.s32.totalorder %s17, 0
      %p105 = por %p103, %p104
      %p106 = scmp.ne.s32.totalorder %s98, %s100
      %p107 = scmp.eq.s32.totalorder %s22, 1
      %p108 = por %p106, %p107
      %p109 = scmp.ne.s32.totalorder %s100, %s101
      %p110 = scmp.eq.s32.totalorder %s22, 0
      %p111 = por %p109, %p110
      %p112 = scmp.ne.s32.totalorder %s100, %s101
      %p113 = scmp.eq.s32.totalorder %s23, 1
      %p114 = por %p112, %p113
      %p116 = scmp.ne.s32.totalorder %s101, %s115
      %p117 = scmp.eq.s32.totalorder %s23, 0
      %p118 = por %p116, %p117
      %s119 = ssub.s32 %s17, %s24
      %p120 = scmp.eq.s32.totalorder %s119, 0
      %s122 = sadd.s32 %s121, 1
      %s123 = scalar_select %p120, %s121, %s122
      %p126 = pneg %p120
      %p127 = scmp.eq.s32.totalorder %s17, 1
      %p128 = por %p126, %p127
      %p129 = scmp.ne.s32.totalorder %s121, %s124
      %p130 = scmp.eq.s32.totalorder %s17, 0
      %p131 = por %p129, %p130
      %p132 = scmp.ne.s32.totalorder %s121, %s124
      %p133 = scmp.eq.s32.totalorder %s22, 1
      %p134 = por %p132, %p133
      %p135 = scmp.ne.s32.totalorder %s124, %s125
      %p136 = scmp.eq.s32.totalorder %s22, 0
      %p137 = por %p135, %p136
      %p138 = scmp.ne.s32.totalorder %s124, %s125
      %p139 = scmp.eq.s32.totalorder %s23, 1
      %p140 = por %p138, %p139
      %p142 = scmp.ne.s32.totalorder %s125, %s141
      %p143 = scmp.eq.s32.totalorder %s23, 0
      %p144 = por %p142, %p143
      %s145 = ssub.s32 %s17, %s24
      %p146 = scmp.eq.s32.totalorder %s145, 0
      %s148 = sadd.s32 %s147, 1
      %s149 = scalar_select %p146, %s147, %s148
      %p152 = pneg %p146
      %p153 = scmp.eq.s32.totalorder %s17, 1
      %p154 = por %p152, %p153
      %p155 = scmp.ne.s32.totalorder %s147, %s150
      %p156 = scmp.eq.s32.totalorder %s17, 0
      %p157 = por %p155, %p156
      %p158 = scmp.ne.s32.totalorder %s147, %s150
      %p159 = scmp.eq.s32.totalorder %s22, 1
      %p160 = por %p158, %p159
      %p161 = scmp.ne.s32.totalorder %s150, %s151
      %p162 = scmp.eq.s32.totalorder %s22, 0
      %p163 = por %p161, %p162
      %p164 = scmp.ne.s32.totalorder %s150, %s151
      %p165 = scmp.eq.s32.totalorder %s23, 1
      %p166 = por %p164, %p165
      %p168 = scmp.ne.s32.totalorder %s151, %s167
      %p169 = scmp.eq.s32.totalorder %s23, 0
      %p170 = por %p168, %p169
      %s171 = ssub.s32 %s17, %s24
      %p172 = scmp.eq.s32.totalorder %s171, 0
      %s174 = sadd.s32 %s173, 1
      %s175 = scalar_select %p172, %s173, %s174
      %p178 = pneg %p172
      %p179 = scmp.eq.s32.totalorder %s17, 1
      %p180 = por %p178, %p179
      %p181 = scmp.ne.s32.totalorder %s173, %s176
      %p182 = scmp.eq.s32.totalorder %s17, 0
      %p183 = por %p181, %p182
      %p184 = scmp.ne.s32.totalorder %s173, %s176
      %p185 = scmp.eq.s32.totalorder %s22, 1
      %p186 = por %p184, %p185
      %p187 = scmp.ne.s32.totalorder %s176, %s177
      %p188 = scmp.eq.s32.totalorder %s22, 0
      %p189 = por %p187, %p188
      %p190 = scmp.ne.s32.totalorder %s176, %s177
      %p191 = scmp.eq.s32.totalorder %s23, 1
      %p192 = por %p190, %p191
      %p194 = scmp.ne.s32.totalorder %s177, %s193
      %p195 = scmp.eq.s32.totalorder %s23, 0
      %p196 = por %p194, %p195
      %s198 = sadd.s32 %s197, 1
      %p201 = scmp.eq.s32.totalorder %s17, 1
      %p202 = scmp.ne.s32.totalorder %s197, %s199
      %p203 = scmp.eq.s32.totalorder %s17, 0
      %p204 = por %p202, %p203
      %p205 = scmp.ne.s32.totalorder %s197, %s199
      %p206 = scmp.eq.s32.totalorder %s22, 1
      %p207 = por %p205, %p206
      %p208 = scmp.ne.s32.totalorder %s199, %s200
      %p209 = scmp.eq.s32.totalorder %s22, 0
      %p210 = por %p208, %p209
      %p211 = scmp.ne.s32.totalorder %s199, %s200
      %p212 = scmp.eq.s32.totalorder %s23, 1
      %p213 = por %p211, %p212
      %p215 = scmp.ne.s32.totalorder %s200, %s214
      %p216 = scmp.eq.s32.totalorder %s23, 0
      %p217 = por %p215, %p216
      %s219 = sadd.s32 %s218, 1
      %p222 = scmp.eq.s32.totalorder %s17, 1
      %p223 = scmp.ne.s32.totalorder %s218, %s220
      %p224 = scmp.eq.s32.totalorder %s17, 0
      %p225 = por %p223, %p224
      %p226 = scmp.ne.s32.totalorder %s218, %s220
      %p227 = scmp.eq.s32.totalorder %s22, 1
      %p228 = por %p226, %p227
      %p229 = scmp.ne.s32.totalorder %s220, %s221
      %p230 = scmp.eq.s32.totalorder %s22, 0
      %p231 = por %p229, %p230
      %p232 = scmp.ne.s32.totalorder %s220, %s221
      %p233 = scmp.eq.s32.totalorder %s23, 1
      %p234 = por %p232, %p233
      %p236 = scmp.ne.s32.totalorder %s221, %s235
      %p237 = scmp.eq.s32.totalorder %s23, 0
      %p238 = por %p236, %p237
      %s239 = ssub.s32 %s17, %s24
      %p240 = scmp.eq.s32.totalorder %s239, 0
      %s242 = sadd.s32 %s241, 1
      %s243 = scalar_select %p240, %s241, %s242
      %p246 = pneg %p240
      %p247 = scmp.eq.s32.totalorder %s17, 1
      %p248 = por %p246, %p247
      %p249 = scmp.ne.s32.totalorder %s241, %s244
      %p250 = scmp.eq.s32.totalorder %s17, 0
      %p251 = por %p249, %p250
      %p252 = scmp.ne.s32.totalorder %s241, %s244
      %p253 = scmp.eq.s32.totalorder %s22, 1
      %p254 = por %p252, %p253
      %p255 = scmp.ne.s32.totalorder %s244, %s245
      %p256 = scmp.eq.s32.totalorder %s22, 0
      %p257 = por %p255, %p256
      %p258 = scmp.ne.s32.totalorder %s244, %s245
      %p259 = scmp.eq.s32.totalorder %s23, 1
      %p260 = por %p258, %p259
      %p262 = scmp.ne.s32.totalorder %s245, %s261
      %p263 = scmp.eq.s32.totalorder %s23, 0
      %p264 = por %p262, %p263
      %p265 = scmp.le.s32.totalorder 1, %s17
      %p266 = scmp.lt.s32.totalorder %s17, 3
      %p267 = pnand %p265, %p266
      %p268 = pneg %p267
      // Predicated region
      $region9: #{seq2seq_forward.1} parent=5 // pred_check
        _
      $region10: #{seq2seq_forward.1} parent=5 // pred_check_branch
        %270 = sbr.rel (%p267) target = $region12
      $region11: #{seq2seq_forward.1} parent=5 // pred_region
        %s271 = ssub.s32 %s17, 1
        // Predicated region
        $region13: #{seq2seq_forward.1} parent=11 // pred_check
          %p272 = pneg %p90
        $region14: #{seq2seq_forward.1} parent=11 // pred_check_branch
          %274 = sbr.rel (%p272) target = $region16
        $region15: #{seq2seq_forward.1} parent=11 // pred_region
          _
        $region16: #{seq2seq_forward.1} parent=11 // pred_fallthru
          _
        // Predicated region
        $region17: #{seq2seq_forward.1} parent=11 // pred_check
          %p275 = pneg %p111
        $region18: #{seq2seq_forward.1} parent=11 // pred_check_branch
          %277 = sbr.rel (%p275) target = $region20
        $region19: #{seq2seq_forward.1} parent=11 // pred_region
          _
        $region20: #{seq2seq_forward.1} parent=11 // pred_fallthru
          _
        // Predicated region
        $region21: #{seq2seq_forward.1} parent=11 // pred_check
          %p278 = pneg %p210
        $region22: #{seq2seq_forward.1} parent=11 // pred_check_branch
          %280 = sbr.rel (%p278) target = $region24
        $region23: #{seq2seq_forward.1} parent=11 // pred_region
          %s282 = ssub.s32 71680, 71680
          %283 = vsyncadd [#allocation3], %s282
          %s284 = sshll.u32 [#allocation2], 4
          %s285 = int_to_ptr.vmem [resolvable:$true] %s284
          %290 = dma.hbm_to_vmem [thread:$0]  %s7, 71680, %s285, [#allocation3], 128, 128, 8
        $region24: #{seq2seq_forward.1} parent=11 // pred_fallthru
          _
        // Predicated region
        $region25: #{seq2seq_forward.1} parent=11 // pred_check
          %p291 = pneg %p231
        $region26: #{seq2seq_forward.1} parent=11 // pred_check_branch
          %293 = sbr.rel (%p291) target = $region28
        $region27: #{seq2seq_forward.1} parent=11 // pred_region
          %s295 = ssub.s32 1024, 1024
          %296 = vsyncadd [#allocation5], %s295
          %s297 = sshll.u32 [#allocation4], 4
          %s298 = int_to_ptr.vmem [resolvable:$true] %s297
          %303 = dma.hbm_to_vmem [thread:$0]  %s8, 1024, %s298, [#allocation5], 128, 128, 8
        $region28: #{seq2seq_forward.1} parent=11 // pred_fallthru
          _
      $region12: #{seq2seq_forward.1} parent=5 // pred_fallthru
        _
      %p304 = scmp.lt.s32.totalorder %s17, 2
      // Predicated region
      $region29: #{seq2seq_forward.1} parent=5 // pred_check
        %p305 = pneg %p304
      $region30: #{seq2seq_forward.1} parent=5 // pred_check_branch
        %307 = sbr.rel (%p305) target = $region32
      $region31: #{seq2seq_forward.1} parent=5 // pred_region
        // Predicated region
        $region33: #{seq2seq_forward.1} parent=31 // pred_check
          %p308 = pneg %p37
        $region34: #{seq2seq_forward.1} parent=31 // pred_check_branch
          %310 = sbr.rel (%p308) target = $region36
        $region35: #{seq2seq_forward.1} parent=31 // pred_region
          %p311 = scmp.lt.s32.totalorder %s17, 1
          %s312 = scalar_select %p311, %s17, 1
          %s313 = smul.addr %s312, 2
          %s314 = smul.addr %s313, 8
          %s315 = scalar_lea.vmem %s0, %s314
        $region36: #{seq2seq_forward.1} parent=31 // pred_fallthru
          _
        // Predicated region
        $region37: #{seq2seq_forward.1} parent=31 // pred_check
          %p316 = pneg %p63
        $region38: #{seq2seq_forward.1} parent=31 // pred_check_branch
          %318 = sbr.rel (%p316) target = $region40
        $region39: #{seq2seq_forward.1} parent=31 // pred_region
          %p319 = scmp.lt.s32.totalorder %s17, 1
          %s320 = scalar_select %p319, %s17, 1
          %s321 = smul.addr %s320, 8
          %s322 = scalar_lea.vmem %s1, %s321
        $region40: #{seq2seq_forward.1} parent=31 // pred_fallthru
          _
        // Predicated region
        $region41: #{seq2seq_forward.1} parent=31 // pred_check
          %p323 = pneg %p131
        $region42: #{seq2seq_forward.1} parent=31 // pred_check_branch
          %325 = sbr.rel (%p323) target = $region44
        $region43: #{seq2seq_forward.1} parent=31 // pred_region
          %p326 = scmp.lt.s32.totalorder %s17, 1
          %s327 = scalar_select %p326, %s17, 1
          %s328 = smul.addr %s327, 2
          %s329 = smul.addr %s328, 8
          %s330 = scalar_lea.vmem %s4, %s329
        $region44: #{seq2seq_forward.1} parent=31 // pred_fallthru
          _
        // Predicated region
        $region45: #{seq2seq_forward.1} parent=31 // pred_check
          %p331 = pneg %p157
        $region46: #{seq2seq_forward.1} parent=31 // pred_check_branch
          %333 = sbr.rel (%p331) target = $region48
        $region47: #{seq2seq_forward.1} parent=31 // pred_region
          %p334 = scmp.lt.s32.totalorder %s17, 1
          %s335 = scalar_select %p334, %s17, 1
          %s336 = smul.addr %s335, 8
          %s337 = scalar_lea.vmem %s5, %s336
        $region48: #{seq2seq_forward.1} parent=31 // pred_fallthru
          _
        // Predicated region
        $region49: #{seq2seq_forward.1} parent=31 // pred_check
          %p338 = pneg %p183
        $region50: #{seq2seq_forward.1} parent=31 // pred_check_branch
          %340 = sbr.rel (%p338) target = $region52
        $region51: #{seq2seq_forward.1} parent=31 // pred_region
          %p341 = scmp.lt.s32.totalorder %s17, 1
          %s342 = scalar_select %p341, %s17, 1
          %s343 = scalar_lea.vmem %s6, %s342
        $region52: #{seq2seq_forward.1} parent=31 // pred_fallthru
          _
      $region32: #{seq2seq_forward.1} parent=5 // pred_fallthru
        _
      %p344 = scmp.le.s32.totalorder 1, %s17
      %p345 = scmp.lt.s32.totalorder %s17, 3
      %p346 = pnand %p344, %p345
      %p347 = pneg %p346
      // Predicated region
      $region53: #{seq2seq_forward.1} parent=5 // pred_check
        _
      $region54: #{seq2seq_forward.1} parent=5 // pred_check_branch
        %349 = sbr.rel (%p346) target = $region56
      $region55: #{seq2seq_forward.1} parent=5 // pred_region
        %s350 = ssub.s32 %s17, 1
        // Predicated region
        $region57: #{seq2seq_forward.1} parent=55 // pred_check
          %p351 = pneg %p210
        $region58: #{seq2seq_forward.1} parent=55 // pred_check_branch
          %353 = sbr.rel (%p351) target = $region60
        $region59: #{seq2seq_forward.1} parent=55 // pred_region
          %354 = dma.done [#allocation3], 71680
        $region60: #{seq2seq_forward.1} parent=55 // pred_fallthru
          _
        // Predicated region
        $region61: #{seq2seq_forward.1} parent=55 // pred_check
          %p355 = pneg %p231
        $region62: #{seq2seq_forward.1} parent=55 // pred_check_branch
          %357 = sbr.rel (%p355) target = $region64
        $region63: #{seq2seq_forward.1} parent=55 // pred_region
          %358 = dma.done [#allocation5], 1024
        $region64: #{seq2seq_forward.1} parent=55 // pred_fallthru
          _
        %p359 = scmp.lt.s32.totalorder %s22, 1
        %s360 = scalar_select %p359, %s22, 1
        %s361 = smul.addr %s360, 2
        %s362 = smul.addr %s361, 8
        %s363 = scalar_lea.vmem %s0, %s362
        %p364 = pneg %p43
        %p365 = pneg %p40
        %p366 = scmp.lt.s32.totalorder %s22, 1
        %s367 = scalar_select %p366, %s22, 1
        %s368 = smul.addr %s367, 8
        %s369 = scalar_lea.vmem %s1, %s368
        %p370 = pneg %p69
        %p371 = pneg %p66
        %p372 = pneg %p90
        %p373 = pneg %p87
        %p374 = pneg %p111
        %p375 = pneg %p108
        %p376 = scmp.lt.s32.totalorder %s22, 1
        %s377 = scalar_select %p376, %s22, 1
        %s378 = smul.addr %s377, 2
        %s379 = smul.addr %s378, 8
        %s380 = scalar_lea.vmem %s4, %s379
        %p381 = pneg %p137
        %p382 = pneg %p134
        %p383 = scmp.lt.s32.totalorder %s22, 1
        %s384 = scalar_select %p383, %s22, 1
        %s385 = smul.addr %s384, 8
        %s386 = scalar_lea.vmem %s5, %s385
        %p387 = pneg %p163
        %p388 = pneg %p160
        %p389 = scmp.lt.s32.totalorder %s22, 1
        %s390 = scalar_select %p389, %s22, 1
        %s391 = scalar_lea.vmem %s6, %s390
        %p392 = pneg %p189
        %p393 = pneg %p186
        %p394 = pneg %p210
        %p395 = pneg %p207
        %p396 = pneg %p231
        %p397 = pneg %p228
        %p398 = pneg %p257
        %p399 = pneg %p254
        %p400 = scmp.lt.s32.totalorder %s22, 1
        %s401 = scalar_select %p400, %s22, 1
        %s402 = smul.addr %s401, 8
        %s403 = scalar_lea.vmem %s9, %s402
        %p404 = scmp.lt.s32.totalorder %s22, 1
        %s405 = scalar_select %p404, %s22, 1
        %s406 = smul.addr %s405, 2
        %s407 = smul.addr %s406, 8
        %s408 = scalar_lea.vmem %s0, %s407
        %p409 = scmp.lt.s32.totalorder %s22, 1
        %s410 = scalar_select %p409, %s22, 1
        %s411 = smul.addr %s410, 8
        %s412 = scalar_lea.vmem %s1, %s411
        %p413 = scmp.lt.s32.totalorder %s22, 1
        %s414 = scalar_select %p413, %s22, 1
        %s415 = smul.addr %s414, 2
        %s416 = smul.addr %s415, 8
        %s417 = scalar_lea.vmem %s4, %s416
        %p418 = scmp.lt.s32.totalorder %s22, 1
        %s419 = scalar_select %p418, %s22, 1
        %s420 = smul.addr %s419, 8
        %s421 = scalar_lea.vmem %s5, %s420
        %p422 = scmp.lt.s32.totalorder %s22, 1
        %s423 = scalar_select %p422, %s22, 1
        %s424 = scalar_lea.vmem %s6, %s423
        %p425 = scmp.lt.s32.totalorder %s22, 1
        %s426 = scalar_select %p425, %s22, 1
        %s427 = smul.addr %s426, 8
        %s428 = scalar_lea.vmem %s9, %s427
        %v429 = vlaneseq
        %v430 = vand.u32 %v429, 127
        %vm431 = vcmp.ge.s32.totalorder %v430, 0
        %vm432 = vcmp.lt.s32.totalorder %v430, 8
        %vm433 = vmand %vm431, %vm432
        %v434 = vsel %vm433, 1, 0
        %v435 = vcvt.s32.f32 %v434
        %vm436 = vcmp.ge.s32.totalorder %v430, 8
        %vm437 = vcmp.lt.s32.totalorder %v430, 16
        %vm438 = vmand %vm436, %vm437
        %v439 = vsel %vm438, 1, 0
        %v440 = vcvt.s32.f32 %v439
        %vm441 = vcmp.ge.s32.totalorder %v430, 16
        %vm442 = vcmp.lt.s32.totalorder %v430, 24
        %vm443 = vmand %vm441, %vm442
        %v444 = vsel %vm443, 1, 0
        %v445 = vcvt.s32.f32 %v444
        %vm446 = vcmp.ge.s32.totalorder %v430, 24
        %vm447 = vcmp.lt.s32.totalorder %v430, 32
        %vm448 = vmand %vm446, %vm447
        %v449 = vsel %vm448, 1, 0
        %v450 = vcvt.s32.f32 %v449
        %v451 = vld [vmem:[%s417] sm:$0xff]
        %v452 = vld [vmem:[%s417 + $0x8] sm:$0x3]
        %v453 = vld [vmem:[%s421] sm:$0xff]
        %v454 = vld [vmem:[%s424] sm:$0x1]
        %v455 = vld [vmem:[%s408] sm:$0xff]
        %v456 = vld [vmem:[%s408 + $0x8] sm:$0x3]
        %457 = vset.pattern.permute.xlu0 0
        %458 = vperm.xlu0 %457, %v455
        %v459 = vpop.permute.xlu0 %458
        %460 = vset.pattern.permute.xlu0 0
        %461 = vperm.xlu0 %460, %v456
        %v462 = vpop.permute.xlu0 %461
        %vm463 = vcmp.eq.s32.totalorder %v459, %v430
        %vm464 = vcmp.eq.s32.totalorder %v462, %v430
        %v465 = vsel %vm463, 1, 0
        %v466 = vsel %vm464, 1, 0
        %v467 = vcvt.s32.f32 %v465
        %v468 = vcvt.s32.f32 %v466
        %v469 = vld [vmem:[#allocation2] sm:$0xff]
        %v470 = vld [vmem:[#allocation2 + $0x8] sm:$0xff]
        %v471 = vld [vmem:[#allocation2 + $0x10] sm:$0xff]
        %v472 = vld [vmem:[#allocation2 + $0x18] sm:$0xff]
        %v473 = vld [vmem:[#allocation2 + $0x20] sm:$0xff]
        %v474 = vld [vmem:[#allocation2 + $0x28] sm:$0xff]
        %v475 = vld [vmem:[#allocation2 + $0x30] sm:$0xff]
        %v476 = vld [vmem:[#allocation2 + $0x38] sm:$0xff]
        %v477 = vld [vmem:[#allocation2 + $0x40] sm:$0xff]
        %v478 = vld [vmem:[#allocation2 + $0x48] sm:$0xff]
        %v479 = vld [vmem:[#allocation2 + $0x50] sm:$0xff]
        %v480 = vld [vmem:[#allocation2 + $0x58] sm:$0xff]
        %v481 = vld [vmem:[#allocation2 + $0x60] sm:$0xff]
        %v482 = vld [vmem:[#allocation2 + $0x68] sm:$0xff]
        %v483 = vld [vmem:[#allocation2 + $0x70] sm:$0xff]
        %v484 = vld [vmem:[#allocation2 + $0x78] sm:$0xff]
        %v485 = vld [vmem:[%s2] sm:$0xff]
        %v486 = vld [vmem:[%s2 + $0x8] sm:$0x3]
        %487 = vmatprep.subr.mxu0 0.0
        %488 = vmatpush1.msra.mxu0 %v469
        %489 = vmatprep.subr.mxu0 0.0
        %490 = vmatpush1.msra.mxu0 %v470
        %491 = vmatprep.subr.mxu0 0.0
        %492 = vmatpush1.msra.mxu0 %v471
        %493 = vmatprep.subr.mxu0 0.0
        %494 = vmatpush1.msra.mxu0 %v472
        %495 = vmatprep.subr.mxu0 0.0
        %496 = vmatpush1.msra.mxu0 %v473
        %497 = vmatprep.subr.mxu0 0.0
        %498 = vmatpush1.msra.mxu0 %v474
        %499 = vmatprep.subr.mxu0 0.0
        %500 = vmatpush1.msra.mxu0 %v475
        %501 = vmatprep.subr.mxu0 0.0
        %502 = vmatpush1.msra.mxu0 %v476
        %503 = vmatprep.subr.mxu0 0.0
        %504 = vmatpush1.msra.mxu0 %v477
        %505 = vmatprep.subr.mxu0 0.0
        %506 = vmatpush1.msra.mxu0 %v478
        %507 = vmatprep.subr.mxu0 0.0
        %508 = vmatpush1.msra.mxu0 %v479
        %509 = vmatprep.subr.mxu0 0.0
        %510 = vmatpush1.msra.mxu0 %v480
        %511 = vmatprep.subr.mxu0 0.0
        %512 = vmatpush1.msra.mxu0 %v481
        %513 = vmatprep.subr.mxu0 0.0
        %514 = vmatpush1.msra.mxu0 %v482
        %515 = vmatprep.subr.mxu0 0.0
        %516 = vmatpush1.msra.mxu0 %v483
        %517 = vmatprep.subr.mxu0 0.0
        %518 = vmatpush1.msra.mxu0 %v484
        %519 = vmatprep.subr.mxu0 0.0
        %520 = vmatpush1.msra.mxu0 0.0
        %521 = vmatprep.subr.mxu0 0.0
        %522 = vmatpush1.msra.mxu0 0.0
        %523 = vmatprep.subr.mxu0 0.0
        %524 = vmatpush1.msra.mxu0 0.0
        %525 = vmatprep.subr.mxu0 0.0
        %526 = vmatpush1.msra.mxu0 0.0
        %527 = vmatprep.subr.mxu0 0.0
        %528 = vmatpush1.msra.mxu0 0.0
        %529 = vmatprep.subr.mxu0 0.0
        %530 = vmatpush1.msra.mxu0 0.0
        %531 = vmatprep.subr.mxu0 0.0
        %532 = vmatpush1.msra.mxu0 0.0
        %533 = vmatprep.subr.mxu0 0.0
        %534 = vmatpush1.msra.mxu0 0.0
        %535 = vmatprep.subr.mxu0 0.0
        %536 = vmatpush1.msra.mxu0 0.0
        %537 = vmatprep.subr.mxu0 0.0
        %538 = vmatpush1.msra.mxu0 0.0
        %539 = vmatprep.subr.mxu0 0.0
        %540 = vmatpush1.msra.mxu0 0.0
        %541 = vmatprep.subr.mxu0 0.0
        %542 = vmatpush1.msra.mxu0 0.0
        %543 = vmatprep.subr.mxu0 0.0
        %544 = vmatpush1.msra.mxu0 0.0
        %545 = vmatprep.subr.mxu0 0.0
        %546 = vmatpush1.msra.mxu0 0.0
        %547 = vmatprep.subr.mxu0 0.0
        %548 = vmatpush1.msra.mxu0 0.0
        %549 = vmatprep.subr.mxu0 0.0
        %550 = vmatpush1.msra.mxu0 0.0
        %551 = vmatprep.mubr.f32.mxu0 0.0
        %552 = vmatmul.mubr.f32.gmra.mrb[0].mxu0 %v467
        %v553 = vpop.f32.mrb[0].mxu0
        %v554 = vadd.f32 %v485, %v553
        %v555 = vpop.f32.mrb[0].mxu0
        %556 = vmatprep.mubr.f32.mxu0 0.0
        %557 = vmatmul.mubr.f32.gmra.mrb[0].mxu0 %v468
        %v558 = vpop.f32.mrb[0].mxu0
        %v559 = vadd.f32 %v486, %v558
        %v560 = vpop.f32.mrb[0].mxu0
        %561 = vdwg.mxu0
        %562 = vadd.xlane.f32.xlu0 %v554
        %v563 = vpop.xlane.xlu0 %562
        %vm564 = vcmask 1041408
        %v565 = vsel %vm564, %v559, 0.0
        %566 = vadd.xlane.f32.xlu0 %v565
        %v567 = vpop.xlane.xlu0 %566
        %v568 = vmul.f32 %v554, %v554
        %v569 = vmul.f32 %v559, %v559
        %570 = vadd.xlane.f32.xlu0 %v568
        %v571 = vpop.xlane.xlu0 %570
        %v572 = vsel %vm564, %v569, 0.0
        %573 = vadd.xlane.f32.xlu0 %v572
        %v574 = vpop.xlane.xlu0 %573
        %v575 = vmul.f32 %v563, 0.03125
        %v576 = vmul.f32 %v567, 0.03125
        %v577 = vmul.f32 %v571, 0.03125
        %v578 = vmul.f32 %v574, 0.03125
        %v579 = vmul.f32 %v575, %v575
        %v580 = vmul.f32 %v576, %v576
        %v581 = vsub.f32 %v577, %v579
        %v582 = vsub.f32 %v578, %v580
        %v583 = vsub.f32 %v554, %v575
        %v584 = vsub.f32 %v559, %v576
        %v585 = vadd.f32 %v581, 1e-05
        %v586 = vadd.f32 %v582, 1e-05
        %v587 = vrsqrt.pop %v585
        %v588 = vrsqrt.pop %v586
        %v589 = vmul.f32 %v583, %v587
        %v590 = vmul.f32 %v584, %v588
        %v591 = vld [vmem:[#allocation4 + $0xb] sm:$0x1]
        %v592 = vlaneseq
        %v593 = vshrl.u32 %v592, 7
        %v594 = vsub.s32 0, %v593
        %v595 = vrot.slane %v591, %v594
        %v596 = vmul.f32 %v589, %v595
        %v597 = vmul.f32 %v590, %v595
        %v598 = vld [vmem:[#allocation4 + $0xc] sm:$0x1]
        %v599 = vlaneseq
        %v600 = vshrl.u32 %v599, 7
        %v601 = vsub.s32 0, %v600
        %v602 = vrot.slane %v598, %v601
        %v603 = vadd.f32 %v596, %v602
        %v604 = vadd.f32 %v597, %v602
        %s605 = scalar_lea.vmem [#allocation2], 384
        %v606 = vld [vmem:[%s605] sm:$0xff]
        %v607 = vld [vmem:[%s605 + $0x8] sm:$0xff]
        %v608 = vld [vmem:[%s605 + $0x10] sm:$0xff]
        %v609 = vld [vmem:[%s605 + $0x18] sm:$0xff]
        %v610 = vld [vmem:[%s605 + $0x20] sm:$0xff]
        %v611 = vld [vmem:[%s605 + $0x28] sm:$0xff]
        %v612 = vld [vmem:[%s605 + $0x30] sm:$0xff]
        %v613 = vld [vmem:[%s605 + $0x38] sm:$0xff]
        %v614 = vld [vmem:[%s605 + $0x40] sm:$0xff]
        %v615 = vld [vmem:[%s605 + $0x48] sm:$0xff]
        %v616 = vld [vmem:[%s605 + $0x50] sm:$0xff]
        %v617 = vld [vmem:[%s605 + $0x58] sm:$0xff]
        %v618 = vld [vmem:[%s605 + $0x60] sm:$0xff]
        %v619 = vld [vmem:[%s605 + $0x68] sm:$0xff]
        %v620 = vld [vmem:[%s605 + $0x70] sm:$0xff]
        %v621 = vld [vmem:[%s605 + $0x78] sm:$0xff]
        %v622 = vld [vmem:[#allocation4 + $0x5] sm:$0x1]
        %v623 = vlaneseq
        %v624 = vshrl.u32 %v623, 7
        %v625 = vsub.s32 0, %v624
        %v626 = vrot.slane %v622, %v625
        %627 = vmatprep.subr.mxu0 0.0
        %628 = vmatpush1.msra.mxu0 %v606
        %629 = vmatprep.subr.mxu0 0.0
        %630 = vmatpush1.msra.mxu0 %v607
        %631 = vmatprep.subr.mxu0 0.0
        %632 = vmatpush1.msra.mxu0 %v608
        %633 = vmatprep.subr.mxu0 0.0
        %634 = vmatpush1.msra.mxu0 %v609
        %635 = vmatprep.subr.mxu0 0.0
        %636 = vmatpush1.msra.mxu0 %v610
        %637 = vmatprep.subr.mxu0 0.0
        %638 = vmatpush1.msra.mxu0 %v611
        %639 = vmatprep.subr.mxu0 0.0
        %640 = vmatpush1.msra.mxu0 %v612
        %641 = vmatprep.subr.mxu0 0.0
        %642 = vmatpush1.msra.mxu0 %v613
        %643 = vmatprep.subr.mxu0 0.0
        %644 = vmatpush1.msra.mxu0 %v614
        %645 = vmatprep.subr.mxu0 0.0
        %646 = vmatpush1.msra.mxu0 %v615
        %647 = vmatprep.subr.mxu0 0.0
        %648 = vmatpush1.msra.mxu0 %v616
        %649 = vmatprep.subr.mxu0 0.0
        %650 = vmatpush1.msra.mxu0 %v617
        %651 = vmatprep.subr.mxu0 0.0
        %652 = vmatpush1.msra.mxu0 %v618
        %653 = vmatprep.subr.mxu0 0.0
        %654 = vmatpush1.msra.mxu0 %v619
        %655 = vmatprep.subr.mxu0 0.0
        %656 = vmatpush1.msra.mxu0 %v620
        %657 = vmatprep.subr.mxu0 0.0
        %658 = vmatpush1.msra.mxu0 %v621
        %659 = vmatprep.subr.mxu0 0.0
        %660 = vmatpush1.msra.mxu0 0.0
        %661 = vmatprep.subr.mxu0 0.0
        %662 = vmatpush1.msra.mxu0 0.0
        %663 = vmatprep.subr.mxu0 0.0
        %664 = vmatpush1.msra.mxu0 0.0
        %665 = vmatprep.subr.mxu0 0.0
        %666 = vmatpush1.msra.mxu0 0.0
        %667 = vmatprep.subr.mxu0 0.0
        %668 = vmatpush1.msra.mxu0 0.0
        %669 = vmatprep.subr.mxu0 0.0
        %670 = vmatpush1.msra.mxu0 0.0
        %671 = vmatprep.subr.mxu0 0.0
        %672 = vmatpush1.msra.mxu0 0.0
        %673 = vmatprep.subr.mxu0 0.0
        %674 = vmatpush1.msra.mxu0 0.0
        %675 = vmatprep.subr.mxu0 0.0
        %676 = vmatpush1.msra.mxu0 0.0
        %677 = vmatprep.subr.mxu0 0.0
        %678 = vmatpush1.msra.mxu0 0.0
        %679 = vmatprep.subr.mxu0 0.0
        %680 = vmatpush1.msra.mxu0 0.0
        %681 = vmatprep.subr.mxu0 0.0
        %682 = vmatpush1.msra.mxu0 0.0
        %683 = vmatprep.subr.mxu0 0.0
        %684 = vmatpush1.msra.mxu0 0.0
        %685 = vmatprep.subr.mxu0 0.0
        %686 = vmatpush1.msra.mxu0 0.0
        %687 = vmatprep.subr.mxu0 0.0
        %688 = vmatpush1.msra.mxu0 0.0
        %689 = vmatprep.subr.mxu0 0.0
        %690 = vmatpush1.msra.mxu0 0.0
        %691 = vmatprep.mubr.f32.mxu0 0.0
        %692 = vmatmul.mubr.f32.gmra.mrb[0].mxu0 %v603
        %v693 = vpop.f32.mrb[0].mxu0
        %v694 = vadd.f32 %v626, %v693
        %v695 = vpop.f32.mrb[0].mxu0
        %696 = vmatprep.mubr.f32.mxu0 0.0
        %697 = vmatmul.mubr.f32.gmra.mrb[0].mxu0 %v604
        %v698 = vpop.f32.mrb[0].mxu0
        %v699 = vadd.f32 %v626, %v698
        %v700 = vpop.f32.mrb[0].mxu0
        %701 = vdwg.mxu0
        %s702 = scalar_lea.vmem [#allocation2], 512
        %v703 = vld [vmem:[%s702] sm:$0xff]
        %v704 = vld [vmem:[%s702 + $0x8] sm:$0xff]
        %v705 = vld [vmem:[%s702 + $0x10] sm:$0xff]
        %v706 = vld [vmem:[%s702 + $0x18] sm:$0xff]
        %v707 = vld [vmem:[%s702 + $0x20] sm:$0xff]
        %v708 = vld [vmem:[%s702 + $0x28] sm:$0xff]
        %v709 = vld [vmem:[%s702 + $0x30] sm:$0xff]
        %v710 = vld [vmem:[%s702 + $0x38] sm:$0xff]
        %v711 = vld [vmem:[%s702 + $0x40] sm:$0xff]
        %v712 = vld [vmem:[%s702 + $0x48] sm:$0xff]
        %v713 = vld [vmem:[%s702 + $0x50] sm:$0xff]
        %v714 = vld [vmem:[%s702 + $0x58] sm:$0xff]
        %v715 = vld [vmem:[%s702 + $0x60] sm:$0xff]
        %v716 = vld [vmem:[%s702 + $0x68] sm:$0xff]
        %v717 = vld [vmem:[%s702 + $0x70] sm:$0xff]
        %v718 = vld [vmem:[%s702 + $0x78] sm:$0xff]
        %v719 = vld [vmem:[#allocation4 + $0x6] sm:$0x1]
        %v720 = vlaneseq
        %v721 = vshrl.u32 %v720, 7
        %v722 = vsub.s32 0, %v721
        %v723 = vrot.slane %v719, %v722
        %724 = vmatprep.subr.mxu0 0.0
        %725 = vmatpush1.msra.mxu0 %v703
        %726 = vmatprep.subr.mxu0 0.0
        %727 = vmatpush1.msra.mxu0 %v704
        %728 = vmatprep.subr.mxu0 0.0
        %729 = vmatpush1.msra.mxu0 %v705
        %730 = vmatprep.subr.mxu0 0.0
        %731 = vmatpush1.msra.mxu0 %v706
        %732 = vmatprep.subr.mxu0 0.0
        %733 = vmatpush1.msra.mxu0 %v707
        %734 = vmatprep.subr.mxu0 0.0
        %735 = vmatpush1.msra.mxu0 %v708
        %736 = vmatprep.subr.mxu0 0.0
        %737 = vmatpush1.msra.mxu0 %v709
        %738 = vmatprep.subr.mxu0 0.0
        %739 = vmatpush1.msra.mxu0 %v710
        %740 = vmatprep.subr.mxu0 0.0
        %741 = vmatpush1.msra.mxu0 %v711
        %742 = vmatprep.subr.mxu0 0.0
        %743 = vmatpush1.msra.mxu0 %v712
        %744 = vmatprep.subr.mxu0 0.0
        %745 = vmatpush1.msra.mxu0 %v713
        %746 = vmatprep.subr.mxu0 0.0
        %747 = vmatpush1.msra.mxu0 %v714
        %748 = vmatprep.subr.mxu0 0.0
        %749 = vmatpush1.msra.mxu0 %v715
        %750 = vmatprep.subr.mxu0 0.0
        %751 = vmatpush1.msra.mxu0 %v716
        %752 = vmatprep.subr.mxu0 0.0
        %753 = vmatpush1.msra.mxu0 %v717
        %754 = vmatprep.subr.mxu0 0.0
        %755 = vmatpush1.msra.mxu0 %v718
        %756 = vmatprep.subr.mxu0 0.0
        %757 = vmatpush1.msra.mxu0 0.0
        %758 = vmatprep.subr.mxu0 0.0
        %759 = vmatpush1.msra.mxu0 0.0
        %760 = vmatprep.subr.mxu0 0.0
        %761 = vmatpush1.msra.mxu0 0.0
        %762 = vmatprep.subr.mxu0 0.0
        %763 = vmatpush1.msra.mxu0 0.0
        %764 = vmatprep.subr.mxu0 0.0
        %765 = vmatpush1.msra.mxu0 0.0
        %766 = vmatprep.subr.mxu0 0.0
        %767 = vmatpush1.msra.mxu0 0.0
        %768 = vmatprep.subr.mxu0 0.0
        %769 = vmatpush1.msra.mxu0 0.0
        %770 = vmatprep.subr.mxu0 0.0
        %771 = vmatpush1.msra.mxu0 0.0
        %772 = vmatprep.subr.mxu0 0.0
        %773 = vmatpush1.msra.mxu0 0.0
        %774 = vmatprep.subr.mxu0 0.0
        %775 = vmatpush1.msra.mxu0 0.0
        %776 = vmatprep.subr.mxu0 0.0
        %777 = vmatpush1.msra.mxu0 0.0
        %778 = vmatprep.subr.mxu0 0.0
        %779 = vmatpush1.msra.mxu0 0.0
        %780 = vmatprep.subr.mxu0 0.0
        %781 = vmatpush1.msra.mxu0 0.0
        %782 = vmatprep.subr.mxu0 0.0
        %783 = vmatpush1.msra.mxu0 0.0
        %784 = vmatprep.subr.mxu0 0.0
        %785 = vmatpush1.msra.mxu0 0.0
        %786 = vmatprep.subr.mxu0 0.0
        %787 = vmatpush1.msra.mxu0 0.0
        %788 = vmatprep.mubr.f32.mxu0 0.0
        %789 = vmatmul.mubr.f32.gmra.mrb[0].mxu0 %v603
        %v790 = vpop.f32.mrb[0].mxu0
        %v791 = vadd.f32 %v723, %v790
        %v792 = vpop.f32.mrb[0].mxu0
        %793 = vmatprep.mubr.f32.mxu0 0.0
        %794 = vmatmul.mubr.f32.gmra.mrb[0].mxu0 %v604
        %v795 = vpop.f32.mrb[0].mxu0
        %v796 = vadd.f32 %v723, %v795
        %v797 = vpop.f32.mrb[0].mxu0
        %798 = vdwg.mxu0
        %s799 = scalar_lea.vmem [#allocation2], 640
        %v800 = vld [vmem:[%s799] sm:$0xff]
        %v801 = vld [vmem:[%s799 + $0x8] sm:$0xff]
        %v802 = vld [vmem:[%s799 + $0x10] sm:$0xff]
        %v803 = vld [vmem:[%s799 + $0x18] sm:$0xff]
        %v804 = vld [vmem:[%s799 + $0x20] sm:$0xff]
        %v805 = vld [vmem:[%s799 + $0x28] sm:$0xff]
        %v806 = vld [vmem:[%s799 + $0x30] sm:$0xff]
        %v807 = vld [vmem:[%s799 + $0x38] sm:$0xff]
        %v808 = vld [vmem:[%s799 + $0x40] sm:$0xff]
        %v809 = vld [vmem:[%s799 + $0x48] sm:$0xff]
        %v810 = vld [vmem:[%s799 + $0x50] sm:$0xff]
        %v811 = vld [vmem:[%s799 + $0x58] sm:$0xff]
        %v812 = vld [vmem:[%s799 + $0x60] sm:$0xff]
        %v813 = vld [vmem:[%s799 + $0x68] sm:$0xff]
        %v814 = vld [vmem:[%s799 + $0x70] sm:$0xff]
        %v815 = vld [vmem:[%s799 + $0x78] sm:$0xff]
        %v816 = vld [vmem:[#allocation4 + $0x7] sm:$0x1]
        %v817 = vlaneseq
        %v818 = vshrl.u32 %v817, 7
        %v819 = vsub.s32 0, %v818
        %v820 = vrot.slane %v816, %v819
        %821 = vmatprep.subr.mxu0 0.0
        %822 = vmatpush1.msra.mxu0 %v800
        %823 = vmatprep.subr.mxu0 0.0
        %824 = vmatpush1.msra.mxu0 %v801
        %825 = vmatprep.subr.mxu0 0.0
        %826 = vmatpush1.msra.mxu0 %v802
        %827 = vmatprep.subr.mxu0 0.0
        %828 = vmatpush1.msra.mxu0 %v803
        %829 = vmatprep.subr.mxu0 0.0
        %830 = vmatpush1.msra.mxu0 %v804
        %831 = vmatprep.subr.mxu0 0.0
        %832 = vmatpush1.msra.mxu0 %v805
        %833 = vmatprep.subr.mxu0 0.0
        %834 = vmatpush1.msra.mxu0 %v806
        %835 = vmatprep.subr.mxu0 0.0
        %836 = vmatpush1.msra.mxu0 %v807
        %837 = vmatprep.subr.mxu0 0.0
        %838 = vmatpush1.msra.mxu0 %v808
        %839 = vmatprep.subr.mxu0 0.0
        %840 = vmatpush1.msra.mxu0 %v809
        %841 = vmatprep.subr.mxu0 0.0
        %842 = vmatpush1.msra.mxu0 %v810
        %843 = vmatprep.subr.mxu0 0.0
        %844 = vmatpush1.msra.mxu0 %v811
        %845 = vmatprep.subr.mxu0 0.0
        %846 = vmatpush1.msra.mxu0 %v812
        %847 = vmatprep.subr.mxu0 0.0
        %848 = vmatpush1.msra.mxu0 %v813
        %849 = vmatprep.subr.mxu0 0.0
        %850 = vmatpush1.msra.mxu0 %v814
        %851 = vmatprep.subr.mxu0 0.0
        %852 = vmatpush1.msra.mxu0 %v815
        %853 = vmatprep.subr.mxu0 0.0
        %854 = vmatpush1.msra.mxu0 0.0
        %855 = vmatprep.subr.mxu0 0.0
        %856 = vmatpush1.msra.mxu0 0.0
        %857 = vmatprep.subr.mxu0 0.0
        %858 = vmatpush1.msra.mxu0 0.0
        %859 = vmatprep.subr.mxu0 0.0
        %860 = vmatpush1.msra.mxu0 0.0
        %861 = vmatprep.subr.mxu0 0.0
        %862 = vmatpush1.msra.mxu0 0.0
        %863 = vmatprep.subr.mxu0 0.0
        %864 = vmatpush1.msra.mxu0 0.0
        %865 = vmatprep.subr.mxu0 0.0
        %866 = vmatpush1.msra.mxu0 0.0
        %867 = vmatprep.subr.mxu0 0.0
        %868 = vmatpush1.msra.mxu0 0.0
        %869 = vmatprep.subr.mxu0 0.0
        %870 = vmatpush1.msra.mxu0 0.0
        %871 = vmatprep.subr.mxu0 0.0
        %872 = vmatpush1.msra.mxu0 0.0
        %873 = vmatprep.subr.mxu0 0.0
        %874 = vmatpush1.msra.mxu0 0.0
        %875 = vmatprep.subr.mxu0 0.0
        %876 = vmatpush1.msra.mxu0 0.0
        %877 = vmatprep.subr.mxu0 0.0
        %878 = vmatpush1.msra.mxu0 0.0
        %879 = vmatprep.subr.mxu0 0.0
        %880 = vmatpush1.msra.mxu0 0.0
        %881 = vmatprep.subr.mxu0 0.0
        %882 = vmatpush1.msra.mxu0 0.0
        %883 = vmatprep.subr.mxu0 0.0
        %884 = vmatpush1.msra.mxu0 0.0
        %885 = vmatprep.mubr.f32.mxu0 0.0
        %886 = vmatmul.mubr.f32.gmra.mrb[0].mxu0 %v603
        %v887 = vpop.f32.mrb[0].mxu0
        %v888 = vadd.f32 %v820, %v887
        %v889 = vpop.f32.mrb[0].mxu0
        %890 = vmatprep.mubr.f32.mxu0 0.0
        %891 = vmatmul.mubr.f32.gmra.mrb[0].mxu0 %v604
        %v892 = vpop.f32.mrb[0].mxu0
        %v893 = vadd.f32 %v820, %v892
        %v894 = vpop.f32.mrb[0].mxu0
        %895 = vdwg.mxu0
        %v896 = vlaneseq
        %v897 = vshrl.u32 %v896, 7
        %v898 = vsub.s32 0, %v897
        %v899 = vrot.slane %v435, %v898
        %v900 = vlaneseq
        %v901 = vshrl.u32 %v900, 7
        %v902 = vsub.s32 0, %v901
        %v903 = vrot.slane %v440, %v902
        %v904 = vlaneseq
        %v905 = vshrl.u32 %v904, 7
        %v906 = vsub.s32 0, %v905
        %v907 = vrot.slane %v445, %v906
        %v908 = vlaneseq
        %v909 = vshrl.u32 %v908, 7
        %v910 = vsub.s32 0, %v909
        %v911 = vrot.slane %v450, %v910
        %v912 = vmul.f32 %v791, %v899
        %v913 = vmul.f32 %v796, %v899
        %v914 = vmul.f32 %v791, %v903
        %v915 = vmul.f32 %v796, %v903
        %v916 = vmul.f32 %v791, %v907
        %v917 = vmul.f32 %v796, %v907
        %v918 = vmul.f32 %v791, %v911
        %v919 = vmul.f32 %v796, %v911
        %v920 = vmul.f32 %v888, %v899
        %v921 = vmul.f32 %v893, %v899
        %v922 = vmul.f32 %v888, %v903
        %v923 = vmul.f32 %v893, %v903
        %v924 = vmul.f32 %v888, %v907
        %v925 = vmul.f32 %v893, %v907
        %v926 = vmul.f32 %v888, %v911
        %v927 = vmul.f32 %v893, %v911
        %928 = vmatprep.subr.mxu0 0.0
        %929 = vmatpush1.xpose.msra.mxu0 %v912
        %930 = vmatprep.subr.mxu0 0.0
        %931 = vmatpush1.xpose.msra.mxu0 %v913
        %932 = vmatprep.subr.mxu0 0.0
        %933 = vmatpush1.xpose.msra.mxu0 0.0
        %934 = vmatprep.subr.mxu0 0.0
        %935 = vmatpush1.xpose.msra.mxu0 0.0
        %936 = vmatprep.subr.mxu0 0.0
        %937 = vmatpush1.xpose.msra.mxu0 0.0
        %938 = vmatprep.subr.mxu0 0.0
        %939 = vmatpush1.xpose.msra.mxu0 0.0
        %940 = vmatprep.subr.mxu0 0.0
        %941 = vmatpush1.xpose.msra.mxu0 0.0
        %942 = vmatprep.subr.mxu0 0.0
        %943 = vmatpush1.xpose.msra.mxu0 0.0
        %944 = vmatprep.subr.mxu0 0.0
        %945 = vmatpush1.xpose.msra.mxu0 0.0
        %946 = vmatprep.subr.mxu0 0.0
        %947 = vmatpush1.xpose.msra.mxu0 0.0
        %948 = vmatprep.subr.mxu0 0.0
        %949 = vmatpush1.xpose.msra.mxu0 0.0
        %950 = vmatprep.subr.mxu0 0.0
        %951 = vmatpush1.xpose.msra.mxu0 0.0
        %952 = vmatprep.subr.mxu0 0.0
        %953 = vmatpush1.xpose.msra.mxu0 0.0
        %954 = vmatprep.subr.mxu0 0.0
        %955 = vmatpush1.xpose.msra.mxu0 0.0
        %956 = vmatprep.subr.mxu0 0.0
        %957 = vmatpush1.xpose.msra.mxu0 0.0
        %958 = vmatprep.subr.mxu0 0.0
        %959 = vmatpush1.xpose.msra.mxu0 0.0
        %960 = vmatprep.subr.mxu0 0.0
        %961 = vmatpush1.xpose.msra.mxu0 0.0
        %962 = vmatprep.subr.mxu0 0.0
        %963 = vmatpush1.xpose.msra.mxu0 0.0
        %964 = vmatprep.subr.mxu0 0.0
        %965 = vmatpush1.xpose.msra.mxu0 0.0
        %966 = vmatprep.subr.mxu0 0.0
        %967 = vmatpush1.xpose.msra.mxu0 0.0
        %968 = vmatprep.subr.mxu0 0.0
        %969 = vmatpush1.xpose.msra.mxu0 0.0
        %970 = vmatprep.subr.mxu0 0.0
        %971 = vmatpush1.xpose.msra.mxu0 0.0
        %972 = vmatprep.subr.mxu0 0.0
        %973 = vmatpush1.xpose.msra.mxu0 0.0
        %974 = vmatprep.subr.mxu0 0.0
        %975 = vmatpush1.xpose.msra.mxu0 0.0
        %976 = vmatprep.subr.mxu0 0.0
        %977 = vmatpush1.xpose.msra.mxu0 0.0
        %978 = vmatprep.subr.mxu0 0.0
        %979 = vmatpush1.xpose.msra.mxu0 0.0
        %980 = vmatprep.subr.mxu0 0.0
        %981 = vmatpush1.xpose.msra.mxu0 0.0
        %982 = vmatprep.subr.mxu0 0.0
        %983 = vmatpush1.xpose.msra.mxu0 0.0
        %984 = vmatprep.subr.mxu0 0.0
        %985 = vmatpush1.xpose.msra.mxu0 0.0
        %986 = vmatprep.subr.mxu0 0.0
        %987 = vmatpush1.xpose.msra.mxu0 0.0
        %988 = vmatprep.subr.mxu0 0.0
        %989 = vmatpush1.xpose.msra.mxu0 0.0
        %990 = vmatprep.subr.mxu0 0.0
        %991 = vmatpush1.xpose.msra.mxu0 0.0
        %992 = vmatprep.mubr.f32.mxu0 0.0
        %993 = vmatmul.mubr.f32.gmra.mrb[0].mxu0 %v694
        %v994 = vpop.f32.mrb[0].mxu0
        %v995 = vadd.f32 %v451, %v994
        %v996 = vpop.f32.mrb[0].mxu0
        %997 = vmatprep.mubr.f32.mxu0 0.0
        %998 = vmatmul.mubr.f32.gmra.mrb[0].mxu0 %v699
        %v999 = vpop.f32.mrb[0].mxu0
        %v1000 = vadd.f32 %v452, %v999
        %v1001 = vpop.f32.mrb[0].mxu0
        %1002 = vdwg.mxu0
        %1003 = vmatprep.subr.mxu0 0.0
        %1004 = vmatpush1.xpose.msra.mxu0 %v914
        %1005 = vmatprep.subr.mxu0 0.0
        %1006 = vmatpush1.xpose.msra.mxu0 %v915
        %1007 = vmatprep.subr.mxu0 0.0
        %1008 = vmatpush1.xpose.msra.mxu0 0.0
        %1009 = vmatprep.subr.mxu0 0.0
        %1010 = vmatpush1.xpose.msra.mxu0 0.0
        %1011 = vmatprep.subr.mxu0 0.0
        %1012 = vmatpush1.xpose.msra.mxu0 0.0
        %1013 = vmatprep.subr.mxu0 0.0
        %1014 = vmatpush1.xpose.msra.mxu0 0.0
        %1015 = vmatprep.subr.mxu0 0.0
        %1016 = vmatpush1.xpose.msra.mxu0 0.0
        %1017 = vmatprep.subr.mxu0 0.0
        %1018 = vmatpush1.xpose.msra.mxu0 0.0
        %1019 = vmatprep.subr.mxu0 0.0
        %1020 = vmatpush1.xpose.msra.mxu0 0.0
        %1021 = vmatprep.subr.mxu0 0.0
        %1022 = vmatpush1.xpose.msra.mxu0 0.0
        %1023 = vmatprep.subr.mxu0 0.0
        %1024 = vmatpush1.xpose.msra.mxu0 0.0
        %1025 = vmatprep.subr.mxu0 0.0
        %1026 = vmatpush1.xpose.msra.mxu0 0.0
        %1027 = vmatprep.subr.mxu0 0.0
        %1028 = vmatpush1.xpose.msra.mxu0 0.0
        %1029 = vmatprep.subr.mxu0 0.0
        %1030 = vmatpush1.xpose.msra.mxu0 0.0
        %1031 = vmatprep.subr.mxu0 0.0
        %1032 = vmatpush1.xpose.msra.mxu0 0.0
        %1033 = vmatprep.subr.mxu0 0.0
        %1034 = vmatpush1.xpose.msra.mxu0 0.0
        %1035 = vmatprep.subr.mxu0 0.0
        %1036 = vmatpush1.xpose.msra.mxu0 0.0
        %1037 = vmatprep.subr.mxu0 0.0
        %1038 = vmatpush1.xpose.msra.mxu0 0.0
        %1039 = vmatprep.subr.mxu0 0.0
        %1040 = vmatpush1.xpose.msra.mxu0 0.0
        %1041 = vmatprep.subr.mxu0 0.0
        %1042 = vmatpush1.xpose.msra.mxu0 0.0
        %1043 = vmatprep.subr.mxu0 0.0
        %1044 = vmatpush1.xpose.msra.mxu0 0.0
        %1045 = vmatprep.subr.mxu0 0.0
        %1046 = vmatpush1.xpose.msra.mxu0 0.0
        %1047 = vmatprep.subr.mxu0 0.0
        %1048 = vmatpush1.xpose.msra.mxu0 0.0
        %1049 = vmatprep.subr.mxu0 0.0
        %1050 = vmatpush1.xpose.msra.mxu0 0.0
        %1051 = vmatprep.subr.mxu0 0.0
        %1052 = vmatpush1.xpose.msra.mxu0 0.0
        %1053 = vmatprep.subr.mxu0 0.0
        %1054 = vmatpush1.xpose.msra.mxu0 0.0
        %1055 = vmatprep.subr.mxu0 0.0
        %1056 = vmatpush1.xpose.msra.mxu0 0.0
        %1057 = vmatprep.subr.mxu0 0.0
        %1058 = vmatpush1.xpose.msra.mxu0 0.0
        %1059 = vmatprep.subr.mxu0 0.0
        %1060 = vmatpush1.xpose.msra.mxu0 0.0
        %1061 = vmatprep.subr.mxu0 0.0
        %1062 = vmatpush1.xpose.msra.mxu0 0.0
        %1063 = vmatprep.subr.mxu0 0.0
        %1064 = vmatpush1.xpose.msra.mxu0 0.0
        %1065 = vmatprep.subr.mxu0 0.0
        %1066 = vmatpush1.xpose.msra.mxu0 0.0
        %1067 = vmatprep.mubr.f32.mxu0 0.0
        %1068 = vmatmul.mubr.f32.gmra.mrb[0].mxu0 %v694
        %v1069 = vpop.f32.mrb[0].mxu0
        %v1070 = vadd.f32 %v451, %v1069
        %v1071 = vpop.f32.mrb[0].mxu0
        %1072 = vmatprep.mubr.f32.mxu0 0.0
        %1073 = vmatmul.mubr.f32.gmra.mrb[0].mxu0 %v699
        %v1074 = vpop.f32.mrb[0].mxu0
        %v1075 = vadd.f32 %v452, %v1074
        %v1076 = vpop.f32.mrb[0].mxu0
        %1077 = vdwg.mxu0
        %1078 = vmatprep.subr.mxu0 0.0
        %1079 = vmatpush1.xpose.msra.mxu0 %v916
        %1080 = vmatprep.subr.mxu0 0.0
        %1081 = vmatpush1.xpose.msra.mxu0 %v917
        %1082 = vmatprep.subr.mxu0 0.0
        %1083 = vmatpush1.xpose.msra.mxu0 0.0
        %1084 = vmatprep.subr.mxu0 0.0
        %1085 = vmatpush1.xpose.msra.mxu0 0.0
        %1086 = vmatprep.subr.mxu0 0.0
        %1087 = vmatpush1.xpose.msra.mxu0 0.0
        %1088 = vmatprep.subr.mxu0 0.0
        %1089 = vmatpush1.xpose.msra.mxu0 0.0
        %1090 = vmatprep.subr.mxu0 0.0
        %1091 = vmatpush1.xpose.msra.mxu0 0.0
        %1092 = vmatprep.subr.mxu0 0.0
        %1093 = vmatpush1.xpose.msra.mxu0 0.0
        %1094 = vmatprep.subr.mxu0 0.0
        %1095 = vmatpush1.xpose.msra.mxu0 0.0
        %1096 = vmatprep.subr.mxu0 0.0
        %1097 = vmatpush1.xpose.msra.mxu0 0.0
        %1098 = vmatprep.subr.mxu0 0.0
        %1099 = vmatpush1.xpose.msra.mxu0 0.0
        %1100 = vmatprep.subr.mxu0 0.0
        %1101 = vmatpush1.xpose.msra.mxu0 0.0
        %1102 = vmatprep.subr.mxu0 0.0
        %1103 = vmatpush1.xpose.msra.mxu0 0.0
        %1104 = vmatprep.subr.mxu0 0.0
        %1105 = vmatpush1.xpose.msra.mxu0 0.0
        %1106 = vmatprep.subr.mxu0 0.0
        %1107 = vmatpush1.xpose.msra.mxu0 0.0
        %1108 = vmatprep.subr.mxu0 0.0
        %1109 = vmatpush1.xpose.msra.mxu0 0.0
        %1110 = vmatprep.subr.mxu0 0.0
        %1111 = vmatpush1.xpose.msra.mxu0 0.0
        %1112 = vmatprep.subr.mxu0 0.0
        %1113 = vmatpush1.xpose.msra.mxu0 0.0
        %1114 = vmatprep.subr.mxu0 0.0
        %1115 = vmatpush1.xpose.msra.mxu0 0.0
        %1116 = vmatprep.subr.mxu0 0.0
        %1117 = vmatpush1.xpose.msra.mxu0 0.0
        %1118 = vmatprep.subr.mxu0 0.0
        %1119 = vmatpush1.xpose.msra.mxu0 0.0
        %1120 = vmatprep.subr.mxu0 0.0
        %1121 = vmatpush1.xpose.msra.mxu0 0.0
        %1122 = vmatprep.subr.mxu0 0.0
        %1123 = vmatpush1.xpose.msra.mxu0 0.0
        %1124 = vmatprep.subr.mxu0 0.0
        %1125 = vmatpush1.xpose.msra.mxu0 0.0
        %1126 = vmatprep.subr.mxu0 0.0
        %1127 = vmatpush1.xpose.msra.mxu0 0.0
        %1128 = vmatprep.subr.mxu0 0.0
        %1129 = vmatpush1.xpose.msra.mxu0 0.0
        %1130 = vmatprep.subr.mxu0 0.0
        %1131 = vmatpush1.xpose.msra.mxu0 0.0
        %1132 = vmatprep.subr.mxu0 0.0
        %1133 = vmatpush1.xpose.msra.mxu0 0.0
        %1134 = vmatprep.subr.mxu0 0.0
        %1135 = vmatpush1.xpose.msra.mxu0 0.0
        %1136 = vmatprep.subr.mxu0 0.0
        %1137 = vmatpush1.xpose.msra.mxu0 0.0
        %1138 = vmatprep.subr.mxu0 0.0
        %1139 = vmatpush1.xpose.msra.mxu0 0.0
        %1140 = vmatprep.subr.mxu0 0.0
        %1141 = vmatpush1.xpose.msra.mxu0 0.0
        %1142 = vmatprep.mubr.f32.mxu0 0.0
        %1143 = vmatmul.mubr.f32.gmra.mrb[0].mxu0 %v694
        %v1144 = vpop.f32.mrb[0].mxu0
        %v1145 = vadd.f32 %v451, %v1144
        %v1146 = vpop.f32.mrb[0].mxu0
        %1147 = vmatprep.mubr.f32.mxu0 0.0
        %1148 = vmatmul.mubr.f32.gmra.mrb[0].mxu0 %v699
        %v1149 = vpop.f32.mrb[0].mxu0
        %v1150 = vadd.f32 %v452, %v1149
        %v1151 = vpop.f32.mrb[0].mxu0
        %1152 = vdwg.mxu0
        %1153 = vmatprep.subr.mxu0 0.0
        %1154 = vmatpush1.xpose.msra.mxu0 %v918
        %1155 = vmatprep.subr.mxu0 0.0
        %1156 = vmatpush1.xpose.msra.mxu0 %v919
        %1157 = vmatprep.subr.mxu0 0.0
        %1158 = vmatpush1.xpose.msra.mxu0 0.0
        %1159 = vmatprep.subr.mxu0 0.0
        %1160 = vmatpush1.xpose.msra.mxu0 0.0
        %1161 = vmatprep.subr.mxu0 0.0
        %1162 = vmatpush1.xpose.msra.mxu0 0.0
        %1163 = vmatprep.subr.mxu0 0.0
        %1164 = vmatpush1.xpose.msra.mxu0 0.0
        %1165 = vmatprep.subr.mxu0 0.0
        %1166 = vmatpush1.xpose.msra.mxu0 0.0
        %1167 = vmatprep.subr.mxu0 0.0
        %1168 = vmatpush1.xpose.msra.mxu0 0.0
        %1169 = vmatprep.subr.mxu0 0.0
        %1170 = vmatpush1.xpose.msra.mxu0 0.0
        %1171 = vmatprep.subr.mxu0 0.0
        %1172 = vmatpush1.xpose.msra.mxu0 0.0
        %1173 = vmatprep.subr.mxu0 0.0
        %1174 = vmatpush1.xpose.msra.mxu0 0.0
        %1175 = vmatprep.subr.mxu0 0.0
        %1176 = vmatpush1.xpose.msra.mxu0 0.0
        %1177 = vmatprep.subr.mxu0 0.0
        %1178 = vmatpush1.xpose.msra.mxu0 0.0
        %1179 = vmatprep.subr.mxu0 0.0
        %1180 = vmatpush1.xpose.msra.mxu0 0.0
        %1181 = vmatprep.subr.mxu0 0.0
        %1182 = vmatpush1.xpose.msra.mxu0 0.0
        %1183 = vmatprep.subr.mxu0 0.0
        %1184 = vmatpush1.xpose.msra.mxu0 0.0
        %1185 = vmatprep.subr.mxu0 0.0
        %1186 = vmatpush1.xpose.msra.mxu0 0.0
        %1187 = vmatprep.subr.mxu0 0.0
        %1188 = vmatpush1.xpose.msra.mxu0 0.0
        %1189 = vmatprep.subr.mxu0 0.0
        %1190 = vmatpush1.xpose.msra.mxu0 0.0
        %1191 = vmatprep.subr.mxu0 0.0
        %1192 = vmatpush1.xpose.msra.mxu0 0.0
        %1193 = vmatprep.subr.mxu0 0.0
        %1194 = vmatpush1.xpose.msra.mxu0 0.0
        %1195 = vmatprep.subr.mxu0 0.0
        %1196 = vmatpush1.xpose.msra.mxu0 0.0
        %1197 = vmatprep.subr.mxu0 0.0
        %1198 = vmatpush1.xpose.msra.mxu0 0.0
        %1199 = vmatprep.subr.mxu0 0.0
        %1200 = vmatpush1.xpose.msra.mxu0 0.0
        %1201 = vmatprep.subr.mxu0 0.0
        %1202 = vmatpush1.xpose.msra.mxu0 0.0
        %1203 = vmatprep.subr.mxu0 0.0
        %1204 = vmatpush1.xpose.msra.mxu0 0.0
        %1205 = vmatprep.subr.mxu0 0.0
        %1206 = vmatpush1.xpose.msra.mxu0 0.0
        %1207 = vmatprep.subr.mxu0 0.0
        %1208 = vmatpush1.xpose.msra.mxu0 0.0
        %1209 = vmatprep.subr.mxu0 0.0
        %1210 = vmatpush1.xpose.msra.mxu0 0.0
        %1211 = vmatprep.subr.mxu0 0.0
        %1212 = vmatpush1.xpose.msra.mxu0 0.0
        %1213 = vmatprep.subr.mxu0 0.0
        %1214 = vmatpush1.xpose.msra.mxu0 0.0
        %1215 = vmatprep.subr.mxu0 0.0
        %1216 = vmatpush1.xpose.msra.mxu0 0.0
        %1217 = vmatprep.mubr.f32.mxu0 0.0
        %1218 = vmatmul.mubr.f32.gmra.mrb[0].mxu0 %v694
        %v1219 = vpop.f32.mrb[0].mxu0
        %v1220 = vadd.f32 %v451, %v1219
        %v1221 = vpop.f32.mrb[0].mxu0
        %1222 = vmatprep.mubr.f32.mxu0 0.0
        %1223 = vmatmul.mubr.f32.gmra.mrb[0].mxu0 %v699
        %v1224 = vpop.f32.mrb[0].mxu0
        %v1225 = vadd.f32 %v452, %v1224
        %v1226 = vpop.f32.mrb[0].mxu0
        %1227 = vdwg.mxu0
        %v1228 = vmul.f32 %v995, 1.442695
        %v1229 = vpow.pop %v1228
        %v1230 = vmul.f32 %v1000, 1.442695
        %v1231 = vpow.pop %v1230
        %v1232 = vmul.f32 %v1070, 1.442695
        %v1233 = vpow.pop %v1232
        %v1234 = vmul.f32 %v1075, 1.442695
        %v1235 = vpow.pop %v1234
        %v1236 = vmul.f32 %v1145, 1.442695
        %v1237 = vpow.pop %v1236
        %v1238 = vmul.f32 %v1150, 1.442695
        %v1239 = vpow.pop %v1238
        %v1240 = vmul.f32 %v1220, 1.442695
        %v1241 = vpow.pop %v1240
        %v1242 = vmul.f32 %v1225, 1.442695
        %v1243 = vpow.pop %v1242
        %vm1244 = vcmask 80896
        %v1245 = vsel %vm1244, %v1229, 0.0
        %1246 = vadd.xlane.f32.xlu0 %v1245
        %v1247 = vpop.xlane.xlu0 %1246
        %vm1248 = vcmask 74752
        %v1249 = vsel %vm1248, %v1231, 0.0
        %1250 = vadd.xlane.f32.xlu0 %v1249
        %v1251 = vpop.xlane.xlu0 %1250
        %v1252 = vsel %vm1244, %v1233, 0.0
        %1253 = vadd.xlane.f32.xlu0 %v1252
        %v1254 = vpop.xlane.xlu0 %1253
        %v1255 = vsel %vm1248, %v1235, 0.0
        %1256 = vadd.xlane.f32.xlu0 %v1255
        %v1257 = vpop.xlane.xlu0 %1256
        %v1258 = vsel %vm1244, %v1237, 0.0
        %1259 = vadd.xlane.f32.xlu0 %v1258
        %v1260 = vpop.xlane.xlu0 %1259
        %v1261 = vsel %vm1248, %v1239, 0.0
        %1262 = vadd.xlane.f32.xlu0 %v1261
        %v1263 = vpop.xlane.xlu0 %1262
        %v1264 = vsel %vm1244, %v1241, 0.0
        %1265 = vadd.xlane.f32.xlu0 %v1264
        %v1266 = vpop.xlane.xlu0 %1265
        %v1267 = vsel %vm1248, %v1243, 0.0
        %1268 = vadd.xlane.f32.xlu0 %v1267
        %v1269 = vpop.xlane.xlu0 %1268
        %v1270 = vrcp.pop %v1247
        %v1271 = vrcp.pop %v1251
        %v1272 = vrcp.pop %v1254
        %v1273 = vrcp.pop %v1257
        %v1274 = vrcp.pop %v1260
        %v1275 = vrcp.pop %v1263
        %v1276 = vrcp.pop %v1266
        %v1277 = vrcp.pop %v1269
        %v1278 = vmul.f32 %v1229, %v1270
        %v1279 = vmul.f32 %v1231, %v1271
        %v1280 = vmul.f32 %v1233, %v1272
        %v1281 = vmul.f32 %v1235, %v1273
        %v1282 = vmul.f32 %v1237, %v1274
        %v1283 = vmul.f32 %v1239, %v1275
        %v1284 = vmul.f32 %v1241, %v1276
        %v1285 = vmul.f32 %v1243, %v1277
        %v1287 = vsel %vm1244, %v1278, 0
        %v1290 = vsel %vm1244, %v1279, 0
        %v1293 = vsel %vm564, %v921, 0
        %1295 = vmatprep.subr.mxu0 0.0
        %1296 = vmatpush1.msra.mxu0 %v920
        %1297 = vmatprep.subr.mxu0 0.0
        %1298 = vmatpush1.msra.mxu0 %v1293
        %1299 = vmatprep.subr.mxu0 0.0
        %1300 = vmatpush1.msra.mxu0 0.0
        %1301 = vmatprep.subr.mxu0 0.0
        %1302 = vmatpush1.msra.mxu0 0.0
        %1303 = vmatprep.subr.mxu0 0.0
        %1304 = vmatpush1.msra.mxu0 0.0
        %1305 = vmatprep.subr.mxu0 0.0
        %1306 = vmatpush1.msra.mxu0 0.0
        %1307 = vmatprep.subr.mxu0 0.0
        %1308 = vmatpush1.msra.mxu0 0.0
        %1309 = vmatprep.subr.mxu0 0.0
        %1310 = vmatpush1.msra.mxu0 0.0
        %1311 = vmatprep.subr.mxu0 0.0
        %1312 = vmatpush1.msra.mxu0 0.0
        %1313 = vmatprep.subr.mxu0 0.0
        %1314 = vmatpush1.msra.mxu0 0.0
        %1315 = vmatprep.subr.mxu0 0.0
        %1316 = vmatpush1.msra.mxu0 0.0
        %1317 = vmatprep.subr.mxu0 0.0
        %1318 = vmatpush1.msra.mxu0 0.0
        %1319 = vmatprep.subr.mxu0 0.0
        %1320 = vmatpush1.msra.mxu0 0.0
        %1321 = vmatprep.subr.mxu0 0.0
        %1322 = vmatpush1.msra.mxu0 0.0
        %1323 = vmatprep.subr.mxu0 0.0
        %1324 = vmatpush1.msra.mxu0 0.0
        %1325 = vmatprep.subr.mxu0 0.0
        %1326 = vmatpush1.msra.mxu0 0.0
        %1327 = vmatprep.subr.mxu0 0.0
        %1328 = vmatpush1.msra.mxu0 0.0
        %1329 = vmatprep.subr.mxu0 0.0
        %1330 = vmatpush1.msra.mxu0 0.0
        %1331 = vmatprep.subr.mxu0 0.0
        %1332 = vmatpush1.msra.mxu0 0.0
        %1333 = vmatprep.subr.mxu0 0.0
        %1334 = vmatpush1.msra.mxu0 0.0
        %1335 = vmatprep.subr.mxu0 0.0
        %1336 = vmatpush1.msra.mxu0 0.0
        %1337 = vmatprep.subr.mxu0 0.0
        %1338 = vmatpush1.msra.mxu0 0.0
        %1339 = vmatprep.subr.mxu0 0.0
        %1340 = vmatpush1.msra.mxu0 0.0
        %1341 = vmatprep.subr.mxu0 0.0
        %1342 = vmatpush1.msra.mxu0 0.0
        %1343 = vmatprep.subr.mxu0 0.0
        %1344 = vmatpush1.msra.mxu0 0.0
        %1345 = vmatprep.subr.mxu0 0.0
        %1346 = vmatpush1.msra.mxu0 0.0
        %1347 = vmatprep.subr.mxu0 0.0
        %1348 = vmatpush1.msra.mxu0 0.0
        %1349 = vmatprep.subr.mxu0 0.0
        %1350 = vmatpush1.msra.mxu0 0.0
        %1351 = vmatprep.subr.mxu0 0.0
        %1352 = vmatpush1.msra.mxu0 0.0
        %1353 = vmatprep.subr.mxu0 0.0
        %1354 = vmatpush1.msra.mxu0 0.0
        %1355 = vmatprep.subr.mxu0 0.0
        %1356 = vmatpush1.msra.mxu0 0.0
        %1357 = vmatprep.subr.mxu0 0.0
        %1358 = vmatpush1.msra.mxu0 0.0
        %1359 = vmatprep.mubr.f32.mxu0 0.0
        %1360 = vmatmul.mubr.f32.gmra.mrb[0].mxu0 %v1287
        %v1361 = vpop.f32.mrb[0].mxu0
        %v1362 = vadd.f32 0.0, %v1361
        %v1363 = vpop.f32.mrb[0].mxu0
        %1364 = vmatprep.mubr.f32.mxu0 0.0
        %1365 = vmatmul.mubr.f32.gmra.mrb[0].mxu0 %v1290
        %v1366 = vpop.f32.mrb[0].mxu0
        %v1367 = vadd.f32 0.0, %v1366
        %v1368 = vpop.f32.mrb[0].mxu0
        %1369 = vdwg.mxu0
        %v1371 = vsel %vm1244, %v1280, 0
        %v1374 = vsel %vm1244, %v1281, 0
        %v1377 = vsel %vm564, %v923, 0
        %1379 = vmatprep.subr.mxu0 0.0
        %1380 = vmatpush1.msra.mxu0 %v922
        %1381 = vmatprep.subr.mxu0 0.0
        %1382 = vmatpush1.msra.mxu0 %v1377
        %1383 = vmatprep.subr.mxu0 0.0
        %1384 = vmatpush1.msra.mxu0 0.0
        %1385 = vmatprep.subr.mxu0 0.0
        %1386 = vmatpush1.msra.mxu0 0.0
        %1387 = vmatprep.subr.mxu0 0.0
        %1388 = vmatpush1.msra.mxu0 0.0
        %1389 = vmatprep.subr.mxu0 0.0
        %1390 = vmatpush1.msra.mxu0 0.0
        %1391 = vmatprep.subr.mxu0 0.0
        %1392 = vmatpush1.msra.mxu0 0.0
        %1393 = vmatprep.subr.mxu0 0.0
        %1394 = vmatpush1.msra.mxu0 0.0
        %1395 = vmatprep.subr.mxu0 0.0
        %1396 = vmatpush1.msra.mxu0 0.0
        %1397 = vmatprep.subr.mxu0 0.0
        %1398 = vmatpush1.msra.mxu0 0.0
        %1399 = vmatprep.subr.mxu0 0.0
        %1400 = vmatpush1.msra.mxu0 0.0
        %1401 = vmatprep.subr.mxu0 0.0
        %1402 = vmatpush1.msra.mxu0 0.0
        %1403 = vmatprep.subr.mxu0 0.0
        %1404 = vmatpush1.msra.mxu0 0.0
        %1405 = vmatprep.subr.mxu0 0.0
        %1406 = vmatpush1.msra.mxu0 0.0
        %1407 = vmatprep.subr.mxu0 0.0
        %1408 = vmatpush1.msra.mxu0 0.0
        %1409 = vmatprep.subr.mxu0 0.0
        %1410 = vmatpush1.msra.mxu0 0.0
        %1411 = vmatprep.subr.mxu0 0.0
        %1412 = vmatpush1.msra.mxu0 0.0
        %1413 = vmatprep.subr.mxu0 0.0
        %1414 = vmatpush1.msra.mxu0 0.0
        %1415 = vmatprep.subr.mxu0 0.0
        %1416 = vmatpush1.msra.mxu0 0.0
        %1417 = vmatprep.subr.mxu0 0.0
        %1418 = vmatpush1.msra.mxu0 0.0
        %1419 = vmatprep.subr.mxu0 0.0
        %1420 = vmatpush1.msra.mxu0 0.0
        %1421 = vmatprep.subr.mxu0 0.0
        %1422 = vmatpush1.msra.mxu0 0.0
        %1423 = vmatprep.subr.mxu0 0.0
        %1424 = vmatpush1.msra.mxu0 0.0
        %1425 = vmatprep.subr.mxu0 0.0
        %1426 = vmatpush1.msra.mxu0 0.0
        %1427 = vmatprep.subr.mxu0 0.0
        %1428 = vmatpush1.msra.mxu0 0.0
        %1429 = vmatprep.subr.mxu0 0.0
        %1430 = vmatpush1.msra.mxu0 0.0
        %1431 = vmatprep.subr.mxu0 0.0
        %1432 = vmatpush1.msra.mxu0 0.0
        %1433 = vmatprep.subr.mxu0 0.0
        %1434 = vmatpush1.msra.mxu0 0.0
        %1435 = vmatprep.subr.mxu0 0.0
        %1436 = vmatpush1.msra.mxu0 0.0
        %1437 = vmatprep.subr.mxu0 0.0
        %1438 = vmatpush1.msra.mxu0 0.0
        %1439 = vmatprep.subr.mxu0 0.0
        %1440 = vmatpush1.msra.mxu0 0.0
        %1441 = vmatprep.subr.mxu0 0.0
        %1442 = vmatpush1.msra.mxu0 0.0
        %1443 = vmatprep.mubr.f32.mxu0 0.0
        %1444 = vmatmul.mubr.f32.gmra.mrb[0].mxu0 %v1371
        %v1445 = vpop.f32.mrb[0].mxu0
        %v1446 = vadd.f32 0.0, %v1445
        %v1447 = vpop.f32.mrb[0].mxu0
        %1448 = vmatprep.mubr.f32.mxu0 0.0
        %1449 = vmatmul.mubr.f32.gmra.mrb[0].mxu0 %v1374
        %v1450 = vpop.f32.mrb[0].mxu0
        %v1451 = vadd.f32 0.0, %v1450
        %v1452 = vpop.f32.mrb[0].mxu0
        %1453 = vdwg.mxu0
        %v1455 = vsel %vm1244, %v1282, 0
        %v1458 = vsel %vm1244, %v1283, 0
        %v1461 = vsel %vm564, %v925, 0
        %1463 = vmatprep.subr.mxu0 0.0
        %1464 = vmatpush1.msra.mxu0 %v924
        %1465 = vmatprep.subr.mxu0 0.0
        %1466 = vmatpush1.msra.mxu0 %v1461
        %1467 = vmatprep.subr.mxu0 0.0
        %1468 = vmatpush1.msra.mxu0 0.0
        %1469 = vmatprep.subr.mxu0 0.0
        %1470 = vmatpush1.msra.mxu0 0.0
        %1471 = vmatprep.subr.mxu0 0.0
        %1472 = vmatpush1.msra.mxu0 0.0
        %1473 = vmatprep.subr.mxu0 0.0
        %1474 = vmatpush1.msra.mxu0 0.0
        %1475 = vmatprep.subr.mxu0 0.0
        %1476 = vmatpush1.msra.mxu0 0.0
        %1477 = vmatprep.subr.mxu0 0.0
        %1478 = vmatpush1.msra.mxu0 0.0
        %1479 = vmatprep.subr.mxu0 0.0
        %1480 = vmatpush1.msra.mxu0 0.0
        %1481 = vmatprep.subr.mxu0 0.0
        %1482 = vmatpush1.msra.mxu0 0.0
        %1483 = vmatprep.subr.mxu0 0.0
        %1484 = vmatpush1.msra.mxu0 0.0
        %1485 = vmatprep.subr.mxu0 0.0
        %1486 = vmatpush1.msra.mxu0 0.0
        %1487 = vmatprep.subr.mxu0 0.0
        %1488 = vmatpush1.msra.mxu0 0.0
        %1489 = vmatprep.subr.mxu0 0.0
        %1490 = vmatpush1.msra.mxu0 0.0
        %1491 = vmatprep.subr.mxu0 0.0
        %1492 = vmatpush1.msra.mxu0 0.0
        %1493 = vmatprep.subr.mxu0 0.0
        %1494 = vmatpush1.msra.mxu0 0.0
        %1495 = vmatprep.subr.mxu0 0.0
        %1496 = vmatpush1.msra.mxu0 0.0
        %1497 = vmatprep.subr.mxu0 0.0
        %1498 = vmatpush1.msra.mxu0 0.0
        %1499 = vmatprep.subr.mxu0 0.0
        %1500 = vmatpush1.msra.mxu0 0.0
        %1501 = vmatprep.subr.mxu0 0.0
        %1502 = vmatpush1.msra.mxu0 0.0
        %1503 = vmatprep.subr.mxu0 0.0
        %1504 = vmatpush1.msra.mxu0 0.0
        %1505 = vmatprep.subr.mxu0 0.0
        %1506 = vmatpush1.msra.mxu0 0.0
        %1507 = vmatprep.subr.mxu0 0.0
        %1508 = vmatpush1.msra.mxu0 0.0
        %1509 = vmatprep.subr.mxu0 0.0
        %1510 = vmatpush1.msra.mxu0 0.0
        %1511 = vmatprep.subr.mxu0 0.0
        %1512 = vmatpush1.msra.mxu0 0.0
        %1513 = vmatprep.subr.mxu0 0.0
        %1514 = vmatpush1.msra.mxu0 0.0
        %1515 = vmatprep.subr.mxu0 0.0
        %1516 = vmatpush1.msra.mxu0 0.0
        %1517 = vmatprep.subr.mxu0 0.0
        %1518 = vmatpush1.msra.mxu0 0.0
        %1519 = vmatprep.subr.mxu0 0.0
        %1520 = vmatpush1.msra.mxu0 0.0
        %1521 = vmatprep.subr.mxu0 0.0
        %1522 = vmatpush1.msra.mxu0 0.0
        %1523 = vmatprep.subr.mxu0 0.0
        %1524 = vmatpush1.msra.mxu0 0.0
        %1525 = vmatprep.subr.mxu0 0.0
        %1526 = vmatpush1.msra.mxu0 0.0
        %1527 = vmatprep.mubr.f32.mxu0 0.0
        %1528 = vmatmul.mubr.f32.gmra.mrb[0].mxu0 %v1455
        %v1529 = vpop.f32.mrb[0].mxu0
        %v1530 = vadd.f32 0.0, %v1529
        %v1531 = vpop.f32.mrb[0].mxu0
        %1532 = vmatprep.mubr.f32.mxu0 0.0
        %1533 = vmatmul.mubr.f32.gmra.mrb[0].mxu0 %v1458
        %v1534 = vpop.f32.mrb[0].mxu0
        %v1535 = vadd.f32 0.0, %v1534
        %v1536 = vpop.f32.mrb[0].mxu0
        %1537 = vdwg.mxu0
        %v1539 = vsel %vm1244, %v1284, 0
        %v1542 = vsel %vm1244, %v1285, 0
        %v1545 = vsel %vm564, %v927, 0
        %1547 = vmatprep.subr.mxu0 0.0
        %1548 = vmatpush1.msra.mxu0 %v926
        %1549 = vmatprep.subr.mxu0 0.0
        %1550 = vmatpush1.msra.mxu0 %v1545
        %1551 = vmatprep.subr.mxu0 0.0
        %1552 = vmatpush1.msra.mxu0 0.0
        %1553 = vmatprep.subr.mxu0 0.0
        %1554 = vmatpush1.msra.mxu0 0.0
        %1555 = vmatprep.subr.mxu0 0.0
        %1556 = vmatpush1.msra.mxu0 0.0
        %1557 = vmatprep.subr.mxu0 0.0
        %1558 = vmatpush1.msra.mxu0 0.0
        %1559 = vmatprep.subr.mxu0 0.0
        %1560 = vmatpush1.msra.mxu0 0.0
        %1561 = vmatprep.subr.mxu0 0.0
        %1562 = vmatpush1.msra.mxu0 0.0
        %1563 = vmatprep.subr.mxu0 0.0
        %1564 = vmatpush1.msra.mxu0 0.0
        %1565 = vmatprep.subr.mxu0 0.0
        %1566 = vmatpush1.msra.mxu0 0.0
        %1567 = vmatprep.subr.mxu0 0.0
        %1568 = vmatpush1.msra.mxu0 0.0
        %1569 = vmatprep.subr.mxu0 0.0
        %1570 = vmatpush1.msra.mxu0 0.0
        %1571 = vmatprep.subr.mxu0 0.0
        %1572 = vmatpush1.msra.mxu0 0.0
        %1573 = vmatprep.subr.mxu0 0.0
        %1574 = vmatpush1.msra.mxu0 0.0
        %1575 = vmatprep.subr.mxu0 0.0
        %1576 = vmatpush1.msra.mxu0 0.0
        %1577 = vmatprep.subr.mxu0 0.0
        %1578 = vmatpush1.msra.mxu0 0.0
        %1579 = vmatprep.subr.mxu0 0.0
        %1580 = vmatpush1.msra.mxu0 0.0
        %1581 = vmatprep.subr.mxu0 0.0
        %1582 = vmatpush1.msra.mxu0 0.0
        %1583 = vmatprep.subr.mxu0 0.0
        %1584 = vmatpush1.msra.mxu0 0.0
        %1585 = vmatprep.subr.mxu0 0.0
        %1586 = vmatpush1.msra.mxu0 0.0
        %1587 = vmatprep.subr.mxu0 0.0
        %1588 = vmatpush1.msra.mxu0 0.0
        %1589 = vmatprep.subr.mxu0 0.0
        %1590 = vmatpush1.msra.mxu0 0.0
        %1591 = vmatprep.subr.mxu0 0.0
        %1592 = vmatpush1.msra.mxu0 0.0
        %1593 = vmatprep.subr.mxu0 0.0
        %1594 = vmatpush1.msra.mxu0 0.0
        %1595 = vmatprep.subr.mxu0 0.0
        %1596 = vmatpush1.msra.mxu0 0.0
        %1597 = vmatprep.subr.mxu0 0.0
        %1598 = vmatpush1.msra.mxu0 0.0
        %1599 = vmatprep.subr.mxu0 0.0
        %1600 = vmatpush1.msra.mxu0 0.0
        %1601 = vmatprep.subr.mxu0 0.0
        %1602 = vmatpush1.msra.mxu0 0.0
        %1603 = vmatprep.subr.mxu0 0.0
        %1604 = vmatpush1.msra.mxu0 0.0
        %1605 = vmatprep.subr.mxu0 0.0
        %1606 = vmatpush1.msra.mxu0 0.0
        %1607 = vmatprep.subr.mxu0 0.0
        %1608 = vmatpush1.msra.mxu0 0.0
        %1609 = vmatprep.subr.mxu0 0.0
        %1610 = vmatpush1.msra.mxu0 0.0
        %1611 = vmatprep.mubr.f32.mxu0 0.0
        %1612 = vmatmul.mubr.f32.gmra.mrb[0].mxu0 %v1539
        %v1613 = vpop.f32.mrb[0].mxu0
        %v1614 = vadd.f32 0.0, %v1613
        %v1615 = vpop.f32.mrb[0].mxu0
        %1616 = vmatprep.mubr.f32.mxu0 0.0
        %1617 = vmatmul.mubr.f32.gmra.mrb[0].mxu0 %v1542
        %v1618 = vpop.f32.mrb[0].mxu0
        %v1619 = vadd.f32 0.0, %v1618
        %v1620 = vpop.f32.mrb[0].mxu0
        %1621 = vdwg.mxu0
        %v1622 = vadd.f32 %v1362, %v1446
        %v1623 = vadd.f32 %v1622, %v1530
        %v1624 = vadd.f32 %v1623, %v1614
        %v1625 = vsel %vm564, %v1367, 0.0
        %v1626 = vsel %vm564, %v1451, 0.0
        %v1627 = vadd.f32 %v1625, %v1626
        %v1628 = vsel %vm564, %v1535, 0.0
        %v1629 = vadd.f32 %v1627, %v1628
        %v1630 = vsel %vm564, %v1619, 0.0
        %v1631 = vadd.f32 %v1629, %v1630
        %s1632 = scalar_lea.vmem [#allocation2], 768
        %v1633 = vld [vmem:[%s1632] sm:$0xff]
        %v1634 = vld [vmem:[%s1632 + $0x8] sm:$0xff]
        %v1635 = vld [vmem:[%s1632 + $0x10] sm:$0xff]
        %v1636 = vld [vmem:[%s1632 + $0x18] sm:$0xff]
        %v1637 = vld [vmem:[%s1632 + $0x20] sm:$0xff]
        %v1638 = vld [vmem:[%s1632 + $0x28] sm:$0xff]
        %v1639 = vld [vmem:[%s1632 + $0x30] sm:$0xff]
        %v1640 = vld [vmem:[%s1632 + $0x38] sm:$0xff]
        %v1641 = vld [vmem:[%s1632 + $0x40] sm:$0xff]
        %v1642 = vld [vmem:[%s1632 + $0x48] sm:$0xff]
        %v1643 = vld [vmem:[%s1632 + $0x50] sm:$0xff]
        %v1644 = vld [vmem:[%s1632 + $0x58] sm:$0xff]
        %v1645 = vld [vmem:[%s1632 + $0x60] sm:$0xff]
        %v1646 = vld [vmem:[%s1632 + $0x68] sm:$0xff]
        %v1647 = vld [vmem:[%s1632 + $0x70] sm:$0xff]
        %v1648 = vld [vmem:[%s1632 + $0x78] sm:$0xff]
        %v1649 = vld [vmem:[#allocation4 + $0x8] sm:$0x1]
        %v1650 = vlaneseq
        %v1651 = vshrl.u32 %v1650, 7
        %v1652 = vsub.s32 0, %v1651
        %v1653 = vrot.slane %v1649, %v1652
        %1654 = vmatprep.subr.mxu0 0.0
        %1655 = vmatpush1.msra.mxu0 %v1633
        %1656 = vmatprep.subr.mxu0 0.0
        %1657 = vmatpush1.msra.mxu0 %v1634
        %1658 = vmatprep.subr.mxu0 0.0
        %1659 = vmatpush1.msra.mxu0 %v1635
        %1660 = vmatprep.subr.mxu0 0.0
        %1661 = vmatpush1.msra.mxu0 %v1636
        %1662 = vmatprep.subr.mxu0 0.0
        %1663 = vmatpush1.msra.mxu0 %v1637
        %1664 = vmatprep.subr.mxu0 0.0
        %1665 = vmatpush1.msra.mxu0 %v1638
        %1666 = vmatprep.subr.mxu0 0.0
        %1667 = vmatpush1.msra.mxu0 %v1639
        %1668 = vmatprep.subr.mxu0 0.0
        %1669 = vmatpush1.msra.mxu0 %v1640
        %1670 = vmatprep.subr.mxu0 0.0
        %1671 = vmatpush1.msra.mxu0 %v1641
        %1672 = vmatprep.subr.mxu0 0.0
        %1673 = vmatpush1.msra.mxu0 %v1642
        %1674 = vmatprep.subr.mxu0 0.0
        %1675 = vmatpush1.msra.mxu0 %v1643
        %1676 = vmatprep.subr.mxu0 0.0
        %1677 = vmatpush1.msra.mxu0 %v1644
        %1678 = vmatprep.subr.mxu0 0.0
        %1679 = vmatpush1.msra.mxu0 %v1645
        %1680 = vmatprep.subr.mxu0 0.0
        %1681 = vmatpush1.msra.mxu0 %v1646
        %1682 = vmatprep.subr.mxu0 0.0
        %1683 = vmatpush1.msra.mxu0 %v1647
        %1684 = vmatprep.subr.mxu0 0.0
        %1685 = vmatpush1.msra.mxu0 %v1648
        %1686 = vmatprep.subr.mxu0 0.0
        %1687 = vmatpush1.msra.mxu0 0.0
        %1688 = vmatprep.subr.mxu0 0.0
        %1689 = vmatpush1.msra.mxu0 0.0
        %1690 = vmatprep.subr.mxu0 0.0
        %1691 = vmatpush1.msra.mxu0 0.0
        %1692 = vmatprep.subr.mxu0 0.0
        %1693 = vmatpush1.msra.mxu0 0.0
        %1694 = vmatprep.subr.mxu0 0.0
        %1695 = vmatpush1.msra.mxu0 0.0
        %1696 = vmatprep.subr.mxu0 0.0
        %1697 = vmatpush1.msra.mxu0 0.0
        %1698 = vmatprep.subr.mxu0 0.0
        %1699 = vmatpush1.msra.mxu0 0.0
        %1700 = vmatprep.subr.mxu0 0.0
        %1701 = vmatpush1.msra.mxu0 0.0
        %1702 = vmatprep.subr.mxu0 0.0
        %1703 = vmatpush1.msra.mxu0 0.0
        %1704 = vmatprep.subr.mxu0 0.0
        %1705 = vmatpush1.msra.mxu0 0.0
        %1706 = vmatprep.subr.mxu0 0.0
        %1707 = vmatpush1.msra.mxu0 0.0
        %1708 = vmatprep.subr.mxu0 0.0
        %1709 = vmatpush1.msra.mxu0 0.0
        %1710 = vmatprep.subr.mxu0 0.0
        %1711 = vmatpush1.msra.mxu0 0.0
        %1712 = vmatprep.subr.mxu0 0.0
        %1713 = vmatpush1.msra.mxu0 0.0
        %1714 = vmatprep.subr.mxu0 0.0
        %1715 = vmatpush1.msra.mxu0 0.0
        %1716 = vmatprep.subr.mxu0 0.0
        %1717 = vmatpush1.msra.mxu0 0.0
        %1718 = vmatprep.mubr.f32.mxu0 0.0
        %1719 = vmatmul.mubr.f32.gmra.mrb[0].mxu0 %v1624
        %v1720 = vpop.f32.mrb[0].mxu0
        %v1721 = vadd.f32 %v1653, %v1720
        %v1722 = vpop.f32.mrb[0].mxu0
        %1723 = vmatprep.mubr.f32.mxu0 0.0
        %1724 = vmatmul.mubr.f32.gmra.mrb[0].mxu0 %v1631
        %v1725 = vpop.f32.mrb[0].mxu0
        %v1726 = vadd.f32 %v1653, %v1725
        %v1727 = vpop.f32.mrb[0].mxu0
        %1728 = vdwg.mxu0
        %v1729 = vadd.f32 %v554, %v1721
        %v1730 = vadd.f32 %v559, %v1726
        %1731 = vadd.xlane.f32.xlu0 %v1729
        %v1732 = vpop.xlane.xlu0 %1731
        %v1733 = vsel %vm564, %v1730, 0.0
        %1734 = vadd.xlane.f32.xlu0 %v1733
        %v1735 = vpop.xlane.xlu0 %1734
        %v1736 = vmul.f32 %v1729, %v1729
        %v1737 = vmul.f32 %v1730, %v1730
        %1738 = vadd.xlane.f32.xlu0 %v1736
        %v1739 = vpop.xlane.xlu0 %1738
        %v1740 = vsel %vm564, %v1737, 0.0
        %1741 = vadd.xlane.f32.xlu0 %v1740
        %v1742 = vpop.xlane.xlu0 %1741
        %v1743 = vmul.f32 %v1732, 0.03125
        %v1744 = vmul.f32 %v1735, 0.03125
        %v1745 = vmul.f32 %v1739, 0.03125
        %v1746 = vmul.f32 %v1742, 0.03125
        %v1747 = vmul.f32 %v1743, %v1743
        %v1748 = vmul.f32 %v1744, %v1744
        %v1749 = vsub.f32 %v1745, %v1747
        %v1750 = vsub.f32 %v1746, %v1748
        %v1751 = vsub.f32 %v1729, %v1743
        %v1752 = vsub.f32 %v1730, %v1744
        %v1753 = vadd.f32 %v1749, 1e-05
        %v1754 = vadd.f32 %v1750, 1e-05
        %v1755 = vrsqrt.pop %v1753
        %v1756 = vrsqrt.pop %v1754
        %v1757 = vmul.f32 %v1751, %v1755
        %v1758 = vmul.f32 %v1752, %v1756
        %v1759 = vld [vmem:[#allocation4 + $0xd] sm:$0x1]
        %v1760 = vlaneseq
        %v1761 = vshrl.u32 %v1760, 7
        %v1762 = vsub.s32 0, %v1761
        %v1763 = vrot.slane %v1759, %v1762
        %v1764 = vmul.f32 %v1757, %v1763
        %v1765 = vmul.f32 %v1758, %v1763
        %v1766 = vld [vmem:[#allocation4 + $0xe] sm:$0x1]
        %v1767 = vlaneseq
        %v1768 = vshrl.u32 %v1767, 7
        %v1769 = vsub.s32 0, %v1768
        %v1770 = vrot.slane %v1766, %v1769
        %v1771 = vadd.f32 %v1764, %v1770
        %v1772 = vadd.f32 %v1765, %v1770
        %s1773 = scalar_lea.vmem [#allocation2], 896
        %v1774 = vld [vmem:[%s1773] sm:$0xff]
        %v1775 = vld [vmem:[%s1773 + $0x8] sm:$0xff]
        %v1776 = vld [vmem:[%s1773 + $0x10] sm:$0xff]
        %v1777 = vld [vmem:[%s1773 + $0x18] sm:$0xff]
        %v1778 = vld [vmem:[%s1773 + $0x20] sm:$0xff]
        %v1779 = vld [vmem:[%s1773 + $0x28] sm:$0xff]
        %v1780 = vld [vmem:[%s1773 + $0x30] sm:$0xff]
        %v1781 = vld [vmem:[%s1773 + $0x38] sm:$0xff]
        %v1782 = vld [vmem:[%s1773 + $0x40] sm:$0xff]
        %v1783 = vld [vmem:[%s1773 + $0x48] sm:$0xff]
        %v1784 = vld [vmem:[%s1773 + $0x50] sm:$0xff]
        %v1785 = vld [vmem:[%s1773 + $0x58] sm:$0xff]
        %v1786 = vld [vmem:[%s1773 + $0x60] sm:$0xff]
        %v1787 = vld [vmem:[%s1773 + $0x68] sm:$0xff]
        %v1788 = vld [vmem:[%s1773 + $0x70] sm:$0xff]
        %v1789 = vld [vmem:[%s1773 + $0x78] sm:$0xff]
        %v1790 = vld [vmem:[#allocation4 + $0x9] sm:$0x1]
        %v1791 = vlaneseq
        %v1792 = vshrl.u32 %v1791, 7
        %v1793 = vsub.s32 0, %v1792
        %v1794 = vrot.slane %v1790, %v1793
        %1795 = vmatprep.subr.mxu0 0.0
        %1796 = vmatpush1.msra.mxu0 %v1774
        %1797 = vmatprep.subr.mxu0 0.0
        %1798 = vmatpush1.msra.mxu0 %v1775
        %1799 = vmatprep.subr.mxu0 0.0
        %1800 = vmatpush1.msra.mxu0 %v1776
        %1801 = vmatprep.subr.mxu0 0.0
        %1802 = vmatpush1.msra.mxu0 %v1777
        %1803 = vmatprep.subr.mxu0 0.0
        %1804 = vmatpush1.msra.mxu0 %v1778
        %1805 = vmatprep.subr.mxu0 0.0
        %1806 = vmatpush1.msra.mxu0 %v1779
        %1807 = vmatprep.subr.mxu0 0.0
        %1808 = vmatpush1.msra.mxu0 %v1780
        %1809 = vmatprep.subr.mxu0 0.0
        %1810 = vmatpush1.msra.mxu0 %v1781
        %1811 = vmatprep.subr.mxu0 0.0
        %1812 = vmatpush1.msra.mxu0 %v1782
        %1813 = vmatprep.subr.mxu0 0.0
        %1814 = vmatpush1.msra.mxu0 %v1783
        %1815 = vmatprep.subr.mxu0 0.0
        %1816 = vmatpush1.msra.mxu0 %v1784
        %1817 = vmatprep.subr.mxu0 0.0
        %1818 = vmatpush1.msra.mxu0 %v1785
        %1819 = vmatprep.subr.mxu0 0.0
        %1820 = vmatpush1.msra.mxu0 %v1786
        %1821 = vmatprep.subr.mxu0 0.0
        %1822 = vmatpush1.msra.mxu0 %v1787
        %1823 = vmatprep.subr.mxu0 0.0
        %1824 = vmatpush1.msra.mxu0 %v1788
        %1825 = vmatprep.subr.mxu0 0.0
        %1826 = vmatpush1.msra.mxu0 %v1789
        %1827 = vmatprep.subr.mxu0 0.0
        %1828 = vmatpush1.msra.mxu0 0.0
        %1829 = vmatprep.subr.mxu0 0.0
        %1830 = vmatpush1.msra.mxu0 0.0
        %1831 = vmatprep.subr.mxu0 0.0
        %1832 = vmatpush1.msra.mxu0 0.0
        %1833 = vmatprep.subr.mxu0 0.0
        %1834 = vmatpush1.msra.mxu0 0.0
        %1835 = vmatprep.subr.mxu0 0.0
        %1836 = vmatpush1.msra.mxu0 0.0
        %1837 = vmatprep.subr.mxu0 0.0
        %1838 = vmatpush1.msra.mxu0 0.0
        %1839 = vmatprep.subr.mxu0 0.0
        %1840 = vmatpush1.msra.mxu0 0.0
        %1841 = vmatprep.subr.mxu0 0.0
        %1842 = vmatpush1.msra.mxu0 0.0
        %1843 = vmatprep.subr.mxu0 0.0
        %1844 = vmatpush1.msra.mxu0 0.0
        %1845 = vmatprep.subr.mxu0 0.0
        %1846 = vmatpush1.msra.mxu0 0.0
        %1847 = vmatprep.subr.mxu0 0.0
        %1848 = vmatpush1.msra.mxu0 0.0
        %1849 = vmatprep.subr.mxu0 0.0
        %1850 = vmatpush1.msra.mxu0 0.0
        %1851 = vmatprep.subr.mxu0 0.0
        %1852 = vmatpush1.msra.mxu0 0.0
        %1853 = vmatprep.subr.mxu0 0.0
        %1854 = vmatpush1.msra.mxu0 0.0
        %1855 = vmatprep.subr.mxu0 0.0
        %1856 = vmatpush1.msra.mxu0 0.0
        %1857 = vmatprep.subr.mxu0 0.0
        %1858 = vmatpush1.msra.mxu0 0.0
        %1859 = vmatprep.mubr.f32.mxu0 0.0
        %1860 = vmatmul.mubr.f32.gmra.mrb[0].mxu0 %v1771
        %v1861 = vpop.f32.mrb[0].mxu0
        %v1862 = vadd.f32 %v1794, %v1861
        %v1863 = vpop.f32.mrb[0].mxu0
        %1864 = vmatprep.mubr.f32.mxu0 0.0
        %1865 = vmatmul.mubr.f32.gmra.mrb[0].mxu0 %v1772
        %v1866 = vpop.f32.mrb[0].mxu0
        %v1867 = vadd.f32 %v1794, %v1866
        %v1868 = vpop.f32.mrb[0].mxu0
        %1869 = vdwg.mxu0
        %v1870 = vmax.f32 %v1862, 0.0
        %v1871 = vmax.f32 %v1867, 0.0
        %s1872 = scalar_lea.vmem [#allocation2], 1024
        %v1873 = vld [vmem:[%s1872] sm:$0xff]
        %v1874 = vld [vmem:[%s1872 + $0x8] sm:$0xff]
        %v1875 = vld [vmem:[%s1872 + $0x10] sm:$0xff]
        %v1876 = vld [vmem:[%s1872 + $0x18] sm:$0xff]
        %v1877 = vld [vmem:[%s1872 + $0x20] sm:$0xff]
        %v1878 = vld [vmem:[%s1872 + $0x28] sm:$0xff]
        %v1879 = vld [vmem:[%s1872 + $0x30] sm:$0xff]
        %v1880 = vld [vmem:[%s1872 + $0x38] sm:$0xff]
        %v1881 = vld [vmem:[%s1872 + $0x40] sm:$0xff]
        %v1882 = vld [vmem:[%s1872 + $0x48] sm:$0xff]
        %v1883 = vld [vmem:[%s1872 + $0x50] sm:$0xff]
        %v1884 = vld [vmem:[%s1872 + $0x58] sm:$0xff]
        %v1885 = vld [vmem:[%s1872 + $0x60] sm:$0xff]
        %v1886 = vld [vmem:[%s1872 + $0x68] sm:$0xff]
        %v1887 = vld [vmem:[%s1872 + $0x70] sm:$0xff]
        %v1888 = vld [vmem:[%s1872 + $0x78] sm:$0xff]
        %v1889 = vld [vmem:[#allocation4 + $0xa] sm:$0x1]
        %v1890 = vlaneseq
        %v1891 = vshrl.u32 %v1890, 7
        %v1892 = vsub.s32 0, %v1891
        %v1893 = vrot.slane %v1889, %v1892
        %1894 = vmatprep.subr.mxu0 0.0
        %1895 = vmatpush1.msra.mxu0 %v1873
        %1896 = vmatprep.subr.mxu0 0.0
        %1897 = vmatpush1.msra.mxu0 %v1874
        %1898 = vmatprep.subr.mxu0 0.0
        %1899 = vmatpush1.msra.mxu0 %v1875
        %1900 = vmatprep.subr.mxu0 0.0
        %1901 = vmatpush1.msra.mxu0 %v1876
        %1902 = vmatprep.subr.mxu0 0.0
        %1903 = vmatpush1.msra.mxu0 %v1877
        %1904 = vmatprep.subr.mxu0 0.0
        %1905 = vmatpush1.msra.mxu0 %v1878
        %1906 = vmatprep.subr.mxu0 0.0
        %1907 = vmatpush1.msra.mxu0 %v1879
        %1908 = vmatprep.subr.mxu0 0.0
        %1909 = vmatpush1.msra.mxu0 %v1880
        %1910 = vmatprep.subr.mxu0 0.0
        %1911 = vmatpush1.msra.mxu0 %v1881
        %1912 = vmatprep.subr.mxu0 0.0
        %1913 = vmatpush1.msra.mxu0 %v1882
        %1914 = vmatprep.subr.mxu0 0.0
        %1915 = vmatpush1.msra.mxu0 %v1883
        %1916 = vmatprep.subr.mxu0 0.0
        %1917 = vmatpush1.msra.mxu0 %v1884
        %1918 = vmatprep.subr.mxu0 0.0
        %1919 = vmatpush1.msra.mxu0 %v1885
        %1920 = vmatprep.subr.mxu0 0.0
        %1921 = vmatpush1.msra.mxu0 %v1886
        %1922 = vmatprep.subr.mxu0 0.0
        %1923 = vmatpush1.msra.mxu0 %v1887
        %1924 = vmatprep.subr.mxu0 0.0
        %1925 = vmatpush1.msra.mxu0 %v1888
        %1926 = vmatprep.subr.mxu0 0.0
        %1927 = vmatpush1.msra.mxu0 0.0
        %1928 = vmatprep.subr.mxu0 0.0
        %1929 = vmatpush1.msra.mxu0 0.0
        %1930 = vmatprep.subr.mxu0 0.0
        %1931 = vmatpush1.msra.mxu0 0.0
        %1932 = vmatprep.subr.mxu0 0.0
        %1933 = vmatpush1.msra.mxu0 0.0
        %1934 = vmatprep.subr.mxu0 0.0
        %1935 = vmatpush1.msra.mxu0 0.0
        %1936 = vmatprep.subr.mxu0 0.0
        %1937 = vmatpush1.msra.mxu0 0.0
        %1938 = vmatprep.subr.mxu0 0.0
        %1939 = vmatpush1.msra.mxu0 0.0
        %1940 = vmatprep.subr.mxu0 0.0
        %1941 = vmatpush1.msra.mxu0 0.0
        %1942 = vmatprep.subr.mxu0 0.0
        %1943 = vmatpush1.msra.mxu0 0.0
        %1944 = vmatprep.subr.mxu0 0.0
        %1945 = vmatpush1.msra.mxu0 0.0
        %1946 = vmatprep.subr.mxu0 0.0
        %1947 = vmatpush1.msra.mxu0 0.0
        %1948 = vmatprep.subr.mxu0 0.0
        %1949 = vmatpush1.msra.mxu0 0.0
        %1950 = vmatprep.subr.mxu0 0.0
        %1951 = vmatpush1.msra.mxu0 0.0
        %1952 = vmatprep.subr.mxu0 0.0
        %1953 = vmatpush1.msra.mxu0 0.0
        %1954 = vmatprep.subr.mxu0 0.0
        %1955 = vmatpush1.msra.mxu0 0.0
        %1956 = vmatprep.subr.mxu0 0.0
        %1957 = vmatpush1.msra.mxu0 0.0
        %1958 = vmatprep.mubr.f32.mxu0 0.0
        %1959 = vmatmul.mubr.f32.gmra.mrb[0].mxu0 %v1870
        %v1960 = vpop.f32.mrb[0].mxu0
        %v1961 = vadd.f32 %v1893, %v1960
        %v1962 = vpop.f32.mrb[0].mxu0
        %1963 = vmatprep.mubr.f32.mxu0 0.0
        %1964 = vmatmul.mubr.f32.gmra.mrb[0].mxu0 %v1871
        %v1965 = vpop.f32.mrb[0].mxu0
        %v1966 = vadd.f32 %v1893, %v1965
        %v1967 = vpop.f32.mrb[0].mxu0
        %1968 = vdwg.mxu0
        %v1969 = vadd.f32 %v1729, %v1961
        %v1970 = vadd.f32 %v1730, %v1966
        %1971 = vadd.xlane.f32.xlu0 %v1969
        %v1972 = vpop.xlane.xlu0 %1971
        %v1973 = vsel %vm564, %v1970, 0.0
        %1974 = vadd.xlane.f32.xlu0 %v1973
        %v1975 = vpop.xlane.xlu0 %1974
        %v1976 = vmul.f32 %v1969, %v1969
        %v1977 = vmul.f32 %v1970, %v1970
        %1978 = vadd.xlane.f32.xlu0 %v1976
        %v1979 = vpop.xlane.xlu0 %1978
        %v1980 = vsel %vm564, %v1977, 0.0
        %1981 = vadd.xlane.f32.xlu0 %v1980
        %v1982 = vpop.xlane.xlu0 %1981
        %v1983 = vmul.f32 %v1972, 0.03125
        %v1984 = vmul.f32 %v1975, 0.03125
        %v1985 = vmul.f32 %v1979, 0.03125
        %v1986 = vmul.f32 %v1982, 0.03125
        %v1987 = vmul.f32 %v1983, %v1983
        %v1988 = vmul.f32 %v1984, %v1984
        %v1989 = vsub.f32 %v1985, %v1987
        %v1990 = vsub.f32 %v1986, %v1988
        %v1991 = vsub.f32 %v1969, %v1983
        %v1992 = vsub.f32 %v1970, %v1984
        %v1993 = vadd.f32 %v1989, 1e-05
        %v1994 = vadd.f32 %v1990, 1e-05
        %v1995 = vrsqrt.pop %v1993
        %v1996 = vrsqrt.pop %v1994
        %v1997 = vmul.f32 %v1991, %v1995
        %v1998 = vmul.f32 %v1992, %v1996
        %v1999 = vld [vmem:[#allocation4 + $0x15] sm:$0x1]
        %v2000 = vlaneseq
        %v2001 = vshrl.u32 %v2000, 7
        %v2002 = vsub.s32 0, %v2001
        %v2003 = vrot.slane %v1999, %v2002
        %v2004 = vmul.f32 %v1997, %v2003
        %v2005 = vmul.f32 %v1998, %v2003
        %v2006 = vld [vmem:[#allocation4 + $0x16] sm:$0x1]
        %v2007 = vlaneseq
        %v2008 = vshrl.u32 %v2007, 7
        %v2009 = vsub.s32 0, %v2008
        %v2010 = vrot.slane %v2006, %v2009
        %v2011 = vadd.f32 %v2004, %v2010
        %v2012 = vadd.f32 %v2005, %v2010
        %s2013 = scalar_lea.vmem [#allocation2], 1152
        %v2014 = vld [vmem:[%s2013] sm:$0xff]
        %v2015 = vld [vmem:[%s2013 + $0x8] sm:$0xff]
        %v2016 = vld [vmem:[%s2013 + $0x10] sm:$0xff]
        %v2017 = vld [vmem:[%s2013 + $0x18] sm:$0xff]
        %v2018 = vld [vmem:[%s2013 + $0x20] sm:$0xff]
        %v2019 = vld [vmem:[%s2013 + $0x28] sm:$0xff]
        %v2020 = vld [vmem:[%s2013 + $0x30] sm:$0xff]
        %v2021 = vld [vmem:[%s2013 + $0x38] sm:$0xff]
        %v2022 = vld [vmem:[%s2013 + $0x40] sm:$0xff]
        %v2023 = vld [vmem:[%s2013 + $0x48] sm:$0xff]
        %v2024 = vld [vmem:[%s2013 + $0x50] sm:$0xff]
        %v2025 = vld [vmem:[%s2013 + $0x58] sm:$0xff]
        %v2026 = vld [vmem:[%s2013 + $0x60] sm:$0xff]
        %v2027 = vld [vmem:[%s2013 + $0x68] sm:$0xff]
        %v2028 = vld [vmem:[%s2013 + $0x70] sm:$0xff]
        %v2029 = vld [vmem:[%s2013 + $0x78] sm:$0xff]
        %v2030 = vld [vmem:[#allocation4 + $0xf] sm:$0x1]
        %v2031 = vlaneseq
        %v2032 = vshrl.u32 %v2031, 7
        %v2033 = vsub.s32 0, %v2032
        %v2034 = vrot.slane %v2030, %v2033
        %2035 = vmatprep.subr.mxu0 0.0
        %2036 = vmatpush1.msra.mxu0 %v2014
        %2037 = vmatprep.subr.mxu0 0.0
        %2038 = vmatpush1.msra.mxu0 %v2015
        %2039 = vmatprep.subr.mxu0 0.0
        %2040 = vmatpush1.msra.mxu0 %v2016
        %2041 = vmatprep.subr.mxu0 0.0
        %2042 = vmatpush1.msra.mxu0 %v2017
        %2043 = vmatprep.subr.mxu0 0.0
        %2044 = vmatpush1.msra.mxu0 %v2018
        %2045 = vmatprep.subr.mxu0 0.0
        %2046 = vmatpush1.msra.mxu0 %v2019
        %2047 = vmatprep.subr.mxu0 0.0
        %2048 = vmatpush1.msra.mxu0 %v2020
        %2049 = vmatprep.subr.mxu0 0.0
        %2050 = vmatpush1.msra.mxu0 %v2021
        %2051 = vmatprep.subr.mxu0 0.0
        %2052 = vmatpush1.msra.mxu0 %v2022
        %2053 = vmatprep.subr.mxu0 0.0
        %2054 = vmatpush1.msra.mxu0 %v2023
        %2055 = vmatprep.subr.mxu0 0.0
        %2056 = vmatpush1.msra.mxu0 %v2024
        %2057 = vmatprep.subr.mxu0 0.0
        %2058 = vmatpush1.msra.mxu0 %v2025
        %2059 = vmatprep.subr.mxu0 0.0
        %2060 = vmatpush1.msra.mxu0 %v2026
        %2061 = vmatprep.subr.mxu0 0.0
        %2062 = vmatpush1.msra.mxu0 %v2027
        %2063 = vmatprep.subr.mxu0 0.0
        %2064 = vmatpush1.msra.mxu0 %v2028
        %2065 = vmatprep.subr.mxu0 0.0
        %2066 = vmatpush1.msra.mxu0 %v2029
        %2067 = vmatprep.subr.mxu0 0.0
        %2068 = vmatpush1.msra.mxu0 0.0
        %2069 = vmatprep.subr.mxu0 0.0
        %2070 = vmatpush1.msra.mxu0 0.0
        %2071 = vmatprep.subr.mxu0 0.0
        %2072 = vmatpush1.msra.mxu0 0.0
        %2073 = vmatprep.subr.mxu0 0.0
        %2074 = vmatpush1.msra.mxu0 0.0
        %2075 = vmatprep.subr.mxu0 0.0
        %2076 = vmatpush1.msra.mxu0 0.0
        %2077 = vmatprep.subr.mxu0 0.0
        %2078 = vmatpush1.msra.mxu0 0.0
        %2079 = vmatprep.subr.mxu0 0.0
        %2080 = vmatpush1.msra.mxu0 0.0
        %2081 = vmatprep.subr.mxu0 0.0
        %2082 = vmatpush1.msra.mxu0 0.0
        %2083 = vmatprep.subr.mxu0 0.0
        %2084 = vmatpush1.msra.mxu0 0.0
        %2085 = vmatprep.subr.mxu0 0.0
        %2086 = vmatpush1.msra.mxu0 0.0
        %2087 = vmatprep.subr.mxu0 0.0
        %2088 = vmatpush1.msra.mxu0 0.0
        %2089 = vmatprep.subr.mxu0 0.0
        %2090 = vmatpush1.msra.mxu0 0.0
        %2091 = vmatprep.subr.mxu0 0.0
        %2092 = vmatpush1.msra.mxu0 0.0
        %2093 = vmatprep.subr.mxu0 0.0
        %2094 = vmatpush1.msra.mxu0 0.0
        %2095 = vmatprep.subr.mxu0 0.0
        %2096 = vmatpush1.msra.mxu0 0.0
        %2097 = vmatprep.subr.mxu0 0.0
        %2098 = vmatpush1.msra.mxu0 0.0
        %2099 = vmatprep.mubr.f32.mxu0 0.0
        %2100 = vmatmul.mubr.f32.gmra.mrb[0].mxu0 %v2011
        %v2101 = vpop.f32.mrb[0].mxu0
        %v2102 = vadd.f32 %v2034, %v2101
        %v2103 = vpop.f32.mrb[0].mxu0
        %2104 = vmatprep.mubr.f32.mxu0 0.0
        %2105 = vmatmul.mubr.f32.gmra.mrb[0].mxu0 %v2012
        %v2106 = vpop.f32.mrb[0].mxu0
        %v2107 = vadd.f32 %v2034, %v2106
        %v2108 = vpop.f32.mrb[0].mxu0
        %2109 = vdwg.mxu0
        %s2110 = scalar_lea.vmem [#allocation2], 1280
        %v2111 = vld [vmem:[%s2110] sm:$0xff]
        %v2112 = vld [vmem:[%s2110 + $0x8] sm:$0xff]
        %v2113 = vld [vmem:[%s2110 + $0x10] sm:$0xff]
        %v2114 = vld [vmem:[%s2110 + $0x18] sm:$0xff]
        %v2115 = vld [vmem:[%s2110 + $0x20] sm:$0xff]
        %v2116 = vld [vmem:[%s2110 + $0x28] sm:$0xff]
        %v2117 = vld [vmem:[%s2110 + $0x30] sm:$0xff]
        %v2118 = vld [vmem:[%s2110 + $0x38] sm:$0xff]
        %v2119 = vld [vmem:[%s2110 + $0x40] sm:$0xff]
        %v2120 = vld [vmem:[%s2110 + $0x48] sm:$0xff]
        %v2121 = vld [vmem:[%s2110 + $0x50] sm:$0xff]
        %v2122 = vld [vmem:[%s2110 + $0x58] sm:$0xff]
        %v2123 = vld [vmem:[%s2110 + $0x60] sm:$0xff]
        %v2124 = vld [vmem:[%s2110 + $0x68] sm:$0xff]
        %v2125 = vld [vmem:[%s2110 + $0x70] sm:$0xff]
        %v2126 = vld [vmem:[%s2110 + $0x78] sm:$0xff]
        %v2127 = vld [vmem:[#allocation4 + $0x10] sm:$0x1]
        %v2128 = vlaneseq
        %v2129 = vshrl.u32 %v2128, 7
        %v2130 = vsub.s32 0, %v2129
        %v2131 = vrot.slane %v2127, %v2130
        %2132 = vmatprep.subr.mxu0 0.0
        %2133 = vmatpush1.msra.mxu0 %v2111
        %2134 = vmatprep.subr.mxu0 0.0
        %2135 = vmatpush1.msra.mxu0 %v2112
        %2136 = vmatprep.subr.mxu0 0.0
        %2137 = vmatpush1.msra.mxu0 %v2113
        %2138 = vmatprep.subr.mxu0 0.0
        %2139 = vmatpush1.msra.mxu0 %v2114
        %2140 = vmatprep.subr.mxu0 0.0
        %2141 = vmatpush1.msra.mxu0 %v2115
        %2142 = vmatprep.subr.mxu0 0.0
        %2143 = vmatpush1.msra.mxu0 %v2116
        %2144 = vmatprep.subr.mxu0 0.0
        %2145 = vmatpush1.msra.mxu0 %v2117
        %2146 = vmatprep.subr.mxu0 0.0
        %2147 = vmatpush1.msra.mxu0 %v2118
        %2148 = vmatprep.subr.mxu0 0.0
        %2149 = vmatpush1.msra.mxu0 %v2119
        %2150 = vmatprep.subr.mxu0 0.0
        %2151 = vmatpush1.msra.mxu0 %v2120
        %2152 = vmatprep.subr.mxu0 0.0
        %2153 = vmatpush1.msra.mxu0 %v2121
        %2154 = vmatprep.subr.mxu0 0.0
        %2155 = vmatpush1.msra.mxu0 %v2122
        %2156 = vmatprep.subr.mxu0 0.0
        %2157 = vmatpush1.msra.mxu0 %v2123
        %2158 = vmatprep.subr.mxu0 0.0
        %2159 = vmatpush1.msra.mxu0 %v2124
        %2160 = vmatprep.subr.mxu0 0.0
        %2161 = vmatpush1.msra.mxu0 %v2125
        %2162 = vmatprep.subr.mxu0 0.0
        %2163 = vmatpush1.msra.mxu0 %v2126
        %2164 = vmatprep.subr.mxu0 0.0
        %2165 = vmatpush1.msra.mxu0 0.0
        %2166 = vmatprep.subr.mxu0 0.0
        %2167 = vmatpush1.msra.mxu0 0.0
        %2168 = vmatprep.subr.mxu0 0.0
        %2169 = vmatpush1.msra.mxu0 0.0
        %2170 = vmatprep.subr.mxu0 0.0
        %2171 = vmatpush1.msra.mxu0 0.0
        %2172 = vmatprep.subr.mxu0 0.0
        %2173 = vmatpush1.msra.mxu0 0.0
        %2174 = vmatprep.subr.mxu0 0.0
        %2175 = vmatpush1.msra.mxu0 0.0
        %2176 = vmatprep.subr.mxu0 0.0
        %2177 = vmatpush1.msra.mxu0 0.0
        %2178 = vmatprep.subr.mxu0 0.0
        %2179 = vmatpush1.msra.mxu0 0.0
        %2180 = vmatprep.subr.mxu0 0.0
        %2181 = vmatpush1.msra.mxu0 0.0
        %2182 = vmatprep.subr.mxu0 0.0
        %2183 = vmatpush1.msra.mxu0 0.0
        %2184 = vmatprep.subr.mxu0 0.0
        %2185 = vmatpush1.msra.mxu0 0.0
        %2186 = vmatprep.subr.mxu0 0.0
        %2187 = vmatpush1.msra.mxu0 0.0
        %2188 = vmatprep.subr.mxu0 0.0
        %2189 = vmatpush1.msra.mxu0 0.0
        %2190 = vmatprep.subr.mxu0 0.0
        %2191 = vmatpush1.msra.mxu0 0.0
        %2192 = vmatprep.subr.mxu0 0.0
        %2193 = vmatpush1.msra.mxu0 0.0
        %2194 = vmatprep.subr.mxu0 0.0
        %2195 = vmatpush1.msra.mxu0 0.0
        %2196 = vmatprep.mubr.f32.mxu0 0.0
        %2197 = vmatmul.mubr.f32.gmra.mrb[0].mxu0 %v2011
        %v2198 = vpop.f32.mrb[0].mxu0
        %v2199 = vadd.f32 %v2131, %v2198
        %v2200 = vpop.f32.mrb[0].mxu0
        %2201 = vmatprep.mubr.f32.mxu0 0.0
        %2202 = vmatmul.mubr.f32.gmra.mrb[0].mxu0 %v2012
        %v2203 = vpop.f32.mrb[0].mxu0
        %v2204 = vadd.f32 %v2131, %v2203
        %v2205 = vpop.f32.mrb[0].mxu0
        %2206 = vdwg.mxu0
        %s2207 = scalar_lea.vmem [#allocation2], 1408
        %v2208 = vld [vmem:[%s2207] sm:$0xff]
        %v2209 = vld [vmem:[%s2207 + $0x8] sm:$0xff]
        %v2210 = vld [vmem:[%s2207 + $0x10] sm:$0xff]
        %v2211 = vld [vmem:[%s2207 + $0x18] sm:$0xff]
        %v2212 = vld [vmem:[%s2207 + $0x20] sm:$0xff]
        %v2213 = vld [vmem:[%s2207 + $0x28] sm:$0xff]
        %v2214 = vld [vmem:[%s2207 + $0x30] sm:$0xff]
        %v2215 = vld [vmem:[%s2207 + $0x38] sm:$0xff]
        %v2216 = vld [vmem:[%s2207 + $0x40] sm:$0xff]
        %v2217 = vld [vmem:[%s2207 + $0x48] sm:$0xff]
        %v2218 = vld [vmem:[%s2207 + $0x50] sm:$0xff]
        %v2219 = vld [vmem:[%s2207 + $0x58] sm:$0xff]
        %v2220 = vld [vmem:[%s2207 + $0x60] sm:$0xff]
        %v2221 = vld [vmem:[%s2207 + $0x68] sm:$0xff]
        %v2222 = vld [vmem:[%s2207 + $0x70] sm:$0xff]
        %v2223 = vld [vmem:[%s2207 + $0x78] sm:$0xff]
        %v2224 = vld [vmem:[#allocation4 + $0x11] sm:$0x1]
        %v2225 = vlaneseq
        %v2226 = vshrl.u32 %v2225, 7
        %v2227 = vsub.s32 0, %v2226
        %v2228 = vrot.slane %v2224, %v2227
        %2229 = vmatprep.subr.mxu0 0.0
        %2230 = vmatpush1.msra.mxu0 %v2208
        %2231 = vmatprep.subr.mxu0 0.0
        %2232 = vmatpush1.msra.mxu0 %v2209
        %2233 = vmatprep.subr.mxu0 0.0
        %2234 = vmatpush1.msra.mxu0 %v2210
        %2235 = vmatprep.subr.mxu0 0.0
        %2236 = vmatpush1.msra.mxu0 %v2211
        %2237 = vmatprep.subr.mxu0 0.0
        %2238 = vmatpush1.msra.mxu0 %v2212
        %2239 = vmatprep.subr.mxu0 0.0
        %2240 = vmatpush1.msra.mxu0 %v2213
        %2241 = vmatprep.subr.mxu0 0.0
        %2242 = vmatpush1.msra.mxu0 %v2214
        %2243 = vmatprep.subr.mxu0 0.0
        %2244 = vmatpush1.msra.mxu0 %v2215
        %2245 = vmatprep.subr.mxu0 0.0
        %2246 = vmatpush1.msra.mxu0 %v2216
        %2247 = vmatprep.subr.mxu0 0.0
        %2248 = vmatpush1.msra.mxu0 %v2217
        %2249 = vmatprep.subr.mxu0 0.0
        %2250 = vmatpush1.msra.mxu0 %v2218
        %2251 = vmatprep.subr.mxu0 0.0
        %2252 = vmatpush1.msra.mxu0 %v2219
        %2253 = vmatprep.subr.mxu0 0.0
        %2254 = vmatpush1.msra.mxu0 %v2220
        %2255 = vmatprep.subr.mxu0 0.0
        %2256 = vmatpush1.msra.mxu0 %v2221
        %2257 = vmatprep.subr.mxu0 0.0
        %2258 = vmatpush1.msra.mxu0 %v2222
        %2259 = vmatprep.subr.mxu0 0.0
        %2260 = vmatpush1.msra.mxu0 %v2223
        %2261 = vmatprep.subr.mxu0 0.0
        %2262 = vmatpush1.msra.mxu0 0.0
        %2263 = vmatprep.subr.mxu0 0.0
        %2264 = vmatpush1.msra.mxu0 0.0
        %2265 = vmatprep.subr.mxu0 0.0
        %2266 = vmatpush1.msra.mxu0 0.0
        %2267 = vmatprep.subr.mxu0 0.0
        %2268 = vmatpush1.msra.mxu0 0.0
        %2269 = vmatprep.subr.mxu0 0.0
        %2270 = vmatpush1.msra.mxu0 0.0
        %2271 = vmatprep.subr.mxu0 0.0
        %2272 = vmatpush1.msra.mxu0 0.0
        %2273 = vmatprep.subr.mxu0 0.0
        %2274 = vmatpush1.msra.mxu0 0.0
        %2275 = vmatprep.subr.mxu0 0.0
        %2276 = vmatpush1.msra.mxu0 0.0
        %2277 = vmatprep.subr.mxu0 0.0
        %2278 = vmatpush1.msra.mxu0 0.0
        %2279 = vmatprep.subr.mxu0 0.0
        %2280 = vmatpush1.msra.mxu0 0.0
        %2281 = vmatprep.subr.mxu0 0.0
        %2282 = vmatpush1.msra.mxu0 0.0
        %2283 = vmatprep.subr.mxu0 0.0
        %2284 = vmatpush1.msra.mxu0 0.0
        %2285 = vmatprep.subr.mxu0 0.0
        %2286 = vmatpush1.msra.mxu0 0.0
        %2287 = vmatprep.subr.mxu0 0.0
        %2288 = vmatpush1.msra.mxu0 0.0
        %2289 = vmatprep.subr.mxu0 0.0
        %2290 = vmatpush1.msra.mxu0 0.0
        %2291 = vmatprep.subr.mxu0 0.0
        %2292 = vmatpush1.msra.mxu0 0.0
        %2293 = vmatprep.mubr.f32.mxu0 0.0
        %2294 = vmatmul.mubr.f32.gmra.mrb[0].mxu0 %v2011
        %v2295 = vpop.f32.mrb[0].mxu0
        %v2296 = vadd.f32 %v2228, %v2295
        %v2297 = vpop.f32.mrb[0].mxu0
        %2298 = vmatprep.mubr.f32.mxu0 0.0
        %2299 = vmatmul.mubr.f32.gmra.mrb[0].mxu0 %v2012
        %v2300 = vpop.f32.mrb[0].mxu0
        %v2301 = vadd.f32 %v2228, %v2300
        %v2302 = vpop.f32.mrb[0].mxu0
        %2303 = vdwg.mxu0
        %v2304 = vmul.f32 %v2199, %v899
        %v2305 = vmul.f32 %v2204, %v899
        %v2306 = vmul.f32 %v2199, %v903
        %v2307 = vmul.f32 %v2204, %v903
        %v2308 = vmul.f32 %v2199, %v907
        %v2309 = vmul.f32 %v2204, %v907
        %v2310 = vmul.f32 %v2199, %v911
        %v2311 = vmul.f32 %v2204, %v911
        %v2312 = vmul.f32 %v2296, %v899
        %v2313 = vmul.f32 %v2301, %v899
        %v2314 = vmul.f32 %v2296, %v903
        %v2315 = vmul.f32 %v2301, %v903
        %v2316 = vmul.f32 %v2296, %v907
        %v2317 = vmul.f32 %v2301, %v907
        %v2318 = vmul.f32 %v2296, %v911
        %v2319 = vmul.f32 %v2301, %v911
        %2320 = vmatprep.subr.mxu0 0.0
        %2321 = vmatpush1.xpose.msra.mxu0 %v2304
        %2322 = vmatprep.subr.mxu0 0.0
        %2323 = vmatpush1.xpose.msra.mxu0 %v2305
        %2324 = vmatprep.subr.mxu0 0.0
        %2325 = vmatpush1.xpose.msra.mxu0 0.0
        %2326 = vmatprep.subr.mxu0 0.0
        %2327 = vmatpush1.xpose.msra.mxu0 0.0
        %2328 = vmatprep.subr.mxu0 0.0
        %2329 = vmatpush1.xpose.msra.mxu0 0.0
        %2330 = vmatprep.subr.mxu0 0.0
        %2331 = vmatpush1.xpose.msra.mxu0 0.0
        %2332 = vmatprep.subr.mxu0 0.0
        %2333 = vmatpush1.xpose.msra.mxu0 0.0
        %2334 = vmatprep.subr.mxu0 0.0
        %2335 = vmatpush1.xpose.msra.mxu0 0.0
        %2336 = vmatprep.subr.mxu0 0.0
        %2337 = vmatpush1.xpose.msra.mxu0 0.0
        %2338 = vmatprep.subr.mxu0 0.0
        %2339 = vmatpush1.xpose.msra.mxu0 0.0
        %2340 = vmatprep.subr.mxu0 0.0
        %2341 = vmatpush1.xpose.msra.mxu0 0.0
        %2342 = vmatprep.subr.mxu0 0.0
        %2343 = vmatpush1.xpose.msra.mxu0 0.0
        %2344 = vmatprep.subr.mxu0 0.0
        %2345 = vmatpush1.xpose.msra.mxu0 0.0
        %2346 = vmatprep.subr.mxu0 0.0
        %2347 = vmatpush1.xpose.msra.mxu0 0.0
        %2348 = vmatprep.subr.mxu0 0.0
        %2349 = vmatpush1.xpose.msra.mxu0 0.0
        %2350 = vmatprep.subr.mxu0 0.0
        %2351 = vmatpush1.xpose.msra.mxu0 0.0
        %2352 = vmatprep.subr.mxu0 0.0
        %2353 = vmatpush1.xpose.msra.mxu0 0.0
        %2354 = vmatprep.subr.mxu0 0.0
        %2355 = vmatpush1.xpose.msra.mxu0 0.0
        %2356 = vmatprep.subr.mxu0 0.0
        %2357 = vmatpush1.xpose.msra.mxu0 0.0
        %2358 = vmatprep.subr.mxu0 0.0
        %2359 = vmatpush1.xpose.msra.mxu0 0.0
        %2360 = vmatprep.subr.mxu0 0.0
        %2361 = vmatpush1.xpose.msra.mxu0 0.0
        %2362 = vmatprep.subr.mxu0 0.0
        %2363 = vmatpush1.xpose.msra.mxu0 0.0
        %2364 = vmatprep.subr.mxu0 0.0
        %2365 = vmatpush1.xpose.msra.mxu0 0.0
        %2366 = vmatprep.subr.mxu0 0.0
        %2367 = vmatpush1.xpose.msra.mxu0 0.0
        %2368 = vmatprep.subr.mxu0 0.0
        %2369 = vmatpush1.xpose.msra.mxu0 0.0
        %2370 = vmatprep.subr.mxu0 0.0
        %2371 = vmatpush1.xpose.msra.mxu0 0.0
        %2372 = vmatprep.subr.mxu0 0.0
        %2373 = vmatpush1.xpose.msra.mxu0 0.0
        %2374 = vmatprep.subr.mxu0 0.0
        %2375 = vmatpush1.xpose.msra.mxu0 0.0
        %2376 = vmatprep.subr.mxu0 0.0
        %2377 = vmatpush1.xpose.msra.mxu0 0.0
        %2378 = vmatprep.subr.mxu0 0.0
        %2379 = vmatpush1.xpose.msra.mxu0 0.0
        %2380 = vmatprep.subr.mxu0 0.0
        %2381 = vmatpush1.xpose.msra.mxu0 0.0
        %2382 = vmatprep.subr.mxu0 0.0
        %2383 = vmatpush1.xpose.msra.mxu0 0.0
        %2384 = vmatprep.mubr.f32.mxu0 0.0
        %2385 = vmatmul.mubr.f32.gmra.mrb[0].mxu0 %v2102
        %v2386 = vpop.f32.mrb[0].mxu0
        %v2387 = vadd.f32 %v451, %v2386
        %v2388 = vpop.f32.mrb[0].mxu0
        %2389 = vmatprep.mubr.f32.mxu0 0.0
        %2390 = vmatmul.mubr.f32.gmra.mrb[0].mxu0 %v2107
        %v2391 = vpop.f32.mrb[0].mxu0
        %v2392 = vadd.f32 %v452, %v2391
        %v2393 = vpop.f32.mrb[0].mxu0
        %2394 = vdwg.mxu0
        %2395 = vmatprep.subr.mxu0 0.0
        %2396 = vmatpush1.xpose.msra.mxu0 %v2306
        %2397 = vmatprep.subr.mxu0 0.0
        %2398 = vmatpush1.xpose.msra.mxu0 %v2307
        %2399 = vmatprep.subr.mxu0 0.0
        %2400 = vmatpush1.xpose.msra.mxu0 0.0
        %2401 = vmatprep.subr.mxu0 0.0
        %2402 = vmatpush1.xpose.msra.mxu0 0.0
        %2403 = vmatprep.subr.mxu0 0.0
        %2404 = vmatpush1.xpose.msra.mxu0 0.0
        %2405 = vmatprep.subr.mxu0 0.0
        %2406 = vmatpush1.xpose.msra.mxu0 0.0
        %2407 = vmatprep.subr.mxu0 0.0
        %2408 = vmatpush1.xpose.msra.mxu0 0.0
        %2409 = vmatprep.subr.mxu0 0.0
        %2410 = vmatpush1.xpose.msra.mxu0 0.0
        %2411 = vmatprep.subr.mxu0 0.0
        %2412 = vmatpush1.xpose.msra.mxu0 0.0
        %2413 = vmatprep.subr.mxu0 0.0
        %2414 = vmatpush1.xpose.msra.mxu0 0.0
        %2415 = vmatprep.subr.mxu0 0.0
        %2416 = vmatpush1.xpose.msra.mxu0 0.0
        %2417 = vmatprep.subr.mxu0 0.0
        %2418 = vmatpush1.xpose.msra.mxu0 0.0
        %2419 = vmatprep.subr.mxu0 0.0
        %2420 = vmatpush1.xpose.msra.mxu0 0.0
        %2421 = vmatprep.subr.mxu0 0.0
        %2422 = vmatpush1.xpose.msra.mxu0 0.0
        %2423 = vmatprep.subr.mxu0 0.0
        %2424 = vmatpush1.xpose.msra.mxu0 0.0
        %2425 = vmatprep.subr.mxu0 0.0
        %2426 = vmatpush1.xpose.msra.mxu0 0.0
        %2427 = vmatprep.subr.mxu0 0.0
        %2428 = vmatpush1.xpose.msra.mxu0 0.0
        %2429 = vmatprep.subr.mxu0 0.0
        %2430 = vmatpush1.xpose.msra.mxu0 0.0
        %2431 = vmatprep.subr.mxu0 0.0
        %2432 = vmatpush1.xpose.msra.mxu0 0.0
        %2433 = vmatprep.subr.mxu0 0.0
        %2434 = vmatpush1.xpose.msra.mxu0 0.0
        %2435 = vmatprep.subr.mxu0 0.0
        %2436 = vmatpush1.xpose.msra.mxu0 0.0
        %2437 = vmatprep.subr.mxu0 0.0
        %2438 = vmatpush1.xpose.msra.mxu0 0.0
        %2439 = vmatprep.subr.mxu0 0.0
        %2440 = vmatpush1.xpose.msra.mxu0 0.0
        %2441 = vmatprep.subr.mxu0 0.0
        %2442 = vmatpush1.xpose.msra.mxu0 0.0
        %2443 = vmatprep.subr.mxu0 0.0
        %2444 = vmatpush1.xpose.msra.mxu0 0.0
        %2445 = vmatprep.subr.mxu0 0.0
        %2446 = vmatpush1.xpose.msra.mxu0 0.0
        %2447 = vmatprep.subr.mxu0 0.0
        %2448 = vmatpush1.xpose.msra.mxu0 0.0
        %2449 = vmatprep.subr.mxu0 0.0
        %2450 = vmatpush1.xpose.msra.mxu0 0.0
        %2451 = vmatprep.subr.mxu0 0.0
        %2452 = vmatpush1.xpose.msra.mxu0 0.0
        %2453 = vmatprep.subr.mxu0 0.0
        %2454 = vmatpush1.xpose.msra.mxu0 0.0
        %2455 = vmatprep.subr.mxu0 0.0
        %2456 = vmatpush1.xpose.msra.mxu0 0.0
        %2457 = vmatprep.subr.mxu0 0.0
        %2458 = vmatpush1.xpose.msra.mxu0 0.0
        %2459 = vmatprep.mubr.f32.mxu0 0.0
        %2460 = vmatmul.mubr.f32.gmra.mrb[0].mxu0 %v2102
        %v2461 = vpop.f32.mrb[0].mxu0
        %v2462 = vadd.f32 %v451, %v2461
        %v2463 = vpop.f32.mrb[0].mxu0
        %2464 = vmatprep.mubr.f32.mxu0 0.0
        %2465 = vmatmul.mubr.f32.gmra.mrb[0].mxu0 %v2107
        %v2466 = vpop.f32.mrb[0].mxu0
        %v2467 = vadd.f32 %v452, %v2466
        %v2468 = vpop.f32.mrb[0].mxu0
        %2469 = vdwg.mxu0
        %2470 = vmatprep.subr.mxu0 0.0
        %2471 = vmatpush1.xpose.msra.mxu0 %v2308
        %2472 = vmatprep.subr.mxu0 0.0
        %2473 = vmatpush1.xpose.msra.mxu0 %v2309
        %2474 = vmatprep.subr.mxu0 0.0
        %2475 = vmatpush1.xpose.msra.mxu0 0.0
        %2476 = vmatprep.subr.mxu0 0.0
        %2477 = vmatpush1.xpose.msra.mxu0 0.0
        %2478 = vmatprep.subr.mxu0 0.0
        %2479 = vmatpush1.xpose.msra.mxu0 0.0
        %2480 = vmatprep.subr.mxu0 0.0
        %2481 = vmatpush1.xpose.msra.mxu0 0.0
        %2482 = vmatprep.subr.mxu0 0.0
        %2483 = vmatpush1.xpose.msra.mxu0 0.0
        %2484 = vmatprep.subr.mxu0 0.0
        %2485 = vmatpush1.xpose.msra.mxu0 0.0
        %2486 = vmatprep.subr.mxu0 0.0
        %2487 = vmatpush1.xpose.msra.mxu0 0.0
        %2488 = vmatprep.subr.mxu0 0.0
        %2489 = vmatpush1.xpose.msra.mxu0 0.0
        %2490 = vmatprep.subr.mxu0 0.0
        %2491 = vmatpush1.xpose.msra.mxu0 0.0
        %2492 = vmatprep.subr.mxu0 0.0
        %2493 = vmatpush1.xpose.msra.mxu0 0.0
        %2494 = vmatprep.subr.mxu0 0.0
        %2495 = vmatpush1.xpose.msra.mxu0 0.0
        %2496 = vmatprep.subr.mxu0 0.0
        %2497 = vmatpush1.xpose.msra.mxu0 0.0
        %2498 = vmatprep.subr.mxu0 0.0
        %2499 = vmatpush1.xpose.msra.mxu0 0.0
        %2500 = vmatprep.subr.mxu0 0.0
        %2501 = vmatpush1.xpose.msra.mxu0 0.0
        %2502 = vmatprep.subr.mxu0 0.0
        %2503 = vmatpush1.xpose.msra.mxu0 0.0
        %2504 = vmatprep.subr.mxu0 0.0
        %2505 = vmatpush1.xpose.msra.mxu0 0.0
        %2506 = vmatprep.subr.mxu0 0.0
        %2507 = vmatpush1.xpose.msra.mxu0 0.0
        %2508 = vmatprep.subr.mxu0 0.0
        %2509 = vmatpush1.xpose.msra.mxu0 0.0
        %2510 = vmatprep.subr.mxu0 0.0
        %2511 = vmatpush1.xpose.msra.mxu0 0.0
        %2512 = vmatprep.subr.mxu0 0.0
        %2513 = vmatpush1.xpose.msra.mxu0 0.0
        %2514 = vmatprep.subr.mxu0 0.0
        %2515 = vmatpush1.xpose.msra.mxu0 0.0
        %2516 = vmatprep.subr.mxu0 0.0
        %2517 = vmatpush1.xpose.msra.mxu0 0.0
        %2518 = vmatprep.subr.mxu0 0.0
        %2519 = vmatpush1.xpose.msra.mxu0 0.0
        %2520 = vmatprep.subr.mxu0 0.0
        %2521 = vmatpush1.xpose.msra.mxu0 0.0
        %2522 = vmatprep.subr.mxu0 0.0
        %2523 = vmatpush1.xpose.msra.mxu0 0.0
        %2524 = vmatprep.subr.mxu0 0.0
        %2525 = vmatpush1.xpose.msra.mxu0 0.0
        %2526 = vmatprep.subr.mxu0 0.0
        %2527 = vmatpush1.xpose.msra.mxu0 0.0
        %2528 = vmatprep.subr.mxu0 0.0
        %2529 = vmatpush1.xpose.msra.mxu0 0.0
        %2530 = vmatprep.subr.mxu0 0.0
        %2531 = vmatpush1.xpose.msra.mxu0 0.0
        %2532 = vmatprep.subr.mxu0 0.0
        %2533 = vmatpush1.xpose.msra.mxu0 0.0
        %2534 = vmatprep.mubr.f32.mxu0 0.0
        %2535 = vmatmul.mubr.f32.gmra.mrb[0].mxu0 %v2102
        %v2536 = vpop.f32.mrb[0].mxu0
        %v2537 = vadd.f32 %v451, %v2536
        %v2538 = vpop.f32.mrb[0].mxu0
        %2539 = vmatprep.mubr.f32.mxu0 0.0
        %2540 = vmatmul.mubr.f32.gmra.mrb[0].mxu0 %v2107
        %v2541 = vpop.f32.mrb[0].mxu0
        %v2542 = vadd.f32 %v452, %v2541
        %v2543 = vpop.f32.mrb[0].mxu0
        %2544 = vdwg.mxu0
        %2545 = vmatprep.subr.mxu0 0.0
        %2546 = vmatpush1.xpose.msra.mxu0 %v2310
        %2547 = vmatprep.subr.mxu0 0.0
        %2548 = vmatpush1.xpose.msra.mxu0 %v2311
        %2549 = vmatprep.subr.mxu0 0.0
        %2550 = vmatpush1.xpose.msra.mxu0 0.0
        %2551 = vmatprep.subr.mxu0 0.0
        %2552 = vmatpush1.xpose.msra.mxu0 0.0
        %2553 = vmatprep.subr.mxu0 0.0
        %2554 = vmatpush1.xpose.msra.mxu0 0.0
        %2555 = vmatprep.subr.mxu0 0.0
        %2556 = vmatpush1.xpose.msra.mxu0 0.0
        %2557 = vmatprep.subr.mxu0 0.0
        %2558 = vmatpush1.xpose.msra.mxu0 0.0
        %2559 = vmatprep.subr.mxu0 0.0
        %2560 = vmatpush1.xpose.msra.mxu0 0.0
        %2561 = vmatprep.subr.mxu0 0.0
        %2562 = vmatpush1.xpose.msra.mxu0 0.0
        %2563 = vmatprep.subr.mxu0 0.0
        %2564 = vmatpush1.xpose.msra.mxu0 0.0
        %2565 = vmatprep.subr.mxu0 0.0
        %2566 = vmatpush1.xpose.msra.mxu0 0.0
        %2567 = vmatprep.subr.mxu0 0.0
        %2568 = vmatpush1.xpose.msra.mxu0 0.0
        %2569 = vmatprep.subr.mxu0 0.0
        %2570 = vmatpush1.xpose.msra.mxu0 0.0
        %2571 = vmatprep.subr.mxu0 0.0
        %2572 = vmatpush1.xpose.msra.mxu0 0.0
        %2573 = vmatprep.subr.mxu0 0.0
        %2574 = vmatpush1.xpose.msra.mxu0 0.0
        %2575 = vmatprep.subr.mxu0 0.0
        %2576 = vmatpush1.xpose.msra.mxu0 0.0
        %2577 = vmatprep.subr.mxu0 0.0
        %2578 = vmatpush1.xpose.msra.mxu0 0.0
        %2579 = vmatprep.subr.mxu0 0.0
        %2580 = vmatpush1.xpose.msra.mxu0 0.0
        %2581 = vmatprep.subr.mxu0 0.0
        %2582 = vmatpush1.xpose.msra.mxu0 0.0
        %2583 = vmatprep.subr.mxu0 0.0
        %2584 = vmatpush1.xpose.msra.mxu0 0.0
        %2585 = vmatprep.subr.mxu0 0.0
        %2586 = vmatpush1.xpose.msra.mxu0 0.0
        %2587 = vmatprep.subr.mxu0 0.0
        %2588 = vmatpush1.xpose.msra.mxu0 0.0
        %2589 = vmatprep.subr.mxu0 0.0
        %2590 = vmatpush1.xpose.msra.mxu0 0.0
        %2591 = vmatprep.subr.mxu0 0.0
        %2592 = vmatpush1.xpose.msra.mxu0 0.0
        %2593 = vmatprep.subr.mxu0 0.0
        %2594 = vmatpush1.xpose.msra.mxu0 0.0
        %2595 = vmatprep.subr.mxu0 0.0
        %2596 = vmatpush1.xpose.msra.mxu0 0.0
        %2597 = vmatprep.subr.mxu0 0.0
        %2598 = vmatpush1.xpose.msra.mxu0 0.0
        %2599 = vmatprep.subr.mxu0 0.0
        %2600 = vmatpush1.xpose.msra.mxu0 0.0
        %2601 = vmatprep.subr.mxu0 0.0
        %2602 = vmatpush1.xpose.msra.mxu0 0.0
        %2603 = vmatprep.subr.mxu0 0.0
        %2604 = vmatpush1.xpose.msra.mxu0 0.0
        %2605 = vmatprep.subr.mxu0 0.0
        %2606 = vmatpush1.xpose.msra.mxu0 0.0
        %2607 = vmatprep.subr.mxu0 0.0
        %2608 = vmatpush1.xpose.msra.mxu0 0.0
        %2609 = vmatprep.mubr.f32.mxu0 0.0
        %2610 = vmatmul.mubr.f32.gmra.mrb[0].mxu0 %v2102
        %v2611 = vpop.f32.mrb[0].mxu0
        %v2612 = vadd.f32 %v451, %v2611
        %v2613 = vpop.f32.mrb[0].mxu0
        %2614 = vmatprep.mubr.f32.mxu0 0.0
        %2615 = vmatmul.mubr.f32.gmra.mrb[0].mxu0 %v2107
        %v2616 = vpop.f32.mrb[0].mxu0
        %v2617 = vadd.f32 %v452, %v2616
        %v2618 = vpop.f32.mrb[0].mxu0
        %2619 = vdwg.mxu0
        %v2620 = vmul.f32 %v2387, 1.442695
        %v2621 = vpow.pop %v2620
        %v2622 = vmul.f32 %v2392, 1.442695
        %v2623 = vpow.pop %v2622
        %v2624 = vmul.f32 %v2462, 1.442695
        %v2625 = vpow.pop %v2624
        %v2626 = vmul.f32 %v2467, 1.442695
        %v2627 = vpow.pop %v2626
        %v2628 = vmul.f32 %v2537, 1.442695
        %v2629 = vpow.pop %v2628
        %v2630 = vmul.f32 %v2542, 1.442695
        %v2631 = vpow.pop %v2630
        %v2632 = vmul.f32 %v2612, 1.442695
        %v2633 = vpow.pop %v2632
        %v2634 = vmul.f32 %v2617, 1.442695
        %v2635 = vpow.pop %v2634
        %v2636 = vsel %vm1244, %v2621, 0.0
        %2637 = vadd.xlane.f32.xlu0 %v2636
        %v2638 = vpop.xlane.xlu0 %2637
        %v2639 = vsel %vm1248, %v2623, 0.0
        %2640 = vadd.xlane.f32.xlu0 %v2639
        %v2641 = vpop.xlane.xlu0 %2640
        %v2642 = vsel %vm1244, %v2625, 0.0
        %2643 = vadd.xlane.f32.xlu0 %v2642
        %v2644 = vpop.xlane.xlu0 %2643
        %v2645 = vsel %vm1248, %v2627, 0.0
        %2646 = vadd.xlane.f32.xlu0 %v2645
        %v2647 = vpop.xlane.xlu0 %2646
        %v2648 = vsel %vm1244, %v2629, 0.0
        %2649 = vadd.xlane.f32.xlu0 %v2648
        %v2650 = vpop.xlane.xlu0 %2649
        %v2651 = vsel %vm1248, %v2631, 0.0
        %2652 = vadd.xlane.f32.xlu0 %v2651
        %v2653 = vpop.xlane.xlu0 %2652
        %v2654 = vsel %vm1244, %v2633, 0.0
        %2655 = vadd.xlane.f32.xlu0 %v2654
        %v2656 = vpop.xlane.xlu0 %2655
        %v2657 = vsel %vm1248, %v2635, 0.0
        %2658 = vadd.xlane.f32.xlu0 %v2657
        %v2659 = vpop.xlane.xlu0 %2658
        %v2660 = vrcp.pop %v2638
        %v2661 = vrcp.pop %v2641
        %v2662 = vrcp.pop %v2644
        %v2663 = vrcp.pop %v2647
        %v2664 = vrcp.pop %v2650
        %v2665 = vrcp.pop %v2653
        %v2666 = vrcp.pop %v2656
        %v2667 = vrcp.pop %v2659
        %v2668 = vmul.f32 %v2621, %v2660
        %v2669 = vmul.f32 %v2623, %v2661
        %v2670 = vmul.f32 %v2625, %v2662
        %v2671 = vmul.f32 %v2627, %v2663
        %v2672 = vmul.f32 %v2629, %v2664
        %v2673 = vmul.f32 %v2631, %v2665
        %v2674 = vmul.f32 %v2633, %v2666
        %v2675 = vmul.f32 %v2635, %v2667
        %v2677 = vsel %vm1244, %v2668, 0
        %v2680 = vsel %vm1244, %v2669, 0
        %v2683 = vsel %vm564, %v2313, 0
        %2685 = vmatprep.subr.mxu0 0.0
        %2686 = vmatpush1.msra.mxu0 %v2312
        %2687 = vmatprep.subr.mxu0 0.0
        %2688 = vmatpush1.msra.mxu0 %v2683
        %2689 = vmatprep.subr.mxu0 0.0
        %2690 = vmatpush1.msra.mxu0 0.0
        %2691 = vmatprep.subr.mxu0 0.0
        %2692 = vmatpush1.msra.mxu0 0.0
        %2693 = vmatprep.subr.mxu0 0.0
        %2694 = vmatpush1.msra.mxu0 0.0
        %2695 = vmatprep.subr.mxu0 0.0
        %2696 = vmatpush1.msra.mxu0 0.0
        %2697 = vmatprep.subr.mxu0 0.0
        %2698 = vmatpush1.msra.mxu0 0.0
        %2699 = vmatprep.subr.mxu0 0.0
        %2700 = vmatpush1.msra.mxu0 0.0
        %2701 = vmatprep.subr.mxu0 0.0
        %2702 = vmatpush1.msra.mxu0 0.0
        %2703 = vmatprep.subr.mxu0 0.0
        %2704 = vmatpush1.msra.mxu0 0.0
        %2705 = vmatprep.subr.mxu0 0.0
        %2706 = vmatpush1.msra.mxu0 0.0
        %2707 = vmatprep.subr.mxu0 0.0
        %2708 = vmatpush1.msra.mxu0 0.0
        %2709 = vmatprep.subr.mxu0 0.0
        %2710 = vmatpush1.msra.mxu0 0.0
        %2711 = vmatprep.subr.mxu0 0.0
        %2712 = vmatpush1.msra.mxu0 0.0
        %2713 = vmatprep.subr.mxu0 0.0
        %2714 = vmatpush1.msra.mxu0 0.0
        %2715 = vmatprep.subr.mxu0 0.0
        %2716 = vmatpush1.msra.mxu0 0.0
        %2717 = vmatprep.subr.mxu0 0.0
        %2718 = vmatpush1.msra.mxu0 0.0
        %2719 = vmatprep.subr.mxu0 0.0
        %2720 = vmatpush1.msra.mxu0 0.0
        %2721 = vmatprep.subr.mxu0 0.0
        %2722 = vmatpush1.msra.mxu0 0.0
        %2723 = vmatprep.subr.mxu0 0.0
        %2724 = vmatpush1.msra.mxu0 0.0
        %2725 = vmatprep.subr.mxu0 0.0
        %2726 = vmatpush1.msra.mxu0 0.0
        %2727 = vmatprep.subr.mxu0 0.0
        %2728 = vmatpush1.msra.mxu0 0.0
        %2729 = vmatprep.subr.mxu0 0.0
        %2730 = vmatpush1.msra.mxu0 0.0
        %2731 = vmatprep.subr.mxu0 0.0
        %2732 = vmatpush1.msra.mxu0 0.0
        %2733 = vmatprep.subr.mxu0 0.0
        %2734 = vmatpush1.msra.mxu0 0.0
        %2735 = vmatprep.subr.mxu0 0.0
        %2736 = vmatpush1.msra.mxu0 0.0
        %2737 = vmatprep.subr.mxu0 0.0
        %2738 = vmatpush1.msra.mxu0 0.0
        %2739 = vmatprep.subr.mxu0 0.0
        %2740 = vmatpush1.msra.mxu0 0.0
        %2741 = vmatprep.subr.mxu0 0.0
        %2742 = vmatpush1.msra.mxu0 0.0
        %2743 = vmatprep.subr.mxu0 0.0
        %2744 = vmatpush1.msra.mxu0 0.0
        %2745 = vmatprep.subr.mxu0 0.0
        %2746 = vmatpush1.msra.mxu0 0.0
        %2747 = vmatprep.subr.mxu0 0.0
        %2748 = vmatpush1.msra.mxu0 0.0
        %2749 = vmatprep.mubr.f32.mxu0 0.0
        %2750 = vmatmul.mubr.f32.gmra.mrb[0].mxu0 %v2677
        %v2751 = vpop.f32.mrb[0].mxu0
        %v2752 = vadd.f32 0.0, %v2751
        %v2753 = vpop.f32.mrb[0].mxu0
        %2754 = vmatprep.mubr.f32.mxu0 0.0
        %2755 = vmatmul.mubr.f32.gmra.mrb[0].mxu0 %v2680
        %v2756 = vpop.f32.mrb[0].mxu0
        %v2757 = vadd.f32 0.0, %v2756
        %v2758 = vpop.f32.mrb[0].mxu0
        %2759 = vdwg.mxu0
        %v2761 = vsel %vm1244, %v2670, 0
        %v2764 = vsel %vm1244, %v2671, 0
        %v2767 = vsel %vm564, %v2315, 0
        %2769 = vmatprep.subr.mxu0 0.0
        %2770 = vmatpush1.msra.mxu0 %v2314
        %2771 = vmatprep.subr.mxu0 0.0
        %2772 = vmatpush1.msra.mxu0 %v2767
        %2773 = vmatprep.subr.mxu0 0.0
        %2774 = vmatpush1.msra.mxu0 0.0
        %2775 = vmatprep.subr.mxu0 0.0
        %2776 = vmatpush1.msra.mxu0 0.0
        %2777 = vmatprep.subr.mxu0 0.0
        %2778 = vmatpush1.msra.mxu0 0.0
        %2779 = vmatprep.subr.mxu0 0.0
        %2780 = vmatpush1.msra.mxu0 0.0
        %2781 = vmatprep.subr.mxu0 0.0
        %2782 = vmatpush1.msra.mxu0 0.0
        %2783 = vmatprep.subr.mxu0 0.0
        %2784 = vmatpush1.msra.mxu0 0.0
        %2785 = vmatprep.subr.mxu0 0.0
        %2786 = vmatpush1.msra.mxu0 0.0
        %2787 = vmatprep.subr.mxu0 0.0
        %2788 = vmatpush1.msra.mxu0 0.0
        %2789 = vmatprep.subr.mxu0 0.0
        %2790 = vmatpush1.msra.mxu0 0.0
        %2791 = vmatprep.subr.mxu0 0.0
        %2792 = vmatpush1.msra.mxu0 0.0
        %2793 = vmatprep.subr.mxu0 0.0
        %2794 = vmatpush1.msra.mxu0 0.0
        %2795 = vmatprep.subr.mxu0 0.0
        %2796 = vmatpush1.msra.mxu0 0.0
        %2797 = vmatprep.subr.mxu0 0.0
        %2798 = vmatpush1.msra.mxu0 0.0
        %2799 = vmatprep.subr.mxu0 0.0
        %2800 = vmatpush1.msra.mxu0 0.0
        %2801 = vmatprep.subr.mxu0 0.0
        %2802 = vmatpush1.msra.mxu0 0.0
        %2803 = vmatprep.subr.mxu0 0.0
        %2804 = vmatpush1.msra.mxu0 0.0
        %2805 = vmatprep.subr.mxu0 0.0
        %2806 = vmatpush1.msra.mxu0 0.0
        %2807 = vmatprep.subr.mxu0 0.0
        %2808 = vmatpush1.msra.mxu0 0.0
        %2809 = vmatprep.subr.mxu0 0.0
        %2810 = vmatpush1.msra.mxu0 0.0
        %2811 = vmatprep.subr.mxu0 0.0
        %2812 = vmatpush1.msra.mxu0 0.0
        %2813 = vmatprep.subr.mxu0 0.0
        %2814 = vmatpush1.msra.mxu0 0.0
        %2815 = vmatprep.subr.mxu0 0.0
        %2816 = vmatpush1.msra.mxu0 0.0
        %2817 = vmatprep.subr.mxu0 0.0
        %2818 = vmatpush1.msra.mxu0 0.0
        %2819 = vmatprep.subr.mxu0 0.0
        %2820 = vmatpush1.msra.mxu0 0.0
        %2821 = vmatprep.subr.mxu0 0.0
        %2822 = vmatpush1.msra.mxu0 0.0
        %2823 = vmatprep.subr.mxu0 0.0
        %2824 = vmatpush1.msra.mxu0 0.0
        %2825 = vmatprep.subr.mxu0 0.0
        %2826 = vmatpush1.msra.mxu0 0.0
        %2827 = vmatprep.subr.mxu0 0.0
        %2828 = vmatpush1.msra.mxu0 0.0
        %2829 = vmatprep.subr.mxu0 0.0
        %2830 = vmatpush1.msra.mxu0 0.0
        %2831 = vmatprep.subr.mxu0 0.0
        %2832 = vmatpush1.msra.mxu0 0.0
        %2833 = vmatprep.mubr.f32.mxu0 0.0
        %2834 = vmatmul.mubr.f32.gmra.mrb[0].mxu0 %v2761
        %v2835 = vpop.f32.mrb[0].mxu0
        %v2836 = vadd.f32 0.0, %v2835
        %v2837 = vpop.f32.mrb[0].mxu0
        %2838 = vmatprep.mubr.f32.mxu0 0.0
        %2839 = vmatmul.mubr.f32.gmra.mrb[0].mxu0 %v2764
        %v2840 = vpop.f32.mrb[0].mxu0
        %v2841 = vadd.f32 0.0, %v2840
        %v2842 = vpop.f32.mrb[0].mxu0
        %2843 = vdwg.mxu0
        %v2845 = vsel %vm1244, %v2672, 0
        %v2848 = vsel %vm1244, %v2673, 0
        %v2851 = vsel %vm564, %v2317, 0
        %2853 = vmatprep.subr.mxu0 0.0
        %2854 = vmatpush1.msra.mxu0 %v2316
        %2855 = vmatprep.subr.mxu0 0.0
        %2856 = vmatpush1.msra.mxu0 %v2851
        %2857 = vmatprep.subr.mxu0 0.0
        %2858 = vmatpush1.msra.mxu0 0.0
        %2859 = vmatprep.subr.mxu0 0.0
        %2860 = vmatpush1.msra.mxu0 0.0
        %2861 = vmatprep.subr.mxu0 0.0
        %2862 = vmatpush1.msra.mxu0 0.0
        %2863 = vmatprep.subr.mxu0 0.0
        %2864 = vmatpush1.msra.mxu0 0.0
        %2865 = vmatprep.subr.mxu0 0.0
        %2866 = vmatpush1.msra.mxu0 0.0
        %2867 = vmatprep.subr.mxu0 0.0
        %2868 = vmatpush1.msra.mxu0 0.0
        %2869 = vmatprep.subr.mxu0 0.0
        %2870 = vmatpush1.msra.mxu0 0.0
        %2871 = vmatprep.subr.mxu0 0.0
        %2872 = vmatpush1.msra.mxu0 0.0
        %2873 = vmatprep.subr.mxu0 0.0
        %2874 = vmatpush1.msra.mxu0 0.0
        %2875 = vmatprep.subr.mxu0 0.0
        %2876 = vmatpush1.msra.mxu0 0.0
        %2877 = vmatprep.subr.mxu0 0.0
        %2878 = vmatpush1.msra.mxu0 0.0
        %2879 = vmatprep.subr.mxu0 0.0
        %2880 = vmatpush1.msra.mxu0 0.0
        %2881 = vmatprep.subr.mxu0 0.0
        %2882 = vmatpush1.msra.mxu0 0.0
        %2883 = vmatprep.subr.mxu0 0.0
        %2884 = vmatpush1.msra.mxu0 0.0
        %2885 = vmatprep.subr.mxu0 0.0
        %2886 = vmatpush1.msra.mxu0 0.0
        %2887 = vmatprep.subr.mxu0 0.0
        %2888 = vmatpush1.msra.mxu0 0.0
        %2889 = vmatprep.subr.mxu0 0.0
        %2890 = vmatpush1.msra.mxu0 0.0
        %2891 = vmatprep.subr.mxu0 0.0
        %2892 = vmatpush1.msra.mxu0 0.0
        %2893 = vmatprep.subr.mxu0 0.0
        %2894 = vmatpush1.msra.mxu0 0.0
        %2895 = vmatprep.subr.mxu0 0.0
        %2896 = vmatpush1.msra.mxu0 0.0
        %2897 = vmatprep.subr.mxu0 0.0
        %2898 = vmatpush1.msra.mxu0 0.0
        %2899 = vmatprep.subr.mxu0 0.0
        %2900 = vmatpush1.msra.mxu0 0.0
        %2901 = vmatprep.subr.mxu0 0.0
        %2902 = vmatpush1.msra.mxu0 0.0
        %2903 = vmatprep.subr.mxu0 0.0
        %2904 = vmatpush1.msra.mxu0 0.0
        %2905 = vmatprep.subr.mxu0 0.0
        %2906 = vmatpush1.msra.mxu0 0.0
        %2907 = vmatprep.subr.mxu0 0.0
        %2908 = vmatpush1.msra.mxu0 0.0
        %2909 = vmatprep.subr.mxu0 0.0
        %2910 = vmatpush1.msra.mxu0 0.0
        %2911 = vmatprep.subr.mxu0 0.0
        %2912 = vmatpush1.msra.mxu0 0.0
        %2913 = vmatprep.subr.mxu0 0.0
        %2914 = vmatpush1.msra.mxu0 0.0
        %2915 = vmatprep.subr.mxu0 0.0
        %2916 = vmatpush1.msra.mxu0 0.0
        %2917 = vmatprep.mubr.f32.mxu0 0.0
        %2918 = vmatmul.mubr.f32.gmra.mrb[0].mxu0 %v2845
        %v2919 = vpop.f32.mrb[0].mxu0
        %v2920 = vadd.f32 0.0, %v2919
        %v2921 = vpop.f32.mrb[0].mxu0
        %2922 = vmatprep.mubr.f32.mxu0 0.0
        %2923 = vmatmul.mubr.f32.gmra.mrb[0].mxu0 %v2848
        %v2924 = vpop.f32.mrb[0].mxu0
        %v2925 = vadd.f32 0.0, %v2924
        %v2926 = vpop.f32.mrb[0].mxu0
        %2927 = vdwg.mxu0
        %v2929 = vsel %vm1244, %v2674, 0
        %v2932 = vsel %vm1244, %v2675, 0
        %v2935 = vsel %vm564, %v2319, 0
        %2937 = vmatprep.subr.mxu0 0.0
        %2938 = vmatpush1.msra.mxu0 %v2318
        %2939 = vmatprep.subr.mxu0 0.0
        %2940 = vmatpush1.msra.mxu0 %v2935
        %2941 = vmatprep.subr.mxu0 0.0
        %2942 = vmatpush1.msra.mxu0 0.0
        %2943 = vmatprep.subr.mxu0 0.0
        %2944 = vmatpush1.msra.mxu0 0.0
        %2945 = vmatprep.subr.mxu0 0.0
        %2946 = vmatpush1.msra.mxu0 0.0
        %2947 = vmatprep.subr.mxu0 0.0
        %2948 = vmatpush1.msra.mxu0 0.0
        %2949 = vmatprep.subr.mxu0 0.0
        %2950 = vmatpush1.msra.mxu0 0.0
        %2951 = vmatprep.subr.mxu0 0.0
        %2952 = vmatpush1.msra.mxu0 0.0
        %2953 = vmatprep.subr.mxu0 0.0
        %2954 = vmatpush1.msra.mxu0 0.0
        %2955 = vmatprep.subr.mxu0 0.0
        %2956 = vmatpush1.msra.mxu0 0.0
        %2957 = vmatprep.subr.mxu0 0.0
        %2958 = vmatpush1.msra.mxu0 0.0
        %2959 = vmatprep.subr.mxu0 0.0
        %2960 = vmatpush1.msra.mxu0 0.0
        %2961 = vmatprep.subr.mxu0 0.0
        %2962 = vmatpush1.msra.mxu0 0.0
        %2963 = vmatprep.subr.mxu0 0.0
        %2964 = vmatpush1.msra.mxu0 0.0
        %2965 = vmatprep.subr.mxu0 0.0
        %2966 = vmatpush1.msra.mxu0 0.0
        %2967 = vmatprep.subr.mxu0 0.0
        %2968 = vmatpush1.msra.mxu0 0.0
        %2969 = vmatprep.subr.mxu0 0.0
        %2970 = vmatpush1.msra.mxu0 0.0
        %2971 = vmatprep.subr.mxu0 0.0
        %2972 = vmatpush1.msra.mxu0 0.0
        %2973 = vmatprep.subr.mxu0 0.0
        %2974 = vmatpush1.msra.mxu0 0.0
        %2975 = vmatprep.subr.mxu0 0.0
        %2976 = vmatpush1.msra.mxu0 0.0
        %2977 = vmatprep.subr.mxu0 0.0
        %2978 = vmatpush1.msra.mxu0 0.0
        %2979 = vmatprep.subr.mxu0 0.0
        %2980 = vmatpush1.msra.mxu0 0.0
        %2981 = vmatprep.subr.mxu0 0.0
        %2982 = vmatpush1.msra.mxu0 0.0
        %2983 = vmatprep.subr.mxu0 0.0
        %2984 = vmatpush1.msra.mxu0 0.0
        %2985 = vmatprep.subr.mxu0 0.0
        %2986 = vmatpush1.msra.mxu0 0.0
        %2987 = vmatprep.subr.mxu0 0.0
        %2988 = vmatpush1.msra.mxu0 0.0
        %2989 = vmatprep.subr.mxu0 0.0
        %2990 = vmatpush1.msra.mxu0 0.0
        %2991 = vmatprep.subr.mxu0 0.0
        %2992 = vmatpush1.msra.mxu0 0.0
        %2993 = vmatprep.subr.mxu0 0.0
        %2994 = vmatpush1.msra.mxu0 0.0
        %2995 = vmatprep.subr.mxu0 0.0
        %2996 = vmatpush1.msra.mxu0 0.0
        %2997 = vmatprep.subr.mxu0 0.0
        %2998 = vmatpush1.msra.mxu0 0.0
        %2999 = vmatprep.subr.mxu0 0.0
        %3000 = vmatpush1.msra.mxu0 0.0
        %3001 = vmatprep.mubr.f32.mxu0 0.0
        %3002 = vmatmul.mubr.f32.gmra.mrb[0].mxu0 %v2929
        %v3003 = vpop.f32.mrb[0].mxu0
        %v3004 = vadd.f32 0.0, %v3003
        %v3005 = vpop.f32.mrb[0].mxu0
        %3006 = vmatprep.mubr.f32.mxu0 0.0
        %3007 = vmatmul.mubr.f32.gmra.mrb[0].mxu0 %v2932
        %v3008 = vpop.f32.mrb[0].mxu0
        %v3009 = vadd.f32 0.0, %v3008
        %v3010 = vpop.f32.mrb[0].mxu0
        %3011 = vdwg.mxu0
        %v3012 = vadd.f32 %v2752, %v2836
        %v3013 = vadd.f32 %v3012, %v2920
        %v3014 = vadd.f32 %v3013, %v3004
        %v3015 = vsel %vm564, %v2757, 0.0
        %v3016 = vsel %vm564, %v2841, 0.0
        %v3017 = vadd.f32 %v3015, %v3016
        %v3018 = vsel %vm564, %v2925, 0.0
        %v3019 = vadd.f32 %v3017, %v3018
        %v3020 = vsel %vm564, %v3009, 0.0
        %v3021 = vadd.f32 %v3019, %v3020
        %s3022 = scalar_lea.vmem [#allocation2], 1536
        %v3023 = vld [vmem:[%s3022] sm:$0xff]
        %v3024 = vld [vmem:[%s3022 + $0x8] sm:$0xff]
        %v3025 = vld [vmem:[%s3022 + $0x10] sm:$0xff]
        %v3026 = vld [vmem:[%s3022 + $0x18] sm:$0xff]
        %v3027 = vld [vmem:[%s3022 + $0x20] sm:$0xff]
        %v3028 = vld [vmem:[%s3022 + $0x28] sm:$0xff]
        %v3029 = vld [vmem:[%s3022 + $0x30] sm:$0xff]
        %v3030 = vld [vmem:[%s3022 + $0x38] sm:$0xff]
        %v3031 = vld [vmem:[%s3022 + $0x40] sm:$0xff]
        %v3032 = vld [vmem:[%s3022 + $0x48] sm:$0xff]
        %v3033 = vld [vmem:[%s3022 + $0x50] sm:$0xff]
        %v3034 = vld [vmem:[%s3022 + $0x58] sm:$0xff]
        %v3035 = vld [vmem:[%s3022 + $0x60] sm:$0xff]
        %v3036 = vld [vmem:[%s3022 + $0x68] sm:$0xff]
        %v3037 = vld [vmem:[%s3022 + $0x70] sm:$0xff]
        %v3038 = vld [vmem:[%s3022 + $0x78] sm:$0xff]
        %v3039 = vld [vmem:[#allocation4 + $0x12] sm:$0x1]
        %v3040 = vlaneseq
        %v3041 = vshrl.u32 %v3040, 7
        %v3042 = vsub.s32 0, %v3041
        %v3043 = vrot.slane %v3039, %v3042
        %3044 = vmatprep.subr.mxu0 0.0
        %3045 = vmatpush1.msra.mxu0 %v3023
        %3046 = vmatprep.subr.mxu0 0.0
        %3047 = vmatpush1.msra.mxu0 %v3024
        %3048 = vmatprep.subr.mxu0 0.0
        %3049 = vmatpush1.msra.mxu0 %v3025
        %3050 = vmatprep.subr.mxu0 0.0
        %3051 = vmatpush1.msra.mxu0 %v3026
        %3052 = vmatprep.subr.mxu0 0.0
        %3053 = vmatpush1.msra.mxu0 %v3027
        %3054 = vmatprep.subr.mxu0 0.0
        %3055 = vmatpush1.msra.mxu0 %v3028
        %3056 = vmatprep.subr.mxu0 0.0
        %3057 = vmatpush1.msra.mxu0 %v3029
        %3058 = vmatprep.subr.mxu0 0.0
        %3059 = vmatpush1.msra.mxu0 %v3030
        %3060 = vmatprep.subr.mxu0 0.0
        %3061 = vmatpush1.msra.mxu0 %v3031
        %3062 = vmatprep.subr.mxu0 0.0
        %3063 = vmatpush1.msra.mxu0 %v3032
        %3064 = vmatprep.subr.mxu0 0.0
        %3065 = vmatpush1.msra.mxu0 %v3033
        %3066 = vmatprep.subr.mxu0 0.0
        %3067 = vmatpush1.msra.mxu0 %v3034
        %3068 = vmatprep.subr.mxu0 0.0
        %3069 = vmatpush1.msra.mxu0 %v3035
        %3070 = vmatprep.subr.mxu0 0.0
        %3071 = vmatpush1.msra.mxu0 %v3036
        %3072 = vmatprep.subr.mxu0 0.0
        %3073 = vmatpush1.msra.mxu0 %v3037
        %3074 = vmatprep.subr.mxu0 0.0
        %3075 = vmatpush1.msra.mxu0 %v3038
        %3076 = vmatprep.subr.mxu0 0.0
        %3077 = vmatpush1.msra.mxu0 0.0
        %3078 = vmatprep.subr.mxu0 0.0
        %3079 = vmatpush1.msra.mxu0 0.0
        %3080 = vmatprep.subr.mxu0 0.0
        %3081 = vmatpush1.msra.mxu0 0.0
        %3082 = vmatprep.subr.mxu0 0.0
        %3083 = vmatpush1.msra.mxu0 0.0
        %3084 = vmatprep.subr.mxu0 0.0
        %3085 = vmatpush1.msra.mxu0 0.0
        %3086 = vmatprep.subr.mxu0 0.0
        %3087 = vmatpush1.msra.mxu0 0.0
        %3088 = vmatprep.subr.mxu0 0.0
        %3089 = vmatpush1.msra.mxu0 0.0
        %3090 = vmatprep.subr.mxu0 0.0
        %3091 = vmatpush1.msra.mxu0 0.0
        %3092 = vmatprep.subr.mxu0 0.0
        %3093 = vmatpush1.msra.mxu0 0.0
        %3094 = vmatprep.subr.mxu0 0.0
        %3095 = vmatpush1.msra.mxu0 0.0
        %3096 = vmatprep.subr.mxu0 0.0
        %3097 = vmatpush1.msra.mxu0 0.0
        %3098 = vmatprep.subr.mxu0 0.0
        %3099 = vmatpush1.msra.mxu0 0.0
        %3100 = vmatprep.subr.mxu0 0.0
        %3101 = vmatpush1.msra.mxu0 0.0
        %3102 = vmatprep.subr.mxu0 0.0
        %3103 = vmatpush1.msra.mxu0 0.0
        %3104 = vmatprep.subr.mxu0 0.0
        %3105 = vmatpush1.msra.mxu0 0.0
        %3106 = vmatprep.subr.mxu0 0.0
        %3107 = vmatpush1.msra.mxu0 0.0
        %3108 = vmatprep.mubr.f32.mxu0 0.0
        %3109 = vmatmul.mubr.f32.gmra.mrb[0].mxu0 %v3014
        %v3110 = vpop.f32.mrb[0].mxu0
        %v3111 = vadd.f32 %v3043, %v3110
        %v3112 = vpop.f32.mrb[0].mxu0
        %3113 = vmatprep.mubr.f32.mxu0 0.0
        %3114 = vmatmul.mubr.f32.gmra.mrb[0].mxu0 %v3021
        %v3115 = vpop.f32.mrb[0].mxu0
        %v3116 = vadd.f32 %v3043, %v3115
        %v3117 = vpop.f32.mrb[0].mxu0
        %3118 = vdwg.mxu0
        %v3119 = vadd.f32 %v1969, %v3111
        %v3120 = vadd.f32 %v1970, %v3116
        %3121 = vadd.xlane.f32.xlu0 %v3119
        %v3122 = vpop.xlane.xlu0 %3121
        %v3123 = vsel %vm564, %v3120, 0.0
        %3124 = vadd.xlane.f32.xlu0 %v3123
        %v3125 = vpop.xlane.xlu0 %3124
        %v3126 = vmul.f32 %v3119, %v3119
        %v3127 = vmul.f32 %v3120, %v3120
        %3128 = vadd.xlane.f32.xlu0 %v3126
        %v3129 = vpop.xlane.xlu0 %3128
        %v3130 = vsel %vm564, %v3127, 0.0
        %3131 = vadd.xlane.f32.xlu0 %v3130
        %v3132 = vpop.xlane.xlu0 %3131
        %v3133 = vmul.f32 %v3122, 0.03125
        %v3134 = vmul.f32 %v3125, 0.03125
        %v3135 = vmul.f32 %v3129, 0.03125
        %v3136 = vmul.f32 %v3132, 0.03125
        %v3137 = vmul.f32 %v3133, %v3133
        %v3138 = vmul.f32 %v3134, %v3134
        %v3139 = vsub.f32 %v3135, %v3137
        %v3140 = vsub.f32 %v3136, %v3138
        %v3141 = vsub.f32 %v3119, %v3133
        %v3142 = vsub.f32 %v3120, %v3134
        %v3143 = vadd.f32 %v3139, 1e-05
        %v3144 = vadd.f32 %v3140, 1e-05
        %v3145 = vrsqrt.pop %v3143
        %v3146 = vrsqrt.pop %v3144
        %v3147 = vmul.f32 %v3141, %v3145
        %v3148 = vmul.f32 %v3142, %v3146
        %v3149 = vld [vmem:[#allocation4 + $0x17] sm:$0x1]
        %v3150 = vlaneseq
        %v3151 = vshrl.u32 %v3150, 7
        %v3152 = vsub.s32 0, %v3151
        %v3153 = vrot.slane %v3149, %v3152
        %v3154 = vmul.f32 %v3147, %v3153
        %v3155 = vmul.f32 %v3148, %v3153
        %v3156 = vld [vmem:[#allocation4 + $0x18] sm:$0x1]
        %v3157 = vlaneseq
        %v3158 = vshrl.u32 %v3157, 7
        %v3159 = vsub.s32 0, %v3158
        %v3160 = vrot.slane %v3156, %v3159
        %v3161 = vadd.f32 %v3154, %v3160
        %v3162 = vadd.f32 %v3155, %v3160
        %s3163 = scalar_lea.vmem [#allocation2], 1664
        %v3164 = vld [vmem:[%s3163] sm:$0xff]
        %v3165 = vld [vmem:[%s3163 + $0x8] sm:$0xff]
        %v3166 = vld [vmem:[%s3163 + $0x10] sm:$0xff]
        %v3167 = vld [vmem:[%s3163 + $0x18] sm:$0xff]
        %v3168 = vld [vmem:[%s3163 + $0x20] sm:$0xff]
        %v3169 = vld [vmem:[%s3163 + $0x28] sm:$0xff]
        %v3170 = vld [vmem:[%s3163 + $0x30] sm:$0xff]
        %v3171 = vld [vmem:[%s3163 + $0x38] sm:$0xff]
        %v3172 = vld [vmem:[%s3163 + $0x40] sm:$0xff]
        %v3173 = vld [vmem:[%s3163 + $0x48] sm:$0xff]
        %v3174 = vld [vmem:[%s3163 + $0x50] sm:$0xff]
        %v3175 = vld [vmem:[%s3163 + $0x58] sm:$0xff]
        %v3176 = vld [vmem:[%s3163 + $0x60] sm:$0xff]
        %v3177 = vld [vmem:[%s3163 + $0x68] sm:$0xff]
        %v3178 = vld [vmem:[%s3163 + $0x70] sm:$0xff]
        %v3179 = vld [vmem:[%s3163 + $0x78] sm:$0xff]
        %v3180 = vld [vmem:[#allocation4 + $0x13] sm:$0x1]
        %v3181 = vlaneseq
        %v3182 = vshrl.u32 %v3181, 7
        %v3183 = vsub.s32 0, %v3182
        %v3184 = vrot.slane %v3180, %v3183
        %3185 = vmatprep.subr.mxu0 0.0
        %3186 = vmatpush1.msra.mxu0 %v3164
        %3187 = vmatprep.subr.mxu0 0.0
        %3188 = vmatpush1.msra.mxu0 %v3165
        %3189 = vmatprep.subr.mxu0 0.0
        %3190 = vmatpush1.msra.mxu0 %v3166
        %3191 = vmatprep.subr.mxu0 0.0
        %3192 = vmatpush1.msra.mxu0 %v3167
        %3193 = vmatprep.subr.mxu0 0.0
        %3194 = vmatpush1.msra.mxu0 %v3168
        %3195 = vmatprep.subr.mxu0 0.0
        %3196 = vmatpush1.msra.mxu0 %v3169
        %3197 = vmatprep.subr.mxu0 0.0
        %3198 = vmatpush1.msra.mxu0 %v3170
        %3199 = vmatprep.subr.mxu0 0.0
        %3200 = vmatpush1.msra.mxu0 %v3171
        %3201 = vmatprep.subr.mxu0 0.0
        %3202 = vmatpush1.msra.mxu0 %v3172
        %3203 = vmatprep.subr.mxu0 0.0
        %3204 = vmatpush1.msra.mxu0 %v3173
        %3205 = vmatprep.subr.mxu0 0.0
        %3206 = vmatpush1.msra.mxu0 %v3174
        %3207 = vmatprep.subr.mxu0 0.0
        %3208 = vmatpush1.msra.mxu0 %v3175
        %3209 = vmatprep.subr.mxu0 0.0
        %3210 = vmatpush1.msra.mxu0 %v3176
        %3211 = vmatprep.subr.mxu0 0.0
        %3212 = vmatpush1.msra.mxu0 %v3177
        %3213 = vmatprep.subr.mxu0 0.0
        %3214 = vmatpush1.msra.mxu0 %v3178
        %3215 = vmatprep.subr.mxu0 0.0
        %3216 = vmatpush1.msra.mxu0 %v3179
        %3217 = vmatprep.subr.mxu0 0.0
        %3218 = vmatpush1.msra.mxu0 0.0
        %3219 = vmatprep.subr.mxu0 0.0
        %3220 = vmatpush1.msra.mxu0 0.0
        %3221 = vmatprep.subr.mxu0 0.0
        %3222 = vmatpush1.msra.mxu0 0.0
        %3223 = vmatprep.subr.mxu0 0.0
        %3224 = vmatpush1.msra.mxu0 0.0
        %3225 = vmatprep.subr.mxu0 0.0
        %3226 = vmatpush1.msra.mxu0 0.0
        %3227 = vmatprep.subr.mxu0 0.0
        %3228 = vmatpush1.msra.mxu0 0.0
        %3229 = vmatprep.subr.mxu0 0.0
        %3230 = vmatpush1.msra.mxu0 0.0
        %3231 = vmatprep.subr.mxu0 0.0
        %3232 = vmatpush1.msra.mxu0 0.0
        %3233 = vmatprep.subr.mxu0 0.0
        %3234 = vmatpush1.msra.mxu0 0.0
        %3235 = vmatprep.subr.mxu0 0.0
        %3236 = vmatpush1.msra.mxu0 0.0
        %3237 = vmatprep.subr.mxu0 0.0
        %3238 = vmatpush1.msra.mxu0 0.0
        %3239 = vmatprep.subr.mxu0 0.0
        %3240 = vmatpush1.msra.mxu0 0.0
        %3241 = vmatprep.subr.mxu0 0.0
        %3242 = vmatpush1.msra.mxu0 0.0
        %3243 = vmatprep.subr.mxu0 0.0
        %3244 = vmatpush1.msra.mxu0 0.0
        %3245 = vmatprep.subr.mxu0 0.0
        %3246 = vmatpush1.msra.mxu0 0.0
        %3247 = vmatprep.subr.mxu0 0.0
        %3248 = vmatpush1.msra.mxu0 0.0
        %3249 = vmatprep.mubr.f32.mxu0 0.0
        %3250 = vmatmul.mubr.f32.gmra.mrb[0].mxu0 %v3161
        %v3251 = vpop.f32.mrb[0].mxu0
        %v3252 = vadd.f32 %v3184, %v3251
        %v3253 = vpop.f32.mrb[0].mxu0
        %3254 = vmatprep.mubr.f32.mxu0 0.0
        %3255 = vmatmul.mubr.f32.gmra.mrb[0].mxu0 %v3162
        %v3256 = vpop.f32.mrb[0].mxu0
        %v3257 = vadd.f32 %v3184, %v3256
        %v3258 = vpop.f32.mrb[0].mxu0
        %3259 = vdwg.mxu0
        %v3260 = vmax.f32 %v3252, 0.0
        %v3261 = vmax.f32 %v3257, 0.0
        %s3262 = scalar_lea.vmem [#allocation2], 1792
        %v3263 = vld [vmem:[%s3262] sm:$0xff]
        %v3264 = vld [vmem:[%s3262 + $0x8] sm:$0xff]
        %v3265 = vld [vmem:[%s3262 + $0x10] sm:$0xff]
        %v3266 = vld [vmem:[%s3262 + $0x18] sm:$0xff]
        %v3267 = vld [vmem:[%s3262 + $0x20] sm:$0xff]
        %v3268 = vld [vmem:[%s3262 + $0x28] sm:$0xff]
        %v3269 = vld [vmem:[%s3262 + $0x30] sm:$0xff]
        %v3270 = vld [vmem:[%s3262 + $0x38] sm:$0xff]
        %v3271 = vld [vmem:[%s3262 + $0x40] sm:$0xff]
        %v3272 = vld [vmem:[%s3262 + $0x48] sm:$0xff]
        %v3273 = vld [vmem:[%s3262 + $0x50] sm:$0xff]
        %v3274 = vld [vmem:[%s3262 + $0x58] sm:$0xff]
        %v3275 = vld [vmem:[%s3262 + $0x60] sm:$0xff]
        %v3276 = vld [vmem:[%s3262 + $0x68] sm:$0xff]
        %v3277 = vld [vmem:[%s3262 + $0x70] sm:$0xff]
        %v3278 = vld [vmem:[%s3262 + $0x78] sm:$0xff]
        %v3279 = vld [vmem:[#allocation4 + $0x14] sm:$0x1]
        %v3280 = vlaneseq
        %v3281 = vshrl.u32 %v3280, 7
        %v3282 = vsub.s32 0, %v3281
        %v3283 = vrot.slane %v3279, %v3282
        %3284 = vmatprep.subr.mxu0 0.0
        %3285 = vmatpush1.msra.mxu0 %v3263
        %3286 = vmatprep.subr.mxu0 0.0
        %3287 = vmatpush1.msra.mxu0 %v3264
        %3288 = vmatprep.subr.mxu0 0.0
        %3289 = vmatpush1.msra.mxu0 %v3265
        %3290 = vmatprep.subr.mxu0 0.0
        %3291 = vmatpush1.msra.mxu0 %v3266
        %3292 = vmatprep.subr.mxu0 0.0
        %3293 = vmatpush1.msra.mxu0 %v3267
        %3294 = vmatprep.subr.mxu0 0.0
        %3295 = vmatpush1.msra.mxu0 %v3268
        %3296 = vmatprep.subr.mxu0 0.0
        %3297 = vmatpush1.msra.mxu0 %v3269
        %3298 = vmatprep.subr.mxu0 0.0
        %3299 = vmatpush1.msra.mxu0 %v3270
        %3300 = vmatprep.subr.mxu0 0.0
        %3301 = vmatpush1.msra.mxu0 %v3271
        %3302 = vmatprep.subr.mxu0 0.0
        %3303 = vmatpush1.msra.mxu0 %v3272
        %3304 = vmatprep.subr.mxu0 0.0
        %3305 = vmatpush1.msra.mxu0 %v3273
        %3306 = vmatprep.subr.mxu0 0.0
        %3307 = vmatpush1.msra.mxu0 %v3274
        %3308 = vmatprep.subr.mxu0 0.0
        %3309 = vmatpush1.msra.mxu0 %v3275
        %3310 = vmatprep.subr.mxu0 0.0
        %3311 = vmatpush1.msra.mxu0 %v3276
        %3312 = vmatprep.subr.mxu0 0.0
        %3313 = vmatpush1.msra.mxu0 %v3277
        %3314 = vmatprep.subr.mxu0 0.0
        %3315 = vmatpush1.msra.mxu0 %v3278
        %3316 = vmatprep.subr.mxu0 0.0
        %3317 = vmatpush1.msra.mxu0 0.0
        %3318 = vmatprep.subr.mxu0 0.0
        %3319 = vmatpush1.msra.mxu0 0.0
        %3320 = vmatprep.subr.mxu0 0.0
        %3321 = vmatpush1.msra.mxu0 0.0
        %3322 = vmatprep.subr.mxu0 0.0
        %3323 = vmatpush1.msra.mxu0 0.0
        %3324 = vmatprep.subr.mxu0 0.0
        %3325 = vmatpush1.msra.mxu0 0.0
        %3326 = vmatprep.subr.mxu0 0.0
        %3327 = vmatpush1.msra.mxu0 0.0
        %3328 = vmatprep.subr.mxu0 0.0
        %3329 = vmatpush1.msra.mxu0 0.0
        %3330 = vmatprep.subr.mxu0 0.0
        %3331 = vmatpush1.msra.mxu0 0.0
        %3332 = vmatprep.subr.mxu0 0.0
        %3333 = vmatpush1.msra.mxu0 0.0
        %3334 = vmatprep.subr.mxu0 0.0
        %3335 = vmatpush1.msra.mxu0 0.0
        %3336 = vmatprep.subr.mxu0 0.0
        %3337 = vmatpush1.msra.mxu0 0.0
        %3338 = vmatprep.subr.mxu0 0.0
        %3339 = vmatpush1.msra.mxu0 0.0
        %3340 = vmatprep.subr.mxu0 0.0
        %3341 = vmatpush1.msra.mxu0 0.0
        %3342 = vmatprep.subr.mxu0 0.0
        %3343 = vmatpush1.msra.mxu0 0.0
        %3344 = vmatprep.subr.mxu0 0.0
        %3345 = vmatpush1.msra.mxu0 0.0
        %3346 = vmatprep.subr.mxu0 0.0
        %3347 = vmatpush1.msra.mxu0 0.0
        %3348 = vmatprep.mubr.f32.mxu0 0.0
        %3349 = vmatmul.mubr.f32.gmra.mrb[0].mxu0 %v3260
        %v3350 = vpop.f32.mrb[0].mxu0
        %v3351 = vadd.f32 %v3283, %v3350
        %v3352 = vpop.f32.mrb[0].mxu0
        %3353 = vmatprep.mubr.f32.mxu0 0.0
        %3354 = vmatmul.mubr.f32.gmra.mrb[0].mxu0 %v3261
        %v3355 = vpop.f32.mrb[0].mxu0
        %v3356 = vadd.f32 %v3283, %v3355
        %v3357 = vpop.f32.mrb[0].mxu0
        %3358 = vdwg.mxu0
        %v3359 = vadd.f32 %v3119, %v3351
        %v3360 = vadd.f32 %v3120, %v3356
        %3361 = vadd.xlane.f32.xlu0 %v3359
        %v3362 = vpop.xlane.xlu0 %3361
        %v3363 = vsel %vm564, %v3360, 0.0
        %3364 = vadd.xlane.f32.xlu0 %v3363
        %v3365 = vpop.xlane.xlu0 %3364
        %v3366 = vmul.f32 %v3359, %v3359
        %v3367 = vmul.f32 %v3360, %v3360
        %3368 = vadd.xlane.f32.xlu0 %v3366
        %v3369 = vpop.xlane.xlu0 %3368
        %v3370 = vsel %vm564, %v3367, 0.0
        %3371 = vadd.xlane.f32.xlu0 %v3370
        %v3372 = vpop.xlane.xlu0 %3371
        %v3373 = vmul.f32 %v3362, 0.03125
        %v3374 = vmul.f32 %v3365, 0.03125
        %v3375 = vmul.f32 %v3369, 0.03125
        %v3376 = vmul.f32 %v3372, 0.03125
        %v3377 = vmul.f32 %v3373, %v3373
        %v3378 = vmul.f32 %v3374, %v3374
        %v3379 = vsub.f32 %v3375, %v3377
        %v3380 = vsub.f32 %v3376, %v3378
        %v3381 = vsub.f32 %v3359, %v3373
        %v3382 = vsub.f32 %v3360, %v3374
        %v3383 = vadd.f32 %v3379, 1e-05
        %v3384 = vadd.f32 %v3380, 1e-05
        %v3385 = vrsqrt.pop %v3383
        %v3386 = vrsqrt.pop %v3384
        %v3387 = vmul.f32 %v3381, %v3385
        %v3388 = vmul.f32 %v3382, %v3386
        %v3389 = vld [vmem:[#allocation4 + $0x1] sm:$0x1]
        %v3390 = vlaneseq
        %v3391 = vshrl.u32 %v3390, 7
        %v3392 = vsub.s32 0, %v3391
        %v3393 = vrot.slane %v3389, %v3392
        %v3394 = vmul.f32 %v3387, %v3393
        %v3395 = vmul.f32 %v3388, %v3393
        %v3396 = vld [vmem:[#allocation4 + $0x2] sm:$0x1]
        %v3397 = vlaneseq
        %v3398 = vshrl.u32 %v3397, 7
        %v3399 = vsub.s32 0, %v3398
        %v3400 = vrot.slane %v3396, %v3399
        %v3401 = vadd.f32 %v3394, %v3400
        %v3402 = vadd.f32 %v3395, %v3400
        %v3403 = vld [vmem:[%s412] sm:$0xff]
        %3404 = vset.pattern.permute.xlu0 0
        %3405 = vperm.xlu0 %3404, %v3403
        %v3406 = vpop.permute.xlu0 %3405
        %vm3407 = vcmp.eq.s32.totalorder %v3406, %v430
        %v3408 = vsel %vm3407, 1, 0
        %v3409 = vcvt.s32.f32 %v3408
        %s3410 = scalar_lea.vmem [#allocation2], 128
        %v3411 = vld [vmem:[%s3410] sm:$0xff]
        %v3412 = vld [vmem:[%s3410 + $0x8] sm:$0xff]
        %v3413 = vld [vmem:[%s3410 + $0x10] sm:$0xff]
        %v3414 = vld [vmem:[%s3410 + $0x18] sm:$0xff]
        %v3415 = vld [vmem:[%s3410 + $0x20] sm:$0xff]
        %v3416 = vld [vmem:[%s3410 + $0x28] sm:$0xff]
        %v3417 = vld [vmem:[%s3410 + $0x30] sm:$0xff]
        %v3418 = vld [vmem:[%s3410 + $0x38] sm:$0xff]
        %v3419 = vld [vmem:[%s3410 + $0x40] sm:$0xff]
        %v3420 = vld [vmem:[%s3410 + $0x48] sm:$0xff]
        %v3421 = vld [vmem:[%s3410 + $0x50] sm:$0xff]
        %v3422 = vld [vmem:[%s3410 + $0x58] sm:$0xff]
        %v3423 = vld [vmem:[%s3410 + $0x60] sm:$0xff]
        %v3424 = vld [vmem:[%s3410 + $0x68] sm:$0xff]
        %v3425 = vld [vmem:[%s3410 + $0x70] sm:$0xff]
        %v3426 = vld [vmem:[%s3410 + $0x78] sm:$0xff]
        %v3427 = vld [vmem:[%s3] sm:$0xff]
        %3428 = vmatprep.subr.mxu0 0.0
        %3429 = vmatpush1.msra.mxu0 %v3411
        %3430 = vmatprep.subr.mxu0 0.0
        %3431 = vmatpush1.msra.mxu0 %v3412
        %3432 = vmatprep.subr.mxu0 0.0
        %3433 = vmatpush1.msra.mxu0 %v3413
        %3434 = vmatprep.subr.mxu0 0.0
        %3435 = vmatpush1.msra.mxu0 %v3414
        %3436 = vmatprep.subr.mxu0 0.0
        %3437 = vmatpush1.msra.mxu0 %v3415
        %3438 = vmatprep.subr.mxu0 0.0
        %3439 = vmatpush1.msra.mxu0 %v3416
        %3440 = vmatprep.subr.mxu0 0.0
        %3441 = vmatpush1.msra.mxu0 %v3417
        %3442 = vmatprep.subr.mxu0 0.0
        %3443 = vmatpush1.msra.mxu0 %v3418
        %3444 = vmatprep.subr.mxu0 0.0
        %3445 = vmatpush1.msra.mxu0 %v3419
        %3446 = vmatprep.subr.mxu0 0.0
        %3447 = vmatpush1.msra.mxu0 %v3420
        %3448 = vmatprep.subr.mxu0 0.0
        %3449 = vmatpush1.msra.mxu0 %v3421
        %3450 = vmatprep.subr.mxu0 0.0
        %3451 = vmatpush1.msra.mxu0 %v3422
        %3452 = vmatprep.subr.mxu0 0.0
        %3453 = vmatpush1.msra.mxu0 %v3423
        %3454 = vmatprep.subr.mxu0 0.0
        %3455 = vmatpush1.msra.mxu0 %v3424
        %3456 = vmatprep.subr.mxu0 0.0
        %3457 = vmatpush1.msra.mxu0 %v3425
        %3458 = vmatprep.subr.mxu0 0.0
        %3459 = vmatpush1.msra.mxu0 %v3426
        %3460 = vmatprep.subr.mxu0 0.0
        %3461 = vmatpush1.msra.mxu0 0.0
        %3462 = vmatprep.subr.mxu0 0.0
        %3463 = vmatpush1.msra.mxu0 0.0
        %3464 = vmatprep.subr.mxu0 0.0
        %3465 = vmatpush1.msra.mxu0 0.0
        %3466 = vmatprep.subr.mxu0 0.0
        %3467 = vmatpush1.msra.mxu0 0.0
        %3468 = vmatprep.subr.mxu0 0.0
        %3469 = vmatpush1.msra.mxu0 0.0
        %3470 = vmatprep.subr.mxu0 0.0
        %3471 = vmatpush1.msra.mxu0 0.0
        %3472 = vmatprep.subr.mxu0 0.0
        %3473 = vmatpush1.msra.mxu0 0.0
        %3474 = vmatprep.subr.mxu0 0.0
        %3475 = vmatpush1.msra.mxu0 0.0
        %3476 = vmatprep.subr.mxu0 0.0
        %3477 = vmatpush1.msra.mxu0 0.0
        %3478 = vmatprep.subr.mxu0 0.0
        %3479 = vmatpush1.msra.mxu0 0.0
        %3480 = vmatprep.subr.mxu0 0.0
        %3481 = vmatpush1.msra.mxu0 0.0
        %3482 = vmatprep.subr.mxu0 0.0
        %3483 = vmatpush1.msra.mxu0 0.0
        %3484 = vmatprep.subr.mxu0 0.0
        %3485 = vmatpush1.msra.mxu0 0.0
        %3486 = vmatprep.subr.mxu0 0.0
        %3487 = vmatpush1.msra.mxu0 0.0
        %3488 = vmatprep.subr.mxu0 0.0
        %3489 = vmatpush1.msra.mxu0 0.0
        %3490 = vmatprep.subr.mxu0 0.0
        %3491 = vmatpush1.msra.mxu0 0.0
        %3492 = vmatprep.mubr.f32.mxu0 0.0
        %3493 = vmatmul.mubr.f32.gmra.mrb[0].mxu0 %v3409
        %v3494 = vpop.f32.mrb[0].mxu0
        %v3495 = vadd.f32 %v3427, %v3494
        %v3496 = vpop.f32.mrb[0].mxu0
        %3497 = vdwg.mxu0
        %3498 = vadd.xlane.f32.xlu0 %v3495
        %v3499 = vpop.xlane.xlu0 %3498
        %v3500 = vmul.f32 %v3495, %v3495
        %3501 = vadd.xlane.f32.xlu0 %v3500
        %v3502 = vpop.xlane.xlu0 %3501
        %v3503 = vmul.f32 %v3499, 0.03125
        %v3504 = vmul.f32 %v3502, 0.03125
        %v3505 = vmul.f32 %v3503, %v3503
        %v3506 = vsub.f32 %v3504, %v3505
        %v3507 = vsub.f32 %v3495, %v3503
        %v3508 = vadd.f32 %v3506, 1e-05
        %v3509 = vrsqrt.pop %v3508
        %v3510 = vmul.f32 %v3507, %v3509
        %v3511 = vld [vmem:[#allocation4 + $0x23] sm:$0x1]
        %v3512 = vlaneseq
        %v3513 = vshrl.u32 %v3512, 7
        %v3514 = vsub.s32 0, %v3513
        %v3515 = vrot.slane %v3511, %v3514
        %v3516 = vmul.f32 %v3510, %v3515
        %v3517 = vld [vmem:[#allocation4 + $0x24] sm:$0x1]
        %v3518 = vlaneseq
        %v3519 = vshrl.u32 %v3518, 7
        %v3520 = vsub.s32 0, %v3519
        %v3521 = vrot.slane %v3517, %v3520
        %v3522 = vadd.f32 %v3516, %v3521
        %s3523 = scalar_lea.vmem [#allocation2], 1920
        %v3524 = vld [vmem:[%s3523] sm:$0xff]
        %v3525 = vld [vmem:[%s3523 + $0x8] sm:$0xff]
        %v3526 = vld [vmem:[%s3523 + $0x10] sm:$0xff]
        %v3527 = vld [vmem:[%s3523 + $0x18] sm:$0xff]
        %v3528 = vld [vmem:[%s3523 + $0x20] sm:$0xff]
        %v3529 = vld [vmem:[%s3523 + $0x28] sm:$0xff]
        %v3530 = vld [vmem:[%s3523 + $0x30] sm:$0xff]
        %v3531 = vld [vmem:[%s3523 + $0x38] sm:$0xff]
        %v3532 = vld [vmem:[%s3523 + $0x40] sm:$0xff]
        %v3533 = vld [vmem:[%s3523 + $0x48] sm:$0xff]
        %v3534 = vld [vmem:[%s3523 + $0x50] sm:$0xff]
        %v3535 = vld [vmem:[%s3523 + $0x58] sm:$0xff]
        %v3536 = vld [vmem:[%s3523 + $0x60] sm:$0xff]
        %v3537 = vld [vmem:[%s3523 + $0x68] sm:$0xff]
        %v3538 = vld [vmem:[%s3523 + $0x70] sm:$0xff]
        %v3539 = vld [vmem:[%s3523 + $0x78] sm:$0xff]
        %v3540 = vld [vmem:[#allocation4 + $0x19] sm:$0x1]
        %v3541 = vlaneseq
        %v3542 = vshrl.u32 %v3541, 7
        %v3543 = vsub.s32 0, %v3542
        %v3544 = vrot.slane %v3540, %v3543
        %3545 = vmatprep.subr.mxu0 0.0
        %3546 = vmatpush1.msra.mxu0 %v3524
        %3547 = vmatprep.subr.mxu0 0.0
        %3548 = vmatpush1.msra.mxu0 %v3525
        %3549 = vmatprep.subr.mxu0 0.0
        %3550 = vmatpush1.msra.mxu0 %v3526
        %3551 = vmatprep.subr.mxu0 0.0
        %3552 = vmatpush1.msra.mxu0 %v3527
        %3553 = vmatprep.subr.mxu0 0.0
        %3554 = vmatpush1.msra.mxu0 %v3528
        %3555 = vmatprep.subr.mxu0 0.0
        %3556 = vmatpush1.msra.mxu0 %v3529
        %3557 = vmatprep.subr.mxu0 0.0
        %3558 = vmatpush1.msra.mxu0 %v3530
        %3559 = vmatprep.subr.mxu0 0.0
        %3560 = vmatpush1.msra.mxu0 %v3531
        %3561 = vmatprep.subr.mxu0 0.0
        %3562 = vmatpush1.msra.mxu0 %v3532
        %3563 = vmatprep.subr.mxu0 0.0
        %3564 = vmatpush1.msra.mxu0 %v3533
        %3565 = vmatprep.subr.mxu0 0.0
        %3566 = vmatpush1.msra.mxu0 %v3534
        %3567 = vmatprep.subr.mxu0 0.0
        %3568 = vmatpush1.msra.mxu0 %v3535
        %3569 = vmatprep.subr.mxu0 0.0
        %3570 = vmatpush1.msra.mxu0 %v3536
        %3571 = vmatprep.subr.mxu0 0.0
        %3572 = vmatpush1.msra.mxu0 %v3537
        %3573 = vmatprep.subr.mxu0 0.0
        %3574 = vmatpush1.msra.mxu0 %v3538
        %3575 = vmatprep.subr.mxu0 0.0
        %3576 = vmatpush1.msra.mxu0 %v3539
        %3577 = vmatprep.subr.mxu0 0.0
        %3578 = vmatpush1.msra.mxu0 0.0
        %3579 = vmatprep.subr.mxu0 0.0
        %3580 = vmatpush1.msra.mxu0 0.0
        %3581 = vmatprep.subr.mxu0 0.0
        %3582 = vmatpush1.msra.mxu0 0.0
        %3583 = vmatprep.subr.mxu0 0.0
        %3584 = vmatpush1.msra.mxu0 0.0
        %3585 = vmatprep.subr.mxu0 0.0
        %3586 = vmatpush1.msra.mxu0 0.0
        %3587 = vmatprep.subr.mxu0 0.0
        %3588 = vmatpush1.msra.mxu0 0.0
        %3589 = vmatprep.subr.mxu0 0.0
        %3590 = vmatpush1.msra.mxu0 0.0
        %3591 = vmatprep.subr.mxu0 0.0
        %3592 = vmatpush1.msra.mxu0 0.0
        %3593 = vmatprep.subr.mxu0 0.0
        %3594 = vmatpush1.msra.mxu0 0.0
        %3595 = vmatprep.subr.mxu0 0.0
        %3596 = vmatpush1.msra.mxu0 0.0
        %3597 = vmatprep.subr.mxu0 0.0
        %3598 = vmatpush1.msra.mxu0 0.0
        %3599 = vmatprep.subr.mxu0 0.0
        %3600 = vmatpush1.msra.mxu0 0.0
        %3601 = vmatprep.subr.mxu0 0.0
        %3602 = vmatpush1.msra.mxu0 0.0
        %3603 = vmatprep.subr.mxu0 0.0
        %3604 = vmatpush1.msra.mxu0 0.0
        %3605 = vmatprep.subr.mxu0 0.0
        %3606 = vmatpush1.msra.mxu0 0.0
        %3607 = vmatprep.subr.mxu0 0.0
        %3608 = vmatpush1.msra.mxu0 0.0
        %3609 = vmatprep.mubr.f32.mxu0 0.0
        %3610 = vmatmul.mubr.f32.gmra.mrb[0].mxu0 %v3522
        %v3611 = vpop.f32.mrb[0].mxu0
        %v3612 = vadd.f32 %v3544, %v3611
        %v3613 = vpop.f32.mrb[0].mxu0
        %3614 = vdwg.mxu0
        %s3615 = scalar_lea.vmem [#allocation2], 2048
        %v3616 = vld [vmem:[%s3615] sm:$0xff]
        %v3617 = vld [vmem:[%s3615 + $0x8] sm:$0xff]
        %v3618 = vld [vmem:[%s3615 + $0x10] sm:$0xff]
        %v3619 = vld [vmem:[%s3615 + $0x18] sm:$0xff]
        %v3620 = vld [vmem:[%s3615 + $0x20] sm:$0xff]
        %v3621 = vld [vmem:[%s3615 + $0x28] sm:$0xff]
        %v3622 = vld [vmem:[%s3615 + $0x30] sm:$0xff]
        %v3623 = vld [vmem:[%s3615 + $0x38] sm:$0xff]
        %v3624 = vld [vmem:[%s3615 + $0x40] sm:$0xff]
        %v3625 = vld [vmem:[%s3615 + $0x48] sm:$0xff]
        %v3626 = vld [vmem:[%s3615 + $0x50] sm:$0xff]
        %v3627 = vld [vmem:[%s3615 + $0x58] sm:$0xff]
        %v3628 = vld [vmem:[%s3615 + $0x60] sm:$0xff]
        %v3629 = vld [vmem:[%s3615 + $0x68] sm:$0xff]
        %v3630 = vld [vmem:[%s3615 + $0x70] sm:$0xff]
        %v3631 = vld [vmem:[%s3615 + $0x78] sm:$0xff]
        %v3632 = vld [vmem:[#allocation4 + $0x1a] sm:$0x1]
        %v3633 = vlaneseq
        %v3634 = vshrl.u32 %v3633, 7
        %v3635 = vsub.s32 0, %v3634
        %v3636 = vrot.slane %v3632, %v3635
        %3637 = vmatprep.subr.mxu0 0.0
        %3638 = vmatpush1.msra.mxu0 %v3616
        %3639 = vmatprep.subr.mxu0 0.0
        %3640 = vmatpush1.msra.mxu0 %v3617
        %3641 = vmatprep.subr.mxu0 0.0
        %3642 = vmatpush1.msra.mxu0 %v3618
        %3643 = vmatprep.subr.mxu0 0.0
        %3644 = vmatpush1.msra.mxu0 %v3619
        %3645 = vmatprep.subr.mxu0 0.0
        %3646 = vmatpush1.msra.mxu0 %v3620
        %3647 = vmatprep.subr.mxu0 0.0
        %3648 = vmatpush1.msra.mxu0 %v3621
        %3649 = vmatprep.subr.mxu0 0.0
        %3650 = vmatpush1.msra.mxu0 %v3622
        %3651 = vmatprep.subr.mxu0 0.0
        %3652 = vmatpush1.msra.mxu0 %v3623
        %3653 = vmatprep.subr.mxu0 0.0
        %3654 = vmatpush1.msra.mxu0 %v3624
        %3655 = vmatprep.subr.mxu0 0.0
        %3656 = vmatpush1.msra.mxu0 %v3625
        %3657 = vmatprep.subr.mxu0 0.0
        %3658 = vmatpush1.msra.mxu0 %v3626
        %3659 = vmatprep.subr.mxu0 0.0
        %3660 = vmatpush1.msra.mxu0 %v3627
        %3661 = vmatprep.subr.mxu0 0.0
        %3662 = vmatpush1.msra.mxu0 %v3628
        %3663 = vmatprep.subr.mxu0 0.0
        %3664 = vmatpush1.msra.mxu0 %v3629
        %3665 = vmatprep.subr.mxu0 0.0
        %3666 = vmatpush1.msra.mxu0 %v3630
        %3667 = vmatprep.subr.mxu0 0.0
        %3668 = vmatpush1.msra.mxu0 %v3631
        %3669 = vmatprep.subr.mxu0 0.0
        %3670 = vmatpush1.msra.mxu0 0.0
        %3671 = vmatprep.subr.mxu0 0.0
        %3672 = vmatpush1.msra.mxu0 0.0
        %3673 = vmatprep.subr.mxu0 0.0
        %3674 = vmatpush1.msra.mxu0 0.0
        %3675 = vmatprep.subr.mxu0 0.0
        %3676 = vmatpush1.msra.mxu0 0.0
        %3677 = vmatprep.subr.mxu0 0.0
        %3678 = vmatpush1.msra.mxu0 0.0
        %3679 = vmatprep.subr.mxu0 0.0
        %3680 = vmatpush1.msra.mxu0 0.0
        %3681 = vmatprep.subr.mxu0 0.0
        %3682 = vmatpush1.msra.mxu0 0.0
        %3683 = vmatprep.subr.mxu0 0.0
        %3684 = vmatpush1.msra.mxu0 0.0
        %3685 = vmatprep.subr.mxu0 0.0
        %3686 = vmatpush1.msra.mxu0 0.0
        %3687 = vmatprep.subr.mxu0 0.0
        %3688 = vmatpush1.msra.mxu0 0.0
        %3689 = vmatprep.subr.mxu0 0.0
        %3690 = vmatpush1.msra.mxu0 0.0
        %3691 = vmatprep.subr.mxu0 0.0
        %3692 = vmatpush1.msra.mxu0 0.0
        %3693 = vmatprep.subr.mxu0 0.0
        %3694 = vmatpush1.msra.mxu0 0.0
        %3695 = vmatprep.subr.mxu0 0.0
        %3696 = vmatpush1.msra.mxu0 0.0
        %3697 = vmatprep.subr.mxu0 0.0
        %3698 = vmatpush1.msra.mxu0 0.0
        %3699 = vmatprep.subr.mxu0 0.0
        %3700 = vmatpush1.msra.mxu0 0.0
        %3701 = vmatprep.mubr.f32.mxu0 0.0
        %3702 = vmatmul.mubr.f32.gmra.mrb[0].mxu0 %v3522
        %v3703 = vpop.f32.mrb[0].mxu0
        %v3704 = vadd.f32 %v3636, %v3703
        %v3705 = vpop.f32.mrb[0].mxu0
        %3706 = vdwg.mxu0
        %s3707 = scalar_lea.vmem [#allocation2], 2176
        %v3708 = vld [vmem:[%s3707] sm:$0xff]
        %v3709 = vld [vmem:[%s3707 + $0x8] sm:$0xff]
        %v3710 = vld [vmem:[%s3707 + $0x10] sm:$0xff]
        %v3711 = vld [vmem:[%s3707 + $0x18] sm:$0xff]
        %v3712 = vld [vmem:[%s3707 + $0x20] sm:$0xff]
        %v3713 = vld [vmem:[%s3707 + $0x28] sm:$0xff]
        %v3714 = vld [vmem:[%s3707 + $0x30] sm:$0xff]
        %v3715 = vld [vmem:[%s3707 + $0x38] sm:$0xff]
        %v3716 = vld [vmem:[%s3707 + $0x40] sm:$0xff]
        %v3717 = vld [vmem:[%s3707 + $0x48] sm:$0xff]
        %v3718 = vld [vmem:[%s3707 + $0x50] sm:$0xff]
        %v3719 = vld [vmem:[%s3707 + $0x58] sm:$0xff]
        %v3720 = vld [vmem:[%s3707 + $0x60] sm:$0xff]
        %v3721 = vld [vmem:[%s3707 + $0x68] sm:$0xff]
        %v3722 = vld [vmem:[%s3707 + $0x70] sm:$0xff]
        %v3723 = vld [vmem:[%s3707 + $0x78] sm:$0xff]
        %v3724 = vld [vmem:[#allocation4 + $0x1b] sm:$0x1]
        %v3725 = vlaneseq
        %v3726 = vshrl.u32 %v3725, 7
        %v3727 = vsub.s32 0, %v3726
        %v3728 = vrot.slane %v3724, %v3727
        %3729 = vmatprep.subr.mxu0 0.0
        %3730 = vmatpush1.msra.mxu0 %v3708
        %3731 = vmatprep.subr.mxu0 0.0
        %3732 = vmatpush1.msra.mxu0 %v3709
        %3733 = vmatprep.subr.mxu0 0.0
        %3734 = vmatpush1.msra.mxu0 %v3710
        %3735 = vmatprep.subr.mxu0 0.0
        %3736 = vmatpush1.msra.mxu0 %v3711
        %3737 = vmatprep.subr.mxu0 0.0
        %3738 = vmatpush1.msra.mxu0 %v3712
        %3739 = vmatprep.subr.mxu0 0.0
        %3740 = vmatpush1.msra.mxu0 %v3713
        %3741 = vmatprep.subr.mxu0 0.0
        %3742 = vmatpush1.msra.mxu0 %v3714
        %3743 = vmatprep.subr.mxu0 0.0
        %3744 = vmatpush1.msra.mxu0 %v3715
        %3745 = vmatprep.subr.mxu0 0.0
        %3746 = vmatpush1.msra.mxu0 %v3716
        %3747 = vmatprep.subr.mxu0 0.0
        %3748 = vmatpush1.msra.mxu0 %v3717
        %3749 = vmatprep.subr.mxu0 0.0
        %3750 = vmatpush1.msra.mxu0 %v3718
        %3751 = vmatprep.subr.mxu0 0.0
        %3752 = vmatpush1.msra.mxu0 %v3719
        %3753 = vmatprep.subr.mxu0 0.0
        %3754 = vmatpush1.msra.mxu0 %v3720
        %3755 = vmatprep.subr.mxu0 0.0
        %3756 = vmatpush1.msra.mxu0 %v3721
        %3757 = vmatprep.subr.mxu0 0.0
        %3758 = vmatpush1.msra.mxu0 %v3722
        %3759 = vmatprep.subr.mxu0 0.0
        %3760 = vmatpush1.msra.mxu0 %v3723
        %3761 = vmatprep.subr.mxu0 0.0
        %3762 = vmatpush1.msra.mxu0 0.0
        %3763 = vmatprep.subr.mxu0 0.0
        %3764 = vmatpush1.msra.mxu0 0.0
        %3765 = vmatprep.subr.mxu0 0.0
        %3766 = vmatpush1.msra.mxu0 0.0
        %3767 = vmatprep.subr.mxu0 0.0
        %3768 = vmatpush1.msra.mxu0 0.0
        %3769 = vmatprep.subr.mxu0 0.0
        %3770 = vmatpush1.msra.mxu0 0.0
        %3771 = vmatprep.subr.mxu0 0.0
        %3772 = vmatpush1.msra.mxu0 0.0
        %3773 = vmatprep.subr.mxu0 0.0
        %3774 = vmatpush1.msra.mxu0 0.0
        %3775 = vmatprep.subr.mxu0 0.0
        %3776 = vmatpush1.msra.mxu0 0.0
        %3777 = vmatprep.subr.mxu0 0.0
        %3778 = vmatpush1.msra.mxu0 0.0
        %3779 = vmatprep.subr.mxu0 0.0
        %3780 = vmatpush1.msra.mxu0 0.0
        %3781 = vmatprep.subr.mxu0 0.0
        %3782 = vmatpush1.msra.mxu0 0.0
        %3783 = vmatprep.subr.mxu0 0.0
        %3784 = vmatpush1.msra.mxu0 0.0
        %3785 = vmatprep.subr.mxu0 0.0
        %3786 = vmatpush1.msra.mxu0 0.0
        %3787 = vmatprep.subr.mxu0 0.0
        %3788 = vmatpush1.msra.mxu0 0.0
        %3789 = vmatprep.subr.mxu0 0.0
        %3790 = vmatpush1.msra.mxu0 0.0
        %3791 = vmatprep.subr.mxu0 0.0
        %3792 = vmatpush1.msra.mxu0 0.0
        %3793 = vmatprep.mubr.f32.mxu0 0.0
        %3794 = vmatmul.mubr.f32.gmra.mrb[0].mxu0 %v3522
        %v3795 = vpop.f32.mrb[0].mxu0
        %v3796 = vadd.f32 %v3728, %v3795
        %v3797 = vpop.f32.mrb[0].mxu0
        %3798 = vdwg.mxu0
        %v3799 = vmul.f32 %v3704, %v899
        %v3800 = vmul.f32 %v3704, %v903
        %v3801 = vmul.f32 %v3704, %v907
        %v3802 = vmul.f32 %v3704, %v911
        %v3803 = vmul.f32 %v3796, %v899
        %v3804 = vmul.f32 %v3796, %v903
        %v3805 = vmul.f32 %v3796, %v907
        %v3806 = vmul.f32 %v3796, %v911
        %3807 = vmatprep.subr.mxu0 0.0
        %3808 = vmatpush1.xpose.msra.mxu0 %v3799
        %3809 = vmatprep.subr.mxu0 0.0
        %3810 = vmatpush1.xpose.msra.mxu0 0.0
        %3811 = vmatprep.subr.mxu0 0.0
        %3812 = vmatpush1.xpose.msra.mxu0 0.0
        %3813 = vmatprep.subr.mxu0 0.0
        %3814 = vmatpush1.xpose.msra.mxu0 0.0
        %3815 = vmatprep.subr.mxu0 0.0
        %3816 = vmatpush1.xpose.msra.mxu0 0.0
        %3817 = vmatprep.subr.mxu0 0.0
        %3818 = vmatpush1.xpose.msra.mxu0 0.0
        %3819 = vmatprep.subr.mxu0 0.0
        %3820 = vmatpush1.xpose.msra.mxu0 0.0
        %3821 = vmatprep.subr.mxu0 0.0
        %3822 = vmatpush1.xpose.msra.mxu0 0.0
        %3823 = vmatprep.subr.mxu0 0.0
        %3824 = vmatpush1.xpose.msra.mxu0 0.0
        %3825 = vmatprep.subr.mxu0 0.0
        %3826 = vmatpush1.xpose.msra.mxu0 0.0
        %3827 = vmatprep.subr.mxu0 0.0
        %3828 = vmatpush1.xpose.msra.mxu0 0.0
        %3829 = vmatprep.subr.mxu0 0.0
        %3830 = vmatpush1.xpose.msra.mxu0 0.0
        %3831 = vmatprep.subr.mxu0 0.0
        %3832 = vmatpush1.xpose.msra.mxu0 0.0
        %3833 = vmatprep.subr.mxu0 0.0
        %3834 = vmatpush1.xpose.msra.mxu0 0.0
        %3835 = vmatprep.subr.mxu0 0.0
        %3836 = vmatpush1.xpose.msra.mxu0 0.0
        %3837 = vmatprep.subr.mxu0 0.0
        %3838 = vmatpush1.xpose.msra.mxu0 0.0
        %3839 = vmatprep.subr.mxu0 0.0
        %3840 = vmatpush1.xpose.msra.mxu0 0.0
        %3841 = vmatprep.subr.mxu0 0.0
        %3842 = vmatpush1.xpose.msra.mxu0 0.0
        %3843 = vmatprep.subr.mxu0 0.0
        %3844 = vmatpush1.xpose.msra.mxu0 0.0
        %3845 = vmatprep.subr.mxu0 0.0
        %3846 = vmatpush1.xpose.msra.mxu0 0.0
        %3847 = vmatprep.subr.mxu0 0.0
        %3848 = vmatpush1.xpose.msra.mxu0 0.0
        %3849 = vmatprep.subr.mxu0 0.0
        %3850 = vmatpush1.xpose.msra.mxu0 0.0
        %3851 = vmatprep.subr.mxu0 0.0
        %3852 = vmatpush1.xpose.msra.mxu0 0.0
        %3853 = vmatprep.subr.mxu0 0.0
        %3854 = vmatpush1.xpose.msra.mxu0 0.0
        %3855 = vmatprep.subr.mxu0 0.0
        %3856 = vmatpush1.xpose.msra.mxu0 0.0
        %3857 = vmatprep.subr.mxu0 0.0
        %3858 = vmatpush1.xpose.msra.mxu0 0.0
        %3859 = vmatprep.subr.mxu0 0.0
        %3860 = vmatpush1.xpose.msra.mxu0 0.0
        %3861 = vmatprep.subr.mxu0 0.0
        %3862 = vmatpush1.xpose.msra.mxu0 0.0
        %3863 = vmatprep.subr.mxu0 0.0
        %3864 = vmatpush1.xpose.msra.mxu0 0.0
        %3865 = vmatprep.subr.mxu0 0.0
        %3866 = vmatpush1.xpose.msra.mxu0 0.0
        %3867 = vmatprep.subr.mxu0 0.0
        %3868 = vmatpush1.xpose.msra.mxu0 0.0
        %3869 = vmatprep.subr.mxu0 0.0
        %3870 = vmatpush1.xpose.msra.mxu0 0.0
        %3871 = vmatprep.mubr.f32.mxu0 0.0
        %3872 = vmatmul.mubr.f32.gmra.mrb[0].mxu0 %v3612
        %v3873 = vpop.f32.mrb[0].mxu0
        %v3874 = vadd.f32 %v453, %v3873
        %v3875 = vpop.f32.mrb[0].mxu0
        %3876 = vdwg.mxu0
        %3877 = vmatprep.subr.mxu0 0.0
        %3878 = vmatpush1.xpose.msra.mxu0 %v3800
        %3879 = vmatprep.subr.mxu0 0.0
        %3880 = vmatpush1.xpose.msra.mxu0 0.0
        %3881 = vmatprep.subr.mxu0 0.0
        %3882 = vmatpush1.xpose.msra.mxu0 0.0
        %3883 = vmatprep.subr.mxu0 0.0
        %3884 = vmatpush1.xpose.msra.mxu0 0.0
        %3885 = vmatprep.subr.mxu0 0.0
        %3886 = vmatpush1.xpose.msra.mxu0 0.0
        %3887 = vmatprep.subr.mxu0 0.0
        %3888 = vmatpush1.xpose.msra.mxu0 0.0
        %3889 = vmatprep.subr.mxu0 0.0
        %3890 = vmatpush1.xpose.msra.mxu0 0.0
        %3891 = vmatprep.subr.mxu0 0.0
        %3892 = vmatpush1.xpose.msra.mxu0 0.0
        %3893 = vmatprep.subr.mxu0 0.0
        %3894 = vmatpush1.xpose.msra.mxu0 0.0
        %3895 = vmatprep.subr.mxu0 0.0
        %3896 = vmatpush1.xpose.msra.mxu0 0.0
        %3897 = vmatprep.subr.mxu0 0.0
        %3898 = vmatpush1.xpose.msra.mxu0 0.0
        %3899 = vmatprep.subr.mxu0 0.0
        %3900 = vmatpush1.xpose.msra.mxu0 0.0
        %3901 = vmatprep.subr.mxu0 0.0
        %3902 = vmatpush1.xpose.msra.mxu0 0.0
        %3903 = vmatprep.subr.mxu0 0.0
        %3904 = vmatpush1.xpose.msra.mxu0 0.0
        %3905 = vmatprep.subr.mxu0 0.0
        %3906 = vmatpush1.xpose.msra.mxu0 0.0
        %3907 = vmatprep.subr.mxu0 0.0
        %3908 = vmatpush1.xpose.msra.mxu0 0.0
        %3909 = vmatprep.subr.mxu0 0.0
        %3910 = vmatpush1.xpose.msra.mxu0 0.0
        %3911 = vmatprep.subr.mxu0 0.0
        %3912 = vmatpush1.xpose.msra.mxu0 0.0
        %3913 = vmatprep.subr.mxu0 0.0
        %3914 = vmatpush1.xpose.msra.mxu0 0.0
        %3915 = vmatprep.subr.mxu0 0.0
        %3916 = vmatpush1.xpose.msra.mxu0 0.0
        %3917 = vmatprep.subr.mxu0 0.0
        %3918 = vmatpush1.xpose.msra.mxu0 0.0
        %3919 = vmatprep.subr.mxu0 0.0
        %3920 = vmatpush1.xpose.msra.mxu0 0.0
        %3921 = vmatprep.subr.mxu0 0.0
        %3922 = vmatpush1.xpose.msra.mxu0 0.0
        %3923 = vmatprep.subr.mxu0 0.0
        %3924 = vmatpush1.xpose.msra.mxu0 0.0
        %3925 = vmatprep.subr.mxu0 0.0
        %3926 = vmatpush1.xpose.msra.mxu0 0.0
        %3927 = vmatprep.subr.mxu0 0.0
        %3928 = vmatpush1.xpose.msra.mxu0 0.0
        %3929 = vmatprep.subr.mxu0 0.0
        %3930 = vmatpush1.xpose.msra.mxu0 0.0
        %3931 = vmatprep.subr.mxu0 0.0
        %3932 = vmatpush1.xpose.msra.mxu0 0.0
        %3933 = vmatprep.subr.mxu0 0.0
        %3934 = vmatpush1.xpose.msra.mxu0 0.0
        %3935 = vmatprep.subr.mxu0 0.0
        %3936 = vmatpush1.xpose.msra.mxu0 0.0
        %3937 = vmatprep.subr.mxu0 0.0
        %3938 = vmatpush1.xpose.msra.mxu0 0.0
        %3939 = vmatprep.subr.mxu0 0.0
        %3940 = vmatpush1.xpose.msra.mxu0 0.0
        %3941 = vmatprep.mubr.f32.mxu0 0.0
        %3942 = vmatmul.mubr.f32.gmra.mrb[0].mxu0 %v3612
        %v3943 = vpop.f32.mrb[0].mxu0
        %v3944 = vadd.f32 %v453, %v3943
        %v3945 = vpop.f32.mrb[0].mxu0
        %3946 = vdwg.mxu0
        %3947 = vmatprep.subr.mxu0 0.0
        %3948 = vmatpush1.xpose.msra.mxu0 %v3801
        %3949 = vmatprep.subr.mxu0 0.0
        %3950 = vmatpush1.xpose.msra.mxu0 0.0
        %3951 = vmatprep.subr.mxu0 0.0
        %3952 = vmatpush1.xpose.msra.mxu0 0.0
        %3953 = vmatprep.subr.mxu0 0.0
        %3954 = vmatpush1.xpose.msra.mxu0 0.0
        %3955 = vmatprep.subr.mxu0 0.0
        %3956 = vmatpush1.xpose.msra.mxu0 0.0
        %3957 = vmatprep.subr.mxu0 0.0
        %3958 = vmatpush1.xpose.msra.mxu0 0.0
        %3959 = vmatprep.subr.mxu0 0.0
        %3960 = vmatpush1.xpose.msra.mxu0 0.0
        %3961 = vmatprep.subr.mxu0 0.0
        %3962 = vmatpush1.xpose.msra.mxu0 0.0
        %3963 = vmatprep.subr.mxu0 0.0
        %3964 = vmatpush1.xpose.msra.mxu0 0.0
        %3965 = vmatprep.subr.mxu0 0.0
        %3966 = vmatpush1.xpose.msra.mxu0 0.0
        %3967 = vmatprep.subr.mxu0 0.0
        %3968 = vmatpush1.xpose.msra.mxu0 0.0
        %3969 = vmatprep.subr.mxu0 0.0
        %3970 = vmatpush1.xpose.msra.mxu0 0.0
        %3971 = vmatprep.subr.mxu0 0.0
        %3972 = vmatpush1.xpose.msra.mxu0 0.0
        %3973 = vmatprep.subr.mxu0 0.0
        %3974 = vmatpush1.xpose.msra.mxu0 0.0
        %3975 = vmatprep.subr.mxu0 0.0
        %3976 = vmatpush1.xpose.msra.mxu0 0.0
        %3977 = vmatprep.subr.mxu0 0.0
        %3978 = vmatpush1.xpose.msra.mxu0 0.0
        %3979 = vmatprep.subr.mxu0 0.0
        %3980 = vmatpush1.xpose.msra.mxu0 0.0
        %3981 = vmatprep.subr.mxu0 0.0
        %3982 = vmatpush1.xpose.msra.mxu0 0.0
        %3983 = vmatprep.subr.mxu0 0.0
        %3984 = vmatpush1.xpose.msra.mxu0 0.0
        %3985 = vmatprep.subr.mxu0 0.0
        %3986 = vmatpush1.xpose.msra.mxu0 0.0
        %3987 = vmatprep.subr.mxu0 0.0
        %3988 = vmatpush1.xpose.msra.mxu0 0.0
        %3989 = vmatprep.subr.mxu0 0.0
        %3990 = vmatpush1.xpose.msra.mxu0 0.0
        %3991 = vmatprep.subr.mxu0 0.0
        %3992 = vmatpush1.xpose.msra.mxu0 0.0
        %3993 = vmatprep.subr.mxu0 0.0
        %3994 = vmatpush1.xpose.msra.mxu0 0.0
        %3995 = vmatprep.subr.mxu0 0.0
        %3996 = vmatpush1.xpose.msra.mxu0 0.0
        %3997 = vmatprep.subr.mxu0 0.0
        %3998 = vmatpush1.xpose.msra.mxu0 0.0
        %3999 = vmatprep.subr.mxu0 0.0
        %4000 = vmatpush1.xpose.msra.mxu0 0.0
        %4001 = vmatprep.subr.mxu0 0.0
        %4002 = vmatpush1.xpose.msra.mxu0 0.0
        %4003 = vmatprep.subr.mxu0 0.0
        %4004 = vmatpush1.xpose.msra.mxu0 0.0
        %4005 = vmatprep.subr.mxu0 0.0
        %4006 = vmatpush1.xpose.msra.mxu0 0.0
        %4007 = vmatprep.subr.mxu0 0.0
        %4008 = vmatpush1.xpose.msra.mxu0 0.0
        %4009 = vmatprep.subr.mxu0 0.0
        %4010 = vmatpush1.xpose.msra.mxu0 0.0
        %4011 = vmatprep.mubr.f32.mxu0 0.0
        %4012 = vmatmul.mubr.f32.gmra.mrb[0].mxu0 %v3612
        %v4013 = vpop.f32.mrb[0].mxu0
        %v4014 = vadd.f32 %v453, %v4013
        %v4015 = vpop.f32.mrb[0].mxu0
        %4016 = vdwg.mxu0
        %4017 = vmatprep.subr.mxu0 0.0
        %4018 = vmatpush1.xpose.msra.mxu0 %v3802
        %4019 = vmatprep.subr.mxu0 0.0
        %4020 = vmatpush1.xpose.msra.mxu0 0.0
        %4021 = vmatprep.subr.mxu0 0.0
        %4022 = vmatpush1.xpose.msra.mxu0 0.0
        %4023 = vmatprep.subr.mxu0 0.0
        %4024 = vmatpush1.xpose.msra.mxu0 0.0
        %4025 = vmatprep.subr.mxu0 0.0
        %4026 = vmatpush1.xpose.msra.mxu0 0.0
        %4027 = vmatprep.subr.mxu0 0.0
        %4028 = vmatpush1.xpose.msra.mxu0 0.0
        %4029 = vmatprep.subr.mxu0 0.0
        %4030 = vmatpush1.xpose.msra.mxu0 0.0
        %4031 = vmatprep.subr.mxu0 0.0
        %4032 = vmatpush1.xpose.msra.mxu0 0.0
        %4033 = vmatprep.subr.mxu0 0.0
        %4034 = vmatpush1.xpose.msra.mxu0 0.0
        %4035 = vmatprep.subr.mxu0 0.0
        %4036 = vmatpush1.xpose.msra.mxu0 0.0
        %4037 = vmatprep.subr.mxu0 0.0
        %4038 = vmatpush1.xpose.msra.mxu0 0.0
        %4039 = vmatprep.subr.mxu0 0.0
        %4040 = vmatpush1.xpose.msra.mxu0 0.0
        %4041 = vmatprep.subr.mxu0 0.0
        %4042 = vmatpush1.xpose.msra.mxu0 0.0
        %4043 = vmatprep.subr.mxu0 0.0
        %4044 = vmatpush1.xpose.msra.mxu0 0.0
        %4045 = vmatprep.subr.mxu0 0.0
        %4046 = vmatpush1.xpose.msra.mxu0 0.0
        %4047 = vmatprep.subr.mxu0 0.0
        %4048 = vmatpush1.xpose.msra.mxu0 0.0
        %4049 = vmatprep.subr.mxu0 0.0
        %4050 = vmatpush1.xpose.msra.mxu0 0.0
        %4051 = vmatprep.subr.mxu0 0.0
        %4052 = vmatpush1.xpose.msra.mxu0 0.0
        %4053 = vmatprep.subr.mxu0 0.0
        %4054 = vmatpush1.xpose.msra.mxu0 0.0
        %4055 = vmatprep.subr.mxu0 0.0
        %4056 = vmatpush1.xpose.msra.mxu0 0.0
        %4057 = vmatprep.subr.mxu0 0.0
        %4058 = vmatpush1.xpose.msra.mxu0 0.0
        %4059 = vmatprep.subr.mxu0 0.0
        %4060 = vmatpush1.xpose.msra.mxu0 0.0
        %4061 = vmatprep.subr.mxu0 0.0
        %4062 = vmatpush1.xpose.msra.mxu0 0.0
        %4063 = vmatprep.subr.mxu0 0.0
        %4064 = vmatpush1.xpose.msra.mxu0 0.0
        %4065 = vmatprep.subr.mxu0 0.0
        %4066 = vmatpush1.xpose.msra.mxu0 0.0
        %4067 = vmatprep.subr.mxu0 0.0
        %4068 = vmatpush1.xpose.msra.mxu0 0.0
        %4069 = vmatprep.subr.mxu0 0.0
        %4070 = vmatpush1.xpose.msra.mxu0 0.0
        %4071 = vmatprep.subr.mxu0 0.0
        %4072 = vmatpush1.xpose.msra.mxu0 0.0
        %4073 = vmatprep.subr.mxu0 0.0
        %4074 = vmatpush1.xpose.msra.mxu0 0.0
        %4075 = vmatprep.subr.mxu0 0.0
        %4076 = vmatpush1.xpose.msra.mxu0 0.0
        %4077 = vmatprep.subr.mxu0 0.0
        %4078 = vmatpush1.xpose.msra.mxu0 0.0
        %4079 = vmatprep.subr.mxu0 0.0
        %4080 = vmatpush1.xpose.msra.mxu0 0.0
        %4081 = vmatprep.mubr.f32.mxu0 0.0
        %4082 = vmatmul.mubr.f32.gmra.mrb[0].mxu0 %v3612
        %v4083 = vpop.f32.mrb[0].mxu0
        %v4084 = vadd.f32 %v453, %v4083
        %v4085 = vpop.f32.mrb[0].mxu0
        %4086 = vdwg.mxu0
        %v4087 = vmul.f32 %v3874, 1.442695
        %v4088 = vpow.pop %v4087
        %v4089 = vmul.f32 %v3944, 1.442695
        %v4090 = vpow.pop %v4089
        %v4091 = vmul.f32 %v4014, 1.442695
        %v4092 = vpow.pop %v4091
        %v4093 = vmul.f32 %v4084, 1.442695
        %v4094 = vpow.pop %v4093
        %vm4095 = vcmask 64512
        %v4096 = vsel %vm4095, %v4088, 0.0
        %4097 = vadd.xlane.f32.xlu0 %v4096
        %v4098 = vpop.xlane.xlu0 %4097
        %v4099 = vsel %vm4095, %v4090, 0.0
        %4100 = vadd.xlane.f32.xlu0 %v4099
        %v4101 = vpop.xlane.xlu0 %4100
        %v4102 = vsel %vm4095, %v4092, 0.0
        %4103 = vadd.xlane.f32.xlu0 %v4102
        %v4104 = vpop.xlane.xlu0 %4103
        %v4105 = vsel %vm4095, %v4094, 0.0
        %4106 = vadd.xlane.f32.xlu0 %v4105
        %v4107 = vpop.xlane.xlu0 %4106
        %v4108 = vrcp.pop %v4098
        %v4109 = vrcp.pop %v4101
        %v4110 = vrcp.pop %v4104
        %v4111 = vrcp.pop %v4107
        %v4112 = vmul.f32 %v4088, %v4108
        %v4113 = vmul.f32 %v4090, %v4109
        %v4114 = vmul.f32 %v4092, %v4110
        %v4115 = vmul.f32 %v4094, %v4111
        %v4117 = vsel %vm4095, %v4112, 0
        %4119 = vmatprep.subr.mxu0 0.0
        %4120 = vmatpush1.msra.mxu0 %v3803
        %4121 = vmatprep.subr.mxu0 0.0
        %4122 = vmatpush1.msra.mxu0 0.0
        %4123 = vmatprep.subr.mxu0 0.0
        %4124 = vmatpush1.msra.mxu0 0.0
        %4125 = vmatprep.subr.mxu0 0.0
        %4126 = vmatpush1.msra.mxu0 0.0
        %4127 = vmatprep.subr.mxu0 0.0
        %4128 = vmatpush1.msra.mxu0 0.0
        %4129 = vmatprep.subr.mxu0 0.0
        %4130 = vmatpush1.msra.mxu0 0.0
        %4131 = vmatprep.subr.mxu0 0.0
        %4132 = vmatpush1.msra.mxu0 0.0
        %4133 = vmatprep.subr.mxu0 0.0
        %4134 = vmatpush1.msra.mxu0 0.0
        %4135 = vmatprep.subr.mxu0 0.0
        %4136 = vmatpush1.msra.mxu0 0.0
        %4137 = vmatprep.subr.mxu0 0.0
        %4138 = vmatpush1.msra.mxu0 0.0
        %4139 = vmatprep.subr.mxu0 0.0
        %4140 = vmatpush1.msra.mxu0 0.0
        %4141 = vmatprep.subr.mxu0 0.0
        %4142 = vmatpush1.msra.mxu0 0.0
        %4143 = vmatprep.subr.mxu0 0.0
        %4144 = vmatpush1.msra.mxu0 0.0
        %4145 = vmatprep.subr.mxu0 0.0
        %4146 = vmatpush1.msra.mxu0 0.0
        %4147 = vmatprep.subr.mxu0 0.0
        %4148 = vmatpush1.msra.mxu0 0.0
        %4149 = vmatprep.subr.mxu0 0.0
        %4150 = vmatpush1.msra.mxu0 0.0
        %4151 = vmatprep.subr.mxu0 0.0
        %4152 = vmatpush1.msra.mxu0 0.0
        %4153 = vmatprep.subr.mxu0 0.0
        %4154 = vmatpush1.msra.mxu0 0.0
        %4155 = vmatprep.subr.mxu0 0.0
        %4156 = vmatpush1.msra.mxu0 0.0
        %4157 = vmatprep.subr.mxu0 0.0
        %4158 = vmatpush1.msra.mxu0 0.0
        %4159 = vmatprep.subr.mxu0 0.0
        %4160 = vmatpush1.msra.mxu0 0.0
        %4161 = vmatprep.subr.mxu0 0.0
        %4162 = vmatpush1.msra.mxu0 0.0
        %4163 = vmatprep.subr.mxu0 0.0
        %4164 = vmatpush1.msra.mxu0 0.0
        %4165 = vmatprep.subr.mxu0 0.0
        %4166 = vmatpush1.msra.mxu0 0.0
        %4167 = vmatprep.subr.mxu0 0.0
        %4168 = vmatpush1.msra.mxu0 0.0
        %4169 = vmatprep.subr.mxu0 0.0
        %4170 = vmatpush1.msra.mxu0 0.0
        %4171 = vmatprep.subr.mxu0 0.0
        %4172 = vmatpush1.msra.mxu0 0.0
        %4173 = vmatprep.subr.mxu0 0.0
        %4174 = vmatpush1.msra.mxu0 0.0
        %4175 = vmatprep.subr.mxu0 0.0
        %4176 = vmatpush1.msra.mxu0 0.0
        %4177 = vmatprep.subr.mxu0 0.0
        %4178 = vmatpush1.msra.mxu0 0.0
        %4179 = vmatprep.subr.mxu0 0.0
        %4180 = vmatpush1.msra.mxu0 0.0
        %4181 = vmatprep.subr.mxu0 0.0
        %4182 = vmatpush1.msra.mxu0 0.0
        %4183 = vmatprep.mubr.f32.mxu0 0.0
        %4184 = vmatmul.mubr.f32.gmra.mrb[0].mxu0 %v4117
        %v4185 = vpop.f32.mrb[0].mxu0
        %v4186 = vadd.f32 0.0, %v4185
        %v4187 = vpop.f32.mrb[0].mxu0
        %4188 = vdwg.mxu0
        %v4190 = vsel %vm4095, %v4113, 0
        %4192 = vmatprep.subr.mxu0 0.0
        %4193 = vmatpush1.msra.mxu0 %v3804
        %4194 = vmatprep.subr.mxu0 0.0
        %4195 = vmatpush1.msra.mxu0 0.0
        %4196 = vmatprep.subr.mxu0 0.0
        %4197 = vmatpush1.msra.mxu0 0.0
        %4198 = vmatprep.subr.mxu0 0.0
        %4199 = vmatpush1.msra.mxu0 0.0
        %4200 = vmatprep.subr.mxu0 0.0
        %4201 = vmatpush1.msra.mxu0 0.0
        %4202 = vmatprep.subr.mxu0 0.0
        %4203 = vmatpush1.msra.mxu0 0.0
        %4204 = vmatprep.subr.mxu0 0.0
        %4205 = vmatpush1.msra.mxu0 0.0
        %4206 = vmatprep.subr.mxu0 0.0
        %4207 = vmatpush1.msra.mxu0 0.0
        %4208 = vmatprep.subr.mxu0 0.0
        %4209 = vmatpush1.msra.mxu0 0.0
        %4210 = vmatprep.subr.mxu0 0.0
        %4211 = vmatpush1.msra.mxu0 0.0
        %4212 = vmatprep.subr.mxu0 0.0
        %4213 = vmatpush1.msra.mxu0 0.0
        %4214 = vmatprep.subr.mxu0 0.0
        %4215 = vmatpush1.msra.mxu0 0.0
        %4216 = vmatprep.subr.mxu0 0.0
        %4217 = vmatpush1.msra.mxu0 0.0
        %4218 = vmatprep.subr.mxu0 0.0
        %4219 = vmatpush1.msra.mxu0 0.0
        %4220 = vmatprep.subr.mxu0 0.0
        %4221 = vmatpush1.msra.mxu0 0.0
        %4222 = vmatprep.subr.mxu0 0.0
        %4223 = vmatpush1.msra.mxu0 0.0
        %4224 = vmatprep.subr.mxu0 0.0
        %4225 = vmatpush1.msra.mxu0 0.0
        %4226 = vmatprep.subr.mxu0 0.0
        %4227 = vmatpush1.msra.mxu0 0.0
        %4228 = vmatprep.subr.mxu0 0.0
        %4229 = vmatpush1.msra.mxu0 0.0
        %4230 = vmatprep.subr.mxu0 0.0
        %4231 = vmatpush1.msra.mxu0 0.0
        %4232 = vmatprep.subr.mxu0 0.0
        %4233 = vmatpush1.msra.mxu0 0.0
        %4234 = vmatprep.subr.mxu0 0.0
        %4235 = vmatpush1.msra.mxu0 0.0
        %4236 = vmatprep.subr.mxu0 0.0
        %4237 = vmatpush1.msra.mxu0 0.0
        %4238 = vmatprep.subr.mxu0 0.0
        %4239 = vmatpush1.msra.mxu0 0.0
        %4240 = vmatprep.subr.mxu0 0.0
        %4241 = vmatpush1.msra.mxu0 0.0
        %4242 = vmatprep.subr.mxu0 0.0
        %4243 = vmatpush1.msra.mxu0 0.0
        %4244 = vmatprep.subr.mxu0 0.0
        %4245 = vmatpush1.msra.mxu0 0.0
        %4246 = vmatprep.subr.mxu0 0.0
        %4247 = vmatpush1.msra.mxu0 0.0
        %4248 = vmatprep.subr.mxu0 0.0
        %4249 = vmatpush1.msra.mxu0 0.0
        %4250 = vmatprep.subr.mxu0 0.0
        %4251 = vmatpush1.msra.mxu0 0.0
        %4252 = vmatprep.subr.mxu0 0.0
        %4253 = vmatpush1.msra.mxu0 0.0
        %4254 = vmatprep.subr.mxu0 0.0
        %4255 = vmatpush1.msra.mxu0 0.0
        %4256 = vmatprep.mubr.f32.mxu0 0.0
        %4257 = vmatmul.mubr.f32.gmra.mrb[0].mxu0 %v4190
        %v4258 = vpop.f32.mrb[0].mxu0
        %v4259 = vadd.f32 0.0, %v4258
        %v4260 = vpop.f32.mrb[0].mxu0
        %4261 = vdwg.mxu0
        %v4263 = vsel %vm4095, %v4114, 0
        %4265 = vmatprep.subr.mxu0 0.0
        %4266 = vmatpush1.msra.mxu0 %v3805
        %4267 = vmatprep.subr.mxu0 0.0
        %4268 = vmatpush1.msra.mxu0 0.0
        %4269 = vmatprep.subr.mxu0 0.0
        %4270 = vmatpush1.msra.mxu0 0.0
        %4271 = vmatprep.subr.mxu0 0.0
        %4272 = vmatpush1.msra.mxu0 0.0
        %4273 = vmatprep.subr.mxu0 0.0
        %4274 = vmatpush1.msra.mxu0 0.0
        %4275 = vmatprep.subr.mxu0 0.0
        %4276 = vmatpush1.msra.mxu0 0.0
        %4277 = vmatprep.subr.mxu0 0.0
        %4278 = vmatpush1.msra.mxu0 0.0
        %4279 = vmatprep.subr.mxu0 0.0
        %4280 = vmatpush1.msra.mxu0 0.0
        %4281 = vmatprep.subr.mxu0 0.0
        %4282 = vmatpush1.msra.mxu0 0.0
        %4283 = vmatprep.subr.mxu0 0.0
        %4284 = vmatpush1.msra.mxu0 0.0
        %4285 = vmatprep.subr.mxu0 0.0
        %4286 = vmatpush1.msra.mxu0 0.0
        %4287 = vmatprep.subr.mxu0 0.0
        %4288 = vmatpush1.msra.mxu0 0.0
        %4289 = vmatprep.subr.mxu0 0.0
        %4290 = vmatpush1.msra.mxu0 0.0
        %4291 = vmatprep.subr.mxu0 0.0
        %4292 = vmatpush1.msra.mxu0 0.0
        %4293 = vmatprep.subr.mxu0 0.0
        %4294 = vmatpush1.msra.mxu0 0.0
        %4295 = vmatprep.subr.mxu0 0.0
        %4296 = vmatpush1.msra.mxu0 0.0
        %4297 = vmatprep.subr.mxu0 0.0
        %4298 = vmatpush1.msra.mxu0 0.0
        %4299 = vmatprep.subr.mxu0 0.0
        %4300 = vmatpush1.msra.mxu0 0.0
        %4301 = vmatprep.subr.mxu0 0.0
        %4302 = vmatpush1.msra.mxu0 0.0
        %4303 = vmatprep.subr.mxu0 0.0
        %4304 = vmatpush1.msra.mxu0 0.0
        %4305 = vmatprep.subr.mxu0 0.0
        %4306 = vmatpush1.msra.mxu0 0.0
        %4307 = vmatprep.subr.mxu0 0.0
        %4308 = vmatpush1.msra.mxu0 0.0
        %4309 = vmatprep.subr.mxu0 0.0
        %4310 = vmatpush1.msra.mxu0 0.0
        %4311 = vmatprep.subr.mxu0 0.0
        %4312 = vmatpush1.msra.mxu0 0.0
        %4313 = vmatprep.subr.mxu0 0.0
        %4314 = vmatpush1.msra.mxu0 0.0
        %4315 = vmatprep.subr.mxu0 0.0
        %4316 = vmatpush1.msra.mxu0 0.0
        %4317 = vmatprep.subr.mxu0 0.0
        %4318 = vmatpush1.msra.mxu0 0.0
        %4319 = vmatprep.subr.mxu0 0.0
        %4320 = vmatpush1.msra.mxu0 0.0
        %4321 = vmatprep.subr.mxu0 0.0
        %4322 = vmatpush1.msra.mxu0 0.0
        %4323 = vmatprep.subr.mxu0 0.0
        %4324 = vmatpush1.msra.mxu0 0.0
        %4325 = vmatprep.subr.mxu0 0.0
        %4326 = vmatpush1.msra.mxu0 0.0
        %4327 = vmatprep.subr.mxu0 0.0
        %4328 = vmatpush1.msra.mxu0 0.0
        %4329 = vmatprep.mubr.f32.mxu0 0.0
        %4330 = vmatmul.mubr.f32.gmra.mrb[0].mxu0 %v4263
        %v4331 = vpop.f32.mrb[0].mxu0
        %v4332 = vadd.f32 0.0, %v4331
        %v4333 = vpop.f32.mrb[0].mxu0
        %4334 = vdwg.mxu0
        %v4336 = vsel %vm4095, %v4115, 0
        %4338 = vmatprep.subr.mxu0 0.0
        %4339 = vmatpush1.msra.mxu0 %v3806
        %4340 = vmatprep.subr.mxu0 0.0
        %4341 = vmatpush1.msra.mxu0 0.0
        %4342 = vmatprep.subr.mxu0 0.0
        %4343 = vmatpush1.msra.mxu0 0.0
        %4344 = vmatprep.subr.mxu0 0.0
        %4345 = vmatpush1.msra.mxu0 0.0
        %4346 = vmatprep.subr.mxu0 0.0
        %4347 = vmatpush1.msra.mxu0 0.0
        %4348 = vmatprep.subr.mxu0 0.0
        %4349 = vmatpush1.msra.mxu0 0.0
        %4350 = vmatprep.subr.mxu0 0.0
        %4351 = vmatpush1.msra.mxu0 0.0
        %4352 = vmatprep.subr.mxu0 0.0
        %4353 = vmatpush1.msra.mxu0 0.0
        %4354 = vmatprep.subr.mxu0 0.0
        %4355 = vmatpush1.msra.mxu0 0.0
        %4356 = vmatprep.subr.mxu0 0.0
        %4357 = vmatpush1.msra.mxu0 0.0
        %4358 = vmatprep.subr.mxu0 0.0
        %4359 = vmatpush1.msra.mxu0 0.0
        %4360 = vmatprep.subr.mxu0 0.0
        %4361 = vmatpush1.msra.mxu0 0.0
        %4362 = vmatprep.subr.mxu0 0.0
        %4363 = vmatpush1.msra.mxu0 0.0
        %4364 = vmatprep.subr.mxu0 0.0
        %4365 = vmatpush1.msra.mxu0 0.0
        %4366 = vmatprep.subr.mxu0 0.0
        %4367 = vmatpush1.msra.mxu0 0.0
        %4368 = vmatprep.subr.mxu0 0.0
        %4369 = vmatpush1.msra.mxu0 0.0
        %4370 = vmatprep.subr.mxu0 0.0
        %4371 = vmatpush1.msra.mxu0 0.0
        %4372 = vmatprep.subr.mxu0 0.0
        %4373 = vmatpush1.msra.mxu0 0.0
        %4374 = vmatprep.subr.mxu0 0.0
        %4375 = vmatpush1.msra.mxu0 0.0
        %4376 = vmatprep.subr.mxu0 0.0
        %4377 = vmatpush1.msra.mxu0 0.0
        %4378 = vmatprep.subr.mxu0 0.0
        %4379 = vmatpush1.msra.mxu0 0.0
        %4380 = vmatprep.subr.mxu0 0.0
        %4381 = vmatpush1.msra.mxu0 0.0
        %4382 = vmatprep.subr.mxu0 0.0
        %4383 = vmatpush1.msra.mxu0 0.0
        %4384 = vmatprep.subr.mxu0 0.0
        %4385 = vmatpush1.msra.mxu0 0.0
        %4386 = vmatprep.subr.mxu0 0.0
        %4387 = vmatpush1.msra.mxu0 0.0
        %4388 = vmatprep.subr.mxu0 0.0
        %4389 = vmatpush1.msra.mxu0 0.0
        %4390 = vmatprep.subr.mxu0 0.0
        %4391 = vmatpush1.msra.mxu0 0.0
        %4392 = vmatprep.subr.mxu0 0.0
        %4393 = vmatpush1.msra.mxu0 0.0
        %4394 = vmatprep.subr.mxu0 0.0
        %4395 = vmatpush1.msra.mxu0 0.0
        %4396 = vmatprep.subr.mxu0 0.0
        %4397 = vmatpush1.msra.mxu0 0.0
        %4398 = vmatprep.subr.mxu0 0.0
        %4399 = vmatpush1.msra.mxu0 0.0
        %4400 = vmatprep.subr.mxu0 0.0
        %4401 = vmatpush1.msra.mxu0 0.0
        %4402 = vmatprep.mubr.f32.mxu0 0.0
        %4403 = vmatmul.mubr.f32.gmra.mrb[0].mxu0 %v4336
        %v4404 = vpop.f32.mrb[0].mxu0
        %v4405 = vadd.f32 0.0, %v4404
        %v4406 = vpop.f32.mrb[0].mxu0
        %4407 = vdwg.mxu0
        %v4408 = vadd.f32 %v4186, %v4259
        %v4409 = vadd.f32 %v4408, %v4332
        %v4410 = vadd.f32 %v4409, %v4405
        %s4411 = scalar_lea.vmem [#allocation2], 2304
        %v4412 = vld [vmem:[%s4411] sm:$0xff]
        %v4413 = vld [vmem:[%s4411 + $0x8] sm:$0xff]
        %v4414 = vld [vmem:[%s4411 + $0x10] sm:$0xff]
        %v4415 = vld [vmem:[%s4411 + $0x18] sm:$0xff]
        %v4416 = vld [vmem:[%s4411 + $0x20] sm:$0xff]
        %v4417 = vld [vmem:[%s4411 + $0x28] sm:$0xff]
        %v4418 = vld [vmem:[%s4411 + $0x30] sm:$0xff]
        %v4419 = vld [vmem:[%s4411 + $0x38] sm:$0xff]
        %v4420 = vld [vmem:[%s4411 + $0x40] sm:$0xff]
        %v4421 = vld [vmem:[%s4411 + $0x48] sm:$0xff]
        %v4422 = vld [vmem:[%s4411 + $0x50] sm:$0xff]
        %v4423 = vld [vmem:[%s4411 + $0x58] sm:$0xff]
        %v4424 = vld [vmem:[%s4411 + $0x60] sm:$0xff]
        %v4425 = vld [vmem:[%s4411 + $0x68] sm:$0xff]
        %v4426 = vld [vmem:[%s4411 + $0x70] sm:$0xff]
        %v4427 = vld [vmem:[%s4411 + $0x78] sm:$0xff]
        %v4428 = vld [vmem:[#allocation4 + $0x1c] sm:$0x1]
        %v4429 = vlaneseq
        %v4430 = vshrl.u32 %v4429, 7
        %v4431 = vsub.s32 0, %v4430
        %v4432 = vrot.slane %v4428, %v4431
        %4433 = vmatprep.subr.mxu0 0.0
        %4434 = vmatpush1.msra.mxu0 %v4412
        %4435 = vmatprep.subr.mxu0 0.0
        %4436 = vmatpush1.msra.mxu0 %v4413
        %4437 = vmatprep.subr.mxu0 0.0
        %4438 = vmatpush1.msra.mxu0 %v4414
        %4439 = vmatprep.subr.mxu0 0.0
        %4440 = vmatpush1.msra.mxu0 %v4415
        %4441 = vmatprep.subr.mxu0 0.0
        %4442 = vmatpush1.msra.mxu0 %v4416
        %4443 = vmatprep.subr.mxu0 0.0
        %4444 = vmatpush1.msra.mxu0 %v4417
        %4445 = vmatprep.subr.mxu0 0.0
        %4446 = vmatpush1.msra.mxu0 %v4418
        %4447 = vmatprep.subr.mxu0 0.0
        %4448 = vmatpush1.msra.mxu0 %v4419
        %4449 = vmatprep.subr.mxu0 0.0
        %4450 = vmatpush1.msra.mxu0 %v4420
        %4451 = vmatprep.subr.mxu0 0.0
        %4452 = vmatpush1.msra.mxu0 %v4421
        %4453 = vmatprep.subr.mxu0 0.0
        %4454 = vmatpush1.msra.mxu0 %v4422
        %4455 = vmatprep.subr.mxu0 0.0
        %4456 = vmatpush1.msra.mxu0 %v4423
        %4457 = vmatprep.subr.mxu0 0.0
        %4458 = vmatpush1.msra.mxu0 %v4424
        %4459 = vmatprep.subr.mxu0 0.0
        %4460 = vmatpush1.msra.mxu0 %v4425
        %4461 = vmatprep.subr.mxu0 0.0
        %4462 = vmatpush1.msra.mxu0 %v4426
        %4463 = vmatprep.subr.mxu0 0.0
        %4464 = vmatpush1.msra.mxu0 %v4427
        %4465 = vmatprep.subr.mxu0 0.0
        %4466 = vmatpush1.msra.mxu0 0.0
        %4467 = vmatprep.subr.mxu0 0.0
        %4468 = vmatpush1.msra.mxu0 0.0
        %4469 = vmatprep.subr.mxu0 0.0
        %4470 = vmatpush1.msra.mxu0 0.0
        %4471 = vmatprep.subr.mxu0 0.0
        %4472 = vmatpush1.msra.mxu0 0.0
        %4473 = vmatprep.subr.mxu0 0.0
        %4474 = vmatpush1.msra.mxu0 0.0
        %4475 = vmatprep.subr.mxu0 0.0
        %4476 = vmatpush1.msra.mxu0 0.0
        %4477 = vmatprep.subr.mxu0 0.0
        %4478 = vmatpush1.msra.mxu0 0.0
        %4479 = vmatprep.subr.mxu0 0.0
        %4480 = vmatpush1.msra.mxu0 0.0
        %4481 = vmatprep.subr.mxu0 0.0
        %4482 = vmatpush1.msra.mxu0 0.0
        %4483 = vmatprep.subr.mxu0 0.0
        %4484 = vmatpush1.msra.mxu0 0.0
        %4485 = vmatprep.subr.mxu0 0.0
        %4486 = vmatpush1.msra.mxu0 0.0
        %4487 = vmatprep.subr.mxu0 0.0
        %4488 = vmatpush1.msra.mxu0 0.0
        %4489 = vmatprep.subr.mxu0 0.0
        %4490 = vmatpush1.msra.mxu0 0.0
        %4491 = vmatprep.subr.mxu0 0.0
        %4492 = vmatpush1.msra.mxu0 0.0
        %4493 = vmatprep.subr.mxu0 0.0
        %4494 = vmatpush1.msra.mxu0 0.0
        %4495 = vmatprep.subr.mxu0 0.0
        %4496 = vmatpush1.msra.mxu0 0.0
        %4497 = vmatprep.mubr.f32.mxu0 0.0
        %4498 = vmatmul.mubr.f32.gmra.mrb[0].mxu0 %v4410
        %v4499 = vpop.f32.mrb[0].mxu0
        %v4500 = vadd.f32 %v4432, %v4499
        %v4501 = vpop.f32.mrb[0].mxu0
        %4502 = vdwg.mxu0
        %v4503 = vadd.f32 %v3495, %v4500
        %4504 = vadd.xlane.f32.xlu0 %v4503
        %v4505 = vpop.xlane.xlu0 %4504
        %v4506 = vmul.f32 %v4503, %v4503
        %4507 = vadd.xlane.f32.xlu0 %v4506
        %v4508 = vpop.xlane.xlu0 %4507
        %v4509 = vmul.f32 %v4505, 0.03125
        %v4510 = vmul.f32 %v4508, 0.03125
        %v4511 = vmul.f32 %v4509, %v4509
        %v4512 = vsub.f32 %v4510, %v4511
        %v4513 = vsub.f32 %v4503, %v4509
        %v4514 = vadd.f32 %v4512, 1e-05
        %v4515 = vrsqrt.pop %v4514
        %v4516 = vmul.f32 %v4513, %v4515
        %v4517 = vld [vmem:[#allocation4 + $0x25] sm:$0x1]
        %v4518 = vlaneseq
        %v4519 = vshrl.u32 %v4518, 7
        %v4520 = vsub.s32 0, %v4519
        %v4521 = vrot.slane %v4517, %v4520
        %v4522 = vmul.f32 %v4516, %v4521
        %v4523 = vld [vmem:[#allocation4 + $0x26] sm:$0x1]
        %v4524 = vlaneseq
        %v4525 = vshrl.u32 %v4524, 7
        %v4526 = vsub.s32 0, %v4525
        %v4527 = vrot.slane %v4523, %v4526
        %v4528 = vadd.f32 %v4522, %v4527
        %s4529 = scalar_lea.vmem [#allocation2], 2432
        %v4530 = vld [vmem:[%s4529] sm:$0xff]
        %v4531 = vld [vmem:[%s4529 + $0x8] sm:$0xff]
        %v4532 = vld [vmem:[%s4529 + $0x10] sm:$0xff]
        %v4533 = vld [vmem:[%s4529 + $0x18] sm:$0xff]
        %v4534 = vld [vmem:[%s4529 + $0x20] sm:$0xff]
        %v4535 = vld [vmem:[%s4529 + $0x28] sm:$0xff]
        %v4536 = vld [vmem:[%s4529 + $0x30] sm:$0xff]
        %v4537 = vld [vmem:[%s4529 + $0x38] sm:$0xff]
        %v4538 = vld [vmem:[%s4529 + $0x40] sm:$0xff]
        %v4539 = vld [vmem:[%s4529 + $0x48] sm:$0xff]
        %v4540 = vld [vmem:[%s4529 + $0x50] sm:$0xff]
        %v4541 = vld [vmem:[%s4529 + $0x58] sm:$0xff]
        %v4542 = vld [vmem:[%s4529 + $0x60] sm:$0xff]
        %v4543 = vld [vmem:[%s4529 + $0x68] sm:$0xff]
        %v4544 = vld [vmem:[%s4529 + $0x70] sm:$0xff]
        %v4545 = vld [vmem:[%s4529 + $0x78] sm:$0xff]
        %v4546 = vld [vmem:[#allocation4 + $0x1d] sm:$0x1]
        %v4547 = vlaneseq
        %v4548 = vshrl.u32 %v4547, 7
        %v4549 = vsub.s32 0, %v4548
        %v4550 = vrot.slane %v4546, %v4549
        %4551 = vmatprep.subr.mxu0 0.0
        %4552 = vmatpush1.msra.mxu0 %v4530
        %4553 = vmatprep.subr.mxu0 0.0
        %4554 = vmatpush1.msra.mxu0 %v4531
        %4555 = vmatprep.subr.mxu0 0.0
        %4556 = vmatpush1.msra.mxu0 %v4532
        %4557 = vmatprep.subr.mxu0 0.0
        %4558 = vmatpush1.msra.mxu0 %v4533
        %4559 = vmatprep.subr.mxu0 0.0
        %4560 = vmatpush1.msra.mxu0 %v4534
        %4561 = vmatprep.subr.mxu0 0.0
        %4562 = vmatpush1.msra.mxu0 %v4535
        %4563 = vmatprep.subr.mxu0 0.0
        %4564 = vmatpush1.msra.mxu0 %v4536
        %4565 = vmatprep.subr.mxu0 0.0
        %4566 = vmatpush1.msra.mxu0 %v4537
        %4567 = vmatprep.subr.mxu0 0.0
        %4568 = vmatpush1.msra.mxu0 %v4538
        %4569 = vmatprep.subr.mxu0 0.0
        %4570 = vmatpush1.msra.mxu0 %v4539
        %4571 = vmatprep.subr.mxu0 0.0
        %4572 = vmatpush1.msra.mxu0 %v4540
        %4573 = vmatprep.subr.mxu0 0.0
        %4574 = vmatpush1.msra.mxu0 %v4541
        %4575 = vmatprep.subr.mxu0 0.0
        %4576 = vmatpush1.msra.mxu0 %v4542
        %4577 = vmatprep.subr.mxu0 0.0
        %4578 = vmatpush1.msra.mxu0 %v4543
        %4579 = vmatprep.subr.mxu0 0.0
        %4580 = vmatpush1.msra.mxu0 %v4544
        %4581 = vmatprep.subr.mxu0 0.0
        %4582 = vmatpush1.msra.mxu0 %v4545
        %4583 = vmatprep.subr.mxu0 0.0
        %4584 = vmatpush1.msra.mxu0 0.0
        %4585 = vmatprep.subr.mxu0 0.0
        %4586 = vmatpush1.msra.mxu0 0.0
        %4587 = vmatprep.subr.mxu0 0.0
        %4588 = vmatpush1.msra.mxu0 0.0
        %4589 = vmatprep.subr.mxu0 0.0
        %4590 = vmatpush1.msra.mxu0 0.0
        %4591 = vmatprep.subr.mxu0 0.0
        %4592 = vmatpush1.msra.mxu0 0.0
        %4593 = vmatprep.subr.mxu0 0.0
        %4594 = vmatpush1.msra.mxu0 0.0
        %4595 = vmatprep.subr.mxu0 0.0
        %4596 = vmatpush1.msra.mxu0 0.0
        %4597 = vmatprep.subr.mxu0 0.0
        %4598 = vmatpush1.msra.mxu0 0.0
        %4599 = vmatprep.subr.mxu0 0.0
        %4600 = vmatpush1.msra.mxu0 0.0
        %4601 = vmatprep.subr.mxu0 0.0
        %4602 = vmatpush1.msra.mxu0 0.0
        %4603 = vmatprep.subr.mxu0 0.0
        %4604 = vmatpush1.msra.mxu0 0.0
        %4605 = vmatprep.subr.mxu0 0.0
        %4606 = vmatpush1.msra.mxu0 0.0
        %4607 = vmatprep.subr.mxu0 0.0
        %4608 = vmatpush1.msra.mxu0 0.0
        %4609 = vmatprep.subr.mxu0 0.0
        %4610 = vmatpush1.msra.mxu0 0.0
        %4611 = vmatprep.subr.mxu0 0.0
        %4612 = vmatpush1.msra.mxu0 0.0
        %4613 = vmatprep.subr.mxu0 0.0
        %4614 = vmatpush1.msra.mxu0 0.0
        %4615 = vmatprep.mubr.f32.mxu0 0.0
        %4616 = vmatmul.mubr.f32.gmra.mrb[0].mxu0 %v4528
        %v4617 = vpop.f32.mrb[0].mxu0
        %v4618 = vadd.f32 %v4550, %v4617
        %v4619 = vpop.f32.mrb[0].mxu0
        %4620 = vdwg.mxu0
        %s4621 = scalar_lea.vmem [#allocation2], 2560
        %v4622 = vld [vmem:[%s4621] sm:$0xff]
        %v4623 = vld [vmem:[%s4621 + $0x8] sm:$0xff]
        %v4624 = vld [vmem:[%s4621 + $0x10] sm:$0xff]
        %v4625 = vld [vmem:[%s4621 + $0x18] sm:$0xff]
        %v4626 = vld [vmem:[%s4621 + $0x20] sm:$0xff]
        %v4627 = vld [vmem:[%s4621 + $0x28] sm:$0xff]
        %v4628 = vld [vmem:[%s4621 + $0x30] sm:$0xff]
        %v4629 = vld [vmem:[%s4621 + $0x38] sm:$0xff]
        %v4630 = vld [vmem:[%s4621 + $0x40] sm:$0xff]
        %v4631 = vld [vmem:[%s4621 + $0x48] sm:$0xff]
        %v4632 = vld [vmem:[%s4621 + $0x50] sm:$0xff]
        %v4633 = vld [vmem:[%s4621 + $0x58] sm:$0xff]
        %v4634 = vld [vmem:[%s4621 + $0x60] sm:$0xff]
        %v4635 = vld [vmem:[%s4621 + $0x68] sm:$0xff]
        %v4636 = vld [vmem:[%s4621 + $0x70] sm:$0xff]
        %v4637 = vld [vmem:[%s4621 + $0x78] sm:$0xff]
        %v4638 = vld [vmem:[#allocation4 + $0x1e] sm:$0x1]
        %v4639 = vlaneseq
        %v4640 = vshrl.u32 %v4639, 7
        %v4641 = vsub.s32 0, %v4640
        %v4642 = vrot.slane %v4638, %v4641
        %4643 = vmatprep.subr.mxu0 0.0
        %4644 = vmatpush1.msra.mxu0 %v4622
        %4645 = vmatprep.subr.mxu0 0.0
        %4646 = vmatpush1.msra.mxu0 %v4623
        %4647 = vmatprep.subr.mxu0 0.0
        %4648 = vmatpush1.msra.mxu0 %v4624
        %4649 = vmatprep.subr.mxu0 0.0
        %4650 = vmatpush1.msra.mxu0 %v4625
        %4651 = vmatprep.subr.mxu0 0.0
        %4652 = vmatpush1.msra.mxu0 %v4626
        %4653 = vmatprep.subr.mxu0 0.0
        %4654 = vmatpush1.msra.mxu0 %v4627
        %4655 = vmatprep.subr.mxu0 0.0
        %4656 = vmatpush1.msra.mxu0 %v4628
        %4657 = vmatprep.subr.mxu0 0.0
        %4658 = vmatpush1.msra.mxu0 %v4629
        %4659 = vmatprep.subr.mxu0 0.0
        %4660 = vmatpush1.msra.mxu0 %v4630
        %4661 = vmatprep.subr.mxu0 0.0
        %4662 = vmatpush1.msra.mxu0 %v4631
        %4663 = vmatprep.subr.mxu0 0.0
        %4664 = vmatpush1.msra.mxu0 %v4632
        %4665 = vmatprep.subr.mxu0 0.0
        %4666 = vmatpush1.msra.mxu0 %v4633
        %4667 = vmatprep.subr.mxu0 0.0
        %4668 = vmatpush1.msra.mxu0 %v4634
        %4669 = vmatprep.subr.mxu0 0.0
        %4670 = vmatpush1.msra.mxu0 %v4635
        %4671 = vmatprep.subr.mxu0 0.0
        %4672 = vmatpush1.msra.mxu0 %v4636
        %4673 = vmatprep.subr.mxu0 0.0
        %4674 = vmatpush1.msra.mxu0 %v4637
        %4675 = vmatprep.subr.mxu0 0.0
        %4676 = vmatpush1.msra.mxu0 0.0
        %4677 = vmatprep.subr.mxu0 0.0
        %4678 = vmatpush1.msra.mxu0 0.0
        %4679 = vmatprep.subr.mxu0 0.0
        %4680 = vmatpush1.msra.mxu0 0.0
        %4681 = vmatprep.subr.mxu0 0.0
        %4682 = vmatpush1.msra.mxu0 0.0
        %4683 = vmatprep.subr.mxu0 0.0
        %4684 = vmatpush1.msra.mxu0 0.0
        %4685 = vmatprep.subr.mxu0 0.0
        %4686 = vmatpush1.msra.mxu0 0.0
        %4687 = vmatprep.subr.mxu0 0.0
        %4688 = vmatpush1.msra.mxu0 0.0
        %4689 = vmatprep.subr.mxu0 0.0
        %4690 = vmatpush1.msra.mxu0 0.0
        %4691 = vmatprep.subr.mxu0 0.0
        %4692 = vmatpush1.msra.mxu0 0.0
        %4693 = vmatprep.subr.mxu0 0.0
        %4694 = vmatpush1.msra.mxu0 0.0
        %4695 = vmatprep.subr.mxu0 0.0
        %4696 = vmatpush1.msra.mxu0 0.0
        %4697 = vmatprep.subr.mxu0 0.0
        %4698 = vmatpush1.msra.mxu0 0.0
        %4699 = vmatprep.subr.mxu0 0.0
        %4700 = vmatpush1.msra.mxu0 0.0
        %4701 = vmatprep.subr.mxu0 0.0
        %4702 = vmatpush1.msra.mxu0 0.0
        %4703 = vmatprep.subr.mxu0 0.0
        %4704 = vmatpush1.msra.mxu0 0.0
        %4705 = vmatprep.subr.mxu0 0.0
        %4706 = vmatpush1.msra.mxu0 0.0
        %4707 = vmatprep.mubr.f32.mxu0 0.0
        %4708 = vmatmul.mubr.f32.gmra.mrb[0].mxu0 %v3401
        %v4709 = vpop.f32.mrb[0].mxu0
        %v4710 = vadd.f32 %v4642, %v4709
        %v4711 = vpop.f32.mrb[0].mxu0
        %4712 = vmatprep.mubr.f32.mxu0 0.0
        %4713 = vmatmul.mubr.f32.gmra.mrb[0].mxu0 %v3402
        %v4714 = vpop.f32.mrb[0].mxu0
        %v4715 = vadd.f32 %v4642, %v4714
        %v4716 = vpop.f32.mrb[0].mxu0
        %4717 = vdwg.mxu0
        %s4718 = scalar_lea.vmem [#allocation2], 2688
        %v4719 = vld [vmem:[%s4718] sm:$0xff]
        %v4720 = vld [vmem:[%s4718 + $0x8] sm:$0xff]
        %v4721 = vld [vmem:[%s4718 + $0x10] sm:$0xff]
        %v4722 = vld [vmem:[%s4718 + $0x18] sm:$0xff]
        %v4723 = vld [vmem:[%s4718 + $0x20] sm:$0xff]
        %v4724 = vld [vmem:[%s4718 + $0x28] sm:$0xff]
        %v4725 = vld [vmem:[%s4718 + $0x30] sm:$0xff]
        %v4726 = vld [vmem:[%s4718 + $0x38] sm:$0xff]
        %v4727 = vld [vmem:[%s4718 + $0x40] sm:$0xff]
        %v4728 = vld [vmem:[%s4718 + $0x48] sm:$0xff]
        %v4729 = vld [vmem:[%s4718 + $0x50] sm:$0xff]
        %v4730 = vld [vmem:[%s4718 + $0x58] sm:$0xff]
        %v4731 = vld [vmem:[%s4718 + $0x60] sm:$0xff]
        %v4732 = vld [vmem:[%s4718 + $0x68] sm:$0xff]
        %v4733 = vld [vmem:[%s4718 + $0x70] sm:$0xff]
        %v4734 = vld [vmem:[%s4718 + $0x78] sm:$0xff]
        %v4735 = vld [vmem:[#allocation4 + $0x1f] sm:$0x1]
        %v4736 = vlaneseq
        %v4737 = vshrl.u32 %v4736, 7
        %v4738 = vsub.s32 0, %v4737
        %v4739 = vrot.slane %v4735, %v4738
        %4740 = vmatprep.subr.mxu0 0.0
        %4741 = vmatpush1.msra.mxu0 %v4719
        %4742 = vmatprep.subr.mxu0 0.0
        %4743 = vmatpush1.msra.mxu0 %v4720
        %4744 = vmatprep.subr.mxu0 0.0
        %4745 = vmatpush1.msra.mxu0 %v4721
        %4746 = vmatprep.subr.mxu0 0.0
        %4747 = vmatpush1.msra.mxu0 %v4722
        %4748 = vmatprep.subr.mxu0 0.0
        %4749 = vmatpush1.msra.mxu0 %v4723
        %4750 = vmatprep.subr.mxu0 0.0
        %4751 = vmatpush1.msra.mxu0 %v4724
        %4752 = vmatprep.subr.mxu0 0.0
        %4753 = vmatpush1.msra.mxu0 %v4725
        %4754 = vmatprep.subr.mxu0 0.0
        %4755 = vmatpush1.msra.mxu0 %v4726
        %4756 = vmatprep.subr.mxu0 0.0
        %4757 = vmatpush1.msra.mxu0 %v4727
        %4758 = vmatprep.subr.mxu0 0.0
        %4759 = vmatpush1.msra.mxu0 %v4728
        %4760 = vmatprep.subr.mxu0 0.0
        %4761 = vmatpush1.msra.mxu0 %v4729
        %4762 = vmatprep.subr.mxu0 0.0
        %4763 = vmatpush1.msra.mxu0 %v4730
        %4764 = vmatprep.subr.mxu0 0.0
        %4765 = vmatpush1.msra.mxu0 %v4731
        %4766 = vmatprep.subr.mxu0 0.0
        %4767 = vmatpush1.msra.mxu0 %v4732
        %4768 = vmatprep.subr.mxu0 0.0
        %4769 = vmatpush1.msra.mxu0 %v4733
        %4770 = vmatprep.subr.mxu0 0.0
        %4771 = vmatpush1.msra.mxu0 %v4734
        %4772 = vmatprep.subr.mxu0 0.0
        %4773 = vmatpush1.msra.mxu0 0.0
        %4774 = vmatprep.subr.mxu0 0.0
        %4775 = vmatpush1.msra.mxu0 0.0
        %4776 = vmatprep.subr.mxu0 0.0
        %4777 = vmatpush1.msra.mxu0 0.0
        %4778 = vmatprep.subr.mxu0 0.0
        %4779 = vmatpush1.msra.mxu0 0.0
        %4780 = vmatprep.subr.mxu0 0.0
        %4781 = vmatpush1.msra.mxu0 0.0
        %4782 = vmatprep.subr.mxu0 0.0
        %4783 = vmatpush1.msra.mxu0 0.0
        %4784 = vmatprep.subr.mxu0 0.0
        %4785 = vmatpush1.msra.mxu0 0.0
        %4786 = vmatprep.subr.mxu0 0.0
        %4787 = vmatpush1.msra.mxu0 0.0
        %4788 = vmatprep.subr.mxu0 0.0
        %4789 = vmatpush1.msra.mxu0 0.0
        %4790 = vmatprep.subr.mxu0 0.0
        %4791 = vmatpush1.msra.mxu0 0.0
        %4792 = vmatprep.subr.mxu0 0.0
        %4793 = vmatpush1.msra.mxu0 0.0
        %4794 = vmatprep.subr.mxu0 0.0
        %4795 = vmatpush1.msra.mxu0 0.0
        %4796 = vmatprep.subr.mxu0 0.0
        %4797 = vmatpush1.msra.mxu0 0.0
        %4798 = vmatprep.subr.mxu0 0.0
        %4799 = vmatpush1.msra.mxu0 0.0
        %4800 = vmatprep.subr.mxu0 0.0
        %4801 = vmatpush1.msra.mxu0 0.0
        %4802 = vmatprep.subr.mxu0 0.0
        %4803 = vmatpush1.msra.mxu0 0.0
        %4804 = vmatprep.mubr.f32.mxu0 0.0
        %4805 = vmatmul.mubr.f32.gmra.mrb[0].mxu0 %v3401
        %v4806 = vpop.f32.mrb[0].mxu0
        %v4807 = vadd.f32 %v4739, %v4806
        %v4808 = vpop.f32.mrb[0].mxu0
        %4809 = vmatprep.mubr.f32.mxu0 0.0
        %4810 = vmatmul.mubr.f32.gmra.mrb[0].mxu0 %v3402
        %v4811 = vpop.f32.mrb[0].mxu0
        %v4812 = vadd.f32 %v4739, %v4811
        %v4813 = vpop.f32.mrb[0].mxu0
        %4814 = vdwg.mxu0
        %v4815 = vmul.f32 %v4710, %v899
        %v4816 = vmul.f32 %v4715, %v899
        %v4817 = vmul.f32 %v4710, %v903
        %v4818 = vmul.f32 %v4715, %v903
        %v4819 = vmul.f32 %v4710, %v907
        %v4820 = vmul.f32 %v4715, %v907
        %v4821 = vmul.f32 %v4710, %v911
        %v4822 = vmul.f32 %v4715, %v911
        %v4823 = vmul.f32 %v4807, %v899
        %v4824 = vmul.f32 %v4812, %v899
        %v4825 = vmul.f32 %v4807, %v903
        %v4826 = vmul.f32 %v4812, %v903
        %v4827 = vmul.f32 %v4807, %v907
        %v4828 = vmul.f32 %v4812, %v907
        %v4829 = vmul.f32 %v4807, %v911
        %v4830 = vmul.f32 %v4812, %v911
        %v4832 = vlaneseq
        %v4833 = vshrl.u32 %v4832, 7
        %v4834 = vsub.s32 0, %v4833
        %v4835 = vrot.slane %v454, %v4834
        %4837 = vmatprep.subr.mxu0 0.0
        %4838 = vmatpush1.xpose.msra.mxu0 %v4815
        %4839 = vmatprep.subr.mxu0 0.0
        %4840 = vmatpush1.xpose.msra.mxu0 %v4816
        %4841 = vmatprep.subr.mxu0 0.0
        %4842 = vmatpush1.xpose.msra.mxu0 0.0
        %4843 = vmatprep.subr.mxu0 0.0
        %4844 = vmatpush1.xpose.msra.mxu0 0.0
        %4845 = vmatprep.subr.mxu0 0.0
        %4846 = vmatpush1.xpose.msra.mxu0 0.0
        %4847 = vmatprep.subr.mxu0 0.0
        %4848 = vmatpush1.xpose.msra.mxu0 0.0
        %4849 = vmatprep.subr.mxu0 0.0
        %4850 = vmatpush1.xpose.msra.mxu0 0.0
        %4851 = vmatprep.subr.mxu0 0.0
        %4852 = vmatpush1.xpose.msra.mxu0 0.0
        %4853 = vmatprep.subr.mxu0 0.0
        %4854 = vmatpush1.xpose.msra.mxu0 0.0
        %4855 = vmatprep.subr.mxu0 0.0
        %4856 = vmatpush1.xpose.msra.mxu0 0.0
        %4857 = vmatprep.subr.mxu0 0.0
        %4858 = vmatpush1.xpose.msra.mxu0 0.0
        %4859 = vmatprep.subr.mxu0 0.0
        %4860 = vmatpush1.xpose.msra.mxu0 0.0
        %4861 = vmatprep.subr.mxu0 0.0
        %4862 = vmatpush1.xpose.msra.mxu0 0.0
        %4863 = vmatprep.subr.mxu0 0.0
        %4864 = vmatpush1.xpose.msra.mxu0 0.0
        %4865 = vmatprep.subr.mxu0 0.0
        %4866 = vmatpush1.xpose.msra.mxu0 0.0
        %4867 = vmatprep.subr.mxu0 0.0
        %4868 = vmatpush1.xpose.msra.mxu0 0.0
        %4869 = vmatprep.subr.mxu0 0.0
        %4870 = vmatpush1.xpose.msra.mxu0 0.0
        %4871 = vmatprep.subr.mxu0 0.0
        %4872 = vmatpush1.xpose.msra.mxu0 0.0
        %4873 = vmatprep.subr.mxu0 0.0
        %4874 = vmatpush1.xpose.msra.mxu0 0.0
        %4875 = vmatprep.subr.mxu0 0.0
        %4876 = vmatpush1.xpose.msra.mxu0 0.0
        %4877 = vmatprep.subr.mxu0 0.0
        %4878 = vmatpush1.xpose.msra.mxu0 0.0
        %4879 = vmatprep.subr.mxu0 0.0
        %4880 = vmatpush1.xpose.msra.mxu0 0.0
        %4881 = vmatprep.subr.mxu0 0.0
        %4882 = vmatpush1.xpose.msra.mxu0 0.0
        %4883 = vmatprep.subr.mxu0 0.0
        %4884 = vmatpush1.xpose.msra.mxu0 0.0
        %4885 = vmatprep.subr.mxu0 0.0
        %4886 = vmatpush1.xpose.msra.mxu0 0.0
        %4887 = vmatprep.subr.mxu0 0.0
        %4888 = vmatpush1.xpose.msra.mxu0 0.0
        %4889 = vmatprep.subr.mxu0 0.0
        %4890 = vmatpush1.xpose.msra.mxu0 0.0
        %4891 = vmatprep.subr.mxu0 0.0
        %4892 = vmatpush1.xpose.msra.mxu0 0.0
        %4893 = vmatprep.subr.mxu0 0.0
        %4894 = vmatpush1.xpose.msra.mxu0 0.0
        %4895 = vmatprep.subr.mxu0 0.0
        %4896 = vmatpush1.xpose.msra.mxu0 0.0
        %4897 = vmatprep.subr.mxu0 0.0
        %4898 = vmatpush1.xpose.msra.mxu0 0.0
        %4899 = vmatprep.subr.mxu0 0.0
        %4900 = vmatpush1.xpose.msra.mxu0 0.0
        %4901 = vmatprep.mubr.f32.mxu0 0.0
        %4902 = vmatmul.mubr.f32.gmra.mrb[0].mxu0 %v4618
        %v4903 = vpop.f32.mrb[0].mxu0
        %v4904 = vadd.f32 %v4835, %v4903
        %v4905 = vpop.f32.mrb[0].mxu0
        %4906 = vdwg.mxu0
        %4907 = vmatprep.subr.mxu0 0.0
        %4908 = vmatpush1.xpose.msra.mxu0 %v4817
        %4909 = vmatprep.subr.mxu0 0.0
        %4910 = vmatpush1.xpose.msra.mxu0 %v4818
        %4911 = vmatprep.subr.mxu0 0.0
        %4912 = vmatpush1.xpose.msra.mxu0 0.0
        %4913 = vmatprep.subr.mxu0 0.0
        %4914 = vmatpush1.xpose.msra.mxu0 0.0
        %4915 = vmatprep.subr.mxu0 0.0
        %4916 = vmatpush1.xpose.msra.mxu0 0.0
        %4917 = vmatprep.subr.mxu0 0.0
        %4918 = vmatpush1.xpose.msra.mxu0 0.0
        %4919 = vmatprep.subr.mxu0 0.0
        %4920 = vmatpush1.xpose.msra.mxu0 0.0
        %4921 = vmatprep.subr.mxu0 0.0
        %4922 = vmatpush1.xpose.msra.mxu0 0.0
        %4923 = vmatprep.subr.mxu0 0.0
        %4924 = vmatpush1.xpose.msra.mxu0 0.0
        %4925 = vmatprep.subr.mxu0 0.0
        %4926 = vmatpush1.xpose.msra.mxu0 0.0
        %4927 = vmatprep.subr.mxu0 0.0
        %4928 = vmatpush1.xpose.msra.mxu0 0.0
        %4929 = vmatprep.subr.mxu0 0.0
        %4930 = vmatpush1.xpose.msra.mxu0 0.0
        %4931 = vmatprep.subr.mxu0 0.0
        %4932 = vmatpush1.xpose.msra.mxu0 0.0
        %4933 = vmatprep.subr.mxu0 0.0
        %4934 = vmatpush1.xpose.msra.mxu0 0.0
        %4935 = vmatprep.subr.mxu0 0.0
        %4936 = vmatpush1.xpose.msra.mxu0 0.0
        %4937 = vmatprep.subr.mxu0 0.0
        %4938 = vmatpush1.xpose.msra.mxu0 0.0
        %4939 = vmatprep.subr.mxu0 0.0
        %4940 = vmatpush1.xpose.msra.mxu0 0.0
        %4941 = vmatprep.subr.mxu0 0.0
        %4942 = vmatpush1.xpose.msra.mxu0 0.0
        %4943 = vmatprep.subr.mxu0 0.0
        %4944 = vmatpush1.xpose.msra.mxu0 0.0
        %4945 = vmatprep.subr.mxu0 0.0
        %4946 = vmatpush1.xpose.msra.mxu0 0.0
        %4947 = vmatprep.subr.mxu0 0.0
        %4948 = vmatpush1.xpose.msra.mxu0 0.0
        %4949 = vmatprep.subr.mxu0 0.0
        %4950 = vmatpush1.xpose.msra.mxu0 0.0
        %4951 = vmatprep.subr.mxu0 0.0
        %4952 = vmatpush1.xpose.msra.mxu0 0.0
        %4953 = vmatprep.subr.mxu0 0.0
        %4954 = vmatpush1.xpose.msra.mxu0 0.0
        %4955 = vmatprep.subr.mxu0 0.0
        %4956 = vmatpush1.xpose.msra.mxu0 0.0
        %4957 = vmatprep.subr.mxu0 0.0
        %4958 = vmatpush1.xpose.msra.mxu0 0.0
        %4959 = vmatprep.subr.mxu0 0.0
        %4960 = vmatpush1.xpose.msra.mxu0 0.0
        %4961 = vmatprep.subr.mxu0 0.0
        %4962 = vmatpush1.xpose.msra.mxu0 0.0
        %4963 = vmatprep.subr.mxu0 0.0
        %4964 = vmatpush1.xpose.msra.mxu0 0.0
        %4965 = vmatprep.subr.mxu0 0.0
        %4966 = vmatpush1.xpose.msra.mxu0 0.0
        %4967 = vmatprep.subr.mxu0 0.0
        %4968 = vmatpush1.xpose.msra.mxu0 0.0
        %4969 = vmatprep.subr.mxu0 0.0
        %4970 = vmatpush1.xpose.msra.mxu0 0.0
        %4971 = vmatprep.mubr.f32.mxu0 0.0
        %4972 = vmatmul.mubr.f32.gmra.mrb[0].mxu0 %v4618
        %v4973 = vpop.f32.mrb[0].mxu0
        %v4974 = vadd.f32 %v4835, %v4973
        %v4975 = vpop.f32.mrb[0].mxu0
        %4976 = vdwg.mxu0
        %4977 = vmatprep.subr.mxu0 0.0
        %4978 = vmatpush1.xpose.msra.mxu0 %v4819
        %4979 = vmatprep.subr.mxu0 0.0
        %4980 = vmatpush1.xpose.msra.mxu0 %v4820
        %4981 = vmatprep.subr.mxu0 0.0
        %4982 = vmatpush1.xpose.msra.mxu0 0.0
        %4983 = vmatprep.subr.mxu0 0.0
        %4984 = vmatpush1.xpose.msra.mxu0 0.0
        %4985 = vmatprep.subr.mxu0 0.0
        %4986 = vmatpush1.xpose.msra.mxu0 0.0
        %4987 = vmatprep.subr.mxu0 0.0
        %4988 = vmatpush1.xpose.msra.mxu0 0.0
        %4989 = vmatprep.subr.mxu0 0.0
        %4990 = vmatpush1.xpose.msra.mxu0 0.0
        %4991 = vmatprep.subr.mxu0 0.0
        %4992 = vmatpush1.xpose.msra.mxu0 0.0
        %4993 = vmatprep.subr.mxu0 0.0
        %4994 = vmatpush1.xpose.msra.mxu0 0.0
        %4995 = vmatprep.subr.mxu0 0.0
        %4996 = vmatpush1.xpose.msra.mxu0 0.0
        %4997 = vmatprep.subr.mxu0 0.0
        %4998 = vmatpush1.xpose.msra.mxu0 0.0
        %4999 = vmatprep.subr.mxu0 0.0
        %5000 = vmatpush1.xpose.msra.mxu0 0.0
        %5001 = vmatprep.subr.mxu0 0.0
        %5002 = vmatpush1.xpose.msra.mxu0 0.0
        %5003 = vmatprep.subr.mxu0 0.0
        %5004 = vmatpush1.xpose.msra.mxu0 0.0
        %5005 = vmatprep.subr.mxu0 0.0
        %5006 = vmatpush1.xpose.msra.mxu0 0.0
        %5007 = vmatprep.subr.mxu0 0.0
        %5008 = vmatpush1.xpose.msra.mxu0 0.0
        %5009 = vmatprep.subr.mxu0 0.0
        %5010 = vmatpush1.xpose.msra.mxu0 0.0
        %5011 = vmatprep.subr.mxu0 0.0
        %5012 = vmatpush1.xpose.msra.mxu0 0.0
        %5013 = vmatprep.subr.mxu0 0.0
        %5014 = vmatpush1.xpose.msra.mxu0 0.0
        %5015 = vmatprep.subr.mxu0 0.0
        %5016 = vmatpush1.xpose.msra.mxu0 0.0
        %5017 = vmatprep.subr.mxu0 0.0
        %5018 = vmatpush1.xpose.msra.mxu0 0.0
        %5019 = vmatprep.subr.mxu0 0.0
        %5020 = vmatpush1.xpose.msra.mxu0 0.0
        %5021 = vmatprep.subr.mxu0 0.0
        %5022 = vmatpush1.xpose.msra.mxu0 0.0
        %5023 = vmatprep.subr.mxu0 0.0
        %5024 = vmatpush1.xpose.msra.mxu0 0.0
        %5025 = vmatprep.subr.mxu0 0.0
        %5026 = vmatpush1.xpose.msra.mxu0 0.0
        %5027 = vmatprep.subr.mxu0 0.0
        %5028 = vmatpush1.xpose.msra.mxu0 0.0
        %5029 = vmatprep.subr.mxu0 0.0
        %5030 = vmatpush1.xpose.msra.mxu0 0.0
        %5031 = vmatprep.subr.mxu0 0.0
        %5032 = vmatpush1.xpose.msra.mxu0 0.0
        %5033 = vmatprep.subr.mxu0 0.0
        %5034 = vmatpush1.xpose.msra.mxu0 0.0
        %5035 = vmatprep.subr.mxu0 0.0
        %5036 = vmatpush1.xpose.msra.mxu0 0.0
        %5037 = vmatprep.subr.mxu0 0.0
        %5038 = vmatpush1.xpose.msra.mxu0 0.0
        %5039 = vmatprep.subr.mxu0 0.0
        %5040 = vmatpush1.xpose.msra.mxu0 0.0
        %5041 = vmatprep.mubr.f32.mxu0 0.0
        %5042 = vmatmul.mubr.f32.gmra.mrb[0].mxu0 %v4618
        %v5043 = vpop.f32.mrb[0].mxu0
        %v5044 = vadd.f32 %v4835, %v5043
        %v5045 = vpop.f32.mrb[0].mxu0
        %5046 = vdwg.mxu0
        %5047 = vmatprep.subr.mxu0 0.0
        %5048 = vmatpush1.xpose.msra.mxu0 %v4821
        %5049 = vmatprep.subr.mxu0 0.0
        %5050 = vmatpush1.xpose.msra.mxu0 %v4822
        %5051 = vmatprep.subr.mxu0 0.0
        %5052 = vmatpush1.xpose.msra.mxu0 0.0
        %5053 = vmatprep.subr.mxu0 0.0
        %5054 = vmatpush1.xpose.msra.mxu0 0.0
        %5055 = vmatprep.subr.mxu0 0.0
        %5056 = vmatpush1.xpose.msra.mxu0 0.0
        %5057 = vmatprep.subr.mxu0 0.0
        %5058 = vmatpush1.xpose.msra.mxu0 0.0
        %5059 = vmatprep.subr.mxu0 0.0
        %5060 = vmatpush1.xpose.msra.mxu0 0.0
        %5061 = vmatprep.subr.mxu0 0.0
        %5062 = vmatpush1.xpose.msra.mxu0 0.0
        %5063 = vmatprep.subr.mxu0 0.0
        %5064 = vmatpush1.xpose.msra.mxu0 0.0
        %5065 = vmatprep.subr.mxu0 0.0
        %5066 = vmatpush1.xpose.msra.mxu0 0.0
        %5067 = vmatprep.subr.mxu0 0.0
        %5068 = vmatpush1.xpose.msra.mxu0 0.0
        %5069 = vmatprep.subr.mxu0 0.0
        %5070 = vmatpush1.xpose.msra.mxu0 0.0
        %5071 = vmatprep.subr.mxu0 0.0
        %5072 = vmatpush1.xpose.msra.mxu0 0.0
        %5073 = vmatprep.subr.mxu0 0.0
        %5074 = vmatpush1.xpose.msra.mxu0 0.0
        %5075 = vmatprep.subr.mxu0 0.0
        %5076 = vmatpush1.xpose.msra.mxu0 0.0
        %5077 = vmatprep.subr.mxu0 0.0
        %5078 = vmatpush1.xpose.msra.mxu0 0.0
        %5079 = vmatprep.subr.mxu0 0.0
        %5080 = vmatpush1.xpose.msra.mxu0 0.0
        %5081 = vmatprep.subr.mxu0 0.0
        %5082 = vmatpush1.xpose.msra.mxu0 0.0
        %5083 = vmatprep.subr.mxu0 0.0
        %5084 = vmatpush1.xpose.msra.mxu0 0.0
        %5085 = vmatprep.subr.mxu0 0.0
        %5086 = vmatpush1.xpose.msra.mxu0 0.0
        %5087 = vmatprep.subr.mxu0 0.0
        %5088 = vmatpush1.xpose.msra.mxu0 0.0
        %5089 = vmatprep.subr.mxu0 0.0
        %5090 = vmatpush1.xpose.msra.mxu0 0.0
        %5091 = vmatprep.subr.mxu0 0.0
        %5092 = vmatpush1.xpose.msra.mxu0 0.0
        %5093 = vmatprep.subr.mxu0 0.0
        %5094 = vmatpush1.xpose.msra.mxu0 0.0
        %5095 = vmatprep.subr.mxu0 0.0
        %5096 = vmatpush1.xpose.msra.mxu0 0.0
        %5097 = vmatprep.subr.mxu0 0.0
        %5098 = vmatpush1.xpose.msra.mxu0 0.0
        %5099 = vmatprep.subr.mxu0 0.0
        %5100 = vmatpush1.xpose.msra.mxu0 0.0
        %5101 = vmatprep.subr.mxu0 0.0
        %5102 = vmatpush1.xpose.msra.mxu0 0.0
        %5103 = vmatprep.subr.mxu0 0.0
        %5104 = vmatpush1.xpose.msra.mxu0 0.0
        %5105 = vmatprep.subr.mxu0 0.0
        %5106 = vmatpush1.xpose.msra.mxu0 0.0
        %5107 = vmatprep.subr.mxu0 0.0
        %5108 = vmatpush1.xpose.msra.mxu0 0.0
        %5109 = vmatprep.subr.mxu0 0.0
        %5110 = vmatpush1.xpose.msra.mxu0 0.0
        %5111 = vmatprep.mubr.f32.mxu0 0.0
        %5112 = vmatmul.mubr.f32.gmra.mrb[0].mxu0 %v4618
        %v5113 = vpop.f32.mrb[0].mxu0
        %v5114 = vadd.f32 %v4835, %v5113
        %v5115 = vpop.f32.mrb[0].mxu0
        %5116 = vdwg.mxu0
        %v5117 = vmul.f32 %v4904, 1.442695
        %v5118 = vpow.pop %v5117
        %v5119 = vmul.f32 %v4974, 1.442695
        %v5120 = vpow.pop %v5119
        %v5121 = vmul.f32 %v5044, 1.442695
        %v5122 = vpow.pop %v5121
        %v5123 = vmul.f32 %v5114, 1.442695
        %v5124 = vpow.pop %v5123
        %v5125 = vsel %vm1244, %v5118, 0.0
        %5126 = vadd.xlane.f32.xlu0 %v5125
        %v5127 = vpop.xlane.xlu0 %5126
        %v5128 = vsel %vm1244, %v5120, 0.0
        %5129 = vadd.xlane.f32.xlu0 %v5128
        %v5130 = vpop.xlane.xlu0 %5129
        %v5131 = vsel %vm1244, %v5122, 0.0
        %5132 = vadd.xlane.f32.xlu0 %v5131
        %v5133 = vpop.xlane.xlu0 %5132
        %v5134 = vsel %vm1244, %v5124, 0.0
        %5135 = vadd.xlane.f32.xlu0 %v5134
        %v5136 = vpop.xlane.xlu0 %5135
        %v5137 = vrcp.pop %v5127
        %v5138 = vrcp.pop %v5130
        %v5139 = vrcp.pop %v5133
        %v5140 = vrcp.pop %v5136
        %v5141 = vmul.f32 %v5118, %v5137
        %v5142 = vmul.f32 %v5120, %v5138
        %v5143 = vmul.f32 %v5122, %v5139
        %v5144 = vmul.f32 %v5124, %v5140
        %v5146 = vsel %vm1244, %v5141, 0
        %v5149 = vsel %vm564, %v4824, 0
        %5151 = vmatprep.subr.mxu0 0.0
        %5152 = vmatpush1.msra.mxu0 %v4823
        %5153 = vmatprep.subr.mxu0 0.0
        %5154 = vmatpush1.msra.mxu0 %v5149
        %5155 = vmatprep.subr.mxu0 0.0
        %5156 = vmatpush1.msra.mxu0 0.0
        %5157 = vmatprep.subr.mxu0 0.0
        %5158 = vmatpush1.msra.mxu0 0.0
        %5159 = vmatprep.subr.mxu0 0.0
        %5160 = vmatpush1.msra.mxu0 0.0
        %5161 = vmatprep.subr.mxu0 0.0
        %5162 = vmatpush1.msra.mxu0 0.0
        %5163 = vmatprep.subr.mxu0 0.0
        %5164 = vmatpush1.msra.mxu0 0.0
        %5165 = vmatprep.subr.mxu0 0.0
        %5166 = vmatpush1.msra.mxu0 0.0
        %5167 = vmatprep.subr.mxu0 0.0
        %5168 = vmatpush1.msra.mxu0 0.0
        %5169 = vmatprep.subr.mxu0 0.0
        %5170 = vmatpush1.msra.mxu0 0.0
        %5171 = vmatprep.subr.mxu0 0.0
        %5172 = vmatpush1.msra.mxu0 0.0
        %5173 = vmatprep.subr.mxu0 0.0
        %5174 = vmatpush1.msra.mxu0 0.0
        %5175 = vmatprep.subr.mxu0 0.0
        %5176 = vmatpush1.msra.mxu0 0.0
        %5177 = vmatprep.subr.mxu0 0.0
        %5178 = vmatpush1.msra.mxu0 0.0
        %5179 = vmatprep.subr.mxu0 0.0
        %5180 = vmatpush1.msra.mxu0 0.0
        %5181 = vmatprep.subr.mxu0 0.0
        %5182 = vmatpush1.msra.mxu0 0.0
        %5183 = vmatprep.subr.mxu0 0.0
        %5184 = vmatpush1.msra.mxu0 0.0
        %5185 = vmatprep.subr.mxu0 0.0
        %5186 = vmatpush1.msra.mxu0 0.0
        %5187 = vmatprep.subr.mxu0 0.0
        %5188 = vmatpush1.msra.mxu0 0.0
        %5189 = vmatprep.subr.mxu0 0.0
        %5190 = vmatpush1.msra.mxu0 0.0
        %5191 = vmatprep.subr.mxu0 0.0
        %5192 = vmatpush1.msra.mxu0 0.0
        %5193 = vmatprep.subr.mxu0 0.0
        %5194 = vmatpush1.msra.mxu0 0.0
        %5195 = vmatprep.subr.mxu0 0.0
        %5196 = vmatpush1.msra.mxu0 0.0
        %5197 = vmatprep.subr.mxu0 0.0
        %5198 = vmatpush1.msra.mxu0 0.0
        %5199 = vmatprep.subr.mxu0 0.0
        %5200 = vmatpush1.msra.mxu0 0.0
        %5201 = vmatprep.subr.mxu0 0.0
        %5202 = vmatpush1.msra.mxu0 0.0
        %5203 = vmatprep.subr.mxu0 0.0
        %5204 = vmatpush1.msra.mxu0 0.0
        %5205 = vmatprep.subr.mxu0 0.0
        %5206 = vmatpush1.msra.mxu0 0.0
        %5207 = vmatprep.subr.mxu0 0.0
        %5208 = vmatpush1.msra.mxu0 0.0
        %5209 = vmatprep.subr.mxu0 0.0
        %5210 = vmatpush1.msra.mxu0 0.0
        %5211 = vmatprep.subr.mxu0 0.0
        %5212 = vmatpush1.msra.mxu0 0.0
        %5213 = vmatprep.subr.mxu0 0.0
        %5214 = vmatpush1.msra.mxu0 0.0
        %5215 = vmatprep.mubr.f32.mxu0 0.0
        %5216 = vmatmul.mubr.f32.gmra.mrb[0].mxu0 %v5146
        %v5217 = vpop.f32.mrb[0].mxu0
        %v5218 = vadd.f32 0.0, %v5217
        %v5219 = vpop.f32.mrb[0].mxu0
        %5220 = vdwg.mxu0
        %v5222 = vsel %vm1244, %v5142, 0
        %v5225 = vsel %vm564, %v4826, 0
        %5227 = vmatprep.subr.mxu0 0.0
        %5228 = vmatpush1.msra.mxu0 %v4825
        %5229 = vmatprep.subr.mxu0 0.0
        %5230 = vmatpush1.msra.mxu0 %v5225
        %5231 = vmatprep.subr.mxu0 0.0
        %5232 = vmatpush1.msra.mxu0 0.0
        %5233 = vmatprep.subr.mxu0 0.0
        %5234 = vmatpush1.msra.mxu0 0.0
        %5235 = vmatprep.subr.mxu0 0.0
        %5236 = vmatpush1.msra.mxu0 0.0
        %5237 = vmatprep.subr.mxu0 0.0
        %5238 = vmatpush1.msra.mxu0 0.0
        %5239 = vmatprep.subr.mxu0 0.0
        %5240 = vmatpush1.msra.mxu0 0.0
        %5241 = vmatprep.subr.mxu0 0.0
        %5242 = vmatpush1.msra.mxu0 0.0
        %5243 = vmatprep.subr.mxu0 0.0
        %5244 = vmatpush1.msra.mxu0 0.0
        %5245 = vmatprep.subr.mxu0 0.0
        %5246 = vmatpush1.msra.mxu0 0.0
        %5247 = vmatprep.subr.mxu0 0.0
        %5248 = vmatpush1.msra.mxu0 0.0
        %5249 = vmatprep.subr.mxu0 0.0
        %5250 = vmatpush1.msra.mxu0 0.0
        %5251 = vmatprep.subr.mxu0 0.0
        %5252 = vmatpush1.msra.mxu0 0.0
        %5253 = vmatprep.subr.mxu0 0.0
        %5254 = vmatpush1.msra.mxu0 0.0
        %5255 = vmatprep.subr.mxu0 0.0
        %5256 = vmatpush1.msra.mxu0 0.0
        %5257 = vmatprep.subr.mxu0 0.0
        %5258 = vmatpush1.msra.mxu0 0.0
        %5259 = vmatprep.subr.mxu0 0.0
        %5260 = vmatpush1.msra.mxu0 0.0
        %5261 = vmatprep.subr.mxu0 0.0
        %5262 = vmatpush1.msra.mxu0 0.0
        %5263 = vmatprep.subr.mxu0 0.0
        %5264 = vmatpush1.msra.mxu0 0.0
        %5265 = vmatprep.subr.mxu0 0.0
        %5266 = vmatpush1.msra.mxu0 0.0
        %5267 = vmatprep.subr.mxu0 0.0
        %5268 = vmatpush1.msra.mxu0 0.0
        %5269 = vmatprep.subr.mxu0 0.0
        %5270 = vmatpush1.msra.mxu0 0.0
        %5271 = vmatprep.subr.mxu0 0.0
        %5272 = vmatpush1.msra.mxu0 0.0
        %5273 = vmatprep.subr.mxu0 0.0
        %5274 = vmatpush1.msra.mxu0 0.0
        %5275 = vmatprep.subr.mxu0 0.0
        %5276 = vmatpush1.msra.mxu0 0.0
        %5277 = vmatprep.subr.mxu0 0.0
        %5278 = vmatpush1.msra.mxu0 0.0
        %5279 = vmatprep.subr.mxu0 0.0
        %5280 = vmatpush1.msra.mxu0 0.0
        %5281 = vmatprep.subr.mxu0 0.0
        %5282 = vmatpush1.msra.mxu0 0.0
        %5283 = vmatprep.subr.mxu0 0.0
        %5284 = vmatpush1.msra.mxu0 0.0
        %5285 = vmatprep.subr.mxu0 0.0
        %5286 = vmatpush1.msra.mxu0 0.0
        %5287 = vmatprep.subr.mxu0 0.0
        %5288 = vmatpush1.msra.mxu0 0.0
        %5289 = vmatprep.subr.mxu0 0.0
        %5290 = vmatpush1.msra.mxu0 0.0
        %5291 = vmatprep.mubr.f32.mxu0 0.0
        %5292 = vmatmul.mubr.f32.gmra.mrb[0].mxu0 %v5222
        %v5293 = vpop.f32.mrb[0].mxu0
        %v5294 = vadd.f32 0.0, %v5293
        %v5295 = vpop.f32.mrb[0].mxu0
        %5296 = vdwg.mxu0
        %v5298 = vsel %vm1244, %v5143, 0
        %v5301 = vsel %vm564, %v4828, 0
        %5303 = vmatprep.subr.mxu0 0.0
        %5304 = vmatpush1.msra.mxu0 %v4827
        %5305 = vmatprep.subr.mxu0 0.0
        %5306 = vmatpush1.msra.mxu0 %v5301
        %5307 = vmatprep.subr.mxu0 0.0
        %5308 = vmatpush1.msra.mxu0 0.0
        %5309 = vmatprep.subr.mxu0 0.0
        %5310 = vmatpush1.msra.mxu0 0.0
        %5311 = vmatprep.subr.mxu0 0.0
        %5312 = vmatpush1.msra.mxu0 0.0
        %5313 = vmatprep.subr.mxu0 0.0
        %5314 = vmatpush1.msra.mxu0 0.0
        %5315 = vmatprep.subr.mxu0 0.0
        %5316 = vmatpush1.msra.mxu0 0.0
        %5317 = vmatprep.subr.mxu0 0.0
        %5318 = vmatpush1.msra.mxu0 0.0
        %5319 = vmatprep.subr.mxu0 0.0
        %5320 = vmatpush1.msra.mxu0 0.0
        %5321 = vmatprep.subr.mxu0 0.0
        %5322 = vmatpush1.msra.mxu0 0.0
        %5323 = vmatprep.subr.mxu0 0.0
        %5324 = vmatpush1.msra.mxu0 0.0
        %5325 = vmatprep.subr.mxu0 0.0
        %5326 = vmatpush1.msra.mxu0 0.0
        %5327 = vmatprep.subr.mxu0 0.0
        %5328 = vmatpush1.msra.mxu0 0.0
        %5329 = vmatprep.subr.mxu0 0.0
        %5330 = vmatpush1.msra.mxu0 0.0
        %5331 = vmatprep.subr.mxu0 0.0
        %5332 = vmatpush1.msra.mxu0 0.0
        %5333 = vmatprep.subr.mxu0 0.0
        %5334 = vmatpush1.msra.mxu0 0.0
        %5335 = vmatprep.subr.mxu0 0.0
        %5336 = vmatpush1.msra.mxu0 0.0
        %5337 = vmatprep.subr.mxu0 0.0
        %5338 = vmatpush1.msra.mxu0 0.0
        %5339 = vmatprep.subr.mxu0 0.0
        %5340 = vmatpush1.msra.mxu0 0.0
        %5341 = vmatprep.subr.mxu0 0.0
        %5342 = vmatpush1.msra.mxu0 0.0
        %5343 = vmatprep.subr.mxu0 0.0
        %5344 = vmatpush1.msra.mxu0 0.0
        %5345 = vmatprep.subr.mxu0 0.0
        %5346 = vmatpush1.msra.mxu0 0.0
        %5347 = vmatprep.subr.mxu0 0.0
        %5348 = vmatpush1.msra.mxu0 0.0
        %5349 = vmatprep.subr.mxu0 0.0
        %5350 = vmatpush1.msra.mxu0 0.0
        %5351 = vmatprep.subr.mxu0 0.0
        %5352 = vmatpush1.msra.mxu0 0.0
        %5353 = vmatprep.subr.mxu0 0.0
        %5354 = vmatpush1.msra.mxu0 0.0
        %5355 = vmatprep.subr.mxu0 0.0
        %5356 = vmatpush1.msra.mxu0 0.0
        %5357 = vmatprep.subr.mxu0 0.0
        %5358 = vmatpush1.msra.mxu0 0.0
        %5359 = vmatprep.subr.mxu0 0.0
        %5360 = vmatpush1.msra.mxu0 0.0
        %5361 = vmatprep.subr.mxu0 0.0
        %5362 = vmatpush1.msra.mxu0 0.0
        %5363 = vmatprep.subr.mxu0 0.0
        %5364 = vmatpush1.msra.mxu0 0.0
        %5365 = vmatprep.subr.mxu0 0.0
        %5366 = vmatpush1.msra.mxu0 0.0
        %5367 = vmatprep.mubr.f32.mxu0 0.0
        %5368 = vmatmul.mubr.f32.gmra.mrb[0].mxu0 %v5298
        %v5369 = vpop.f32.mrb[0].mxu0
        %v5370 = vadd.f32 0.0, %v5369
        %v5371 = vpop.f32.mrb[0].mxu0
        %5372 = vdwg.mxu0
        %v5374 = vsel %vm1244, %v5144, 0
        %v5377 = vsel %vm564, %v4830, 0
        %5379 = vmatprep.subr.mxu0 0.0
        %5380 = vmatpush1.msra.mxu0 %v4829
        %5381 = vmatprep.subr.mxu0 0.0
        %5382 = vmatpush1.msra.mxu0 %v5377
        %5383 = vmatprep.subr.mxu0 0.0
        %5384 = vmatpush1.msra.mxu0 0.0
        %5385 = vmatprep.subr.mxu0 0.0
        %5386 = vmatpush1.msra.mxu0 0.0
        %5387 = vmatprep.subr.mxu0 0.0
        %5388 = vmatpush1.msra.mxu0 0.0
        %5389 = vmatprep.subr.mxu0 0.0
        %5390 = vmatpush1.msra.mxu0 0.0
        %5391 = vmatprep.subr.mxu0 0.0
        %5392 = vmatpush1.msra.mxu0 0.0
        %5393 = vmatprep.subr.mxu0 0.0
        %5394 = vmatpush1.msra.mxu0 0.0
        %5395 = vmatprep.subr.mxu0 0.0
        %5396 = vmatpush1.msra.mxu0 0.0
        %5397 = vmatprep.subr.mxu0 0.0
        %5398 = vmatpush1.msra.mxu0 0.0
        %5399 = vmatprep.subr.mxu0 0.0
        %5400 = vmatpush1.msra.mxu0 0.0
        %5401 = vmatprep.subr.mxu0 0.0
        %5402 = vmatpush1.msra.mxu0 0.0
        %5403 = vmatprep.subr.mxu0 0.0
        %5404 = vmatpush1.msra.mxu0 0.0
        %5405 = vmatprep.subr.mxu0 0.0
        %5406 = vmatpush1.msra.mxu0 0.0
        %5407 = vmatprep.subr.mxu0 0.0
        %5408 = vmatpush1.msra.mxu0 0.0
        %5409 = vmatprep.subr.mxu0 0.0
        %5410 = vmatpush1.msra.mxu0 0.0
        %5411 = vmatprep.subr.mxu0 0.0
        %5412 = vmatpush1.msra.mxu0 0.0
        %5413 = vmatprep.subr.mxu0 0.0
        %5414 = vmatpush1.msra.mxu0 0.0
        %5415 = vmatprep.subr.mxu0 0.0
        %5416 = vmatpush1.msra.mxu0 0.0
        %5417 = vmatprep.subr.mxu0 0.0
        %5418 = vmatpush1.msra.mxu0 0.0
        %5419 = vmatprep.subr.mxu0 0.0
        %5420 = vmatpush1.msra.mxu0 0.0
        %5421 = vmatprep.subr.mxu0 0.0
        %5422 = vmatpush1.msra.mxu0 0.0
        %5423 = vmatprep.subr.mxu0 0.0
        %5424 = vmatpush1.msra.mxu0 0.0
        %5425 = vmatprep.subr.mxu0 0.0
        %5426 = vmatpush1.msra.mxu0 0.0
        %5427 = vmatprep.subr.mxu0 0.0
        %5428 = vmatpush1.msra.mxu0 0.0
        %5429 = vmatprep.subr.mxu0 0.0
        %5430 = vmatpush1.msra.mxu0 0.0
        %5431 = vmatprep.subr.mxu0 0.0
        %5432 = vmatpush1.msra.mxu0 0.0
        %5433 = vmatprep.subr.mxu0 0.0
        %5434 = vmatpush1.msra.mxu0 0.0
        %5435 = vmatprep.subr.mxu0 0.0
        %5436 = vmatpush1.msra.mxu0 0.0
        %5437 = vmatprep.subr.mxu0 0.0
        %5438 = vmatpush1.msra.mxu0 0.0
        %5439 = vmatprep.subr.mxu0 0.0
        %5440 = vmatpush1.msra.mxu0 0.0
        %5441 = vmatprep.subr.mxu0 0.0
        %5442 = vmatpush1.msra.mxu0 0.0
        %5443 = vmatprep.mubr.f32.mxu0 0.0
        %5444 = vmatmul.mubr.f32.gmra.mrb[0].mxu0 %v5374
        %v5445 = vpop.f32.mrb[0].mxu0
        %v5446 = vadd.f32 0.0, %v5445
        %v5447 = vpop.f32.mrb[0].mxu0
        %5448 = vdwg.mxu0
        %v5449 = vadd.f32 %v5218, %v5294
        %v5450 = vadd.f32 %v5449, %v5370
        %v5451 = vadd.f32 %v5450, %v5446
        %s5452 = scalar_lea.vmem [#allocation2], 2816
        %v5453 = vld [vmem:[%s5452] sm:$0xff]
        %v5454 = vld [vmem:[%s5452 + $0x8] sm:$0xff]
        %v5455 = vld [vmem:[%s5452 + $0x10] sm:$0xff]
        %v5456 = vld [vmem:[%s5452 + $0x18] sm:$0xff]
        %v5457 = vld [vmem:[%s5452 + $0x20] sm:$0xff]
        %v5458 = vld [vmem:[%s5452 + $0x28] sm:$0xff]
        %v5459 = vld [vmem:[%s5452 + $0x30] sm:$0xff]
        %v5460 = vld [vmem:[%s5452 + $0x38] sm:$0xff]
        %v5461 = vld [vmem:[%s5452 + $0x40] sm:$0xff]
        %v5462 = vld [vmem:[%s5452 + $0x48] sm:$0xff]
        %v5463 = vld [vmem:[%s5452 + $0x50] sm:$0xff]
        %v5464 = vld [vmem:[%s5452 + $0x58] sm:$0xff]
        %v5465 = vld [vmem:[%s5452 + $0x60] sm:$0xff]
        %v5466 = vld [vmem:[%s5452 + $0x68] sm:$0xff]
        %v5467 = vld [vmem:[%s5452 + $0x70] sm:$0xff]
        %v5468 = vld [vmem:[%s5452 + $0x78] sm:$0xff]
        %v5469 = vld [vmem:[#allocation4 + $0x20] sm:$0x1]
        %v5470 = vlaneseq
        %v5471 = vshrl.u32 %v5470, 7
        %v5472 = vsub.s32 0, %v5471
        %v5473 = vrot.slane %v5469, %v5472
        %5474 = vmatprep.subr.mxu0 0.0
        %5475 = vmatpush1.msra.mxu0 %v5453
        %5476 = vmatprep.subr.mxu0 0.0
        %5477 = vmatpush1.msra.mxu0 %v5454
        %5478 = vmatprep.subr.mxu0 0.0
        %5479 = vmatpush1.msra.mxu0 %v5455
        %5480 = vmatprep.subr.mxu0 0.0
        %5481 = vmatpush1.msra.mxu0 %v5456
        %5482 = vmatprep.subr.mxu0 0.0
        %5483 = vmatpush1.msra.mxu0 %v5457
        %5484 = vmatprep.subr.mxu0 0.0
        %5485 = vmatpush1.msra.mxu0 %v5458
        %5486 = vmatprep.subr.mxu0 0.0
        %5487 = vmatpush1.msra.mxu0 %v5459
        %5488 = vmatprep.subr.mxu0 0.0
        %5489 = vmatpush1.msra.mxu0 %v5460
        %5490 = vmatprep.subr.mxu0 0.0
        %5491 = vmatpush1.msra.mxu0 %v5461
        %5492 = vmatprep.subr.mxu0 0.0
        %5493 = vmatpush1.msra.mxu0 %v5462
        %5494 = vmatprep.subr.mxu0 0.0
        %5495 = vmatpush1.msra.mxu0 %v5463
        %5496 = vmatprep.subr.mxu0 0.0
        %5497 = vmatpush1.msra.mxu0 %v5464
        %5498 = vmatprep.subr.mxu0 0.0
        %5499 = vmatpush1.msra.mxu0 %v5465
        %5500 = vmatprep.subr.mxu0 0.0
        %5501 = vmatpush1.msra.mxu0 %v5466
        %5502 = vmatprep.subr.mxu0 0.0
        %5503 = vmatpush1.msra.mxu0 %v5467
        %5504 = vmatprep.subr.mxu0 0.0
        %5505 = vmatpush1.msra.mxu0 %v5468
        %5506 = vmatprep.subr.mxu0 0.0
        %5507 = vmatpush1.msra.mxu0 0.0
        %5508 = vmatprep.subr.mxu0 0.0
        %5509 = vmatpush1.msra.mxu0 0.0
        %5510 = vmatprep.subr.mxu0 0.0
        %5511 = vmatpush1.msra.mxu0 0.0
        %5512 = vmatprep.subr.mxu0 0.0
        %5513 = vmatpush1.msra.mxu0 0.0
        %5514 = vmatprep.subr.mxu0 0.0
        %5515 = vmatpush1.msra.mxu0 0.0
        %5516 = vmatprep.subr.mxu0 0.0
        %5517 = vmatpush1.msra.mxu0 0.0
        %5518 = vmatprep.subr.mxu0 0.0
        %5519 = vmatpush1.msra.mxu0 0.0
        %5520 = vmatprep.subr.mxu0 0.0
        %5521 = vmatpush1.msra.mxu0 0.0
        %5522 = vmatprep.subr.mxu0 0.0
        %5523 = vmatpush1.msra.mxu0 0.0
        %5524 = vmatprep.subr.mxu0 0.0
        %5525 = vmatpush1.msra.mxu0 0.0
        %5526 = vmatprep.subr.mxu0 0.0
        %5527 = vmatpush1.msra.mxu0 0.0
        %5528 = vmatprep.subr.mxu0 0.0
        %5529 = vmatpush1.msra.mxu0 0.0
        %5530 = vmatprep.subr.mxu0 0.0
        %5531 = vmatpush1.msra.mxu0 0.0
        %5532 = vmatprep.subr.mxu0 0.0
        %5533 = vmatpush1.msra.mxu0 0.0
        %5534 = vmatprep.subr.mxu0 0.0
        %5535 = vmatpush1.msra.mxu0 0.0
        %5536 = vmatprep.subr.mxu0 0.0
        %5537 = vmatpush1.msra.mxu0 0.0
        %5538 = vmatprep.mubr.f32.mxu0 0.0
        %5539 = vmatmul.mubr.f32.gmra.mrb[0].mxu0 %v5451
        %v5540 = vpop.f32.mrb[0].mxu0
        %v5541 = vadd.f32 %v5473, %v5540
        %v5542 = vpop.f32.mrb[0].mxu0
        %5543 = vdwg.mxu0
        %v5544 = vadd.f32 %v4503, %v5541
        %5545 = vadd.xlane.f32.xlu0 %v5544
        %v5546 = vpop.xlane.xlu0 %5545
        %v5547 = vmul.f32 %v5544, %v5544
        %5548 = vadd.xlane.f32.xlu0 %v5547
        %v5549 = vpop.xlane.xlu0 %5548
        %v5550 = vmul.f32 %v5546, 0.03125
        %v5551 = vmul.f32 %v5549, 0.03125
        %v5552 = vmul.f32 %v5550, %v5550
        %v5553 = vsub.f32 %v5551, %v5552
        %v5554 = vsub.f32 %v5544, %v5550
        %v5555 = vadd.f32 %v5553, 1e-05
        %v5556 = vrsqrt.pop %v5555
        %v5557 = vmul.f32 %v5554, %v5556
        %v5558 = vld [vmem:[#allocation4 + $0x27] sm:$0x1]
        %v5559 = vlaneseq
        %v5560 = vshrl.u32 %v5559, 7
        %v5561 = vsub.s32 0, %v5560
        %v5562 = vrot.slane %v5558, %v5561
        %v5563 = vmul.f32 %v5557, %v5562
        %v5564 = vld [vmem:[#allocation4 + $0x28] sm:$0x1]
        %v5565 = vlaneseq
        %v5566 = vshrl.u32 %v5565, 7
        %v5567 = vsub.s32 0, %v5566
        %v5568 = vrot.slane %v5564, %v5567
        %v5569 = vadd.f32 %v5563, %v5568
        %s5570 = scalar_lea.vmem [#allocation2], 2944
        %v5571 = vld [vmem:[%s5570] sm:$0xff]
        %v5572 = vld [vmem:[%s5570 + $0x8] sm:$0xff]
        %v5573 = vld [vmem:[%s5570 + $0x10] sm:$0xff]
        %v5574 = vld [vmem:[%s5570 + $0x18] sm:$0xff]
        %v5575 = vld [vmem:[%s5570 + $0x20] sm:$0xff]
        %v5576 = vld [vmem:[%s5570 + $0x28] sm:$0xff]
        %v5577 = vld [vmem:[%s5570 + $0x30] sm:$0xff]
        %v5578 = vld [vmem:[%s5570 + $0x38] sm:$0xff]
        %v5579 = vld [vmem:[%s5570 + $0x40] sm:$0xff]
        %v5580 = vld [vmem:[%s5570 + $0x48] sm:$0xff]
        %v5581 = vld [vmem:[%s5570 + $0x50] sm:$0xff]
        %v5582 = vld [vmem:[%s5570 + $0x58] sm:$0xff]
        %v5583 = vld [vmem:[%s5570 + $0x60] sm:$0xff]
        %v5584 = vld [vmem:[%s5570 + $0x68] sm:$0xff]
        %v5585 = vld [vmem:[%s5570 + $0x70] sm:$0xff]
        %v5586 = vld [vmem:[%s5570 + $0x78] sm:$0xff]
        %v5587 = vld [vmem:[#allocation4 + $0x21] sm:$0x1]
        %v5588 = vlaneseq
        %v5589 = vshrl.u32 %v5588, 7
        %v5590 = vsub.s32 0, %v5589
        %v5591 = vrot.slane %v5587, %v5590
        %5592 = vmatprep.subr.mxu0 0.0
        %5593 = vmatpush1.msra.mxu0 %v5571
        %5594 = vmatprep.subr.mxu0 0.0
        %5595 = vmatpush1.msra.mxu0 %v5572
        %5596 = vmatprep.subr.mxu0 0.0
        %5597 = vmatpush1.msra.mxu0 %v5573
        %5598 = vmatprep.subr.mxu0 0.0
        %5599 = vmatpush1.msra.mxu0 %v5574
        %5600 = vmatprep.subr.mxu0 0.0
        %5601 = vmatpush1.msra.mxu0 %v5575
        %5602 = vmatprep.subr.mxu0 0.0
        %5603 = vmatpush1.msra.mxu0 %v5576
        %5604 = vmatprep.subr.mxu0 0.0
        %5605 = vmatpush1.msra.mxu0 %v5577
        %5606 = vmatprep.subr.mxu0 0.0
        %5607 = vmatpush1.msra.mxu0 %v5578
        %5608 = vmatprep.subr.mxu0 0.0
        %5609 = vmatpush1.msra.mxu0 %v5579
        %5610 = vmatprep.subr.mxu0 0.0
        %5611 = vmatpush1.msra.mxu0 %v5580
        %5612 = vmatprep.subr.mxu0 0.0
        %5613 = vmatpush1.msra.mxu0 %v5581
        %5614 = vmatprep.subr.mxu0 0.0
        %5615 = vmatpush1.msra.mxu0 %v5582
        %5616 = vmatprep.subr.mxu0 0.0
        %5617 = vmatpush1.msra.mxu0 %v5583
        %5618 = vmatprep.subr.mxu0 0.0
        %5619 = vmatpush1.msra.mxu0 %v5584
        %5620 = vmatprep.subr.mxu0 0.0
        %5621 = vmatpush1.msra.mxu0 %v5585
        %5622 = vmatprep.subr.mxu0 0.0
        %5623 = vmatpush1.msra.mxu0 %v5586
        %5624 = vmatprep.subr.mxu0 0.0
        %5625 = vmatpush1.msra.mxu0 0.0
        %5626 = vmatprep.subr.mxu0 0.0
        %5627 = vmatpush1.msra.mxu0 0.0
        %5628 = vmatprep.subr.mxu0 0.0
        %5629 = vmatpush1.msra.mxu0 0.0
        %5630 = vmatprep.subr.mxu0 0.0
        %5631 = vmatpush1.msra.mxu0 0.0
        %5632 = vmatprep.subr.mxu0 0.0
        %5633 = vmatpush1.msra.mxu0 0.0
        %5634 = vmatprep.subr.mxu0 0.0
        %5635 = vmatpush1.msra.mxu0 0.0
        %5636 = vmatprep.subr.mxu0 0.0
        %5637 = vmatpush1.msra.mxu0 0.0
        %5638 = vmatprep.subr.mxu0 0.0
        %5639 = vmatpush1.msra.mxu0 0.0
        %5640 = vmatprep.subr.mxu0 0.0
        %5641 = vmatpush1.msra.mxu0 0.0
        %5642 = vmatprep.subr.mxu0 0.0
        %5643 = vmatpush1.msra.mxu0 0.0
        %5644 = vmatprep.subr.mxu0 0.0
        %5645 = vmatpush1.msra.mxu0 0.0
        %5646 = vmatprep.subr.mxu0 0.0
        %5647 = vmatpush1.msra.mxu0 0.0
        %5648 = vmatprep.subr.mxu0 0.0
        %5649 = vmatpush1.msra.mxu0 0.0
        %5650 = vmatprep.subr.mxu0 0.0
        %5651 = vmatpush1.msra.mxu0 0.0
        %5652 = vmatprep.subr.mxu0 0.0
        %5653 = vmatpush1.msra.mxu0 0.0
        %5654 = vmatprep.subr.mxu0 0.0
        %5655 = vmatpush1.msra.mxu0 0.0
        %5656 = vmatprep.mubr.f32.mxu0 0.0
        %5657 = vmatmul.mubr.f32.gmra.mrb[0].mxu0 %v5569
        %v5658 = vpop.f32.mrb[0].mxu0
        %v5659 = vadd.f32 %v5591, %v5658
        %v5660 = vpop.f32.mrb[0].mxu0
        %5661 = vdwg.mxu0
        %v5662 = vmax.f32 %v5659, 0.0
        %s5663 = scalar_lea.vmem [#allocation2], 3072
        %v5664 = vld [vmem:[%s5663] sm:$0xff]
        %v5665 = vld [vmem:[%s5663 + $0x8] sm:$0xff]
        %v5666 = vld [vmem:[%s5663 + $0x10] sm:$0xff]
        %v5667 = vld [vmem:[%s5663 + $0x18] sm:$0xff]
        %v5668 = vld [vmem:[%s5663 + $0x20] sm:$0xff]
        %v5669 = vld [vmem:[%s5663 + $0x28] sm:$0xff]
        %v5670 = vld [vmem:[%s5663 + $0x30] sm:$0xff]
        %v5671 = vld [vmem:[%s5663 + $0x38] sm:$0xff]
        %v5672 = vld [vmem:[%s5663 + $0x40] sm:$0xff]
        %v5673 = vld [vmem:[%s5663 + $0x48] sm:$0xff]
        %v5674 = vld [vmem:[%s5663 + $0x50] sm:$0xff]
        %v5675 = vld [vmem:[%s5663 + $0x58] sm:$0xff]
        %v5676 = vld [vmem:[%s5663 + $0x60] sm:$0xff]
        %v5677 = vld [vmem:[%s5663 + $0x68] sm:$0xff]
        %v5678 = vld [vmem:[%s5663 + $0x70] sm:$0xff]
        %v5679 = vld [vmem:[%s5663 + $0x78] sm:$0xff]
        %v5680 = vld [vmem:[#allocation4 + $0x22] sm:$0x1]
        %v5681 = vlaneseq
        %v5682 = vshrl.u32 %v5681, 7
        %v5683 = vsub.s32 0, %v5682
        %v5684 = vrot.slane %v5680, %v5683
        %5685 = vmatprep.subr.mxu0 0.0
        %5686 = vmatpush1.msra.mxu0 %v5664
        %5687 = vmatprep.subr.mxu0 0.0
        %5688 = vmatpush1.msra.mxu0 %v5665
        %5689 = vmatprep.subr.mxu0 0.0
        %5690 = vmatpush1.msra.mxu0 %v5666
        %5691 = vmatprep.subr.mxu0 0.0
        %5692 = vmatpush1.msra.mxu0 %v5667
        %5693 = vmatprep.subr.mxu0 0.0
        %5694 = vmatpush1.msra.mxu0 %v5668
        %5695 = vmatprep.subr.mxu0 0.0
        %5696 = vmatpush1.msra.mxu0 %v5669
        %5697 = vmatprep.subr.mxu0 0.0
        %5698 = vmatpush1.msra.mxu0 %v5670
        %5699 = vmatprep.subr.mxu0 0.0
        %5700 = vmatpush1.msra.mxu0 %v5671
        %5701 = vmatprep.subr.mxu0 0.0
        %5702 = vmatpush1.msra.mxu0 %v5672
        %5703 = vmatprep.subr.mxu0 0.0
        %5704 = vmatpush1.msra.mxu0 %v5673
        %5705 = vmatprep.subr.mxu0 0.0
        %5706 = vmatpush1.msra.mxu0 %v5674
        %5707 = vmatprep.subr.mxu0 0.0
        %5708 = vmatpush1.msra.mxu0 %v5675
        %5709 = vmatprep.subr.mxu0 0.0
        %5710 = vmatpush1.msra.mxu0 %v5676
        %5711 = vmatprep.subr.mxu0 0.0
        %5712 = vmatpush1.msra.mxu0 %v5677
        %5713 = vmatprep.subr.mxu0 0.0
        %5714 = vmatpush1.msra.mxu0 %v5678
        %5715 = vmatprep.subr.mxu0 0.0
        %5716 = vmatpush1.msra.mxu0 %v5679
        %5717 = vmatprep.subr.mxu0 0.0
        %5718 = vmatpush1.msra.mxu0 0.0
        %5719 = vmatprep.subr.mxu0 0.0
        %5720 = vmatpush1.msra.mxu0 0.0
        %5721 = vmatprep.subr.mxu0 0.0
        %5722 = vmatpush1.msra.mxu0 0.0
        %5723 = vmatprep.subr.mxu0 0.0
        %5724 = vmatpush1.msra.mxu0 0.0
        %5725 = vmatprep.subr.mxu0 0.0
        %5726 = vmatpush1.msra.mxu0 0.0
        %5727 = vmatprep.subr.mxu0 0.0
        %5728 = vmatpush1.msra.mxu0 0.0
        %5729 = vmatprep.subr.mxu0 0.0
        %5730 = vmatpush1.msra.mxu0 0.0
        %5731 = vmatprep.subr.mxu0 0.0
        %5732 = vmatpush1.msra.mxu0 0.0
        %5733 = vmatprep.subr.mxu0 0.0
        %5734 = vmatpush1.msra.mxu0 0.0
        %5735 = vmatprep.subr.mxu0 0.0
        %5736 = vmatpush1.msra.mxu0 0.0
        %5737 = vmatprep.subr.mxu0 0.0
        %5738 = vmatpush1.msra.mxu0 0.0
        %5739 = vmatprep.subr.mxu0 0.0
        %5740 = vmatpush1.msra.mxu0 0.0
        %5741 = vmatprep.subr.mxu0 0.0
        %5742 = vmatpush1.msra.mxu0 0.0
        %5743 = vmatprep.subr.mxu0 0.0
        %5744 = vmatpush1.msra.mxu0 0.0
        %5745 = vmatprep.subr.mxu0 0.0
        %5746 = vmatpush1.msra.mxu0 0.0
        %5747 = vmatprep.subr.mxu0 0.0
        %5748 = vmatpush1.msra.mxu0 0.0
        %5749 = vmatprep.mubr.f32.mxu0 0.0
        %5750 = vmatmul.mubr.f32.gmra.mrb[0].mxu0 %v5662
        %v5751 = vpop.f32.mrb[0].mxu0
        %v5752 = vadd.f32 %v5684, %v5751
        %v5753 = vpop.f32.mrb[0].mxu0
        %5754 = vdwg.mxu0
        %v5755 = vadd.f32 %v5544, %v5752
        %5756 = vadd.xlane.f32.xlu0 %v5755
        %v5757 = vpop.xlane.xlu0 %5756
        %v5758 = vmul.f32 %v5755, %v5755
        %5759 = vadd.xlane.f32.xlu0 %v5758
        %v5760 = vpop.xlane.xlu0 %5759
        %v5761 = vmul.f32 %v5757, 0.03125
        %v5762 = vmul.f32 %v5760, 0.03125
        %v5763 = vmul.f32 %v5761, %v5761
        %v5764 = vsub.f32 %v5762, %v5763
        %v5765 = vsub.f32 %v5755, %v5761
        %v5766 = vadd.f32 %v5764, 1e-05
        %v5767 = vrsqrt.pop %v5766
        %v5768 = vmul.f32 %v5765, %v5767
        %v5769 = vld [vmem:[#allocation4 + $0x33] sm:$0x1]
        %v5770 = vlaneseq
        %v5771 = vshrl.u32 %v5770, 7
        %v5772 = vsub.s32 0, %v5771
        %v5773 = vrot.slane %v5769, %v5772
        %v5774 = vmul.f32 %v5768, %v5773
        %v5775 = vld [vmem:[#allocation4 + $0x34] sm:$0x1]
        %v5776 = vlaneseq
        %v5777 = vshrl.u32 %v5776, 7
        %v5778 = vsub.s32 0, %v5777
        %v5779 = vrot.slane %v5775, %v5778
        %v5780 = vadd.f32 %v5774, %v5779
        %s5781 = scalar_lea.vmem [#allocation2], 3200
        %v5782 = vld [vmem:[%s5781] sm:$0xff]
        %v5783 = vld [vmem:[%s5781 + $0x8] sm:$0xff]
        %v5784 = vld [vmem:[%s5781 + $0x10] sm:$0xff]
        %v5785 = vld [vmem:[%s5781 + $0x18] sm:$0xff]
        %v5786 = vld [vmem:[%s5781 + $0x20] sm:$0xff]
        %v5787 = vld [vmem:[%s5781 + $0x28] sm:$0xff]
        %v5788 = vld [vmem:[%s5781 + $0x30] sm:$0xff]
        %v5789 = vld [vmem:[%s5781 + $0x38] sm:$0xff]
        %v5790 = vld [vmem:[%s5781 + $0x40] sm:$0xff]
        %v5791 = vld [vmem:[%s5781 + $0x48] sm:$0xff]
        %v5792 = vld [vmem:[%s5781 + $0x50] sm:$0xff]
        %v5793 = vld [vmem:[%s5781 + $0x58] sm:$0xff]
        %v5794 = vld [vmem:[%s5781 + $0x60] sm:$0xff]
        %v5795 = vld [vmem:[%s5781 + $0x68] sm:$0xff]
        %v5796 = vld [vmem:[%s5781 + $0x70] sm:$0xff]
        %v5797 = vld [vmem:[%s5781 + $0x78] sm:$0xff]
        %v5798 = vld [vmem:[#allocation4 + $0x29] sm:$0x1]
        %v5799 = vlaneseq
        %v5800 = vshrl.u32 %v5799, 7
        %v5801 = vsub.s32 0, %v5800
        %v5802 = vrot.slane %v5798, %v5801
        %5803 = vmatprep.subr.mxu0 0.0
        %5804 = vmatpush1.msra.mxu0 %v5782
        %5805 = vmatprep.subr.mxu0 0.0
        %5806 = vmatpush1.msra.mxu0 %v5783
        %5807 = vmatprep.subr.mxu0 0.0
        %5808 = vmatpush1.msra.mxu0 %v5784
        %5809 = vmatprep.subr.mxu0 0.0
        %5810 = vmatpush1.msra.mxu0 %v5785
        %5811 = vmatprep.subr.mxu0 0.0
        %5812 = vmatpush1.msra.mxu0 %v5786
        %5813 = vmatprep.subr.mxu0 0.0
        %5814 = vmatpush1.msra.mxu0 %v5787
        %5815 = vmatprep.subr.mxu0 0.0
        %5816 = vmatpush1.msra.mxu0 %v5788
        %5817 = vmatprep.subr.mxu0 0.0
        %5818 = vmatpush1.msra.mxu0 %v5789
        %5819 = vmatprep.subr.mxu0 0.0
        %5820 = vmatpush1.msra.mxu0 %v5790
        %5821 = vmatprep.subr.mxu0 0.0
        %5822 = vmatpush1.msra.mxu0 %v5791
        %5823 = vmatprep.subr.mxu0 0.0
        %5824 = vmatpush1.msra.mxu0 %v5792
        %5825 = vmatprep.subr.mxu0 0.0
        %5826 = vmatpush1.msra.mxu0 %v5793
        %5827 = vmatprep.subr.mxu0 0.0
        %5828 = vmatpush1.msra.mxu0 %v5794
        %5829 = vmatprep.subr.mxu0 0.0
        %5830 = vmatpush1.msra.mxu0 %v5795
        %5831 = vmatprep.subr.mxu0 0.0
        %5832 = vmatpush1.msra.mxu0 %v5796
        %5833 = vmatprep.subr.mxu0 0.0
        %5834 = vmatpush1.msra.mxu0 %v5797
        %5835 = vmatprep.subr.mxu0 0.0
        %5836 = vmatpush1.msra.mxu0 0.0
        %5837 = vmatprep.subr.mxu0 0.0
        %5838 = vmatpush1.msra.mxu0 0.0
        %5839 = vmatprep.subr.mxu0 0.0
        %5840 = vmatpush1.msra.mxu0 0.0
        %5841 = vmatprep.subr.mxu0 0.0
        %5842 = vmatpush1.msra.mxu0 0.0
        %5843 = vmatprep.subr.mxu0 0.0
        %5844 = vmatpush1.msra.mxu0 0.0
        %5845 = vmatprep.subr.mxu0 0.0
        %5846 = vmatpush1.msra.mxu0 0.0
        %5847 = vmatprep.subr.mxu0 0.0
        %5848 = vmatpush1.msra.mxu0 0.0
        %5849 = vmatprep.subr.mxu0 0.0
        %5850 = vmatpush1.msra.mxu0 0.0
        %5851 = vmatprep.subr.mxu0 0.0
        %5852 = vmatpush1.msra.mxu0 0.0
        %5853 = vmatprep.subr.mxu0 0.0
        %5854 = vmatpush1.msra.mxu0 0.0
        %5855 = vmatprep.subr.mxu0 0.0
        %5856 = vmatpush1.msra.mxu0 0.0
        %5857 = vmatprep.subr.mxu0 0.0
        %5858 = vmatpush1.msra.mxu0 0.0
        %5859 = vmatprep.subr.mxu0 0.0
        %5860 = vmatpush1.msra.mxu0 0.0
        %5861 = vmatprep.subr.mxu0 0.0
        %5862 = vmatpush1.msra.mxu0 0.0
        %5863 = vmatprep.subr.mxu0 0.0
        %5864 = vmatpush1.msra.mxu0 0.0
        %5865 = vmatprep.subr.mxu0 0.0
        %5866 = vmatpush1.msra.mxu0 0.0
        %5867 = vmatprep.mubr.f32.mxu0 0.0
        %5868 = vmatmul.mubr.f32.gmra.mrb[0].mxu0 %v5780
        %v5869 = vpop.f32.mrb[0].mxu0
        %v5870 = vadd.f32 %v5802, %v5869
        %v5871 = vpop.f32.mrb[0].mxu0
        %5872 = vdwg.mxu0
        %s5873 = scalar_lea.vmem [#allocation2], 3328
        %v5874 = vld [vmem:[%s5873] sm:$0xff]
        %v5875 = vld [vmem:[%s5873 + $0x8] sm:$0xff]
        %v5876 = vld [vmem:[%s5873 + $0x10] sm:$0xff]
        %v5877 = vld [vmem:[%s5873 + $0x18] sm:$0xff]
        %v5878 = vld [vmem:[%s5873 + $0x20] sm:$0xff]
        %v5879 = vld [vmem:[%s5873 + $0x28] sm:$0xff]
        %v5880 = vld [vmem:[%s5873 + $0x30] sm:$0xff]
        %v5881 = vld [vmem:[%s5873 + $0x38] sm:$0xff]
        %v5882 = vld [vmem:[%s5873 + $0x40] sm:$0xff]
        %v5883 = vld [vmem:[%s5873 + $0x48] sm:$0xff]
        %v5884 = vld [vmem:[%s5873 + $0x50] sm:$0xff]
        %v5885 = vld [vmem:[%s5873 + $0x58] sm:$0xff]
        %v5886 = vld [vmem:[%s5873 + $0x60] sm:$0xff]
        %v5887 = vld [vmem:[%s5873 + $0x68] sm:$0xff]
        %v5888 = vld [vmem:[%s5873 + $0x70] sm:$0xff]
        %v5889 = vld [vmem:[%s5873 + $0x78] sm:$0xff]
        %v5890 = vld [vmem:[#allocation4 + $0x2a] sm:$0x1]
        %v5891 = vlaneseq
        %v5892 = vshrl.u32 %v5891, 7
        %v5893 = vsub.s32 0, %v5892
        %v5894 = vrot.slane %v5890, %v5893
        %5895 = vmatprep.subr.mxu0 0.0
        %5896 = vmatpush1.msra.mxu0 %v5874
        %5897 = vmatprep.subr.mxu0 0.0
        %5898 = vmatpush1.msra.mxu0 %v5875
        %5899 = vmatprep.subr.mxu0 0.0
        %5900 = vmatpush1.msra.mxu0 %v5876
        %5901 = vmatprep.subr.mxu0 0.0
        %5902 = vmatpush1.msra.mxu0 %v5877
        %5903 = vmatprep.subr.mxu0 0.0
        %5904 = vmatpush1.msra.mxu0 %v5878
        %5905 = vmatprep.subr.mxu0 0.0
        %5906 = vmatpush1.msra.mxu0 %v5879
        %5907 = vmatprep.subr.mxu0 0.0
        %5908 = vmatpush1.msra.mxu0 %v5880
        %5909 = vmatprep.subr.mxu0 0.0
        %5910 = vmatpush1.msra.mxu0 %v5881
        %5911 = vmatprep.subr.mxu0 0.0
        %5912 = vmatpush1.msra.mxu0 %v5882
        %5913 = vmatprep.subr.mxu0 0.0
        %5914 = vmatpush1.msra.mxu0 %v5883
        %5915 = vmatprep.subr.mxu0 0.0
        %5916 = vmatpush1.msra.mxu0 %v5884
        %5917 = vmatprep.subr.mxu0 0.0
        %5918 = vmatpush1.msra.mxu0 %v5885
        %5919 = vmatprep.subr.mxu0 0.0
        %5920 = vmatpush1.msra.mxu0 %v5886
        %5921 = vmatprep.subr.mxu0 0.0
        %5922 = vmatpush1.msra.mxu0 %v5887
        %5923 = vmatprep.subr.mxu0 0.0
        %5924 = vmatpush1.msra.mxu0 %v5888
        %5925 = vmatprep.subr.mxu0 0.0
        %5926 = vmatpush1.msra.mxu0 %v5889
        %5927 = vmatprep.subr.mxu0 0.0
        %5928 = vmatpush1.msra.mxu0 0.0
        %5929 = vmatprep.subr.mxu0 0.0
        %5930 = vmatpush1.msra.mxu0 0.0
        %5931 = vmatprep.subr.mxu0 0.0
        %5932 = vmatpush1.msra.mxu0 0.0
        %5933 = vmatprep.subr.mxu0 0.0
        %5934 = vmatpush1.msra.mxu0 0.0
        %5935 = vmatprep.subr.mxu0 0.0
        %5936 = vmatpush1.msra.mxu0 0.0
        %5937 = vmatprep.subr.mxu0 0.0
        %5938 = vmatpush1.msra.mxu0 0.0
        %5939 = vmatprep.subr.mxu0 0.0
        %5940 = vmatpush1.msra.mxu0 0.0
        %5941 = vmatprep.subr.mxu0 0.0
        %5942 = vmatpush1.msra.mxu0 0.0
        %5943 = vmatprep.subr.mxu0 0.0
        %5944 = vmatpush1.msra.mxu0 0.0
        %5945 = vmatprep.subr.mxu0 0.0
        %5946 = vmatpush1.msra.mxu0 0.0
        %5947 = vmatprep.subr.mxu0 0.0
        %5948 = vmatpush1.msra.mxu0 0.0
        %5949 = vmatprep.subr.mxu0 0.0
        %5950 = vmatpush1.msra.mxu0 0.0
        %5951 = vmatprep.subr.mxu0 0.0
        %5952 = vmatpush1.msra.mxu0 0.0
        %5953 = vmatprep.subr.mxu0 0.0
        %5954 = vmatpush1.msra.mxu0 0.0
        %5955 = vmatprep.subr.mxu0 0.0
        %5956 = vmatpush1.msra.mxu0 0.0
        %5957 = vmatprep.subr.mxu0 0.0
        %5958 = vmatpush1.msra.mxu0 0.0
        %5959 = vmatprep.mubr.f32.mxu0 0.0
        %5960 = vmatmul.mubr.f32.gmra.mrb[0].mxu0 %v5780
        %v5961 = vpop.f32.mrb[0].mxu0
        %v5962 = vadd.f32 %v5894, %v5961
        %v5963 = vpop.f32.mrb[0].mxu0
        %5964 = vdwg.mxu0
        %s5965 = scalar_lea.vmem [#allocation2], 3456
        %v5966 = vld [vmem:[%s5965] sm:$0xff]
        %v5967 = vld [vmem:[%s5965 + $0x8] sm:$0xff]
        %v5968 = vld [vmem:[%s5965 + $0x10] sm:$0xff]
        %v5969 = vld [vmem:[%s5965 + $0x18] sm:$0xff]
        %v5970 = vld [vmem:[%s5965 + $0x20] sm:$0xff]
        %v5971 = vld [vmem:[%s5965 + $0x28] sm:$0xff]
        %v5972 = vld [vmem:[%s5965 + $0x30] sm:$0xff]
        %v5973 = vld [vmem:[%s5965 + $0x38] sm:$0xff]
        %v5974 = vld [vmem:[%s5965 + $0x40] sm:$0xff]
        %v5975 = vld [vmem:[%s5965 + $0x48] sm:$0xff]
        %v5976 = vld [vmem:[%s5965 + $0x50] sm:$0xff]
        %v5977 = vld [vmem:[%s5965 + $0x58] sm:$0xff]
        %v5978 = vld [vmem:[%s5965 + $0x60] sm:$0xff]
        %v5979 = vld [vmem:[%s5965 + $0x68] sm:$0xff]
        %v5980 = vld [vmem:[%s5965 + $0x70] sm:$0xff]
        %v5981 = vld [vmem:[%s5965 + $0x78] sm:$0xff]
        %v5982 = vld [vmem:[#allocation4 + $0x2b] sm:$0x1]
        %v5983 = vlaneseq
        %v5984 = vshrl.u32 %v5983, 7
        %v5985 = vsub.s32 0, %v5984
        %v5986 = vrot.slane %v5982, %v5985
        %5987 = vmatprep.subr.mxu0 0.0
        %5988 = vmatpush1.msra.mxu0 %v5966
        %5989 = vmatprep.subr.mxu0 0.0
        %5990 = vmatpush1.msra.mxu0 %v5967
        %5991 = vmatprep.subr.mxu0 0.0
        %5992 = vmatpush1.msra.mxu0 %v5968
        %5993 = vmatprep.subr.mxu0 0.0
        %5994 = vmatpush1.msra.mxu0 %v5969
        %5995 = vmatprep.subr.mxu0 0.0
        %5996 = vmatpush1.msra.mxu0 %v5970
        %5997 = vmatprep.subr.mxu0 0.0
        %5998 = vmatpush1.msra.mxu0 %v5971
        %5999 = vmatprep.subr.mxu0 0.0
        %6000 = vmatpush1.msra.mxu0 %v5972
        %6001 = vmatprep.subr.mxu0 0.0
        %6002 = vmatpush1.msra.mxu0 %v5973
        %6003 = vmatprep.subr.mxu0 0.0
        %6004 = vmatpush1.msra.mxu0 %v5974
        %6005 = vmatprep.subr.mxu0 0.0
        %6006 = vmatpush1.msra.mxu0 %v5975
        %6007 = vmatprep.subr.mxu0 0.0
        %6008 = vmatpush1.msra.mxu0 %v5976
        %6009 = vmatprep.subr.mxu0 0.0
        %6010 = vmatpush1.msra.mxu0 %v5977
        %6011 = vmatprep.subr.mxu0 0.0
        %6012 = vmatpush1.msra.mxu0 %v5978
        %6013 = vmatprep.subr.mxu0 0.0
        %6014 = vmatpush1.msra.mxu0 %v5979
        %6015 = vmatprep.subr.mxu0 0.0
        %6016 = vmatpush1.msra.mxu0 %v5980
        %6017 = vmatprep.subr.mxu0 0.0
        %6018 = vmatpush1.msra.mxu0 %v5981
        %6019 = vmatprep.subr.mxu0 0.0
        %6020 = vmatpush1.msra.mxu0 0.0
        %6021 = vmatprep.subr.mxu0 0.0
        %6022 = vmatpush1.msra.mxu0 0.0
        %6023 = vmatprep.subr.mxu0 0.0
        %6024 = vmatpush1.msra.mxu0 0.0
        %6025 = vmatprep.subr.mxu0 0.0
        %6026 = vmatpush1.msra.mxu0 0.0
        %6027 = vmatprep.subr.mxu0 0.0
        %6028 = vmatpush1.msra.mxu0 0.0
        %6029 = vmatprep.subr.mxu0 0.0
        %6030 = vmatpush1.msra.mxu0 0.0
        %6031 = vmatprep.subr.mxu0 0.0
        %6032 = vmatpush1.msra.mxu0 0.0
        %6033 = vmatprep.subr.mxu0 0.0
        %6034 = vmatpush1.msra.mxu0 0.0
        %6035 = vmatprep.subr.mxu0 0.0
        %6036 = vmatpush1.msra.mxu0 0.0
        %6037 = vmatprep.subr.mxu0 0.0
        %6038 = vmatpush1.msra.mxu0 0.0
        %6039 = vmatprep.subr.mxu0 0.0
        %6040 = vmatpush1.msra.mxu0 0.0
        %6041 = vmatprep.subr.mxu0 0.0
        %6042 = vmatpush1.msra.mxu0 0.0
        %6043 = vmatprep.subr.mxu0 0.0
        %6044 = vmatpush1.msra.mxu0 0.0
        %6045 = vmatprep.subr.mxu0 0.0
        %6046 = vmatpush1.msra.mxu0 0.0
        %6047 = vmatprep.subr.mxu0 0.0
        %6048 = vmatpush1.msra.mxu0 0.0
        %6049 = vmatprep.subr.mxu0 0.0
        %6050 = vmatpush1.msra.mxu0 0.0
        %6051 = vmatprep.mubr.f32.mxu0 0.0
        %6052 = vmatmul.mubr.f32.gmra.mrb[0].mxu0 %v5780
        %v6053 = vpop.f32.mrb[0].mxu0
        %v6054 = vadd.f32 %v5986, %v6053
        %v6055 = vpop.f32.mrb[0].mxu0
        %6056 = vdwg.mxu0
        %v6057 = vmul.f32 %v5962, %v899
        %v6058 = vmul.f32 %v5962, %v903
        %v6059 = vmul.f32 %v5962, %v907
        %v6060 = vmul.f32 %v5962, %v911
        %v6061 = vmul.f32 %v6054, %v899
        %v6062 = vmul.f32 %v6054, %v903
        %v6063 = vmul.f32 %v6054, %v907
        %v6064 = vmul.f32 %v6054, %v911
        %6065 = vmatprep.subr.mxu0 0.0
        %6066 = vmatpush1.xpose.msra.mxu0 %v6057
        %6067 = vmatprep.subr.mxu0 0.0
        %6068 = vmatpush1.xpose.msra.mxu0 0.0
        %6069 = vmatprep.subr.mxu0 0.0
        %6070 = vmatpush1.xpose.msra.mxu0 0.0
        %6071 = vmatprep.subr.mxu0 0.0
        %6072 = vmatpush1.xpose.msra.mxu0 0.0
        %6073 = vmatprep.subr.mxu0 0.0
        %6074 = vmatpush1.xpose.msra.mxu0 0.0
        %6075 = vmatprep.subr.mxu0 0.0
        %6076 = vmatpush1.xpose.msra.mxu0 0.0
        %6077 = vmatprep.subr.mxu0 0.0
        %6078 = vmatpush1.xpose.msra.mxu0 0.0
        %6079 = vmatprep.subr.mxu0 0.0
        %6080 = vmatpush1.xpose.msra.mxu0 0.0
        %6081 = vmatprep.subr.mxu0 0.0
        %6082 = vmatpush1.xpose.msra.mxu0 0.0
        %6083 = vmatprep.subr.mxu0 0.0
        %6084 = vmatpush1.xpose.msra.mxu0 0.0
        %6085 = vmatprep.subr.mxu0 0.0
        %6086 = vmatpush1.xpose.msra.mxu0 0.0
        %6087 = vmatprep.subr.mxu0 0.0
        %6088 = vmatpush1.xpose.msra.mxu0 0.0
        %6089 = vmatprep.subr.mxu0 0.0
        %6090 = vmatpush1.xpose.msra.mxu0 0.0
        %6091 = vmatprep.subr.mxu0 0.0
        %6092 = vmatpush1.xpose.msra.mxu0 0.0
        %6093 = vmatprep.subr.mxu0 0.0
        %6094 = vmatpush1.xpose.msra.mxu0 0.0
        %6095 = vmatprep.subr.mxu0 0.0
        %6096 = vmatpush1.xpose.msra.mxu0 0.0
        %6097 = vmatprep.subr.mxu0 0.0
        %6098 = vmatpush1.xpose.msra.mxu0 0.0
        %6099 = vmatprep.subr.mxu0 0.0
        %6100 = vmatpush1.xpose.msra.mxu0 0.0
        %6101 = vmatprep.subr.mxu0 0.0
        %6102 = vmatpush1.xpose.msra.mxu0 0.0
        %6103 = vmatprep.subr.mxu0 0.0
        %6104 = vmatpush1.xpose.msra.mxu0 0.0
        %6105 = vmatprep.subr.mxu0 0.0
        %6106 = vmatpush1.xpose.msra.mxu0 0.0
        %6107 = vmatprep.subr.mxu0 0.0
        %6108 = vmatpush1.xpose.msra.mxu0 0.0
        %6109 = vmatprep.subr.mxu0 0.0
        %6110 = vmatpush1.xpose.msra.mxu0 0.0
        %6111 = vmatprep.subr.mxu0 0.0
        %6112 = vmatpush1.xpose.msra.mxu0 0.0
        %6113 = vmatprep.subr.mxu0 0.0
        %6114 = vmatpush1.xpose.msra.mxu0 0.0
        %6115 = vmatprep.subr.mxu0 0.0
        %6116 = vmatpush1.xpose.msra.mxu0 0.0
        %6117 = vmatprep.subr.mxu0 0.0
        %6118 = vmatpush1.xpose.msra.mxu0 0.0
        %6119 = vmatprep.subr.mxu0 0.0
        %6120 = vmatpush1.xpose.msra.mxu0 0.0
        %6121 = vmatprep.subr.mxu0 0.0
        %6122 = vmatpush1.xpose.msra.mxu0 0.0
        %6123 = vmatprep.subr.mxu0 0.0
        %6124 = vmatpush1.xpose.msra.mxu0 0.0
        %6125 = vmatprep.subr.mxu0 0.0
        %6126 = vmatpush1.xpose.msra.mxu0 0.0
        %6127 = vmatprep.subr.mxu0 0.0
        %6128 = vmatpush1.xpose.msra.mxu0 0.0
        %6129 = vmatprep.mubr.f32.mxu0 0.0
        %6130 = vmatmul.mubr.f32.gmra.mrb[0].mxu0 %v5870
        %v6131 = vpop.f32.mrb[0].mxu0
        %v6132 = vadd.f32 %v453, %v6131
        %v6133 = vpop.f32.mrb[0].mxu0
        %6134 = vdwg.mxu0
        %6135 = vmatprep.subr.mxu0 0.0
        %6136 = vmatpush1.xpose.msra.mxu0 %v6058
        %6137 = vmatprep.subr.mxu0 0.0
        %6138 = vmatpush1.xpose.msra.mxu0 0.0
        %6139 = vmatprep.subr.mxu0 0.0
        %6140 = vmatpush1.xpose.msra.mxu0 0.0
        %6141 = vmatprep.subr.mxu0 0.0
        %6142 = vmatpush1.xpose.msra.mxu0 0.0
        %6143 = vmatprep.subr.mxu0 0.0
        %6144 = vmatpush1.xpose.msra.mxu0 0.0
        %6145 = vmatprep.subr.mxu0 0.0
        %6146 = vmatpush1.xpose.msra.mxu0 0.0
        %6147 = vmatprep.subr.mxu0 0.0
        %6148 = vmatpush1.xpose.msra.mxu0 0.0
        %6149 = vmatprep.subr.mxu0 0.0
        %6150 = vmatpush1.xpose.msra.mxu0 0.0
        %6151 = vmatprep.subr.mxu0 0.0
        %6152 = vmatpush1.xpose.msra.mxu0 0.0
        %6153 = vmatprep.subr.mxu0 0.0
        %6154 = vmatpush1.xpose.msra.mxu0 0.0
        %6155 = vmatprep.subr.mxu0 0.0
        %6156 = vmatpush1.xpose.msra.mxu0 0.0
        %6157 = vmatprep.subr.mxu0 0.0
        %6158 = vmatpush1.xpose.msra.mxu0 0.0
        %6159 = vmatprep.subr.mxu0 0.0
        %6160 = vmatpush1.xpose.msra.mxu0 0.0
        %6161 = vmatprep.subr.mxu0 0.0
        %6162 = vmatpush1.xpose.msra.mxu0 0.0
        %6163 = vmatprep.subr.mxu0 0.0
        %6164 = vmatpush1.xpose.msra.mxu0 0.0
        %6165 = vmatprep.subr.mxu0 0.0
        %6166 = vmatpush1.xpose.msra.mxu0 0.0
        %6167 = vmatprep.subr.mxu0 0.0
        %6168 = vmatpush1.xpose.msra.mxu0 0.0
        %6169 = vmatprep.subr.mxu0 0.0
        %6170 = vmatpush1.xpose.msra.mxu0 0.0
        %6171 = vmatprep.subr.mxu0 0.0
        %6172 = vmatpush1.xpose.msra.mxu0 0.0
        %6173 = vmatprep.subr.mxu0 0.0
        %6174 = vmatpush1.xpose.msra.mxu0 0.0
        %6175 = vmatprep.subr.mxu0 0.0
        %6176 = vmatpush1.xpose.msra.mxu0 0.0
        %6177 = vmatprep.subr.mxu0 0.0
        %6178 = vmatpush1.xpose.msra.mxu0 0.0
        %6179 = vmatprep.subr.mxu0 0.0
        %6180 = vmatpush1.xpose.msra.mxu0 0.0
        %6181 = vmatprep.subr.mxu0 0.0
        %6182 = vmatpush1.xpose.msra.mxu0 0.0
        %6183 = vmatprep.subr.mxu0 0.0
        %6184 = vmatpush1.xpose.msra.mxu0 0.0
        %6185 = vmatprep.subr.mxu0 0.0
        %6186 = vmatpush1.xpose.msra.mxu0 0.0
        %6187 = vmatprep.subr.mxu0 0.0
        %6188 = vmatpush1.xpose.msra.mxu0 0.0
        %6189 = vmatprep.subr.mxu0 0.0
        %6190 = vmatpush1.xpose.msra.mxu0 0.0
        %6191 = vmatprep.subr.mxu0 0.0
        %6192 = vmatpush1.xpose.msra.mxu0 0.0
        %6193 = vmatprep.subr.mxu0 0.0
        %6194 = vmatpush1.xpose.msra.mxu0 0.0
        %6195 = vmatprep.subr.mxu0 0.0
        %6196 = vmatpush1.xpose.msra.mxu0 0.0
        %6197 = vmatprep.subr.mxu0 0.0
        %6198 = vmatpush1.xpose.msra.mxu0 0.0
        %6199 = vmatprep.mubr.f32.mxu0 0.0
        %6200 = vmatmul.mubr.f32.gmra.mrb[0].mxu0 %v5870
        %v6201 = vpop.f32.mrb[0].mxu0
        %v6202 = vadd.f32 %v453, %v6201
        %v6203 = vpop.f32.mrb[0].mxu0
        %6204 = vdwg.mxu0
        %6205 = vmatprep.subr.mxu0 0.0
        %6206 = vmatpush1.xpose.msra.mxu0 %v6059
        %6207 = vmatprep.subr.mxu0 0.0
        %6208 = vmatpush1.xpose.msra.mxu0 0.0
        %6209 = vmatprep.subr.mxu0 0.0
        %6210 = vmatpush1.xpose.msra.mxu0 0.0
        %6211 = vmatprep.subr.mxu0 0.0
        %6212 = vmatpush1.xpose.msra.mxu0 0.0
        %6213 = vmatprep.subr.mxu0 0.0
        %6214 = vmatpush1.xpose.msra.mxu0 0.0
        %6215 = vmatprep.subr.mxu0 0.0
        %6216 = vmatpush1.xpose.msra.mxu0 0.0
        %6217 = vmatprep.subr.mxu0 0.0
        %6218 = vmatpush1.xpose.msra.mxu0 0.0
        %6219 = vmatprep.subr.mxu0 0.0
        %6220 = vmatpush1.xpose.msra.mxu0 0.0
        %6221 = vmatprep.subr.mxu0 0.0
        %6222 = vmatpush1.xpose.msra.mxu0 0.0
        %6223 = vmatprep.subr.mxu0 0.0
        %6224 = vmatpush1.xpose.msra.mxu0 0.0
        %6225 = vmatprep.subr.mxu0 0.0
        %6226 = vmatpush1.xpose.msra.mxu0 0.0
        %6227 = vmatprep.subr.mxu0 0.0
        %6228 = vmatpush1.xpose.msra.mxu0 0.0
        %6229 = vmatprep.subr.mxu0 0.0
        %6230 = vmatpush1.xpose.msra.mxu0 0.0
        %6231 = vmatprep.subr.mxu0 0.0
        %6232 = vmatpush1.xpose.msra.mxu0 0.0
        %6233 = vmatprep.subr.mxu0 0.0
        %6234 = vmatpush1.xpose.msra.mxu0 0.0
        %6235 = vmatprep.subr.mxu0 0.0
        %6236 = vmatpush1.xpose.msra.mxu0 0.0
        %6237 = vmatprep.subr.mxu0 0.0
        %6238 = vmatpush1.xpose.msra.mxu0 0.0
        %6239 = vmatprep.subr.mxu0 0.0
        %6240 = vmatpush1.xpose.msra.mxu0 0.0
        %6241 = vmatprep.subr.mxu0 0.0
        %6242 = vmatpush1.xpose.msra.mxu0 0.0
        %6243 = vmatprep.subr.mxu0 0.0
        %6244 = vmatpush1.xpose.msra.mxu0 0.0
        %6245 = vmatprep.subr.mxu0 0.0
        %6246 = vmatpush1.xpose.msra.mxu0 0.0
        %6247 = vmatprep.subr.mxu0 0.0
        %6248 = vmatpush1.xpose.msra.mxu0 0.0
        %6249 = vmatprep.subr.mxu0 0.0
        %6250 = vmatpush1.xpose.msra.mxu0 0.0
        %6251 = vmatprep.subr.mxu0 0.0
        %6252 = vmatpush1.xpose.msra.mxu0 0.0
        %6253 = vmatprep.subr.mxu0 0.0
        %6254 = vmatpush1.xpose.msra.mxu0 0.0
        %6255 = vmatprep.subr.mxu0 0.0
        %6256 = vmatpush1.xpose.msra.mxu0 0.0
        %6257 = vmatprep.subr.mxu0 0.0
        %6258 = vmatpush1.xpose.msra.mxu0 0.0
        %6259 = vmatprep.subr.mxu0 0.0
        %6260 = vmatpush1.xpose.msra.mxu0 0.0
        %6261 = vmatprep.subr.mxu0 0.0
        %6262 = vmatpush1.xpose.msra.mxu0 0.0
        %6263 = vmatprep.subr.mxu0 0.0
        %6264 = vmatpush1.xpose.msra.mxu0 0.0
        %6265 = vmatprep.subr.mxu0 0.0
        %6266 = vmatpush1.xpose.msra.mxu0 0.0
        %6267 = vmatprep.subr.mxu0 0.0
        %6268 = vmatpush1.xpose.msra.mxu0 0.0
        %6269 = vmatprep.mubr.f32.mxu0 0.0
        %6270 = vmatmul.mubr.f32.gmra.mrb[0].mxu0 %v5870
        %v6271 = vpop.f32.mrb[0].mxu0
        %v6272 = vadd.f32 %v453, %v6271
        %v6273 = vpop.f32.mrb[0].mxu0
        %6274 = vdwg.mxu0
        %6275 = vmatprep.subr.mxu0 0.0
        %6276 = vmatpush1.xpose.msra.mxu0 %v6060
        %6277 = vmatprep.subr.mxu0 0.0
        %6278 = vmatpush1.xpose.msra.mxu0 0.0
        %6279 = vmatprep.subr.mxu0 0.0
        %6280 = vmatpush1.xpose.msra.mxu0 0.0
        %6281 = vmatprep.subr.mxu0 0.0
        %6282 = vmatpush1.xpose.msra.mxu0 0.0
        %6283 = vmatprep.subr.mxu0 0.0
        %6284 = vmatpush1.xpose.msra.mxu0 0.0
        %6285 = vmatprep.subr.mxu0 0.0
        %6286 = vmatpush1.xpose.msra.mxu0 0.0
        %6287 = vmatprep.subr.mxu0 0.0
        %6288 = vmatpush1.xpose.msra.mxu0 0.0
        %6289 = vmatprep.subr.mxu0 0.0
        %6290 = vmatpush1.xpose.msra.mxu0 0.0
        %6291 = vmatprep.subr.mxu0 0.0
        %6292 = vmatpush1.xpose.msra.mxu0 0.0
        %6293 = vmatprep.subr.mxu0 0.0
        %6294 = vmatpush1.xpose.msra.mxu0 0.0
        %6295 = vmatprep.subr.mxu0 0.0
        %6296 = vmatpush1.xpose.msra.mxu0 0.0
        %6297 = vmatprep.subr.mxu0 0.0
        %6298 = vmatpush1.xpose.msra.mxu0 0.0
        %6299 = vmatprep.subr.mxu0 0.0
        %6300 = vmatpush1.xpose.msra.mxu0 0.0
        %6301 = vmatprep.subr.mxu0 0.0
        %6302 = vmatpush1.xpose.msra.mxu0 0.0
        %6303 = vmatprep.subr.mxu0 0.0
        %6304 = vmatpush1.xpose.msra.mxu0 0.0
        %6305 = vmatprep.subr.mxu0 0.0
        %6306 = vmatpush1.xpose.msra.mxu0 0.0
        %6307 = vmatprep.subr.mxu0 0.0
        %6308 = vmatpush1.xpose.msra.mxu0 0.0
        %6309 = vmatprep.subr.mxu0 0.0
        %6310 = vmatpush1.xpose.msra.mxu0 0.0
        %6311 = vmatprep.subr.mxu0 0.0
        %6312 = vmatpush1.xpose.msra.mxu0 0.0
        %6313 = vmatprep.subr.mxu0 0.0
        %6314 = vmatpush1.xpose.msra.mxu0 0.0
        %6315 = vmatprep.subr.mxu0 0.0
        %6316 = vmatpush1.xpose.msra.mxu0 0.0
        %6317 = vmatprep.subr.mxu0 0.0
        %6318 = vmatpush1.xpose.msra.mxu0 0.0
        %6319 = vmatprep.subr.mxu0 0.0
        %6320 = vmatpush1.xpose.msra.mxu0 0.0
        %6321 = vmatprep.subr.mxu0 0.0
        %6322 = vmatpush1.xpose.msra.mxu0 0.0
        %6323 = vmatprep.subr.mxu0 0.0
        %6324 = vmatpush1.xpose.msra.mxu0 0.0
        %6325 = vmatprep.subr.mxu0 0.0
        %6326 = vmatpush1.xpose.msra.mxu0 0.0
        %6327 = vmatprep.subr.mxu0 0.0
        %6328 = vmatpush1.xpose.msra.mxu0 0.0
        %6329 = vmatprep.subr.mxu0 0.0
        %6330 = vmatpush1.xpose.msra.mxu0 0.0
        %6331 = vmatprep.subr.mxu0 0.0
        %6332 = vmatpush1.xpose.msra.mxu0 0.0
        %6333 = vmatprep.subr.mxu0 0.0
        %6334 = vmatpush1.xpose.msra.mxu0 0.0
        %6335 = vmatprep.subr.mxu0 0.0
        %6336 = vmatpush1.xpose.msra.mxu0 0.0
        %6337 = vmatprep.subr.mxu0 0.0
        %6338 = vmatpush1.xpose.msra.mxu0 0.0
        %6339 = vmatprep.mubr.f32.mxu0 0.0
        %6340 = vmatmul.mubr.f32.gmra.mrb[0].mxu0 %v5870
        %v6341 = vpop.f32.mrb[0].mxu0
        %v6342 = vadd.f32 %v453, %v6341
        %v6343 = vpop.f32.mrb[0].mxu0
        %6344 = vdwg.mxu0
        %v6345 = vmul.f32 %v6132, 1.442695
        %v6346 = vpow.pop %v6345
        %v6347 = vmul.f32 %v6202, 1.442695
        %v6348 = vpow.pop %v6347
        %v6349 = vmul.f32 %v6272, 1.442695
        %v6350 = vpow.pop %v6349
        %v6351 = vmul.f32 %v6342, 1.442695
        %v6352 = vpow.pop %v6351
        %v6353 = vsel %vm4095, %v6346, 0.0
        %6354 = vadd.xlane.f32.xlu0 %v6353
        %v6355 = vpop.xlane.xlu0 %6354
        %v6356 = vsel %vm4095, %v6348, 0.0
        %6357 = vadd.xlane.f32.xlu0 %v6356
        %v6358 = vpop.xlane.xlu0 %6357
        %v6359 = vsel %vm4095, %v6350, 0.0
        %6360 = vadd.xlane.f32.xlu0 %v6359
        %v6361 = vpop.xlane.xlu0 %6360
        %v6362 = vsel %vm4095, %v6352, 0.0
        %6363 = vadd.xlane.f32.xlu0 %v6362
        %v6364 = vpop.xlane.xlu0 %6363
        %v6365 = vrcp.pop %v6355
        %v6366 = vrcp.pop %v6358
        %v6367 = vrcp.pop %v6361
        %v6368 = vrcp.pop %v6364
        %v6369 = vmul.f32 %v6346, %v6365
        %v6370 = vmul.f32 %v6348, %v6366
        %v6371 = vmul.f32 %v6350, %v6367
        %v6372 = vmul.f32 %v6352, %v6368
        %v6374 = vsel %vm4095, %v6369, 0
        %6376 = vmatprep.subr.mxu0 0.0
        %6377 = vmatpush1.msra.mxu0 %v6061
        %6378 = vmatprep.subr.mxu0 0.0
        %6379 = vmatpush1.msra.mxu0 0.0
        %6380 = vmatprep.subr.mxu0 0.0
        %6381 = vmatpush1.msra.mxu0 0.0
        %6382 = vmatprep.subr.mxu0 0.0
        %6383 = vmatpush1.msra.mxu0 0.0
        %6384 = vmatprep.subr.mxu0 0.0
        %6385 = vmatpush1.msra.mxu0 0.0
        %6386 = vmatprep.subr.mxu0 0.0
        %6387 = vmatpush1.msra.mxu0 0.0
        %6388 = vmatprep.subr.mxu0 0.0
        %6389 = vmatpush1.msra.mxu0 0.0
        %6390 = vmatprep.subr.mxu0 0.0
        %6391 = vmatpush1.msra.mxu0 0.0
        %6392 = vmatprep.subr.mxu0 0.0
        %6393 = vmatpush1.msra.mxu0 0.0
        %6394 = vmatprep.subr.mxu0 0.0
        %6395 = vmatpush1.msra.mxu0 0.0
        %6396 = vmatprep.subr.mxu0 0.0
        %6397 = vmatpush1.msra.mxu0 0.0
        %6398 = vmatprep.subr.mxu0 0.0
        %6399 = vmatpush1.msra.mxu0 0.0
        %6400 = vmatprep.subr.mxu0 0.0
        %6401 = vmatpush1.msra.mxu0 0.0
        %6402 = vmatprep.subr.mxu0 0.0
        %6403 = vmatpush1.msra.mxu0 0.0
        %6404 = vmatprep.subr.mxu0 0.0
        %6405 = vmatpush1.msra.mxu0 0.0
        %6406 = vmatprep.subr.mxu0 0.0
        %6407 = vmatpush1.msra.mxu0 0.0
        %6408 = vmatprep.subr.mxu0 0.0
        %6409 = vmatpush1.msra.mxu0 0.0
        %6410 = vmatprep.subr.mxu0 0.0
        %6411 = vmatpush1.msra.mxu0 0.0
        %6412 = vmatprep.subr.mxu0 0.0
        %6413 = vmatpush1.msra.mxu0 0.0
        %6414 = vmatprep.subr.mxu0 0.0
        %6415 = vmatpush1.msra.mxu0 0.0
        %6416 = vmatprep.subr.mxu0 0.0
        %6417 = vmatpush1.msra.mxu0 0.0
        %6418 = vmatprep.subr.mxu0 0.0
        %6419 = vmatpush1.msra.mxu0 0.0
        %6420 = vmatprep.subr.mxu0 0.0
        %6421 = vmatpush1.msra.mxu0 0.0
        %6422 = vmatprep.subr.mxu0 0.0
        %6423 = vmatpush1.msra.mxu0 0.0
        %6424 = vmatprep.subr.mxu0 0.0
        %6425 = vmatpush1.msra.mxu0 0.0
        %6426 = vmatprep.subr.mxu0 0.0
        %6427 = vmatpush1.msra.mxu0 0.0
        %6428 = vmatprep.subr.mxu0 0.0
        %6429 = vmatpush1.msra.mxu0 0.0
        %6430 = vmatprep.subr.mxu0 0.0
        %6431 = vmatpush1.msra.mxu0 0.0
        %6432 = vmatprep.subr.mxu0 0.0
        %6433 = vmatpush1.msra.mxu0 0.0
        %6434 = vmatprep.subr.mxu0 0.0
        %6435 = vmatpush1.msra.mxu0 0.0
        %6436 = vmatprep.subr.mxu0 0.0
        %6437 = vmatpush1.msra.mxu0 0.0
        %6438 = vmatprep.subr.mxu0 0.0
        %6439 = vmatpush1.msra.mxu0 0.0
        %6440 = vmatprep.mubr.f32.mxu0 0.0
        %6441 = vmatmul.mubr.f32.gmra.mrb[0].mxu0 %v6374
        %v6442 = vpop.f32.mrb[0].mxu0
        %v6443 = vadd.f32 0.0, %v6442
        %v6444 = vpop.f32.mrb[0].mxu0
        %6445 = vdwg.mxu0
        %v6447 = vsel %vm4095, %v6370, 0
        %6449 = vmatprep.subr.mxu0 0.0
        %6450 = vmatpush1.msra.mxu0 %v6062
        %6451 = vmatprep.subr.mxu0 0.0
        %6452 = vmatpush1.msra.mxu0 0.0
        %6453 = vmatprep.subr.mxu0 0.0
        %6454 = vmatpush1.msra.mxu0 0.0
        %6455 = vmatprep.subr.mxu0 0.0
        %6456 = vmatpush1.msra.mxu0 0.0
        %6457 = vmatprep.subr.mxu0 0.0
        %6458 = vmatpush1.msra.mxu0 0.0
        %6459 = vmatprep.subr.mxu0 0.0
        %6460 = vmatpush1.msra.mxu0 0.0
        %6461 = vmatprep.subr.mxu0 0.0
        %6462 = vmatpush1.msra.mxu0 0.0
        %6463 = vmatprep.subr.mxu0 0.0
        %6464 = vmatpush1.msra.mxu0 0.0
        %6465 = vmatprep.subr.mxu0 0.0
        %6466 = vmatpush1.msra.mxu0 0.0
        %6467 = vmatprep.subr.mxu0 0.0
        %6468 = vmatpush1.msra.mxu0 0.0
        %6469 = vmatprep.subr.mxu0 0.0
        %6470 = vmatpush1.msra.mxu0 0.0
        %6471 = vmatprep.subr.mxu0 0.0
        %6472 = vmatpush1.msra.mxu0 0.0
        %6473 = vmatprep.subr.mxu0 0.0
        %6474 = vmatpush1.msra.mxu0 0.0
        %6475 = vmatprep.subr.mxu0 0.0
        %6476 = vmatpush1.msra.mxu0 0.0
        %6477 = vmatprep.subr.mxu0 0.0
        %6478 = vmatpush1.msra.mxu0 0.0
        %6479 = vmatprep.subr.mxu0 0.0
        %6480 = vmatpush1.msra.mxu0 0.0
        %6481 = vmatprep.subr.mxu0 0.0
        %6482 = vmatpush1.msra.mxu0 0.0
        %6483 = vmatprep.subr.mxu0 0.0
        %6484 = vmatpush1.msra.mxu0 0.0
        %6485 = vmatprep.subr.mxu0 0.0
        %6486 = vmatpush1.msra.mxu0 0.0
        %6487 = vmatprep.subr.mxu0 0.0
        %6488 = vmatpush1.msra.mxu0 0.0
        %6489 = vmatprep.subr.mxu0 0.0
        %6490 = vmatpush1.msra.mxu0 0.0
        %6491 = vmatprep.subr.mxu0 0.0
        %6492 = vmatpush1.msra.mxu0 0.0
        %6493 = vmatprep.subr.mxu0 0.0
        %6494 = vmatpush1.msra.mxu0 0.0
        %6495 = vmatprep.subr.mxu0 0.0
        %6496 = vmatpush1.msra.mxu0 0.0
        %6497 = vmatprep.subr.mxu0 0.0
        %6498 = vmatpush1.msra.mxu0 0.0
        %6499 = vmatprep.subr.mxu0 0.0
        %6500 = vmatpush1.msra.mxu0 0.0
        %6501 = vmatprep.subr.mxu0 0.0
        %6502 = vmatpush1.msra.mxu0 0.0
        %6503 = vmatprep.subr.mxu0 0.0
        %6504 = vmatpush1.msra.mxu0 0.0
        %6505 = vmatprep.subr.mxu0 0.0
        %6506 = vmatpush1.msra.mxu0 0.0
        %6507 = vmatprep.subr.mxu0 0.0
        %6508 = vmatpush1.msra.mxu0 0.0
        %6509 = vmatprep.subr.mxu0 0.0
        %6510 = vmatpush1.msra.mxu0 0.0
        %6511 = vmatprep.subr.mxu0 0.0
        %6512 = vmatpush1.msra.mxu0 0.0
        %6513 = vmatprep.mubr.f32.mxu0 0.0
        %6514 = vmatmul.mubr.f32.gmra.mrb[0].mxu0 %v6447
        %v6515 = vpop.f32.mrb[0].mxu0
        %v6516 = vadd.f32 0.0, %v6515
        %v6517 = vpop.f32.mrb[0].mxu0
        %6518 = vdwg.mxu0
        %v6520 = vsel %vm4095, %v6371, 0
        %6522 = vmatprep.subr.mxu0 0.0
        %6523 = vmatpush1.msra.mxu0 %v6063
        %6524 = vmatprep.subr.mxu0 0.0
        %6525 = vmatpush1.msra.mxu0 0.0
        %6526 = vmatprep.subr.mxu0 0.0
        %6527 = vmatpush1.msra.mxu0 0.0
        %6528 = vmatprep.subr.mxu0 0.0
        %6529 = vmatpush1.msra.mxu0 0.0
        %6530 = vmatprep.subr.mxu0 0.0
        %6531 = vmatpush1.msra.mxu0 0.0
        %6532 = vmatprep.subr.mxu0 0.0
        %6533 = vmatpush1.msra.mxu0 0.0
        %6534 = vmatprep.subr.mxu0 0.0
        %6535 = vmatpush1.msra.mxu0 0.0
        %6536 = vmatprep.subr.mxu0 0.0
        %6537 = vmatpush1.msra.mxu0 0.0
        %6538 = vmatprep.subr.mxu0 0.0
        %6539 = vmatpush1.msra.mxu0 0.0
        %6540 = vmatprep.subr.mxu0 0.0
        %6541 = vmatpush1.msra.mxu0 0.0
        %6542 = vmatprep.subr.mxu0 0.0
        %6543 = vmatpush1.msra.mxu0 0.0
        %6544 = vmatprep.subr.mxu0 0.0
        %6545 = vmatpush1.msra.mxu0 0.0
        %6546 = vmatprep.subr.mxu0 0.0
        %6547 = vmatpush1.msra.mxu0 0.0
        %6548 = vmatprep.subr.mxu0 0.0
        %6549 = vmatpush1.msra.mxu0 0.0
        %6550 = vmatprep.subr.mxu0 0.0
        %6551 = vmatpush1.msra.mxu0 0.0
        %6552 = vmatprep.subr.mxu0 0.0
        %6553 = vmatpush1.msra.mxu0 0.0
        %6554 = vmatprep.subr.mxu0 0.0
        %6555 = vmatpush1.msra.mxu0 0.0
        %6556 = vmatprep.subr.mxu0 0.0
        %6557 = vmatpush1.msra.mxu0 0.0
        %6558 = vmatprep.subr.mxu0 0.0
        %6559 = vmatpush1.msra.mxu0 0.0
        %6560 = vmatprep.subr.mxu0 0.0
        %6561 = vmatpush1.msra.mxu0 0.0
        %6562 = vmatprep.subr.mxu0 0.0
        %6563 = vmatpush1.msra.mxu0 0.0
        %6564 = vmatprep.subr.mxu0 0.0
        %6565 = vmatpush1.msra.mxu0 0.0
        %6566 = vmatprep.subr.mxu0 0.0
        %6567 = vmatpush1.msra.mxu0 0.0
        %6568 = vmatprep.subr.mxu0 0.0
        %6569 = vmatpush1.msra.mxu0 0.0
        %6570 = vmatprep.subr.mxu0 0.0
        %6571 = vmatpush1.msra.mxu0 0.0
        %6572 = vmatprep.subr.mxu0 0.0
        %6573 = vmatpush1.msra.mxu0 0.0
        %6574 = vmatprep.subr.mxu0 0.0
        %6575 = vmatpush1.msra.mxu0 0.0
        %6576 = vmatprep.subr.mxu0 0.0
        %6577 = vmatpush1.msra.mxu0 0.0
        %6578 = vmatprep.subr.mxu0 0.0
        %6579 = vmatpush1.msra.mxu0 0.0
        %6580 = vmatprep.subr.mxu0 0.0
        %6581 = vmatpush1.msra.mxu0 0.0
        %6582 = vmatprep.subr.mxu0 0.0
        %6583 = vmatpush1.msra.mxu0 0.0
        %6584 = vmatprep.subr.mxu0 0.0
        %6585 = vmatpush1.msra.mxu0 0.0
        %6586 = vmatprep.mubr.f32.mxu0 0.0
        %6587 = vmatmul.mubr.f32.gmra.mrb[0].mxu0 %v6520
        %v6588 = vpop.f32.mrb[0].mxu0
        %v6589 = vadd.f32 0.0, %v6588
        %v6590 = vpop.f32.mrb[0].mxu0
        %6591 = vdwg.mxu0
        %v6593 = vsel %vm4095, %v6372, 0
        %6595 = vmatprep.subr.mxu0 0.0
        %6596 = vmatpush1.msra.mxu0 %v6064
        %6597 = vmatprep.subr.mxu0 0.0
        %6598 = vmatpush1.msra.mxu0 0.0
        %6599 = vmatprep.subr.mxu0 0.0
        %6600 = vmatpush1.msra.mxu0 0.0
        %6601 = vmatprep.subr.mxu0 0.0
        %6602 = vmatpush1.msra.mxu0 0.0
        %6603 = vmatprep.subr.mxu0 0.0
        %6604 = vmatpush1.msra.mxu0 0.0
        %6605 = vmatprep.subr.mxu0 0.0
        %6606 = vmatpush1.msra.mxu0 0.0
        %6607 = vmatprep.subr.mxu0 0.0
        %6608 = vmatpush1.msra.mxu0 0.0
        %6609 = vmatprep.subr.mxu0 0.0
        %6610 = vmatpush1.msra.mxu0 0.0
        %6611 = vmatprep.subr.mxu0 0.0
        %6612 = vmatpush1.msra.mxu0 0.0
        %6613 = vmatprep.subr.mxu0 0.0
        %6614 = vmatpush1.msra.mxu0 0.0
        %6615 = vmatprep.subr.mxu0 0.0
        %6616 = vmatpush1.msra.mxu0 0.0
        %6617 = vmatprep.subr.mxu0 0.0
        %6618 = vmatpush1.msra.mxu0 0.0
        %6619 = vmatprep.subr.mxu0 0.0
        %6620 = vmatpush1.msra.mxu0 0.0
        %6621 = vmatprep.subr.mxu0 0.0
        %6622 = vmatpush1.msra.mxu0 0.0
        %6623 = vmatprep.subr.mxu0 0.0
        %6624 = vmatpush1.msra.mxu0 0.0
        %6625 = vmatprep.subr.mxu0 0.0
        %6626 = vmatpush1.msra.mxu0 0.0
        %6627 = vmatprep.subr.mxu0 0.0
        %6628 = vmatpush1.msra.mxu0 0.0
        %6629 = vmatprep.subr.mxu0 0.0
        %6630 = vmatpush1.msra.mxu0 0.0
        %6631 = vmatprep.subr.mxu0 0.0
        %6632 = vmatpush1.msra.mxu0 0.0
        %6633 = vmatprep.subr.mxu0 0.0
        %6634 = vmatpush1.msra.mxu0 0.0
        %6635 = vmatprep.subr.mxu0 0.0
        %6636 = vmatpush1.msra.mxu0 0.0
        %6637 = vmatprep.subr.mxu0 0.0
        %6638 = vmatpush1.msra.mxu0 0.0
        %6639 = vmatprep.subr.mxu0 0.0
        %6640 = vmatpush1.msra.mxu0 0.0
        %6641 = vmatprep.subr.mxu0 0.0
        %6642 = vmatpush1.msra.mxu0 0.0
        %6643 = vmatprep.subr.mxu0 0.0
        %6644 = vmatpush1.msra.mxu0 0.0
        %6645 = vmatprep.subr.mxu0 0.0
        %6646 = vmatpush1.msra.mxu0 0.0
        %6647 = vmatprep.subr.mxu0 0.0
        %6648 = vmatpush1.msra.mxu0 0.0
        %6649 = vmatprep.subr.mxu0 0.0
        %6650 = vmatpush1.msra.mxu0 0.0
        %6651 = vmatprep.subr.mxu0 0.0
        %6652 = vmatpush1.msra.mxu0 0.0
        %6653 = vmatprep.subr.mxu0 0.0
        %6654 = vmatpush1.msra.mxu0 0.0
        %6655 = vmatprep.subr.mxu0 0.0
        %6656 = vmatpush1.msra.mxu0 0.0
        %6657 = vmatprep.subr.mxu0 0.0
        %6658 = vmatpush1.msra.mxu0 0.0
        %6659 = vmatprep.mubr.f32.mxu0 0.0
        %6660 = vmatmul.mubr.f32.gmra.mrb[0].mxu0 %v6593
        %v6661 = vpop.f32.mrb[0].mxu0
        %v6662 = vadd.f32 0.0, %v6661
        %v6663 = vpop.f32.mrb[0].mxu0
        %6664 = vdwg.mxu0
        %v6665 = vadd.f32 %v6443, %v6516
        %v6666 = vadd.f32 %v6665, %v6589
        %v6667 = vadd.f32 %v6666, %v6662
        %s6668 = scalar_lea.vmem [#allocation2], 3584
        %v6669 = vld [vmem:[%s6668] sm:$0xff]
        %v6670 = vld [vmem:[%s6668 + $0x8] sm:$0xff]
        %v6671 = vld [vmem:[%s6668 + $0x10] sm:$0xff]
        %v6672 = vld [vmem:[%s6668 + $0x18] sm:$0xff]
        %v6673 = vld [vmem:[%s6668 + $0x20] sm:$0xff]
        %v6674 = vld [vmem:[%s6668 + $0x28] sm:$0xff]
        %v6675 = vld [vmem:[%s6668 + $0x30] sm:$0xff]
        %v6676 = vld [vmem:[%s6668 + $0x38] sm:$0xff]
        %v6677 = vld [vmem:[%s6668 + $0x40] sm:$0xff]
        %v6678 = vld [vmem:[%s6668 + $0x48] sm:$0xff]
        %v6679 = vld [vmem:[%s6668 + $0x50] sm:$0xff]
        %v6680 = vld [vmem:[%s6668 + $0x58] sm:$0xff]
        %v6681 = vld [vmem:[%s6668 + $0x60] sm:$0xff]
        %v6682 = vld [vmem:[%s6668 + $0x68] sm:$0xff]
        %v6683 = vld [vmem:[%s6668 + $0x70] sm:$0xff]
        %v6684 = vld [vmem:[%s6668 + $0x78] sm:$0xff]
        %v6685 = vld [vmem:[#allocation4 + $0x2c] sm:$0x1]
        %v6686 = vlaneseq
        %v6687 = vshrl.u32 %v6686, 7
        %v6688 = vsub.s32 0, %v6687
        %v6689 = vrot.slane %v6685, %v6688
        %6690 = vmatprep.subr.mxu0 0.0
        %6691 = vmatpush1.msra.mxu0 %v6669
        %6692 = vmatprep.subr.mxu0 0.0
        %6693 = vmatpush1.msra.mxu0 %v6670
        %6694 = vmatprep.subr.mxu0 0.0
        %6695 = vmatpush1.msra.mxu0 %v6671
        %6696 = vmatprep.subr.mxu0 0.0
        %6697 = vmatpush1.msra.mxu0 %v6672
        %6698 = vmatprep.subr.mxu0 0.0
        %6699 = vmatpush1.msra.mxu0 %v6673
        %6700 = vmatprep.subr.mxu0 0.0
        %6701 = vmatpush1.msra.mxu0 %v6674
        %6702 = vmatprep.subr.mxu0 0.0
        %6703 = vmatpush1.msra.mxu0 %v6675
        %6704 = vmatprep.subr.mxu0 0.0
        %6705 = vmatpush1.msra.mxu0 %v6676
        %6706 = vmatprep.subr.mxu0 0.0
        %6707 = vmatpush1.msra.mxu0 %v6677
        %6708 = vmatprep.subr.mxu0 0.0
        %6709 = vmatpush1.msra.mxu0 %v6678
        %6710 = vmatprep.subr.mxu0 0.0
        %6711 = vmatpush1.msra.mxu0 %v6679
        %6712 = vmatprep.subr.mxu0 0.0
        %6713 = vmatpush1.msra.mxu0 %v6680
        %6714 = vmatprep.subr.mxu0 0.0
        %6715 = vmatpush1.msra.mxu0 %v6681
        %6716 = vmatprep.subr.mxu0 0.0
        %6717 = vmatpush1.msra.mxu0 %v6682
        %6718 = vmatprep.subr.mxu0 0.0
        %6719 = vmatpush1.msra.mxu0 %v6683
        %6720 = vmatprep.subr.mxu0 0.0
        %6721 = vmatpush1.msra.mxu0 %v6684
        %6722 = vmatprep.subr.mxu0 0.0
        %6723 = vmatpush1.msra.mxu0 0.0
        %6724 = vmatprep.subr.mxu0 0.0
        %6725 = vmatpush1.msra.mxu0 0.0
        %6726 = vmatprep.subr.mxu0 0.0
        %6727 = vmatpush1.msra.mxu0 0.0
        %6728 = vmatprep.subr.mxu0 0.0
        %6729 = vmatpush1.msra.mxu0 0.0
        %6730 = vmatprep.subr.mxu0 0.0
        %6731 = vmatpush1.msra.mxu0 0.0
        %6732 = vmatprep.subr.mxu0 0.0
        %6733 = vmatpush1.msra.mxu0 0.0
        %6734 = vmatprep.subr.mxu0 0.0
        %6735 = vmatpush1.msra.mxu0 0.0
        %6736 = vmatprep.subr.mxu0 0.0
        %6737 = vmatpush1.msra.mxu0 0.0
        %6738 = vmatprep.subr.mxu0 0.0
        %6739 = vmatpush1.msra.mxu0 0.0
        %6740 = vmatprep.subr.mxu0 0.0
        %6741 = vmatpush1.msra.mxu0 0.0
        %6742 = vmatprep.subr.mxu0 0.0
        %6743 = vmatpush1.msra.mxu0 0.0
        %6744 = vmatprep.subr.mxu0 0.0
        %6745 = vmatpush1.msra.mxu0 0.0
        %6746 = vmatprep.subr.mxu0 0.0
        %6747 = vmatpush1.msra.mxu0 0.0
        %6748 = vmatprep.subr.mxu0 0.0
        %6749 = vmatpush1.msra.mxu0 0.0
        %6750 = vmatprep.subr.mxu0 0.0
        %6751 = vmatpush1.msra.mxu0 0.0
        %6752 = vmatprep.subr.mxu0 0.0
        %6753 = vmatpush1.msra.mxu0 0.0
        %6754 = vmatprep.mubr.f32.mxu0 0.0
        %6755 = vmatmul.mubr.f32.gmra.mrb[0].mxu0 %v6667
        %v6756 = vpop.f32.mrb[0].mxu0
        %v6757 = vadd.f32 %v6689, %v6756
        %v6758 = vpop.f32.mrb[0].mxu0
        %6759 = vdwg.mxu0
        %v6760 = vadd.f32 %v5755, %v6757
        %6761 = vadd.xlane.f32.xlu0 %v6760
        %v6762 = vpop.xlane.xlu0 %6761
        %v6763 = vmul.f32 %v6760, %v6760
        %6764 = vadd.xlane.f32.xlu0 %v6763
        %v6765 = vpop.xlane.xlu0 %6764
        %v6766 = vmul.f32 %v6762, 0.03125
        %v6767 = vmul.f32 %v6765, 0.03125
        %v6768 = vmul.f32 %v6766, %v6766
        %v6769 = vsub.f32 %v6767, %v6768
        %v6770 = vsub.f32 %v6760, %v6766
        %v6771 = vadd.f32 %v6769, 1e-05
        %v6772 = vrsqrt.pop %v6771
        %v6773 = vmul.f32 %v6770, %v6772
        %v6774 = vld [vmem:[#allocation4 + $0x35] sm:$0x1]
        %v6775 = vlaneseq
        %v6776 = vshrl.u32 %v6775, 7
        %v6777 = vsub.s32 0, %v6776
        %v6778 = vrot.slane %v6774, %v6777
        %v6779 = vmul.f32 %v6773, %v6778
        %v6780 = vld [vmem:[#allocation4 + $0x36] sm:$0x1]
        %v6781 = vlaneseq
        %v6782 = vshrl.u32 %v6781, 7
        %v6783 = vsub.s32 0, %v6782
        %v6784 = vrot.slane %v6780, %v6783
        %v6785 = vadd.f32 %v6779, %v6784
        %s6786 = scalar_lea.vmem [#allocation2], 3712
        %v6787 = vld [vmem:[%s6786] sm:$0xff]
        %v6788 = vld [vmem:[%s6786 + $0x8] sm:$0xff]
        %v6789 = vld [vmem:[%s6786 + $0x10] sm:$0xff]
        %v6790 = vld [vmem:[%s6786 + $0x18] sm:$0xff]
        %v6791 = vld [vmem:[%s6786 + $0x20] sm:$0xff]
        %v6792 = vld [vmem:[%s6786 + $0x28] sm:$0xff]
        %v6793 = vld [vmem:[%s6786 + $0x30] sm:$0xff]
        %v6794 = vld [vmem:[%s6786 + $0x38] sm:$0xff]
        %v6795 = vld [vmem:[%s6786 + $0x40] sm:$0xff]
        %v6796 = vld [vmem:[%s6786 + $0x48] sm:$0xff]
        %v6797 = vld [vmem:[%s6786 + $0x50] sm:$0xff]
        %v6798 = vld [vmem:[%s6786 + $0x58] sm:$0xff]
        %v6799 = vld [vmem:[%s6786 + $0x60] sm:$0xff]
        %v6800 = vld [vmem:[%s6786 + $0x68] sm:$0xff]
        %v6801 = vld [vmem:[%s6786 + $0x70] sm:$0xff]
        %v6802 = vld [vmem:[%s6786 + $0x78] sm:$0xff]
        %v6803 = vld [vmem:[#allocation4 + $0x2d] sm:$0x1]
        %v6804 = vlaneseq
        %v6805 = vshrl.u32 %v6804, 7
        %v6806 = vsub.s32 0, %v6805
        %v6807 = vrot.slane %v6803, %v6806
        %6808 = vmatprep.subr.mxu0 0.0
        %6809 = vmatpush1.msra.mxu0 %v6787
        %6810 = vmatprep.subr.mxu0 0.0
        %6811 = vmatpush1.msra.mxu0 %v6788
        %6812 = vmatprep.subr.mxu0 0.0
        %6813 = vmatpush1.msra.mxu0 %v6789
        %6814 = vmatprep.subr.mxu0 0.0
        %6815 = vmatpush1.msra.mxu0 %v6790
        %6816 = vmatprep.subr.mxu0 0.0
        %6817 = vmatpush1.msra.mxu0 %v6791
        %6818 = vmatprep.subr.mxu0 0.0
        %6819 = vmatpush1.msra.mxu0 %v6792
        %6820 = vmatprep.subr.mxu0 0.0
        %6821 = vmatpush1.msra.mxu0 %v6793
        %6822 = vmatprep.subr.mxu0 0.0
        %6823 = vmatpush1.msra.mxu0 %v6794
        %6824 = vmatprep.subr.mxu0 0.0
        %6825 = vmatpush1.msra.mxu0 %v6795
        %6826 = vmatprep.subr.mxu0 0.0
        %6827 = vmatpush1.msra.mxu0 %v6796
        %6828 = vmatprep.subr.mxu0 0.0
        %6829 = vmatpush1.msra.mxu0 %v6797
        %6830 = vmatprep.subr.mxu0 0.0
        %6831 = vmatpush1.msra.mxu0 %v6798
        %6832 = vmatprep.subr.mxu0 0.0
        %6833 = vmatpush1.msra.mxu0 %v6799
        %6834 = vmatprep.subr.mxu0 0.0
        %6835 = vmatpush1.msra.mxu0 %v6800
        %6836 = vmatprep.subr.mxu0 0.0
        %6837 = vmatpush1.msra.mxu0 %v6801
        %6838 = vmatprep.subr.mxu0 0.0
        %6839 = vmatpush1.msra.mxu0 %v6802
        %6840 = vmatprep.subr.mxu0 0.0
        %6841 = vmatpush1.msra.mxu0 0.0
        %6842 = vmatprep.subr.mxu0 0.0
        %6843 = vmatpush1.msra.mxu0 0.0
        %6844 = vmatprep.subr.mxu0 0.0
        %6845 = vmatpush1.msra.mxu0 0.0
        %6846 = vmatprep.subr.mxu0 0.0
        %6847 = vmatpush1.msra.mxu0 0.0
        %6848 = vmatprep.subr.mxu0 0.0
        %6849 = vmatpush1.msra.mxu0 0.0
        %6850 = vmatprep.subr.mxu0 0.0
        %6851 = vmatpush1.msra.mxu0 0.0
        %6852 = vmatprep.subr.mxu0 0.0
        %6853 = vmatpush1.msra.mxu0 0.0
        %6854 = vmatprep.subr.mxu0 0.0
        %6855 = vmatpush1.msra.mxu0 0.0
        %6856 = vmatprep.subr.mxu0 0.0
        %6857 = vmatpush1.msra.mxu0 0.0
        %6858 = vmatprep.subr.mxu0 0.0
        %6859 = vmatpush1.msra.mxu0 0.0
        %6860 = vmatprep.subr.mxu0 0.0
        %6861 = vmatpush1.msra.mxu0 0.0
        %6862 = vmatprep.subr.mxu0 0.0
        %6863 = vmatpush1.msra.mxu0 0.0
        %6864 = vmatprep.subr.mxu0 0.0
        %6865 = vmatpush1.msra.mxu0 0.0
        %6866 = vmatprep.subr.mxu0 0.0
        %6867 = vmatpush1.msra.mxu0 0.0
        %6868 = vmatprep.subr.mxu0 0.0
        %6869 = vmatpush1.msra.mxu0 0.0
        %6870 = vmatprep.subr.mxu0 0.0
        %6871 = vmatpush1.msra.mxu0 0.0
        %6872 = vmatprep.mubr.f32.mxu0 0.0
        %6873 = vmatmul.mubr.f32.gmra.mrb[0].mxu0 %v6785
        %v6874 = vpop.f32.mrb[0].mxu0
        %v6875 = vadd.f32 %v6807, %v6874
        %v6876 = vpop.f32.mrb[0].mxu0
        %6877 = vdwg.mxu0
        %s6878 = scalar_lea.vmem [#allocation2], 3840
        %v6879 = vld [vmem:[%s6878] sm:$0xff]
        %v6880 = vld [vmem:[%s6878 + $0x8] sm:$0xff]
        %v6881 = vld [vmem:[%s6878 + $0x10] sm:$0xff]
        %v6882 = vld [vmem:[%s6878 + $0x18] sm:$0xff]
        %v6883 = vld [vmem:[%s6878 + $0x20] sm:$0xff]
        %v6884 = vld [vmem:[%s6878 + $0x28] sm:$0xff]
        %v6885 = vld [vmem:[%s6878 + $0x30] sm:$0xff]
        %v6886 = vld [vmem:[%s6878 + $0x38] sm:$0xff]
        %v6887 = vld [vmem:[%s6878 + $0x40] sm:$0xff]
        %v6888 = vld [vmem:[%s6878 + $0x48] sm:$0xff]
        %v6889 = vld [vmem:[%s6878 + $0x50] sm:$0xff]
        %v6890 = vld [vmem:[%s6878 + $0x58] sm:$0xff]
        %v6891 = vld [vmem:[%s6878 + $0x60] sm:$0xff]
        %v6892 = vld [vmem:[%s6878 + $0x68] sm:$0xff]
        %v6893 = vld [vmem:[%s6878 + $0x70] sm:$0xff]
        %v6894 = vld [vmem:[%s6878 + $0x78] sm:$0xff]
        %v6895 = vld [vmem:[#allocation4 + $0x2e] sm:$0x1]
        %v6896 = vlaneseq
        %v6897 = vshrl.u32 %v6896, 7
        %v6898 = vsub.s32 0, %v6897
        %v6899 = vrot.slane %v6895, %v6898
        %6900 = vmatprep.subr.mxu0 0.0
        %6901 = vmatpush1.msra.mxu0 %v6879
        %6902 = vmatprep.subr.mxu0 0.0
        %6903 = vmatpush1.msra.mxu0 %v6880
        %6904 = vmatprep.subr.mxu0 0.0
        %6905 = vmatpush1.msra.mxu0 %v6881
        %6906 = vmatprep.subr.mxu0 0.0
        %6907 = vmatpush1.msra.mxu0 %v6882
        %6908 = vmatprep.subr.mxu0 0.0
        %6909 = vmatpush1.msra.mxu0 %v6883
        %6910 = vmatprep.subr.mxu0 0.0
        %6911 = vmatpush1.msra.mxu0 %v6884
        %6912 = vmatprep.subr.mxu0 0.0
        %6913 = vmatpush1.msra.mxu0 %v6885
        %6914 = vmatprep.subr.mxu0 0.0
        %6915 = vmatpush1.msra.mxu0 %v6886
        %6916 = vmatprep.subr.mxu0 0.0
        %6917 = vmatpush1.msra.mxu0 %v6887
        %6918 = vmatprep.subr.mxu0 0.0
        %6919 = vmatpush1.msra.mxu0 %v6888
        %6920 = vmatprep.subr.mxu0 0.0
        %6921 = vmatpush1.msra.mxu0 %v6889
        %6922 = vmatprep.subr.mxu0 0.0
        %6923 = vmatpush1.msra.mxu0 %v6890
        %6924 = vmatprep.subr.mxu0 0.0
        %6925 = vmatpush1.msra.mxu0 %v6891
        %6926 = vmatprep.subr.mxu0 0.0
        %6927 = vmatpush1.msra.mxu0 %v6892
        %6928 = vmatprep.subr.mxu0 0.0
        %6929 = vmatpush1.msra.mxu0 %v6893
        %6930 = vmatprep.subr.mxu0 0.0
        %6931 = vmatpush1.msra.mxu0 %v6894
        %6932 = vmatprep.subr.mxu0 0.0
        %6933 = vmatpush1.msra.mxu0 0.0
        %6934 = vmatprep.subr.mxu0 0.0
        %6935 = vmatpush1.msra.mxu0 0.0
        %6936 = vmatprep.subr.mxu0 0.0
        %6937 = vmatpush1.msra.mxu0 0.0
        %6938 = vmatprep.subr.mxu0 0.0
        %6939 = vmatpush1.msra.mxu0 0.0
        %6940 = vmatprep.subr.mxu0 0.0
        %6941 = vmatpush1.msra.mxu0 0.0
        %6942 = vmatprep.subr.mxu0 0.0
        %6943 = vmatpush1.msra.mxu0 0.0
        %6944 = vmatprep.subr.mxu0 0.0
        %6945 = vmatpush1.msra.mxu0 0.0
        %6946 = vmatprep.subr.mxu0 0.0
        %6947 = vmatpush1.msra.mxu0 0.0
        %6948 = vmatprep.subr.mxu0 0.0
        %6949 = vmatpush1.msra.mxu0 0.0
        %6950 = vmatprep.subr.mxu0 0.0
        %6951 = vmatpush1.msra.mxu0 0.0
        %6952 = vmatprep.subr.mxu0 0.0
        %6953 = vmatpush1.msra.mxu0 0.0
        %6954 = vmatprep.subr.mxu0 0.0
        %6955 = vmatpush1.msra.mxu0 0.0
        %6956 = vmatprep.subr.mxu0 0.0
        %6957 = vmatpush1.msra.mxu0 0.0
        %6958 = vmatprep.subr.mxu0 0.0
        %6959 = vmatpush1.msra.mxu0 0.0
        %6960 = vmatprep.subr.mxu0 0.0
        %6961 = vmatpush1.msra.mxu0 0.0
        %6962 = vmatprep.subr.mxu0 0.0
        %6963 = vmatpush1.msra.mxu0 0.0
        %6964 = vmatprep.mubr.f32.mxu0 0.0
        %6965 = vmatmul.mubr.f32.gmra.mrb[0].mxu0 %v3401
        %v6966 = vpop.f32.mrb[0].mxu0
        %v6967 = vadd.f32 %v6899, %v6966
        %v6968 = vpop.f32.mrb[0].mxu0
        %6969 = vmatprep.mubr.f32.mxu0 0.0
        %6970 = vmatmul.mubr.f32.gmra.mrb[0].mxu0 %v3402
        %v6971 = vpop.f32.mrb[0].mxu0
        %v6972 = vadd.f32 %v6899, %v6971
        %v6973 = vpop.f32.mrb[0].mxu0
        %6974 = vdwg.mxu0
        %s6975 = scalar_lea.vmem [#allocation2], 3968
        %v6976 = vld [vmem:[%s6975] sm:$0xff]
        %v6977 = vld [vmem:[%s6975 + $0x8] sm:$0xff]
        %v6978 = vld [vmem:[%s6975 + $0x10] sm:$0xff]
        %v6979 = vld [vmem:[%s6975 + $0x18] sm:$0xff]
        %v6980 = vld [vmem:[%s6975 + $0x20] sm:$0xff]
        %v6981 = vld [vmem:[%s6975 + $0x28] sm:$0xff]
        %v6982 = vld [vmem:[%s6975 + $0x30] sm:$0xff]
        %v6983 = vld [vmem:[%s6975 + $0x38] sm:$0xff]
        %v6984 = vld [vmem:[%s6975 + $0x40] sm:$0xff]
        %v6985 = vld [vmem:[%s6975 + $0x48] sm:$0xff]
        %v6986 = vld [vmem:[%s6975 + $0x50] sm:$0xff]
        %v6987 = vld [vmem:[%s6975 + $0x58] sm:$0xff]
        %v6988 = vld [vmem:[%s6975 + $0x60] sm:$0xff]
        %v6989 = vld [vmem:[%s6975 + $0x68] sm:$0xff]
        %v6990 = vld [vmem:[%s6975 + $0x70] sm:$0xff]
        %v6991 = vld [vmem:[%s6975 + $0x78] sm:$0xff]
        %v6992 = vld [vmem:[#allocation4 + $0x2f] sm:$0x1]
        %v6993 = vlaneseq
        %v6994 = vshrl.u32 %v6993, 7
        %v6995 = vsub.s32 0, %v6994
        %v6996 = vrot.slane %v6992, %v6995
        %6997 = vmatprep.subr.mxu0 0.0
        %6998 = vmatpush1.msra.mxu0 %v6976
        %6999 = vmatprep.subr.mxu0 0.0
        %7000 = vmatpush1.msra.mxu0 %v6977
        %7001 = vmatprep.subr.mxu0 0.0
        %7002 = vmatpush1.msra.mxu0 %v6978
        %7003 = vmatprep.subr.mxu0 0.0
        %7004 = vmatpush1.msra.mxu0 %v6979
        %7005 = vmatprep.subr.mxu0 0.0
        %7006 = vmatpush1.msra.mxu0 %v6980
        %7007 = vmatprep.subr.mxu0 0.0
        %7008 = vmatpush1.msra.mxu0 %v6981
        %7009 = vmatprep.subr.mxu0 0.0
        %7010 = vmatpush1.msra.mxu0 %v6982
        %7011 = vmatprep.subr.mxu0 0.0
        %7012 = vmatpush1.msra.mxu0 %v6983
        %7013 = vmatprep.subr.mxu0 0.0
        %7014 = vmatpush1.msra.mxu0 %v6984
        %7015 = vmatprep.subr.mxu0 0.0
        %7016 = vmatpush1.msra.mxu0 %v6985
        %7017 = vmatprep.subr.mxu0 0.0
        %7018 = vmatpush1.msra.mxu0 %v6986
        %7019 = vmatprep.subr.mxu0 0.0
        %7020 = vmatpush1.msra.mxu0 %v6987
        %7021 = vmatprep.subr.mxu0 0.0
        %7022 = vmatpush1.msra.mxu0 %v6988
        %7023 = vmatprep.subr.mxu0 0.0
        %7024 = vmatpush1.msra.mxu0 %v6989
        %7025 = vmatprep.subr.mxu0 0.0
        %7026 = vmatpush1.msra.mxu0 %v6990
        %7027 = vmatprep.subr.mxu0 0.0
        %7028 = vmatpush1.msra.mxu0 %v6991
        %7029 = vmatprep.subr.mxu0 0.0
        %7030 = vmatpush1.msra.mxu0 0.0
        %7031 = vmatprep.subr.mxu0 0.0
        %7032 = vmatpush1.msra.mxu0 0.0
        %7033 = vmatprep.subr.mxu0 0.0
        %7034 = vmatpush1.msra.mxu0 0.0
        %7035 = vmatprep.subr.mxu0 0.0
        %7036 = vmatpush1.msra.mxu0 0.0
        %7037 = vmatprep.subr.mxu0 0.0
        %7038 = vmatpush1.msra.mxu0 0.0
        %7039 = vmatprep.subr.mxu0 0.0
        %7040 = vmatpush1.msra.mxu0 0.0
        %7041 = vmatprep.subr.mxu0 0.0
        %7042 = vmatpush1.msra.mxu0 0.0
        %7043 = vmatprep.subr.mxu0 0.0
        %7044 = vmatpush1.msra.mxu0 0.0
        %7045 = vmatprep.subr.mxu0 0.0
        %7046 = vmatpush1.msra.mxu0 0.0
        %7047 = vmatprep.subr.mxu0 0.0
        %7048 = vmatpush1.msra.mxu0 0.0
        %7049 = vmatprep.subr.mxu0 0.0
        %7050 = vmatpush1.msra.mxu0 0.0
        %7051 = vmatprep.subr.mxu0 0.0
        %7052 = vmatpush1.msra.mxu0 0.0
        %7053 = vmatprep.subr.mxu0 0.0
        %7054 = vmatpush1.msra.mxu0 0.0
        %7055 = vmatprep.subr.mxu0 0.0
        %7056 = vmatpush1.msra.mxu0 0.0
        %7057 = vmatprep.subr.mxu0 0.0
        %7058 = vmatpush1.msra.mxu0 0.0
        %7059 = vmatprep.subr.mxu0 0.0
        %7060 = vmatpush1.msra.mxu0 0.0
        %7061 = vmatprep.mubr.f32.mxu0 0.0
        %7062 = vmatmul.mubr.f32.gmra.mrb[0].mxu0 %v3401
        %v7063 = vpop.f32.mrb[0].mxu0
        %v7064 = vadd.f32 %v6996, %v7063
        %v7065 = vpop.f32.mrb[0].mxu0
        %7066 = vmatprep.mubr.f32.mxu0 0.0
        %7067 = vmatmul.mubr.f32.gmra.mrb[0].mxu0 %v3402
        %v7068 = vpop.f32.mrb[0].mxu0
        %v7069 = vadd.f32 %v6996, %v7068
        %v7070 = vpop.f32.mrb[0].mxu0
        %7071 = vdwg.mxu0
        %v7072 = vmul.f32 %v6967, %v899
        %v7073 = vmul.f32 %v6972, %v899
        %v7074 = vmul.f32 %v6967, %v903
        %v7075 = vmul.f32 %v6972, %v903
        %v7076 = vmul.f32 %v6967, %v907
        %v7077 = vmul.f32 %v6972, %v907
        %v7078 = vmul.f32 %v6967, %v911
        %v7079 = vmul.f32 %v6972, %v911
        %v7080 = vmul.f32 %v7064, %v899
        %v7081 = vmul.f32 %v7069, %v899
        %v7082 = vmul.f32 %v7064, %v903
        %v7083 = vmul.f32 %v7069, %v903
        %v7084 = vmul.f32 %v7064, %v907
        %v7085 = vmul.f32 %v7069, %v907
        %v7086 = vmul.f32 %v7064, %v911
        %v7087 = vmul.f32 %v7069, %v911
        %7088 = vmatprep.subr.mxu0 0.0
        %7089 = vmatpush1.xpose.msra.mxu0 %v7072
        %7090 = vmatprep.subr.mxu0 0.0
        %7091 = vmatpush1.xpose.msra.mxu0 %v7073
        %7092 = vmatprep.subr.mxu0 0.0
        %7093 = vmatpush1.xpose.msra.mxu0 0.0
        %7094 = vmatprep.subr.mxu0 0.0
        %7095 = vmatpush1.xpose.msra.mxu0 0.0
        %7096 = vmatprep.subr.mxu0 0.0
        %7097 = vmatpush1.xpose.msra.mxu0 0.0
        %7098 = vmatprep.subr.mxu0 0.0
        %7099 = vmatpush1.xpose.msra.mxu0 0.0
        %7100 = vmatprep.subr.mxu0 0.0
        %7101 = vmatpush1.xpose.msra.mxu0 0.0
        %7102 = vmatprep.subr.mxu0 0.0
        %7103 = vmatpush1.xpose.msra.mxu0 0.0
        %7104 = vmatprep.subr.mxu0 0.0
        %7105 = vmatpush1.xpose.msra.mxu0 0.0
        %7106 = vmatprep.subr.mxu0 0.0
        %7107 = vmatpush1.xpose.msra.mxu0 0.0
        %7108 = vmatprep.subr.mxu0 0.0
        %7109 = vmatpush1.xpose.msra.mxu0 0.0
        %7110 = vmatprep.subr.mxu0 0.0
        %7111 = vmatpush1.xpose.msra.mxu0 0.0
        %7112 = vmatprep.subr.mxu0 0.0
        %7113 = vmatpush1.xpose.msra.mxu0 0.0
        %7114 = vmatprep.subr.mxu0 0.0
        %7115 = vmatpush1.xpose.msra.mxu0 0.0
        %7116 = vmatprep.subr.mxu0 0.0
        %7117 = vmatpush1.xpose.msra.mxu0 0.0
        %7118 = vmatprep.subr.mxu0 0.0
        %7119 = vmatpush1.xpose.msra.mxu0 0.0
        %7120 = vmatprep.subr.mxu0 0.0
        %7121 = vmatpush1.xpose.msra.mxu0 0.0
        %7122 = vmatprep.subr.mxu0 0.0
        %7123 = vmatpush1.xpose.msra.mxu0 0.0
        %7124 = vmatprep.subr.mxu0 0.0
        %7125 = vmatpush1.xpose.msra.mxu0 0.0
        %7126 = vmatprep.subr.mxu0 0.0
        %7127 = vmatpush1.xpose.msra.mxu0 0.0
        %7128 = vmatprep.subr.mxu0 0.0
        %7129 = vmatpush1.xpose.msra.mxu0 0.0
        %7130 = vmatprep.subr.mxu0 0.0
        %7131 = vmatpush1.xpose.msra.mxu0 0.0
        %7132 = vmatprep.subr.mxu0 0.0
        %7133 = vmatpush1.xpose.msra.mxu0 0.0
        %7134 = vmatprep.subr.mxu0 0.0
        %7135 = vmatpush1.xpose.msra.mxu0 0.0
        %7136 = vmatprep.subr.mxu0 0.0
        %7137 = vmatpush1.xpose.msra.mxu0 0.0
        %7138 = vmatprep.subr.mxu0 0.0
        %7139 = vmatpush1.xpose.msra.mxu0 0.0
        %7140 = vmatprep.subr.mxu0 0.0
        %7141 = vmatpush1.xpose.msra.mxu0 0.0
        %7142 = vmatprep.subr.mxu0 0.0
        %7143 = vmatpush1.xpose.msra.mxu0 0.0
        %7144 = vmatprep.subr.mxu0 0.0
        %7145 = vmatpush1.xpose.msra.mxu0 0.0
        %7146 = vmatprep.subr.mxu0 0.0
        %7147 = vmatpush1.xpose.msra.mxu0 0.0
        %7148 = vmatprep.subr.mxu0 0.0
        %7149 = vmatpush1.xpose.msra.mxu0 0.0
        %7150 = vmatprep.subr.mxu0 0.0
        %7151 = vmatpush1.xpose.msra.mxu0 0.0
        %7152 = vmatprep.mubr.f32.mxu0 0.0
        %7153 = vmatmul.mubr.f32.gmra.mrb[0].mxu0 %v6875
        %v7154 = vpop.f32.mrb[0].mxu0
        %v7155 = vadd.f32 %v4835, %v7154
        %v7156 = vpop.f32.mrb[0].mxu0
        %7157 = vdwg.mxu0
        %7158 = vmatprep.subr.mxu0 0.0
        %7159 = vmatpush1.xpose.msra.mxu0 %v7074
        %7160 = vmatprep.subr.mxu0 0.0
        %7161 = vmatpush1.xpose.msra.mxu0 %v7075
        %7162 = vmatprep.subr.mxu0 0.0
        %7163 = vmatpush1.xpose.msra.mxu0 0.0
        %7164 = vmatprep.subr.mxu0 0.0
        %7165 = vmatpush1.xpose.msra.mxu0 0.0
        %7166 = vmatprep.subr.mxu0 0.0
        %7167 = vmatpush1.xpose.msra.mxu0 0.0
        %7168 = vmatprep.subr.mxu0 0.0
        %7169 = vmatpush1.xpose.msra.mxu0 0.0
        %7170 = vmatprep.subr.mxu0 0.0
        %7171 = vmatpush1.xpose.msra.mxu0 0.0
        %7172 = vmatprep.subr.mxu0 0.0
        %7173 = vmatpush1.xpose.msra.mxu0 0.0
        %7174 = vmatprep.subr.mxu0 0.0
        %7175 = vmatpush1.xpose.msra.mxu0 0.0
        %7176 = vmatprep.subr.mxu0 0.0
        %7177 = vmatpush1.xpose.msra.mxu0 0.0
        %7178 = vmatprep.subr.mxu0 0.0
        %7179 = vmatpush1.xpose.msra.mxu0 0.0
        %7180 = vmatprep.subr.mxu0 0.0
        %7181 = vmatpush1.xpose.msra.mxu0 0.0
        %7182 = vmatprep.subr.mxu0 0.0
        %7183 = vmatpush1.xpose.msra.mxu0 0.0
        %7184 = vmatprep.subr.mxu0 0.0
        %7185 = vmatpush1.xpose.msra.mxu0 0.0
        %7186 = vmatprep.subr.mxu0 0.0
        %7187 = vmatpush1.xpose.msra.mxu0 0.0
        %7188 = vmatprep.subr.mxu0 0.0
        %7189 = vmatpush1.xpose.msra.mxu0 0.0
        %7190 = vmatprep.subr.mxu0 0.0
        %7191 = vmatpush1.xpose.msra.mxu0 0.0
        %7192 = vmatprep.subr.mxu0 0.0
        %7193 = vmatpush1.xpose.msra.mxu0 0.0
        %7194 = vmatprep.subr.mxu0 0.0
        %7195 = vmatpush1.xpose.msra.mxu0 0.0
        %7196 = vmatprep.subr.mxu0 0.0
        %7197 = vmatpush1.xpose.msra.mxu0 0.0
        %7198 = vmatprep.subr.mxu0 0.0
        %7199 = vmatpush1.xpose.msra.mxu0 0.0
        %7200 = vmatprep.subr.mxu0 0.0
        %7201 = vmatpush1.xpose.msra.mxu0 0.0
        %7202 = vmatprep.subr.mxu0 0.0
        %7203 = vmatpush1.xpose.msra.mxu0 0.0
        %7204 = vmatprep.subr.mxu0 0.0
        %7205 = vmatpush1.xpose.msra.mxu0 0.0
        %7206 = vmatprep.subr.mxu0 0.0
        %7207 = vmatpush1.xpose.msra.mxu0 0.0
        %7208 = vmatprep.subr.mxu0 0.0
        %7209 = vmatpush1.xpose.msra.mxu0 0.0
        %7210 = vmatprep.subr.mxu0 0.0
        %7211 = vmatpush1.xpose.msra.mxu0 0.0
        %7212 = vmatprep.subr.mxu0 0.0
        %7213 = vmatpush1.xpose.msra.mxu0 0.0
        %7214 = vmatprep.subr.mxu0 0.0
        %7215 = vmatpush1.xpose.msra.mxu0 0.0
        %7216 = vmatprep.subr.mxu0 0.0
        %7217 = vmatpush1.xpose.msra.mxu0 0.0
        %7218 = vmatprep.subr.mxu0 0.0
        %7219 = vmatpush1.xpose.msra.mxu0 0.0
        %7220 = vmatprep.subr.mxu0 0.0
        %7221 = vmatpush1.xpose.msra.mxu0 0.0
        %7222 = vmatprep.mubr.f32.mxu0 0.0
        %7223 = vmatmul.mubr.f32.gmra.mrb[0].mxu0 %v6875
        %v7224 = vpop.f32.mrb[0].mxu0
        %v7225 = vadd.f32 %v4835, %v7224
        %v7226 = vpop.f32.mrb[0].mxu0
        %7227 = vdwg.mxu0
        %7228 = vmatprep.subr.mxu0 0.0
        %7229 = vmatpush1.xpose.msra.mxu0 %v7076
        %7230 = vmatprep.subr.mxu0 0.0
        %7231 = vmatpush1.xpose.msra.mxu0 %v7077
        %7232 = vmatprep.subr.mxu0 0.0
        %7233 = vmatpush1.xpose.msra.mxu0 0.0
        %7234 = vmatprep.subr.mxu0 0.0
        %7235 = vmatpush1.xpose.msra.mxu0 0.0
        %7236 = vmatprep.subr.mxu0 0.0
        %7237 = vmatpush1.xpose.msra.mxu0 0.0
        %7238 = vmatprep.subr.mxu0 0.0
        %7239 = vmatpush1.xpose.msra.mxu0 0.0
        %7240 = vmatprep.subr.mxu0 0.0
        %7241 = vmatpush1.xpose.msra.mxu0 0.0
        %7242 = vmatprep.subr.mxu0 0.0
        %7243 = vmatpush1.xpose.msra.mxu0 0.0
        %7244 = vmatprep.subr.mxu0 0.0
        %7245 = vmatpush1.xpose.msra.mxu0 0.0
        %7246 = vmatprep.subr.mxu0 0.0
        %7247 = vmatpush1.xpose.msra.mxu0 0.0
        %7248 = vmatprep.subr.mxu0 0.0
        %7249 = vmatpush1.xpose.msra.mxu0 0.0
        %7250 = vmatprep.subr.mxu0 0.0
        %7251 = vmatpush1.xpose.msra.mxu0 0.0
        %7252 = vmatprep.subr.mxu0 0.0
        %7253 = vmatpush1.xpose.msra.mxu0 0.0
        %7254 = vmatprep.subr.mxu0 0.0
        %7255 = vmatpush1.xpose.msra.mxu0 0.0
        %7256 = vmatprep.subr.mxu0 0.0
        %7257 = vmatpush1.xpose.msra.mxu0 0.0
        %7258 = vmatprep.subr.mxu0 0.0
        %7259 = vmatpush1.xpose.msra.mxu0 0.0
        %7260 = vmatprep.subr.mxu0 0.0
        %7261 = vmatpush1.xpose.msra.mxu0 0.0
        %7262 = vmatprep.subr.mxu0 0.0
        %7263 = vmatpush1.xpose.msra.mxu0 0.0
        %7264 = vmatprep.subr.mxu0 0.0
        %7265 = vmatpush1.xpose.msra.mxu0 0.0
        %7266 = vmatprep.subr.mxu0 0.0
        %7267 = vmatpush1.xpose.msra.mxu0 0.0
        %7268 = vmatprep.subr.mxu0 0.0
        %7269 = vmatpush1.xpose.msra.mxu0 0.0
        %7270 = vmatprep.subr.mxu0 0.0
        %7271 = vmatpush1.xpose.msra.mxu0 0.0
        %7272 = vmatprep.subr.mxu0 0.0
        %7273 = vmatpush1.xpose.msra.mxu0 0.0
        %7274 = vmatprep.subr.mxu0 0.0
        %7275 = vmatpush1.xpose.msra.mxu0 0.0
        %7276 = vmatprep.subr.mxu0 0.0
        %7277 = vmatpush1.xpose.msra.mxu0 0.0
        %7278 = vmatprep.subr.mxu0 0.0
        %7279 = vmatpush1.xpose.msra.mxu0 0.0
        %7280 = vmatprep.subr.mxu0 0.0
        %7281 = vmatpush1.xpose.msra.mxu0 0.0
        %7282 = vmatprep.subr.mxu0 0.0
        %7283 = vmatpush1.xpose.msra.mxu0 0.0
        %7284 = vmatprep.subr.mxu0 0.0
        %7285 = vmatpush1.xpose.msra.mxu0 0.0
        %7286 = vmatprep.subr.mxu0 0.0
        %7287 = vmatpush1.xpose.msra.mxu0 0.0
        %7288 = vmatprep.subr.mxu0 0.0
        %7289 = vmatpush1.xpose.msra.mxu0 0.0
        %7290 = vmatprep.subr.mxu0 0.0
        %7291 = vmatpush1.xpose.msra.mxu0 0.0
        %7292 = vmatprep.mubr.f32.mxu0 0.0
        %7293 = vmatmul.mubr.f32.gmra.mrb[0].mxu0 %v6875
        %v7294 = vpop.f32.mrb[0].mxu0
        %v7295 = vadd.f32 %v4835, %v7294
        %v7296 = vpop.f32.mrb[0].mxu0
        %7297 = vdwg.mxu0
        %7298 = vmatprep.subr.mxu0 0.0
        %7299 = vmatpush1.xpose.msra.mxu0 %v7078
        %7300 = vmatprep.subr.mxu0 0.0
        %7301 = vmatpush1.xpose.msra.mxu0 %v7079
        %7302 = vmatprep.subr.mxu0 0.0
        %7303 = vmatpush1.xpose.msra.mxu0 0.0
        %7304 = vmatprep.subr.mxu0 0.0
        %7305 = vmatpush1.xpose.msra.mxu0 0.0
        %7306 = vmatprep.subr.mxu0 0.0
        %7307 = vmatpush1.xpose.msra.mxu0 0.0
        %7308 = vmatprep.subr.mxu0 0.0
        %7309 = vmatpush1.xpose.msra.mxu0 0.0
        %7310 = vmatprep.subr.mxu0 0.0
        %7311 = vmatpush1.xpose.msra.mxu0 0.0
        %7312 = vmatprep.subr.mxu0 0.0
        %7313 = vmatpush1.xpose.msra.mxu0 0.0
        %7314 = vmatprep.subr.mxu0 0.0
        %7315 = vmatpush1.xpose.msra.mxu0 0.0
        %7316 = vmatprep.subr.mxu0 0.0
        %7317 = vmatpush1.xpose.msra.mxu0 0.0
        %7318 = vmatprep.subr.mxu0 0.0
        %7319 = vmatpush1.xpose.msra.mxu0 0.0
        %7320 = vmatprep.subr.mxu0 0.0
        %7321 = vmatpush1.xpose.msra.mxu0 0.0
        %7322 = vmatprep.subr.mxu0 0.0
        %7323 = vmatpush1.xpose.msra.mxu0 0.0
        %7324 = vmatprep.subr.mxu0 0.0
        %7325 = vmatpush1.xpose.msra.mxu0 0.0
        %7326 = vmatprep.subr.mxu0 0.0
        %7327 = vmatpush1.xpose.msra.mxu0 0.0
        %7328 = vmatprep.subr.mxu0 0.0
        %7329 = vmatpush1.xpose.msra.mxu0 0.0
        %7330 = vmatprep.subr.mxu0 0.0
        %7331 = vmatpush1.xpose.msra.mxu0 0.0
        %7332 = vmatprep.subr.mxu0 0.0
        %7333 = vmatpush1.xpose.msra.mxu0 0.0
        %7334 = vmatprep.subr.mxu0 0.0
        %7335 = vmatpush1.xpose.msra.mxu0 0.0
        %7336 = vmatprep.subr.mxu0 0.0
        %7337 = vmatpush1.xpose.msra.mxu0 0.0
        %7338 = vmatprep.subr.mxu0 0.0
        %7339 = vmatpush1.xpose.msra.mxu0 0.0
        %7340 = vmatprep.subr.mxu0 0.0
        %7341 = vmatpush1.xpose.msra.mxu0 0.0
        %7342 = vmatprep.subr.mxu0 0.0
        %7343 = vmatpush1.xpose.msra.mxu0 0.0
        %7344 = vmatprep.subr.mxu0 0.0
        %7345 = vmatpush1.xpose.msra.mxu0 0.0
        %7346 = vmatprep.subr.mxu0 0.0
        %7347 = vmatpush1.xpose.msra.mxu0 0.0
        %7348 = vmatprep.subr.mxu0 0.0
        %7349 = vmatpush1.xpose.msra.mxu0 0.0
        %7350 = vmatprep.subr.mxu0 0.0
        %7351 = vmatpush1.xpose.msra.mxu0 0.0
        %7352 = vmatprep.subr.mxu0 0.0
        %7353 = vmatpush1.xpose.msra.mxu0 0.0
        %7354 = vmatprep.subr.mxu0 0.0
        %7355 = vmatpush1.xpose.msra.mxu0 0.0
        %7356 = vmatprep.subr.mxu0 0.0
        %7357 = vmatpush1.xpose.msra.mxu0 0.0
        %7358 = vmatprep.subr.mxu0 0.0
        %7359 = vmatpush1.xpose.msra.mxu0 0.0
        %7360 = vmatprep.subr.mxu0 0.0
        %7361 = vmatpush1.xpose.msra.mxu0 0.0
        %7362 = vmatprep.mubr.f32.mxu0 0.0
        %7363 = vmatmul.mubr.f32.gmra.mrb[0].mxu0 %v6875
        %v7364 = vpop.f32.mrb[0].mxu0
        %v7365 = vadd.f32 %v4835, %v7364
        %v7366 = vpop.f32.mrb[0].mxu0
        %7367 = vdwg.mxu0
        %v7368 = vmul.f32 %v7155, 1.442695
        %v7369 = vpow.pop %v7368
        %v7370 = vmul.f32 %v7225, 1.442695
        %v7371 = vpow.pop %v7370
        %v7372 = vmul.f32 %v7295, 1.442695
        %v7373 = vpow.pop %v7372
        %v7374 = vmul.f32 %v7365, 1.442695
        %v7375 = vpow.pop %v7374
        %v7376 = vsel %vm1244, %v7369, 0.0
        %7377 = vadd.xlane.f32.xlu0 %v7376
        %v7378 = vpop.xlane.xlu0 %7377
        %v7379 = vsel %vm1244, %v7371, 0.0
        %7380 = vadd.xlane.f32.xlu0 %v7379
        %v7381 = vpop.xlane.xlu0 %7380
        %v7382 = vsel %vm1244, %v7373, 0.0
        %7383 = vadd.xlane.f32.xlu0 %v7382
        %v7384 = vpop.xlane.xlu0 %7383
        %v7385 = vsel %vm1244, %v7375, 0.0
        %7386 = vadd.xlane.f32.xlu0 %v7385
        %v7387 = vpop.xlane.xlu0 %7386
        %v7388 = vrcp.pop %v7378
        %v7389 = vrcp.pop %v7381
        %v7390 = vrcp.pop %v7384
        %v7391 = vrcp.pop %v7387
        %v7392 = vmul.f32 %v7369, %v7388
        %v7393 = vmul.f32 %v7371, %v7389
        %v7394 = vmul.f32 %v7373, %v7390
        %v7395 = vmul.f32 %v7375, %v7391
        %v7397 = vsel %vm1244, %v7392, 0
        %v7400 = vsel %vm564, %v7081, 0
        %7402 = vmatprep.subr.mxu0 0.0
        %7403 = vmatpush1.msra.mxu0 %v7080
        %7404 = vmatprep.subr.mxu0 0.0
        %7405 = vmatpush1.msra.mxu0 %v7400
        %7406 = vmatprep.subr.mxu0 0.0
        %7407 = vmatpush1.msra.mxu0 0.0
        %7408 = vmatprep.subr.mxu0 0.0
        %7409 = vmatpush1.msra.mxu0 0.0
        %7410 = vmatprep.subr.mxu0 0.0
        %7411 = vmatpush1.msra.mxu0 0.0
        %7412 = vmatprep.subr.mxu0 0.0
        %7413 = vmatpush1.msra.mxu0 0.0
        %7414 = vmatprep.subr.mxu0 0.0
        %7415 = vmatpush1.msra.mxu0 0.0
        %7416 = vmatprep.subr.mxu0 0.0
        %7417 = vmatpush1.msra.mxu0 0.0
        %7418 = vmatprep.subr.mxu0 0.0
        %7419 = vmatpush1.msra.mxu0 0.0
        %7420 = vmatprep.subr.mxu0 0.0
        %7421 = vmatpush1.msra.mxu0 0.0
        %7422 = vmatprep.subr.mxu0 0.0
        %7423 = vmatpush1.msra.mxu0 0.0
        %7424 = vmatprep.subr.mxu0 0.0
        %7425 = vmatpush1.msra.mxu0 0.0
        %7426 = vmatprep.subr.mxu0 0.0
        %7427 = vmatpush1.msra.mxu0 0.0
        %7428 = vmatprep.subr.mxu0 0.0
        %7429 = vmatpush1.msra.mxu0 0.0
        %7430 = vmatprep.subr.mxu0 0.0
        %7431 = vmatpush1.msra.mxu0 0.0
        %7432 = vmatprep.subr.mxu0 0.0
        %7433 = vmatpush1.msra.mxu0 0.0
        %7434 = vmatprep.subr.mxu0 0.0
        %7435 = vmatpush1.msra.mxu0 0.0
        %7436 = vmatprep.subr.mxu0 0.0
        %7437 = vmatpush1.msra.mxu0 0.0
        %7438 = vmatprep.subr.mxu0 0.0
        %7439 = vmatpush1.msra.mxu0 0.0
        %7440 = vmatprep.subr.mxu0 0.0
        %7441 = vmatpush1.msra.mxu0 0.0
        %7442 = vmatprep.subr.mxu0 0.0
        %7443 = vmatpush1.msra.mxu0 0.0
        %7444 = vmatprep.subr.mxu0 0.0
        %7445 = vmatpush1.msra.mxu0 0.0
        %7446 = vmatprep.subr.mxu0 0.0
        %7447 = vmatpush1.msra.mxu0 0.0
        %7448 = vmatprep.subr.mxu0 0.0
        %7449 = vmatpush1.msra.mxu0 0.0
        %7450 = vmatprep.subr.mxu0 0.0
        %7451 = vmatpush1.msra.mxu0 0.0
        %7452 = vmatprep.subr.mxu0 0.0
        %7453 = vmatpush1.msra.mxu0 0.0
        %7454 = vmatprep.subr.mxu0 0.0
        %7455 = vmatpush1.msra.mxu0 0.0
        %7456 = vmatprep.subr.mxu0 0.0
        %7457 = vmatpush1.msra.mxu0 0.0
        %7458 = vmatprep.subr.mxu0 0.0
        %7459 = vmatpush1.msra.mxu0 0.0
        %7460 = vmatprep.subr.mxu0 0.0
        %7461 = vmatpush1.msra.mxu0 0.0
        %7462 = vmatprep.subr.mxu0 0.0
        %7463 = vmatpush1.msra.mxu0 0.0
        %7464 = vmatprep.subr.mxu0 0.0
        %7465 = vmatpush1.msra.mxu0 0.0
        %7466 = vmatprep.mubr.f32.mxu0 0.0
        %7467 = vmatmul.mubr.f32.gmra.mrb[0].mxu0 %v7397
        %v7468 = vpop.f32.mrb[0].mxu0
        %v7469 = vadd.f32 0.0, %v7468
        %v7470 = vpop.f32.mrb[0].mxu0
        %7471 = vdwg.mxu0
        %v7473 = vsel %vm1244, %v7393, 0
        %v7476 = vsel %vm564, %v7083, 0
        %7478 = vmatprep.subr.mxu0 0.0
        %7479 = vmatpush1.msra.mxu0 %v7082
        %7480 = vmatprep.subr.mxu0 0.0
        %7481 = vmatpush1.msra.mxu0 %v7476
        %7482 = vmatprep.subr.mxu0 0.0
        %7483 = vmatpush1.msra.mxu0 0.0
        %7484 = vmatprep.subr.mxu0 0.0
        %7485 = vmatpush1.msra.mxu0 0.0
        %7486 = vmatprep.subr.mxu0 0.0
        %7487 = vmatpush1.msra.mxu0 0.0
        %7488 = vmatprep.subr.mxu0 0.0
        %7489 = vmatpush1.msra.mxu0 0.0
        %7490 = vmatprep.subr.mxu0 0.0
        %7491 = vmatpush1.msra.mxu0 0.0
        %7492 = vmatprep.subr.mxu0 0.0
        %7493 = vmatpush1.msra.mxu0 0.0
        %7494 = vmatprep.subr.mxu0 0.0
        %7495 = vmatpush1.msra.mxu0 0.0
        %7496 = vmatprep.subr.mxu0 0.0
        %7497 = vmatpush1.msra.mxu0 0.0
        %7498 = vmatprep.subr.mxu0 0.0
        %7499 = vmatpush1.msra.mxu0 0.0
        %7500 = vmatprep.subr.mxu0 0.0
        %7501 = vmatpush1.msra.mxu0 0.0
        %7502 = vmatprep.subr.mxu0 0.0
        %7503 = vmatpush1.msra.mxu0 0.0
        %7504 = vmatprep.subr.mxu0 0.0
        %7505 = vmatpush1.msra.mxu0 0.0
        %7506 = vmatprep.subr.mxu0 0.0
        %7507 = vmatpush1.msra.mxu0 0.0
        %7508 = vmatprep.subr.mxu0 0.0
        %7509 = vmatpush1.msra.mxu0 0.0
        %7510 = vmatprep.subr.mxu0 0.0
        %7511 = vmatpush1.msra.mxu0 0.0
        %7512 = vmatprep.subr.mxu0 0.0
        %7513 = vmatpush1.msra.mxu0 0.0
        %7514 = vmatprep.subr.mxu0 0.0
        %7515 = vmatpush1.msra.mxu0 0.0
        %7516 = vmatprep.subr.mxu0 0.0
        %7517 = vmatpush1.msra.mxu0 0.0
        %7518 = vmatprep.subr.mxu0 0.0
        %7519 = vmatpush1.msra.mxu0 0.0
        %7520 = vmatprep.subr.mxu0 0.0
        %7521 = vmatpush1.msra.mxu0 0.0
        %7522 = vmatprep.subr.mxu0 0.0
        %7523 = vmatpush1.msra.mxu0 0.0
        %7524 = vmatprep.subr.mxu0 0.0
        %7525 = vmatpush1.msra.mxu0 0.0
        %7526 = vmatprep.subr.mxu0 0.0
        %7527 = vmatpush1.msra.mxu0 0.0
        %7528 = vmatprep.subr.mxu0 0.0
        %7529 = vmatpush1.msra.mxu0 0.0
        %7530 = vmatprep.subr.mxu0 0.0
        %7531 = vmatpush1.msra.mxu0 0.0
        %7532 = vmatprep.subr.mxu0 0.0
        %7533 = vmatpush1.msra.mxu0 0.0
        %7534 = vmatprep.subr.mxu0 0.0
        %7535 = vmatpush1.msra.mxu0 0.0
        %7536 = vmatprep.subr.mxu0 0.0
        %7537 = vmatpush1.msra.mxu0 0.0
        %7538 = vmatprep.subr.mxu0 0.0
        %7539 = vmatpush1.msra.mxu0 0.0
        %7540 = vmatprep.subr.mxu0 0.0
        %7541 = vmatpush1.msra.mxu0 0.0
        %7542 = vmatprep.mubr.f32.mxu0 0.0
        %7543 = vmatmul.mubr.f32.gmra.mrb[0].mxu0 %v7473
        %v7544 = vpop.f32.mrb[0].mxu0
        %v7545 = vadd.f32 0.0, %v7544
        %v7546 = vpop.f32.mrb[0].mxu0
        %7547 = vdwg.mxu0
        %v7549 = vsel %vm1244, %v7394, 0
        %v7552 = vsel %vm564, %v7085, 0
        %7554 = vmatprep.subr.mxu0 0.0
        %7555 = vmatpush1.msra.mxu0 %v7084
        %7556 = vmatprep.subr.mxu0 0.0
        %7557 = vmatpush1.msra.mxu0 %v7552
        %7558 = vmatprep.subr.mxu0 0.0
        %7559 = vmatpush1.msra.mxu0 0.0
        %7560 = vmatprep.subr.mxu0 0.0
        %7561 = vmatpush1.msra.mxu0 0.0
        %7562 = vmatprep.subr.mxu0 0.0
        %7563 = vmatpush1.msra.mxu0 0.0
        %7564 = vmatprep.subr.mxu0 0.0
        %7565 = vmatpush1.msra.mxu0 0.0
        %7566 = vmatprep.subr.mxu0 0.0
        %7567 = vmatpush1.msra.mxu0 0.0
        %7568 = vmatprep.subr.mxu0 0.0
        %7569 = vmatpush1.msra.mxu0 0.0
        %7570 = vmatprep.subr.mxu0 0.0
        %7571 = vmatpush1.msra.mxu0 0.0
        %7572 = vmatprep.subr.mxu0 0.0
        %7573 = vmatpush1.msra.mxu0 0.0
        %7574 = vmatprep.subr.mxu0 0.0
        %7575 = vmatpush1.msra.mxu0 0.0
        %7576 = vmatprep.subr.mxu0 0.0
        %7577 = vmatpush1.msra.mxu0 0.0
        %7578 = vmatprep.subr.mxu0 0.0
        %7579 = vmatpush1.msra.mxu0 0.0
        %7580 = vmatprep.subr.mxu0 0.0
        %7581 = vmatpush1.msra.mxu0 0.0
        %7582 = vmatprep.subr.mxu0 0.0
        %7583 = vmatpush1.msra.mxu0 0.0
        %7584 = vmatprep.subr.mxu0 0.0
        %7585 = vmatpush1.msra.mxu0 0.0
        %7586 = vmatprep.subr.mxu0 0.0
        %7587 = vmatpush1.msra.mxu0 0.0
        %7588 = vmatprep.subr.mxu0 0.0
        %7589 = vmatpush1.msra.mxu0 0.0
        %7590 = vmatprep.subr.mxu0 0.0
        %7591 = vmatpush1.msra.mxu0 0.0
        %7592 = vmatprep.subr.mxu0 0.0
        %7593 = vmatpush1.msra.mxu0 0.0
        %7594 = vmatprep.subr.mxu0 0.0
        %7595 = vmatpush1.msra.mxu0 0.0
        %7596 = vmatprep.subr.mxu0 0.0
        %7597 = vmatpush1.msra.mxu0 0.0
        %7598 = vmatprep.subr.mxu0 0.0
        %7599 = vmatpush1.msra.mxu0 0.0
        %7600 = vmatprep.subr.mxu0 0.0
        %7601 = vmatpush1.msra.mxu0 0.0
        %7602 = vmatprep.subr.mxu0 0.0
        %7603 = vmatpush1.msra.mxu0 0.0
        %7604 = vmatprep.subr.mxu0 0.0
        %7605 = vmatpush1.msra.mxu0 0.0
        %7606 = vmatprep.subr.mxu0 0.0
        %7607 = vmatpush1.msra.mxu0 0.0
        %7608 = vmatprep.subr.mxu0 0.0
        %7609 = vmatpush1.msra.mxu0 0.0
        %7610 = vmatprep.subr.mxu0 0.0
        %7611 = vmatpush1.msra.mxu0 0.0
        %7612 = vmatprep.subr.mxu0 0.0
        %7613 = vmatpush1.msra.mxu0 0.0
        %7614 = vmatprep.subr.mxu0 0.0
        %7615 = vmatpush1.msra.mxu0 0.0
        %7616 = vmatprep.subr.mxu0 0.0
        %7617 = vmatpush1.msra.mxu0 0.0
        %7618 = vmatprep.mubr.f32.mxu0 0.0
        %7619 = vmatmul.mubr.f32.gmra.mrb[0].mxu0 %v7549
        %v7620 = vpop.f32.mrb[0].mxu0
        %v7621 = vadd.f32 0.0, %v7620
        %v7622 = vpop.f32.mrb[0].mxu0
        %7623 = vdwg.mxu0
        %v7625 = vsel %vm1244, %v7395, 0
        %v7628 = vsel %vm564, %v7087, 0
        %7630 = vmatprep.subr.mxu0 0.0
        %7631 = vmatpush1.msra.mxu0 %v7086
        %7632 = vmatprep.subr.mxu0 0.0
        %7633 = vmatpush1.msra.mxu0 %v7628
        %7634 = vmatprep.subr.mxu0 0.0
        %7635 = vmatpush1.msra.mxu0 0.0
        %7636 = vmatprep.subr.mxu0 0.0
        %7637 = vmatpush1.msra.mxu0 0.0
        %7638 = vmatprep.subr.mxu0 0.0
        %7639 = vmatpush1.msra.mxu0 0.0
        %7640 = vmatprep.subr.mxu0 0.0
        %7641 = vmatpush1.msra.mxu0 0.0
        %7642 = vmatprep.subr.mxu0 0.0
        %7643 = vmatpush1.msra.mxu0 0.0
        %7644 = vmatprep.subr.mxu0 0.0
        %7645 = vmatpush1.msra.mxu0 0.0
        %7646 = vmatprep.subr.mxu0 0.0
        %7647 = vmatpush1.msra.mxu0 0.0
        %7648 = vmatprep.subr.mxu0 0.0
        %7649 = vmatpush1.msra.mxu0 0.0
        %7650 = vmatprep.subr.mxu0 0.0
        %7651 = vmatpush1.msra.mxu0 0.0
        %7652 = vmatprep.subr.mxu0 0.0
        %7653 = vmatpush1.msra.mxu0 0.0
        %7654 = vmatprep.subr.mxu0 0.0
        %7655 = vmatpush1.msra.mxu0 0.0
        %7656 = vmatprep.subr.mxu0 0.0
        %7657 = vmatpush1.msra.mxu0 0.0
        %7658 = vmatprep.subr.mxu0 0.0
        %7659 = vmatpush1.msra.mxu0 0.0
        %7660 = vmatprep.subr.mxu0 0.0
        %7661 = vmatpush1.msra.mxu0 0.0
        %7662 = vmatprep.subr.mxu0 0.0
        %7663 = vmatpush1.msra.mxu0 0.0
        %7664 = vmatprep.subr.mxu0 0.0
        %7665 = vmatpush1.msra.mxu0 0.0
        %7666 = vmatprep.subr.mxu0 0.0
        %7667 = vmatpush1.msra.mxu0 0.0
        %7668 = vmatprep.subr.mxu0 0.0
        %7669 = vmatpush1.msra.mxu0 0.0
        %7670 = vmatprep.subr.mxu0 0.0
        %7671 = vmatpush1.msra.mxu0 0.0
        %7672 = vmatprep.subr.mxu0 0.0
        %7673 = vmatpush1.msra.mxu0 0.0
        %7674 = vmatprep.subr.mxu0 0.0
        %7675 = vmatpush1.msra.mxu0 0.0
        %7676 = vmatprep.subr.mxu0 0.0
        %7677 = vmatpush1.msra.mxu0 0.0
        %7678 = vmatprep.subr.mxu0 0.0
        %7679 = vmatpush1.msra.mxu0 0.0
        %7680 = vmatprep.subr.mxu0 0.0
        %7681 = vmatpush1.msra.mxu0 0.0
        %7682 = vmatprep.subr.mxu0 0.0
        %7683 = vmatpush1.msra.mxu0 0.0
        %7684 = vmatprep.subr.mxu0 0.0
        %7685 = vmatpush1.msra.mxu0 0.0
        %7686 = vmatprep.subr.mxu0 0.0
        %7687 = vmatpush1.msra.mxu0 0.0
        %7688 = vmatprep.subr.mxu0 0.0
        %7689 = vmatpush1.msra.mxu0 0.0
        %7690 = vmatprep.subr.mxu0 0.0
        %7691 = vmatpush1.msra.mxu0 0.0
        %7692 = vmatprep.subr.mxu0 0.0
        %7693 = vmatpush1.msra.mxu0 0.0
        %7694 = vmatprep.mubr.f32.mxu0 0.0
        %7695 = vmatmul.mubr.f32.gmra.mrb[0].mxu0 %v7625
        %v7696 = vpop.f32.mrb[0].mxu0
        %v7697 = vadd.f32 0.0, %v7696
        %v7698 = vpop.f32.mrb[0].mxu0
        %7699 = vdwg.mxu0
        %v7700 = vadd.f32 %v7469, %v7545
        %v7701 = vadd.f32 %v7700, %v7621
        %v7702 = vadd.f32 %v7701, %v7697
        %s7703 = scalar_lea.vmem [#allocation2], 4096
        %v7704 = vld [vmem:[%s7703] sm:$0xff]
        %v7705 = vld [vmem:[%s7703 + $0x8] sm:$0xff]
        %v7706 = vld [vmem:[%s7703 + $0x10] sm:$0xff]
        %v7707 = vld [vmem:[%s7703 + $0x18] sm:$0xff]
        %v7708 = vld [vmem:[%s7703 + $0x20] sm:$0xff]
        %v7709 = vld [vmem:[%s7703 + $0x28] sm:$0xff]
        %v7710 = vld [vmem:[%s7703 + $0x30] sm:$0xff]
        %v7711 = vld [vmem:[%s7703 + $0x38] sm:$0xff]
        %v7712 = vld [vmem:[%s7703 + $0x40] sm:$0xff]
        %v7713 = vld [vmem:[%s7703 + $0x48] sm:$0xff]
        %v7714 = vld [vmem:[%s7703 + $0x50] sm:$0xff]
        %v7715 = vld [vmem:[%s7703 + $0x58] sm:$0xff]
        %v7716 = vld [vmem:[%s7703 + $0x60] sm:$0xff]
        %v7717 = vld [vmem:[%s7703 + $0x68] sm:$0xff]
        %v7718 = vld [vmem:[%s7703 + $0x70] sm:$0xff]
        %v7719 = vld [vmem:[%s7703 + $0x78] sm:$0xff]
        %v7720 = vld [vmem:[#allocation4 + $0x30] sm:$0x1]
        %v7721 = vlaneseq
        %v7722 = vshrl.u32 %v7721, 7
        %v7723 = vsub.s32 0, %v7722
        %v7724 = vrot.slane %v7720, %v7723
        %7725 = vmatprep.subr.mxu0 0.0
        %7726 = vmatpush1.msra.mxu0 %v7704
        %7727 = vmatprep.subr.mxu0 0.0
        %7728 = vmatpush1.msra.mxu0 %v7705
        %7729 = vmatprep.subr.mxu0 0.0
        %7730 = vmatpush1.msra.mxu0 %v7706
        %7731 = vmatprep.subr.mxu0 0.0
        %7732 = vmatpush1.msra.mxu0 %v7707
        %7733 = vmatprep.subr.mxu0 0.0
        %7734 = vmatpush1.msra.mxu0 %v7708
        %7735 = vmatprep.subr.mxu0 0.0
        %7736 = vmatpush1.msra.mxu0 %v7709
        %7737 = vmatprep.subr.mxu0 0.0
        %7738 = vmatpush1.msra.mxu0 %v7710
        %7739 = vmatprep.subr.mxu0 0.0
        %7740 = vmatpush1.msra.mxu0 %v7711
        %7741 = vmatprep.subr.mxu0 0.0
        %7742 = vmatpush1.msra.mxu0 %v7712
        %7743 = vmatprep.subr.mxu0 0.0
        %7744 = vmatpush1.msra.mxu0 %v7713
        %7745 = vmatprep.subr.mxu0 0.0
        %7746 = vmatpush1.msra.mxu0 %v7714
        %7747 = vmatprep.subr.mxu0 0.0
        %7748 = vmatpush1.msra.mxu0 %v7715
        %7749 = vmatprep.subr.mxu0 0.0
        %7750 = vmatpush1.msra.mxu0 %v7716
        %7751 = vmatprep.subr.mxu0 0.0
        %7752 = vmatpush1.msra.mxu0 %v7717
        %7753 = vmatprep.subr.mxu0 0.0
        %7754 = vmatpush1.msra.mxu0 %v7718
        %7755 = vmatprep.subr.mxu0 0.0
        %7756 = vmatpush1.msra.mxu0 %v7719
        %7757 = vmatprep.subr.mxu0 0.0
        %7758 = vmatpush1.msra.mxu0 0.0
        %7759 = vmatprep.subr.mxu0 0.0
        %7760 = vmatpush1.msra.mxu0 0.0
        %7761 = vmatprep.subr.mxu0 0.0
        %7762 = vmatpush1.msra.mxu0 0.0
        %7763 = vmatprep.subr.mxu0 0.0
        %7764 = vmatpush1.msra.mxu0 0.0
        %7765 = vmatprep.subr.mxu0 0.0
        %7766 = vmatpush1.msra.mxu0 0.0
        %7767 = vmatprep.subr.mxu0 0.0
        %7768 = vmatpush1.msra.mxu0 0.0
        %7769 = vmatprep.subr.mxu0 0.0
        %7770 = vmatpush1.msra.mxu0 0.0
        %7771 = vmatprep.subr.mxu0 0.0
        %7772 = vmatpush1.msra.mxu0 0.0
        %7773 = vmatprep.subr.mxu0 0.0
        %7774 = vmatpush1.msra.mxu0 0.0
        %7775 = vmatprep.subr.mxu0 0.0
        %7776 = vmatpush1.msra.mxu0 0.0
        %7777 = vmatprep.subr.mxu0 0.0
        %7778 = vmatpush1.msra.mxu0 0.0
        %7779 = vmatprep.subr.mxu0 0.0
        %7780 = vmatpush1.msra.mxu0 0.0
        %7781 = vmatprep.subr.mxu0 0.0
        %7782 = vmatpush1.msra.mxu0 0.0
        %7783 = vmatprep.subr.mxu0 0.0
        %7784 = vmatpush1.msra.mxu0 0.0
        %7785 = vmatprep.subr.mxu0 0.0
        %7786 = vmatpush1.msra.mxu0 0.0
        %7787 = vmatprep.subr.mxu0 0.0
        %7788 = vmatpush1.msra.mxu0 0.0
        %7789 = vmatprep.mubr.f32.mxu0 0.0
        %7790 = vmatmul.mubr.f32.gmra.mrb[0].mxu0 %v7702
        %v7791 = vpop.f32.mrb[0].mxu0
        %v7792 = vadd.f32 %v7724, %v7791
        %v7793 = vpop.f32.mrb[0].mxu0
        %7794 = vdwg.mxu0
        %v7795 = vadd.f32 %v6760, %v7792
        %7796 = vadd.xlane.f32.xlu0 %v7795
        %v7797 = vpop.xlane.xlu0 %7796
        %v7798 = vmul.f32 %v7795, %v7795
        %7799 = vadd.xlane.f32.xlu0 %v7798
        %v7800 = vpop.xlane.xlu0 %7799
        %v7801 = vmul.f32 %v7797, 0.03125
        %v7802 = vmul.f32 %v7800, 0.03125
        %v7803 = vmul.f32 %v7801, %v7801
        %v7804 = vsub.f32 %v7802, %v7803
        %v7805 = vsub.f32 %v7795, %v7801
        %v7806 = vadd.f32 %v7804, 1e-05
        %v7807 = vrsqrt.pop %v7806
        %v7808 = vmul.f32 %v7805, %v7807
        %v7809 = vld [vmem:[#allocation4 + $0x37] sm:$0x1]
        %v7810 = vlaneseq
        %v7811 = vshrl.u32 %v7810, 7
        %v7812 = vsub.s32 0, %v7811
        %v7813 = vrot.slane %v7809, %v7812
        %v7814 = vmul.f32 %v7808, %v7813
        %v7815 = vld [vmem:[#allocation4 + $0x38] sm:$0x1]
        %v7816 = vlaneseq
        %v7817 = vshrl.u32 %v7816, 7
        %v7818 = vsub.s32 0, %v7817
        %v7819 = vrot.slane %v7815, %v7818
        %v7820 = vadd.f32 %v7814, %v7819
        %s7821 = scalar_lea.vmem [#allocation2], 4224
        %v7822 = vld [vmem:[%s7821] sm:$0xff]
        %v7823 = vld [vmem:[%s7821 + $0x8] sm:$0xff]
        %v7824 = vld [vmem:[%s7821 + $0x10] sm:$0xff]
        %v7825 = vld [vmem:[%s7821 + $0x18] sm:$0xff]
        %v7826 = vld [vmem:[%s7821 + $0x20] sm:$0xff]
        %v7827 = vld [vmem:[%s7821 + $0x28] sm:$0xff]
        %v7828 = vld [vmem:[%s7821 + $0x30] sm:$0xff]
        %v7829 = vld [vmem:[%s7821 + $0x38] sm:$0xff]
        %v7830 = vld [vmem:[%s7821 + $0x40] sm:$0xff]
        %v7831 = vld [vmem:[%s7821 + $0x48] sm:$0xff]
        %v7832 = vld [vmem:[%s7821 + $0x50] sm:$0xff]
        %v7833 = vld [vmem:[%s7821 + $0x58] sm:$0xff]
        %v7834 = vld [vmem:[%s7821 + $0x60] sm:$0xff]
        %v7835 = vld [vmem:[%s7821 + $0x68] sm:$0xff]
        %v7836 = vld [vmem:[%s7821 + $0x70] sm:$0xff]
        %v7837 = vld [vmem:[%s7821 + $0x78] sm:$0xff]
        %v7838 = vld [vmem:[#allocation4 + $0x31] sm:$0x1]
        %v7839 = vlaneseq
        %v7840 = vshrl.u32 %v7839, 7
        %v7841 = vsub.s32 0, %v7840
        %v7842 = vrot.slane %v7838, %v7841
        %7843 = vmatprep.subr.mxu0 0.0
        %7844 = vmatpush1.msra.mxu0 %v7822
        %7845 = vmatprep.subr.mxu0 0.0
        %7846 = vmatpush1.msra.mxu0 %v7823
        %7847 = vmatprep.subr.mxu0 0.0
        %7848 = vmatpush1.msra.mxu0 %v7824
        %7849 = vmatprep.subr.mxu0 0.0
        %7850 = vmatpush1.msra.mxu0 %v7825
        %7851 = vmatprep.subr.mxu0 0.0
        %7852 = vmatpush1.msra.mxu0 %v7826
        %7853 = vmatprep.subr.mxu0 0.0
        %7854 = vmatpush1.msra.mxu0 %v7827
        %7855 = vmatprep.subr.mxu0 0.0
        %7856 = vmatpush1.msra.mxu0 %v7828
        %7857 = vmatprep.subr.mxu0 0.0
        %7858 = vmatpush1.msra.mxu0 %v7829
        %7859 = vmatprep.subr.mxu0 0.0
        %7860 = vmatpush1.msra.mxu0 %v7830
        %7861 = vmatprep.subr.mxu0 0.0
        %7862 = vmatpush1.msra.mxu0 %v7831
        %7863 = vmatprep.subr.mxu0 0.0
        %7864 = vmatpush1.msra.mxu0 %v7832
        %7865 = vmatprep.subr.mxu0 0.0
        %7866 = vmatpush1.msra.mxu0 %v7833
        %7867 = vmatprep.subr.mxu0 0.0
        %7868 = vmatpush1.msra.mxu0 %v7834
        %7869 = vmatprep.subr.mxu0 0.0
        %7870 = vmatpush1.msra.mxu0 %v7835
        %7871 = vmatprep.subr.mxu0 0.0
        %7872 = vmatpush1.msra.mxu0 %v7836
        %7873 = vmatprep.subr.mxu0 0.0
        %7874 = vmatpush1.msra.mxu0 %v7837
        %7875 = vmatprep.subr.mxu0 0.0
        %7876 = vmatpush1.msra.mxu0 0.0
        %7877 = vmatprep.subr.mxu0 0.0
        %7878 = vmatpush1.msra.mxu0 0.0
        %7879 = vmatprep.subr.mxu0 0.0
        %7880 = vmatpush1.msra.mxu0 0.0
        %7881 = vmatprep.subr.mxu0 0.0
        %7882 = vmatpush1.msra.mxu0 0.0
        %7883 = vmatprep.subr.mxu0 0.0
        %7884 = vmatpush1.msra.mxu0 0.0
        %7885 = vmatprep.subr.mxu0 0.0
        %7886 = vmatpush1.msra.mxu0 0.0
        %7887 = vmatprep.subr.mxu0 0.0
        %7888 = vmatpush1.msra.mxu0 0.0
        %7889 = vmatprep.subr.mxu0 0.0
        %7890 = vmatpush1.msra.mxu0 0.0
        %7891 = vmatprep.subr.mxu0 0.0
        %7892 = vmatpush1.msra.mxu0 0.0
        %7893 = vmatprep.subr.mxu0 0.0
        %7894 = vmatpush1.msra.mxu0 0.0
        %7895 = vmatprep.subr.mxu0 0.0
        %7896 = vmatpush1.msra.mxu0 0.0
        %7897 = vmatprep.subr.mxu0 0.0
        %7898 = vmatpush1.msra.mxu0 0.0
        %7899 = vmatprep.subr.mxu0 0.0
        %7900 = vmatpush1.msra.mxu0 0.0
        %7901 = vmatprep.subr.mxu0 0.0
        %7902 = vmatpush1.msra.mxu0 0.0
        %7903 = vmatprep.subr.mxu0 0.0
        %7904 = vmatpush1.msra.mxu0 0.0
        %7905 = vmatprep.subr.mxu0 0.0
        %7906 = vmatpush1.msra.mxu0 0.0
        %7907 = vmatprep.mubr.f32.mxu0 0.0
        %7908 = vmatmul.mubr.f32.gmra.mrb[0].mxu0 %v7820
        %v7909 = vpop.f32.mrb[0].mxu0
        %v7910 = vadd.f32 %v7842, %v7909
        %v7911 = vpop.f32.mrb[0].mxu0
        %7912 = vdwg.mxu0
        %v7913 = vmax.f32 %v7910, 0.0
        %s7914 = scalar_lea.vmem [#allocation2], 4352
        %v7915 = vld [vmem:[%s7914] sm:$0xff]
        %v7916 = vld [vmem:[%s7914 + $0x8] sm:$0xff]
        %v7917 = vld [vmem:[%s7914 + $0x10] sm:$0xff]
        %v7918 = vld [vmem:[%s7914 + $0x18] sm:$0xff]
        %v7919 = vld [vmem:[%s7914 + $0x20] sm:$0xff]
        %v7920 = vld [vmem:[%s7914 + $0x28] sm:$0xff]
        %v7921 = vld [vmem:[%s7914 + $0x30] sm:$0xff]
        %v7922 = vld [vmem:[%s7914 + $0x38] sm:$0xff]
        %v7923 = vld [vmem:[%s7914 + $0x40] sm:$0xff]
        %v7924 = vld [vmem:[%s7914 + $0x48] sm:$0xff]
        %v7925 = vld [vmem:[%s7914 + $0x50] sm:$0xff]
        %v7926 = vld [vmem:[%s7914 + $0x58] sm:$0xff]
        %v7927 = vld [vmem:[%s7914 + $0x60] sm:$0xff]
        %v7928 = vld [vmem:[%s7914 + $0x68] sm:$0xff]
        %v7929 = vld [vmem:[%s7914 + $0x70] sm:$0xff]
        %v7930 = vld [vmem:[%s7914 + $0x78] sm:$0xff]
        %v7931 = vld [vmem:[#allocation4 + $0x32] sm:$0x1]
        %v7932 = vlaneseq
        %v7933 = vshrl.u32 %v7932, 7
        %v7934 = vsub.s32 0, %v7933
        %v7935 = vrot.slane %v7931, %v7934
        %7936 = vmatprep.subr.mxu0 0.0
        %7937 = vmatpush1.msra.mxu0 %v7915
        %7938 = vmatprep.subr.mxu0 0.0
        %7939 = vmatpush1.msra.mxu0 %v7916
        %7940 = vmatprep.subr.mxu0 0.0
        %7941 = vmatpush1.msra.mxu0 %v7917
        %7942 = vmatprep.subr.mxu0 0.0
        %7943 = vmatpush1.msra.mxu0 %v7918
        %7944 = vmatprep.subr.mxu0 0.0
        %7945 = vmatpush1.msra.mxu0 %v7919
        %7946 = vmatprep.subr.mxu0 0.0
        %7947 = vmatpush1.msra.mxu0 %v7920
        %7948 = vmatprep.subr.mxu0 0.0
        %7949 = vmatpush1.msra.mxu0 %v7921
        %7950 = vmatprep.subr.mxu0 0.0
        %7951 = vmatpush1.msra.mxu0 %v7922
        %7952 = vmatprep.subr.mxu0 0.0
        %7953 = vmatpush1.msra.mxu0 %v7923
        %7954 = vmatprep.subr.mxu0 0.0
        %7955 = vmatpush1.msra.mxu0 %v7924
        %7956 = vmatprep.subr.mxu0 0.0
        %7957 = vmatpush1.msra.mxu0 %v7925
        %7958 = vmatprep.subr.mxu0 0.0
        %7959 = vmatpush1.msra.mxu0 %v7926
        %7960 = vmatprep.subr.mxu0 0.0
        %7961 = vmatpush1.msra.mxu0 %v7927
        %7962 = vmatprep.subr.mxu0 0.0
        %7963 = vmatpush1.msra.mxu0 %v7928
        %7964 = vmatprep.subr.mxu0 0.0
        %7965 = vmatpush1.msra.mxu0 %v7929
        %7966 = vmatprep.subr.mxu0 0.0
        %7967 = vmatpush1.msra.mxu0 %v7930
        %7968 = vmatprep.subr.mxu0 0.0
        %7969 = vmatpush1.msra.mxu0 0.0
        %7970 = vmatprep.subr.mxu0 0.0
        %7971 = vmatpush1.msra.mxu0 0.0
        %7972 = vmatprep.subr.mxu0 0.0
        %7973 = vmatpush1.msra.mxu0 0.0
        %7974 = vmatprep.subr.mxu0 0.0
        %7975 = vmatpush1.msra.mxu0 0.0
        %7976 = vmatprep.subr.mxu0 0.0
        %7977 = vmatpush1.msra.mxu0 0.0
        %7978 = vmatprep.subr.mxu0 0.0
        %7979 = vmatpush1.msra.mxu0 0.0
        %7980 = vmatprep.subr.mxu0 0.0
        %7981 = vmatpush1.msra.mxu0 0.0
        %7982 = vmatprep.subr.mxu0 0.0
        %7983 = vmatpush1.msra.mxu0 0.0
        %7984 = vmatprep.subr.mxu0 0.0
        %7985 = vmatpush1.msra.mxu0 0.0
        %7986 = vmatprep.subr.mxu0 0.0
        %7987 = vmatpush1.msra.mxu0 0.0
        %7988 = vmatprep.subr.mxu0 0.0
        %7989 = vmatpush1.msra.mxu0 0.0
        %7990 = vmatprep.subr.mxu0 0.0
        %7991 = vmatpush1.msra.mxu0 0.0
        %7992 = vmatprep.subr.mxu0 0.0
        %7993 = vmatpush1.msra.mxu0 0.0
        %7994 = vmatprep.subr.mxu0 0.0
        %7995 = vmatpush1.msra.mxu0 0.0
        %7996 = vmatprep.subr.mxu0 0.0
        %7997 = vmatpush1.msra.mxu0 0.0
        %7998 = vmatprep.subr.mxu0 0.0
        %7999 = vmatpush1.msra.mxu0 0.0
        %8000 = vmatprep.mubr.f32.mxu0 0.0
        %8001 = vmatmul.mubr.f32.gmra.mrb[0].mxu0 %v7913
        %v8002 = vpop.f32.mrb[0].mxu0
        %v8003 = vadd.f32 %v7935, %v8002
        %v8004 = vpop.f32.mrb[0].mxu0
        %8005 = vdwg.mxu0
        %v8006 = vadd.f32 %v7795, %v8003
        %8007 = vadd.xlane.f32.xlu0 %v8006
        %v8008 = vpop.xlane.xlu0 %8007
        %v8009 = vmul.f32 %v8006, %v8006
        %8010 = vadd.xlane.f32.xlu0 %v8009
        %v8011 = vpop.xlane.xlu0 %8010
        %v8012 = vmul.f32 %v8008, 0.03125
        %v8013 = vmul.f32 %v8011, 0.03125
        %v8014 = vmul.f32 %v8012, %v8012
        %v8015 = vsub.f32 %v8013, %v8014
        %v8016 = vsub.f32 %v8006, %v8012
        %v8017 = vadd.f32 %v8015, 1e-05
        %v8018 = vrsqrt.pop %v8017
        %v8019 = vmul.f32 %v8016, %v8018
        %v8020 = vld [vmem:[#allocation4 + $0x3] sm:$0x1]
        %v8021 = vlaneseq
        %v8022 = vshrl.u32 %v8021, 7
        %v8023 = vsub.s32 0, %v8022
        %v8024 = vrot.slane %v8020, %v8023
        %v8025 = vmul.f32 %v8019, %v8024
        %v8026 = vld [vmem:[#allocation4 + $0x4] sm:$0x1]
        %v8027 = vlaneseq
        %v8028 = vshrl.u32 %v8027, 7
        %v8029 = vsub.s32 0, %v8028
        %v8030 = vrot.slane %v8026, %v8029
        %v8031 = vadd.f32 %v8025, %v8030
        %s8032 = scalar_lea.vmem [#allocation2], 256
        %v8033 = vld [vmem:[%s8032] sm:$0xff]
        %v8034 = vld [vmem:[%s8032 + $0x8] sm:$0xff]
        %v8035 = vld [vmem:[%s8032 + $0x10] sm:$0xff]
        %v8036 = vld [vmem:[%s8032 + $0x18] sm:$0xff]
        %v8037 = vld [vmem:[%s8032 + $0x20] sm:$0xff]
        %v8038 = vld [vmem:[%s8032 + $0x28] sm:$0xff]
        %v8039 = vld [vmem:[%s8032 + $0x30] sm:$0xff]
        %v8040 = vld [vmem:[%s8032 + $0x38] sm:$0xff]
        %v8041 = vld [vmem:[%s8032 + $0x40] sm:$0xff]
        %v8042 = vld [vmem:[%s8032 + $0x48] sm:$0xff]
        %v8043 = vld [vmem:[%s8032 + $0x50] sm:$0xff]
        %v8044 = vld [vmem:[%s8032 + $0x58] sm:$0xff]
        %v8045 = vld [vmem:[%s8032 + $0x60] sm:$0xff]
        %v8046 = vld [vmem:[%s8032 + $0x68] sm:$0xff]
        %v8047 = vld [vmem:[%s8032 + $0x70] sm:$0xff]
        %v8048 = vld [vmem:[%s8032 + $0x78] sm:$0xff]
        %v8049 = vld [vmem:[#allocation4] sm:$0x1]
        %v8050 = vlaneseq
        %v8051 = vshrl.u32 %v8050, 7
        %v8052 = vsub.s32 0, %v8051
        %v8053 = vrot.slane %v8049, %v8052
        %8054 = vmatprep.subr.mxu0 0.0
        %8055 = vmatpush1.msra.mxu0 %v8033
        %8056 = vmatprep.subr.mxu0 0.0
        %8057 = vmatpush1.msra.mxu0 %v8034
        %8058 = vmatprep.subr.mxu0 0.0
        %8059 = vmatpush1.msra.mxu0 %v8035
        %8060 = vmatprep.subr.mxu0 0.0
        %8061 = vmatpush1.msra.mxu0 %v8036
        %8062 = vmatprep.subr.mxu0 0.0
        %8063 = vmatpush1.msra.mxu0 %v8037
        %8064 = vmatprep.subr.mxu0 0.0
        %8065 = vmatpush1.msra.mxu0 %v8038
        %8066 = vmatprep.subr.mxu0 0.0
        %8067 = vmatpush1.msra.mxu0 %v8039
        %8068 = vmatprep.subr.mxu0 0.0
        %8069 = vmatpush1.msra.mxu0 %v8040
        %8070 = vmatprep.subr.mxu0 0.0
        %8071 = vmatpush1.msra.mxu0 %v8041
        %8072 = vmatprep.subr.mxu0 0.0
        %8073 = vmatpush1.msra.mxu0 %v8042
        %8074 = vmatprep.subr.mxu0 0.0
        %8075 = vmatpush1.msra.mxu0 %v8043
        %8076 = vmatprep.subr.mxu0 0.0
        %8077 = vmatpush1.msra.mxu0 %v8044
        %8078 = vmatprep.subr.mxu0 0.0
        %8079 = vmatpush1.msra.mxu0 %v8045
        %8080 = vmatprep.subr.mxu0 0.0
        %8081 = vmatpush1.msra.mxu0 %v8046
        %8082 = vmatprep.subr.mxu0 0.0
        %8083 = vmatpush1.msra.mxu0 %v8047
        %8084 = vmatprep.subr.mxu0 0.0
        %8085 = vmatpush1.msra.mxu0 %v8048
        %8086 = vmatprep.subr.mxu0 0.0
        %8087 = vmatpush1.msra.mxu0 0.0
        %8088 = vmatprep.subr.mxu0 0.0
        %8089 = vmatpush1.msra.mxu0 0.0
        %8090 = vmatprep.subr.mxu0 0.0
        %8091 = vmatpush1.msra.mxu0 0.0
        %8092 = vmatprep.subr.mxu0 0.0
        %8093 = vmatpush1.msra.mxu0 0.0
        %8094 = vmatprep.subr.mxu0 0.0
        %8095 = vmatpush1.msra.mxu0 0.0
        %8096 = vmatprep.subr.mxu0 0.0
        %8097 = vmatpush1.msra.mxu0 0.0
        %8098 = vmatprep.subr.mxu0 0.0
        %8099 = vmatpush1.msra.mxu0 0.0
        %8100 = vmatprep.subr.mxu0 0.0
        %8101 = vmatpush1.msra.mxu0 0.0
        %8102 = vmatprep.subr.mxu0 0.0
        %8103 = vmatpush1.msra.mxu0 0.0
        %8104 = vmatprep.subr.mxu0 0.0
        %8105 = vmatpush1.msra.mxu0 0.0
        %8106 = vmatprep.subr.mxu0 0.0
        %8107 = vmatpush1.msra.mxu0 0.0
        %8108 = vmatprep.subr.mxu0 0.0
        %8109 = vmatpush1.msra.mxu0 0.0
        %8110 = vmatprep.subr.mxu0 0.0
        %8111 = vmatpush1.msra.mxu0 0.0
        %8112 = vmatprep.subr.mxu0 0.0
        %8113 = vmatpush1.msra.mxu0 0.0
        %8114 = vmatprep.subr.mxu0 0.0
        %8115 = vmatpush1.msra.mxu0 0.0
        %8116 = vmatprep.subr.mxu0 0.0
        %8117 = vmatpush1.msra.mxu0 0.0
        %8118 = vmatprep.mubr.f32.mxu0 0.0
        %8119 = vmatmul.mubr.f32.gmra.mrb[0].mxu0 %v8031
        %v8120 = vpop.f32.mrb[0].mxu0
        %v8121 = vadd.f32 %v8053, %v8120
        %v8122 = vpop.f32.mrb[0].mxu0
        %8123 = vdwg.mxu0
        %8124 = vst [vmem:[%s428] sm:$0xff] %v8121
        %p8125 = scmp.lt.s32.totalorder %s22, 1
        %s8126 = scalar_select %p8125, %s22, 1
        %s8127 = smul.addr %s8126, 8
        %s8128 = scalar_lea.vmem %s9, %s8127
        // Predicated region
        $region65: #{seq2seq_forward.1} parent=55 // pred_check
          %p8129 = pneg %p254
        $region66: #{seq2seq_forward.1} parent=55 // pred_check_branch
          %8131 = sbr.rel (%p8129) target = $region68
        $region67: #{seq2seq_forward.1} parent=55 // pred_region
          _
        $region68: #{seq2seq_forward.1} parent=55 // pred_fallthru
          _
      $region56: #{seq2seq_forward.1} parent=5 // pred_fallthru
        _
      %p8132 = scmp.le.s32.totalorder 2, %s17
      // Predicated region
      $region69: #{seq2seq_forward.1} parent=5 // pred_check
        %p8133 = pneg %p8132
      $region70: #{seq2seq_forward.1} parent=5 // pred_check_branch
        %8135 = sbr.rel (%p8133) target = $region72
      $region71: #{seq2seq_forward.1} parent=5 // pred_region
        %s8136 = ssub.s32 %s17, 2
        // Predicated region
        $region73: #{seq2seq_forward.1} parent=71 // pred_check
          %p8137 = pneg %p260
        $region74: #{seq2seq_forward.1} parent=71 // pred_check_branch
          %8139 = sbr.rel (%p8137) target = $region76
        $region75: #{seq2seq_forward.1} parent=71 // pred_region
          %p8140 = scmp.lt.s32.totalorder %s23, 1
          %s8141 = scalar_select %p8140, %s23, 1
          %s8142 = smul.addr %s8141, 8
          %s8143 = scalar_lea.vmem %s9, %s8142
        $region76: #{seq2seq_forward.1} parent=71 // pred_fallthru
          _
      $region72: #{seq2seq_forward.1} parent=5 // pred_fallthru
        _
    $region6: #{seq2seq_forward.1} parent=1 // loop_footer
      %s21 = sadd.s32 1, %s17
    $region7: #{seq2seq_forward.1} parent=1 // loop_footer_branch
      %16 = sbr.rel target = $region3
    $region8: #{seq2seq_forward.1} parent=1 // loop_exit
      _
    %8144 = vsyncpa [#allocation3], 1
    %s8145 = scalar_lea.sflag [#allocation3], 1
    %8146 = vsyncpa %s8145, 1
    %8147 = vsyncpa [#allocation5], 1

</llo_original>
